<compile_context>
chip_gen: v5e
topology: v5e:2x2
jax: 0.10.0
libtpu: 0.0.40
codegen_flags: <defaults>
</compile_context>

<pallas_src>
import jax
import jax.numpy as jnp
from jax.experimental import pallas as pl
from jax.experimental.pallas import tpu as pltpu

# Logical dims (PyTorch module) and 128-aligned padded dims.
D_IN, H1, H2, H3, Z = 784, 500, 500, 2000, 10
D_IN_P, H1_P, H2_P, H3_P = 896, 512, 512, 2048
HEAD = 2 * Z          # fused mean|log_var
HEAD_P = 32           # padded fused-head width
SUBLANE = 16          # bf16 rows per packed vreg (pad batch to this)


def encoder_kernel(x_ref, w1_ref, b1_ref, w2_ref, b2_ref,
                   w3_ref, b3_ref, wh_ref, bh_ref, out_ref):
    # fc1 -> ReLU
    h = jnp.dot(x_ref[...], w1_ref[...], preferred_element_type=jnp.float32)
    h = jnp.maximum(h + b1_ref[...], 0.0).astype(jnp.bfloat16)
    # fc2 -> ReLU
    h = jnp.dot(h, w2_ref[...], preferred_element_type=jnp.float32)
    h = jnp.maximum(h + b2_ref[...], 0.0).astype(jnp.bfloat16)
    # fc3 -> ReLU
    h = jnp.dot(h, w3_ref[...], preferred_element_type=jnp.float32)
    h = jnp.maximum(h + b3_ref[...], 0.0).astype(jnp.bfloat16)
    # fused mean|log_var head
    out_ref[...] = (jnp.dot(h, wh_ref[...], preferred_element_type=jnp.float32)
                    + bh_ref[...])


def encoder_forward(x, p):
    B = x.shape[0]
    B_P = max(SUBLANE, ((B + SUBLANE - 1) // SUBLANE) * SUBLANE)

    # zero-pad batch to 16 rows and features to 896, cast to bf16
    x_pad = jnp.zeros((B_P, D_IN_P), jnp.bfloat16).at[:B, :D_IN].set(
        x.astype(jnp.bfloat16))

    flops = 2 * B_P * (D_IN_P * H1_P + H1_P * H2_P + H2_P * H3_P + H3_P * HEAD_P)
    bytes_accessed = (
        2 * (D_IN_P * H1_P + H1_P * H2_P + H2_P * H3_P + H3_P * HEAD_P)  # bf16 w
        + 4 * (H1_P + H2_P + H3_P + HEAD_P)                              # f32 b
        + 2 * B_P * D_IN_P                                               # x in
        + 4 * B_P * HEAD_P)                                              # out

    vmem = pl.BlockSpec(memory_space=pltpu.MemorySpace.VMEM)  # whole array, VMEM
    out = pl.pallas_call(
        encoder_kernel,
        out_shape=jax.ShapeDtypeStruct((B_P, HEAD_P), jnp.float32),
        in_specs=[vmem] * 9,
        out_specs=vmem,
        cost_estimate=pl.CostEstimate(flops=flops, transcendentals=0,
                                      bytes_accessed=bytes_accessed),
        compiler_params=pltpu.CompilerParams(vmem_limit_bytes=16 << 20),
    )(x_pad, p["w1"], p["b1"], p["w2"], p["b2"],
      p["w3"], p["b3"], p["wh"], p["bh"])

    return out[:B, :Z], out[:B, Z:HEAD]  # (mean, log_var)


def init_params(key):
    """PyTorch-style init, stored as [in, out], zero-padded to 128-aligned
    shapes, weights in bf16, biases in fp32 (padding entries are exactly 0)."""
    dims = {"1": (D_IN, H1), "2": (H1, H2), "3": (H2, H3),
            "m": (H3, Z), "v": (H3, Z)}
    raw = {}
    keys = jax.random.split(key, len(dims))
    for (name, (din, dout)), k in zip(dims.items(), keys):
        kw, kb = jax.random.split(k)
        bound = 1.0 / jnp.sqrt(din)
        raw[f"w{name}"] = jax.random.uniform(kw, (din, dout), jnp.float32,
                                             -bound, bound)
        raw[f"b{name}"] = jax.random.uniform(kb, (1, dout), jnp.float32,
                                             -bound, bound)

    def pad(a, shape):
        return jnp.zeros(shape, a.dtype).at[:a.shape[0], :a.shape[1]].set(a)

    p = {
        "w1": pad(raw["w1"], (D_IN_P, H1_P)).astype(jnp.bfloat16),
        "b1": pad(raw["b1"], (1, H1_P)),
        "w2": pad(raw["w2"], (H1_P, H2_P)).astype(jnp.bfloat16),
        "b2": pad(raw["b2"], (1, H2_P)),
        "w3": pad(raw["w3"], (H2_P, H3_P)).astype(jnp.bfloat16),
        "b3": pad(raw["b3"], (1, H3_P)),
        # fused heads: mean in cols 0:10, log_var in cols 10:20
        "wh": pad(jnp.concatenate([raw["wm"], raw["wv"]], axis=1),
                  (H3_P, HEAD_P)).astype(jnp.bfloat16),
        "bh": pad(jnp.concatenate([raw["bm"], raw["bv"]], axis=1),
                  (1, HEAD_P)),
    }
    return p


def encoder_reference(x, p):
    """Pure-JAX reference performing the same bf16/f32 mixed-precision math."""
    B = x.shape[0]
    xb = jnp.zeros((B, D_IN_P), jnp.bfloat16).at[:, :D_IN].set(
        x.astype(jnp.bfloat16))
    h = jnp.dot(xb, p["w1"], preferred_element_type=jnp.float32)
    h = jnp.maximum(h + p["b1"], 0.0).astype(jnp.bfloat16)
    h = jnp.dot(h, p["w2"], preferred_element_type=jnp.float32)
    h = jnp.maximum(h + p["b2"], 0.0).astype(jnp.bfloat16)
    h = jnp.dot(h, p["w3"], preferred_element_type=jnp.float32)
    h = jnp.maximum(h + p["b3"], 0.0).astype(jnp.bfloat16)
    out = jnp.dot(h, p["wh"], preferred_element_type=jnp.float32) + p["bh"]
    return out[:, :Z], out[:, Z:HEAD]


if __name__ == "__main__":
    key = jax.random.PRNGKey(0)
    k_x, k_p = jax.random.split(key)

    B = 8
    x = jax.random.normal(k_x, (B, D_IN), jnp.float32)
    params = init_params(k_p)

    mean, log_var = encoder_forward(x, params)
    jax.block_until_ready((mean, log_var))

    ref_mean, ref_log_var = encoder_reference(x, params)
    assert mean.shape == (B, Z) and log_var.shape == (B, Z)
    assert jnp.allclose(mean, ref_mean, atol=1e-2, rtol=1e-2)
    assert jnp.allclose(log_var, ref_log_var, atol=1e-2, rtol=1e-2)

    print("KERNEL_OK")
</pallas_src>

<mosaic_0001>
module attributes {stable_mosaic.version = 11 : i64} {
  func.func @encoder_kernel(%arg0: memref<16x896xbf16, #tpu.memory_space<vmem>>, %arg1: memref<896x512xbf16, #tpu.memory_space<vmem>>, %arg2: memref<1x512xf32, #tpu.memory_space<vmem>>, %arg3: memref<512x512xbf16, #tpu.memory_space<vmem>>, %arg4: memref<1x512xf32, #tpu.memory_space<vmem>>, %arg5: memref<512x2048xbf16, #tpu.memory_space<vmem>>, %arg6: memref<1x2048xf32, #tpu.memory_space<vmem>>, %arg7: memref<2048x32xbf16, #tpu.memory_space<vmem>>, %arg8: memref<1x32xf32, #tpu.memory_space<vmem>>, %arg9: memref<16x32xf32, #tpu.memory_space<vmem>>) attributes {dimension_semantics = [], scalar_prefetch = 0 : i64, scratch_operands = 0 : i64, tpu.core_type = #tpu.core_type<tc>} {
    %c0 = arith.constant 0 : index
    %c0_0 = arith.constant 0 : index
    %0 = vector.load %arg0[%c0, %c0_0] : memref<16x896xbf16, #tpu.memory_space<vmem>>, vector<16x896xbf16>
    %c0_1 = arith.constant 0 : index
    %c0_2 = arith.constant 0 : index
    %1 = vector.load %arg1[%c0_1, %c0_2] : memref<896x512xbf16, #tpu.memory_space<vmem>>, vector<896x512xbf16>
    %cst = arith.constant dense<0.000000e+00> : vector<16x512xf32>
    %2 = tpu.matmul %0, %1, %cst {dimension_numbers = #tpu.dot_dimension_numbers<[1], [0], [0], [1], [0, 0, 1, 1], [], []>} : vector<16x896xbf16>, vector<896x512xbf16>, vector<16x512xf32> -> vector<16x512xf32>
    %c0_3 = arith.constant 0 : index
    %c0_4 = arith.constant 0 : index
    %3 = vector.load %arg2[%c0_3, %c0_4] : memref<1x512xf32, #tpu.memory_space<vmem>>, vector<1x512xf32>
    %4 = vector.broadcast %3 : vector<1x512xf32> to vector<16x512xf32>
    %5 = arith.addf %2, %4 : vector<16x512xf32>
    %cst_5 = arith.constant 0.000000e+00 : f32
    %6 = vector.broadcast %cst_5 : f32 to vector<16x512xf32>
    %7 = arith.maximumf %5, %6 : vector<16x512xf32>
    %8 = arith.truncf %7 : vector<16x512xf32> to vector<16x512xbf16>
    %c0_6 = arith.constant 0 : index
    %c0_7 = arith.constant 0 : index
    %9 = vector.load %arg3[%c0_6, %c0_7] : memref<512x512xbf16, #tpu.memory_space<vmem>>, vector<512x512xbf16>
    %cst_8 = arith.constant dense<0.000000e+00> : vector<16x512xf32>
    %10 = tpu.matmul %8, %9, %cst_8 {dimension_numbers = #tpu.dot_dimension_numbers<[1], [0], [0], [1], [0, 0, 1, 1], [], []>} : vector<16x512xbf16>, vector<512x512xbf16>, vector<16x512xf32> -> vector<16x512xf32>
    %c0_9 = arith.constant 0 : index
    %c0_10 = arith.constant 0 : index
    %11 = vector.load %arg4[%c0_9, %c0_10] : memref<1x512xf32, #tpu.memory_space<vmem>>, vector<1x512xf32>
    %12 = vector.broadcast %11 : vector<1x512xf32> to vector<16x512xf32>
    %13 = arith.addf %10, %12 : vector<16x512xf32>
    %cst_11 = arith.constant 0.000000e+00 : f32
    %14 = vector.broadcast %cst_11 : f32 to vector<16x512xf32>
    %15 = arith.maximumf %13, %14 : vector<16x512xf32>
    %16 = arith.truncf %15 : vector<16x512xf32> to vector<16x512xbf16>
    %c0_12 = arith.constant 0 : index
    %c0_13 = arith.constant 0 : index
    %17 = vector.load %arg5[%c0_12, %c0_13] : memref<512x2048xbf16, #tpu.memory_space<vmem>>, vector<512x2048xbf16>
    %cst_14 = arith.constant dense<0.000000e+00> : vector<16x2048xf32>
    %18 = tpu.matmul %16, %17, %cst_14 {dimension_numbers = #tpu.dot_dimension_numbers<[1], [0], [0], [1], [0, 0, 1, 1], [], []>} : vector<16x512xbf16>, vector<512x2048xbf16>, vector<16x2048xf32> -> vector<16x2048xf32>
    %c0_15 = arith.constant 0 : index
    %c0_16 = arith.constant 0 : index
    %19 = vector.load %arg6[%c0_15, %c0_16] : memref<1x2048xf32, #tpu.memory_space<vmem>>, vector<1x2048xf32>
    %20 = vector.broadcast %19 : vector<1x2048xf32> to vector<16x2048xf32>
    %21 = arith.addf %18, %20 : vector<16x2048xf32>
    %cst_17 = arith.constant 0.000000e+00 : f32
    %22 = vector.broadcast %cst_17 : f32 to vector<16x2048xf32>
    %23 = arith.maximumf %21, %22 : vector<16x2048xf32>
    %24 = arith.truncf %23 : vector<16x2048xf32> to vector<16x2048xbf16>
    %c0_18 = arith.constant 0 : index
    %c0_19 = arith.constant 0 : index
    %25 = vector.load %arg7[%c0_18, %c0_19] : memref<2048x32xbf16, #tpu.memory_space<vmem>>, vector<2048x32xbf16>
    %cst_20 = arith.constant dense<0.000000e+00> : vector<16x32xf32>
    %26 = tpu.matmul %24, %25, %cst_20 {dimension_numbers = #tpu.dot_dimension_numbers<[1], [0], [0], [1], [0, 0, 1, 1], [], []>} : vector<16x2048xbf16>, vector<2048x32xbf16>, vector<16x32xf32> -> vector<16x32xf32>
    %c0_21 = arith.constant 0 : index
    %c0_22 = arith.constant 0 : index
    %27 = vector.load %arg8[%c0_21, %c0_22] : memref<1x32xf32, #tpu.memory_space<vmem>>, vector<1x32xf32>
    %28 = vector.broadcast %27 : vector<1x32xf32> to vector<16x32xf32>
    %29 = arith.addf %26, %28 : vector<16x32xf32>
    %c0_23 = arith.constant 0 : index
    %c0_24 = arith.constant 0 : index
    %30 = vector.load %arg9[%c0_23, %c0_24] : memref<16x32xf32, #tpu.memory_space<vmem>>, vector<16x32xf32>
    tpu.vector_store %arg9[%c0_23, %c0_24], %29 {strides = array<i32>} : memref<16x32xf32, #tpu.memory_space<vmem>>, vector<16x32xf32>,
    return
  }
}

</mosaic_0001>

<llo_original>
// kernel: tpu_custom_call.1
$region0: #{tpu_custom_call.1}
  #allocation0 [shape = 'u32[]', space=smem, size = 0x4, offset = 0x4, fixed_abs, tag = 'smem constant byte address 0x4 - core index']
  #allocation1 [shape = 'u32[72,128]{1,0:T(1,128)}', space=vmem, size = 0x9000, scoped, tag = 'internal scratch']
  %s0 = inlined_call_operand.hbm [shape: bf16[16,896], index: 0, kind: input, shape index: {}]
  %s1 = inlined_call_operand.hbm [shape: bf16[896,512], index: 1, kind: input, shape index: {}]
  %s2 = inlined_call_operand.hbm [shape: f32[1,512], index: 2, kind: input, shape index: {}]
  %s3 = inlined_call_operand.hbm [shape: bf16[512,512], index: 3, kind: input, shape index: {}]
  %s4 = inlined_call_operand.hbm [shape: f32[1,512], index: 4, kind: input, shape index: {}]
  %s5 = inlined_call_operand.hbm [shape: bf16[512,2048], index: 5, kind: input, shape index: {}]
  %s6 = inlined_call_operand.hbm [shape: f32[1,2048], index: 6, kind: input, shape index: {}]
  %s7 = inlined_call_operand.vmem [shape: bf16[2048,32], index: 7, kind: input, shape index: {}]
  %s8 = inlined_call_operand.hbm [shape: f32[1,32], index: 8, kind: input, shape index: {}]
  %s9 = inlined_call_operand.hbm [shape: f32[16,32], index: 9, kind: output, shape index: {}]
  %s10 = sld [smem:[#allocation0]]
  $region78: #{tpu_custom_call.1} parent=0
    _
  %s12 = ssub.s32 1, %s10
  %s13 = scalar_select 0, %s12, %s10
  $region1: #{tpu_custom_call.1} parent=0
    #allocation2 [shape = 'u8[28672]{0}', space=vmem, size = 0x7000, scoped, tag = 'input window, operand 0, single buffered']
    #allocation3 [shape = 's32[1]{0}', space=sflag, size = 0x4, scoped, tag = 'scoped memory for tpu_custom_call.1']
    #allocation4 [shape = 's32[1]{0}', space=sflag, size = 0x4, scoped, tag = 'scoped memory for tpu_custom_call.1']
    #allocation5 [shape = 'u8[917504]{0}', space=vmem, size = 0xe0000, scoped, tag = 'input window, operand 1, single buffered']
    #allocation6 [shape = 's32[1]{0}', space=sflag, size = 0x4, scoped, tag = 'scoped memory for tpu_custom_call.1']
    #allocation7 [shape = 'u8[2048]{0}', space=vmem, size = 0x800, scoped, tag = 'input window, operand 2, single buffered']
    #allocation8 [shape = 'u8[524288]{0}', space=vmem, size = 0x80000, scoped, tag = 'input window, operand 3, single buffered']
    #allocation9 [shape = 's32[1]{0}', space=sflag, size = 0x4, scoped, tag = 'scoped memory for tpu_custom_call.1']
    #allocation10 [shape = 'u8[2048]{0}', space=vmem, size = 0x800, scoped, tag = 'input window, operand 4, single buffered']
    #allocation11 [shape = 'u8[2097152]{0}', space=vmem, size = 0x200000, scoped, tag = 'input window, operand 5, single buffered']
    #allocation12 [shape = 's32[1]{0}', space=sflag, size = 0x4, scoped, tag = 'scoped memory for tpu_custom_call.1']
    #allocation13 [shape = 'u8[8192]{0}', space=vmem, size = 0x2000, scoped, tag = 'input window, operand 6, single buffered']
    #allocation14 [shape = 'u8[512]{0}', space=vmem, size = 0x400, scoped, tag = 'input window, operand 8, single buffered']
    #allocation15 [shape = 's32[1]{0}', space=sflag, size = 0x4, scoped, tag = 'scoped memory for tpu_custom_call.1']
    #allocation16 [shape = 'u8[8192]{0}', space=vmem, size = 0x2000, scoped, tag = 'output window, operand 0, single buffered']
    %14 = vsyncpa [#allocation3], 0
    %15 = vsyncpa [#allocation6], 0
    %16 = vsyncpa [#allocation9], 0
    %17 = vsyncpa [#allocation12], 0
    %18 = vsyncpa [#allocation15], 0
    %19 = vsyncpa [#allocation4], 0
    // Predicated region
    $region2: #{tpu_custom_call.1} parent=1 // pred_check
      _
    $region3: #{tpu_custom_call.1} parent=1 // pred_check_branch
      %21 = sbr.rel (0) target = $region5
    $region4: #{tpu_custom_call.1} parent=1 // pred_region
      %23 = vsyncadd [#allocation3], 0
      %s24 = sshll.u32 %s0, 4
      %s25 = int_to_ptr.hbm [resolvable:$true] %s24
      %s26 = sshll.u32 [#allocation2], 4
      %s27 = int_to_ptr.vmem [resolvable:$true] %s26
      %32 = dma.hbm_to_vmem [thread:$0]  %s25, 896, %s27, [#allocation3], 448, 448, 28
    $region5: #{tpu_custom_call.1} parent=1 // pred_fallthru
      _
    // Predicated region
    $region6: #{tpu_custom_call.1} parent=1 // pred_check
      _
    $region7: #{tpu_custom_call.1} parent=1 // pred_check_branch
      %34 = sbr.rel (0) target = $region9
    $region8: #{tpu_custom_call.1} parent=1 // pred_region
      %36 = vsyncadd [#allocation6], 0
      %s37 = sshll.u32 %s1, 4
      %s38 = int_to_ptr.hbm [resolvable:$true] %s37
      %s39 = sshll.u32 [#allocation5], 4
      %s40 = int_to_ptr.vmem [resolvable:$true] %s39
      %45 = dma.hbm_to_vmem [thread:$0]  %s38, 28672, %s40, [#allocation6], 256, 256, 16
    $region9: #{tpu_custom_call.1} parent=1 // pred_fallthru
      _
    // Predicated region
    $region10: #{tpu_custom_call.1} parent=1 // pred_check
      _
    $region11: #{tpu_custom_call.1} parent=1 // pred_check_branch
      %47 = sbr.rel (0) target = $region13
    $region12: #{tpu_custom_call.1} parent=1 // pred_region
      %49 = vsyncadd [#allocation6], 0
      %s51 = sshll.u32 %s2, 4
      %s52 = int_to_ptr.hbm [resolvable:$true] %s51
      %s53 = sshll.u32 [#allocation7], 4
      %s54 = int_to_ptr.vmem [resolvable:$true] %s53
      %56 = dma.hbm_to_vmem [thread:$0]  %s52, 64, %s54, [#allocation6]
    $region13: #{tpu_custom_call.1} parent=1 // pred_fallthru
      _
    // Predicated region
    $region14: #{tpu_custom_call.1} parent=1 // pred_check
      _
    $region15: #{tpu_custom_call.1} parent=1 // pred_check_branch
      %58 = sbr.rel (0) target = $region17
    $region16: #{tpu_custom_call.1} parent=1 // pred_region
      %60 = vsyncadd [#allocation9], 0
      %s61 = sshll.u32 %s3, 4
      %s62 = int_to_ptr.hbm [resolvable:$true] %s61
      %s63 = sshll.u32 [#allocation8], 4
      %s64 = int_to_ptr.vmem [resolvable:$true] %s63
      %69 = dma.hbm_to_vmem [thread:$0]  %s62, 16384, %s64, [#allocation9], 256, 256, 16
    $region17: #{tpu_custom_call.1} parent=1 // pred_fallthru
      _
    // Predicated region
    $region18: #{tpu_custom_call.1} parent=1 // pred_check
      _
    $region19: #{tpu_custom_call.1} parent=1 // pred_check_branch
      %71 = sbr.rel (0) target = $region21
    $region20: #{tpu_custom_call.1} parent=1 // pred_region
      %73 = vsyncadd [#allocation9], 0
      %s75 = sshll.u32 %s4, 4
      %s76 = int_to_ptr.hbm [resolvable:$true] %s75
      %s77 = sshll.u32 [#allocation10], 4
      %s78 = int_to_ptr.vmem [resolvable:$true] %s77
      %80 = dma.hbm_to_vmem [thread:$0]  %s76, 64, %s78, [#allocation9]
    $region21: #{tpu_custom_call.1} parent=1 // pred_fallthru
      _
    // Predicated region
    $region22: #{tpu_custom_call.1} parent=1 // pred_check
      _
    $region23: #{tpu_custom_call.1} parent=1 // pred_check_branch
      %82 = sbr.rel (0) target = $region25
    $region24: #{tpu_custom_call.1} parent=1 // pred_region
      %84 = vsyncadd [#allocation12], 0
      %s85 = sshll.u32 %s5, 4
      %s86 = int_to_ptr.hbm [resolvable:$true] %s85
      %s87 = sshll.u32 [#allocation11], 4
      %s88 = int_to_ptr.vmem [resolvable:$true] %s87
      %93 = dma.hbm_to_vmem [thread:$0]  %s86, 65536, %s88, [#allocation12], 1024, 1024, 64
    $region25: #{tpu_custom_call.1} parent=1 // pred_fallthru
      _
    // Predicated region
    $region26: #{tpu_custom_call.1} parent=1 // pred_check
      _
    $region27: #{tpu_custom_call.1} parent=1 // pred_check_branch
      %95 = sbr.rel (0) target = $region29
    $region28: #{tpu_custom_call.1} parent=1 // pred_region
      %97 = vsyncadd [#allocation12], 0
      %s99 = sshll.u32 %s6, 4
      %s100 = int_to_ptr.hbm [resolvable:$true] %s99
      %s101 = sshll.u32 [#allocation13], 4
      %s102 = int_to_ptr.vmem [resolvable:$true] %s101
      %104 = dma.hbm_to_vmem [thread:$0]  %s100, 256, %s102, [#allocation12]
    $region29: #{tpu_custom_call.1} parent=1 // pred_fallthru
      _
    // Predicated region
    $region30: #{tpu_custom_call.1} parent=1 // pred_check
      _
    $region31: #{tpu_custom_call.1} parent=1 // pred_check_branch
      %106 = sbr.rel (0) target = $region33
    $region32: #{tpu_custom_call.1} parent=1 // pred_region
      _
    $region33: #{tpu_custom_call.1} parent=1 // pred_fallthru
      _
    // Predicated region
    $region34: #{tpu_custom_call.1} parent=1 // pred_check
      _
    $region35: #{tpu_custom_call.1} parent=1 // pred_check_branch
      %108 = sbr.rel (0) target = $region37
    $region36: #{tpu_custom_call.1} parent=1 // pred_region
      %110 = vsyncadd [#allocation15], 0
      %s112 = sshll.u32 %s8, 4
      %s113 = int_to_ptr.hbm [resolvable:$true] %s112
      %s114 = sshll.u32 [#allocation14], 4
      %s115 = int_to_ptr.vmem [resolvable:$true] %s114
      %117 = dma.hbm_to_vmem [thread:$0]  %s113, 16, %s115, [#allocation15]
    $region37: #{tpu_custom_call.1} parent=1 // pred_fallthru
      _
    // Predicated region
    $region38: #{tpu_custom_call.1} parent=1 // pred_check
      _
    $region39: #{tpu_custom_call.1} parent=1 // pred_check_branch
      %119 = sbr.rel (0) target = $region41
    $region40: #{tpu_custom_call.1} parent=1 // pred_region
      %121 = dma.done [#allocation3], 896
    $region41: #{tpu_custom_call.1} parent=1 // pred_fallthru
      _
    // Predicated region
    $region42: #{tpu_custom_call.1} parent=1 // pred_check
      _
    $region43: #{tpu_custom_call.1} parent=1 // pred_check_branch
      %123 = sbr.rel (0) target = $region45
    $region44: #{tpu_custom_call.1} parent=1 // pred_region
      %125 = dma.done [#allocation6], 28672
    $region45: #{tpu_custom_call.1} parent=1 // pred_fallthru
      _
    // Predicated region
    $region46: #{tpu_custom_call.1} parent=1 // pred_check
      _
    $region47: #{tpu_custom_call.1} parent=1 // pred_check_branch
      %127 = sbr.rel (0) target = $region49
    $region48: #{tpu_custom_call.1} parent=1 // pred_region
      %129 = dma.done [#allocation6], 64
    $region49: #{tpu_custom_call.1} parent=1 // pred_fallthru
      _
    // Predicated region
    $region50: #{tpu_custom_call.1} parent=1 // pred_check
      _
    $region51: #{tpu_custom_call.1} parent=1 // pred_check_branch
      %131 = sbr.rel (0) target = $region53
    $region52: #{tpu_custom_call.1} parent=1 // pred_region
      %133 = dma.done [#allocation9], 16384
    $region53: #{tpu_custom_call.1} parent=1 // pred_fallthru
      _
    // Predicated region
    $region54: #{tpu_custom_call.1} parent=1 // pred_check
      _
    $region55: #{tpu_custom_call.1} parent=1 // pred_check_branch
      %135 = sbr.rel (0) target = $region57
    $region56: #{tpu_custom_call.1} parent=1 // pred_region
      %137 = dma.done [#allocation9], 64
    $region57: #{tpu_custom_call.1} parent=1 // pred_fallthru
      _
    // Predicated region
    $region58: #{tpu_custom_call.1} parent=1 // pred_check
      _
    $region59: #{tpu_custom_call.1} parent=1 // pred_check_branch
      %139 = sbr.rel (0) target = $region61
    $region60: #{tpu_custom_call.1} parent=1 // pred_region
      %141 = dma.done [#allocation12], 65536
    $region61: #{tpu_custom_call.1} parent=1 // pred_fallthru
      _
    // Predicated region
    $region62: #{tpu_custom_call.1} parent=1 // pred_check
      _
    $region63: #{tpu_custom_call.1} parent=1 // pred_check_branch
      %143 = sbr.rel (0) target = $region65
    $region64: #{tpu_custom_call.1} parent=1 // pred_region
      %145 = dma.done [#allocation12], 256
    $region65: #{tpu_custom_call.1} parent=1 // pred_fallthru
      _
    // Predicated region
    $region66: #{tpu_custom_call.1} parent=1 // pred_check
      _
    $region67: #{tpu_custom_call.1} parent=1 // pred_check_branch
      %147 = sbr.rel (0) target = $region69
    $region68: #{tpu_custom_call.1} parent=1 // pred_region
      %149 = dma.done [#allocation15], 16
    $region69: #{tpu_custom_call.1} parent=1 // pred_fallthru
      _
    %v150 = vld [vmem:[#allocation2] sm:$0xff]
    %v151 = vld [vmem:[#allocation2 + $0x8] sm:$0xff]
    %v152 = vld [vmem:[#allocation2 + $0x10] sm:$0xff]
    %v153 = vld [vmem:[#allocation2 + $0x18] sm:$0xf]
    %v154 = vld [vmem:[#allocation2 + $0x1c] sm:$0xff]
    %v155 = vld [vmem:[#allocation2 + $0x24] sm:$0xff]
    %v156 = vld [vmem:[#allocation2 + $0x2c] sm:$0xff]
    %v157 = vld [vmem:[#allocation2 + $0x34] sm:$0xf]
    %v158 = vld [vmem:[#allocation5] sm:$0xff]
    %v159 = vld [vmem:[#allocation5 + $0x8] sm:$0xff]
    %v160 = vld [vmem:[#allocation5 + $0x10] sm:$0xff]
    %v161 = vld [vmem:[#allocation5 + $0x18] sm:$0xff]
    %v162 = vld [vmem:[#allocation5 + $0x20] sm:$0xff]
    %v163 = vld [vmem:[#allocation5 + $0x28] sm:$0xff]
    %v164 = vld [vmem:[#allocation5 + $0x30] sm:$0xff]
    %v165 = vld [vmem:[#allocation5 + $0x38] sm:$0xff]
    %v166 = vld [vmem:[#allocation5 + $0x40] sm:$0xff]
    %v167 = vld [vmem:[#allocation5 + $0x48] sm:$0xff]
    %v168 = vld [vmem:[#allocation5 + $0x50] sm:$0xff]
    %v169 = vld [vmem:[#allocation5 + $0x58] sm:$0xff]
    %v170 = vld [vmem:[#allocation5 + $0x60] sm:$0xff]
    %v171 = vld [vmem:[#allocation5 + $0x68] sm:$0xff]
    %v172 = vld [vmem:[#allocation5 + $0x70] sm:$0xff]
    %v173 = vld [vmem:[#allocation5 + $0x78] sm:$0xff]
    %v174 = vld [vmem:[#allocation5 + $0x80] sm:$0xff]
    %v175 = vld [vmem:[#allocation5 + $0x88] sm:$0xff]
    %v176 = vld [vmem:[#allocation5 + $0x90] sm:$0xff]
    %v177 = vld [vmem:[#allocation5 + $0x98] sm:$0xff]
    %v178 = vld [vmem:[#allocation5 + $0xa0] sm:$0xff]
    %v179 = vld [vmem:[#allocation5 + $0xa8] sm:$0xff]
    %v180 = vld [vmem:[#allocation5 + $0xb0] sm:$0xff]
    %v181 = vld [vmem:[#allocation5 + $0xb8] sm:$0xff]
    %v182 = vld [vmem:[#allocation5 + $0xc0] sm:$0xff]
    %v183 = vld [vmem:[#allocation5 + $0xc8] sm:$0xff]
    %v184 = vld [vmem:[#allocation5 + $0xd0] sm:$0xff]
    %v185 = vld [vmem:[#allocation5 + $0xd8] sm:$0xff]
    %v186 = vld [vmem:[#allocation5 + $0xe0] sm:$0xff]
    %v187 = vld [vmem:[#allocation5 + $0xe8] sm:$0xff]
    %v188 = vld [vmem:[#allocation5 + $0xf0] sm:$0xff]
    %v189 = vld [vmem:[#allocation5 + $0xf8] sm:$0xff]
    %v190 = vld [vmem:[#allocation5 + $0x100] sm:$0xff]
    %v191 = vld [vmem:[#allocation5 + $0x108] sm:$0xff]
    %v192 = vld [vmem:[#allocation5 + $0x110] sm:$0xff]
    %v193 = vld [vmem:[#allocation5 + $0x118] sm:$0xff]
    %v194 = vld [vmem:[#allocation5 + $0x120] sm:$0xff]
    %v195 = vld [vmem:[#allocation5 + $0x128] sm:$0xff]
    %v196 = vld [vmem:[#allocation5 + $0x130] sm:$0xff]
    %v197 = vld [vmem:[#allocation5 + $0x138] sm:$0xff]
    %v198 = vld [vmem:[#allocation5 + $0x140] sm:$0xff]
    %v199 = vld [vmem:[#allocation5 + $0x148] sm:$0xff]
    %v200 = vld [vmem:[#allocation5 + $0x150] sm:$0xff]
    %v201 = vld [vmem:[#allocation5 + $0x158] sm:$0xff]
    %v202 = vld [vmem:[#allocation5 + $0x160] sm:$0xff]
    %v203 = vld [vmem:[#allocation5 + $0x168] sm:$0xff]
    %v204 = vld [vmem:[#allocation5 + $0x170] sm:$0xff]
    %v205 = vld [vmem:[#allocation5 + $0x178] sm:$0xff]
    %v206 = vld [vmem:[#allocation5 + $0x180] sm:$0xff]
    %v207 = vld [vmem:[#allocation5 + $0x188] sm:$0xff]
    %v208 = vld [vmem:[#allocation5 + $0x190] sm:$0xff]
    %v209 = vld [vmem:[#allocation5 + $0x198] sm:$0xff]
    %v210 = vld [vmem:[#allocation5 + $0x1a0] sm:$0xff]
    %v211 = vld [vmem:[#allocation5 + $0x1a8] sm:$0xff]
    %v212 = vld [vmem:[#allocation5 + $0x1b0] sm:$0xff]
    %v213 = vld [vmem:[#allocation5 + $0x1b8] sm:$0xff]
    %v214 = vld [vmem:[#allocation5 + $0x1c0] sm:$0xff]
    %v215 = vld [vmem:[#allocation5 + $0x1c8] sm:$0xff]
    %v216 = vld [vmem:[#allocation5 + $0x1d0] sm:$0xff]
    %v217 = vld [vmem:[#allocation5 + $0x1d8] sm:$0xff]
    %v218 = vld [vmem:[#allocation5 + $0x1e0] sm:$0xff]
    %v219 = vld [vmem:[#allocation5 + $0x1e8] sm:$0xff]
    %v220 = vld [vmem:[#allocation5 + $0x1f0] sm:$0xff]
    %v221 = vld [vmem:[#allocation5 + $0x1f8] sm:$0xff]
    %v222 = vld [vmem:[#allocation5 + $0x200] sm:$0xff]
    %v223 = vld [vmem:[#allocation5 + $0x208] sm:$0xff]
    %v224 = vld [vmem:[#allocation5 + $0x210] sm:$0xff]
    %v225 = vld [vmem:[#allocation5 + $0x218] sm:$0xff]
    %v226 = vld [vmem:[#allocation5 + $0x220] sm:$0xff]
    %v227 = vld [vmem:[#allocation5 + $0x228] sm:$0xff]
    %v228 = vld [vmem:[#allocation5 + $0x230] sm:$0xff]
    %v229 = vld [vmem:[#allocation5 + $0x238] sm:$0xff]
    %v230 = vld [vmem:[#allocation5 + $0x240] sm:$0xff]
    %v231 = vld [vmem:[#allocation5 + $0x248] sm:$0xff]
    %v232 = vld [vmem:[#allocation5 + $0x250] sm:$0xff]
    %v233 = vld [vmem:[#allocation5 + $0x258] sm:$0xff]
    %v234 = vld [vmem:[#allocation5 + $0x260] sm:$0xff]
    %v235 = vld [vmem:[#allocation5 + $0x268] sm:$0xff]
    %v236 = vld [vmem:[#allocation5 + $0x270] sm:$0xff]
    %v237 = vld [vmem:[#allocation5 + $0x278] sm:$0xff]
    %v238 = vld [vmem:[#allocation5 + $0x280] sm:$0xff]
    %v239 = vld [vmem:[#allocation5 + $0x288] sm:$0xff]
    %v240 = vld [vmem:[#allocation5 + $0x290] sm:$0xff]
    %v241 = vld [vmem:[#allocation5 + $0x298] sm:$0xff]
    %v242 = vld [vmem:[#allocation5 + $0x2a0] sm:$0xff]
    %v243 = vld [vmem:[#allocation5 + $0x2a8] sm:$0xff]
    %v244 = vld [vmem:[#allocation5 + $0x2b0] sm:$0xff]
    %v245 = vld [vmem:[#allocation5 + $0x2b8] sm:$0xff]
    %v246 = vld [vmem:[#allocation5 + $0x2c0] sm:$0xff]
    %v247 = vld [vmem:[#allocation5 + $0x2c8] sm:$0xff]
    %v248 = vld [vmem:[#allocation5 + $0x2d0] sm:$0xff]
    %v249 = vld [vmem:[#allocation5 + $0x2d8] sm:$0xff]
    %v250 = vld [vmem:[#allocation5 + $0x2e0] sm:$0xff]
    %v251 = vld [vmem:[#allocation5 + $0x2e8] sm:$0xff]
    %v252 = vld [vmem:[#allocation5 + $0x2f0] sm:$0xff]
    %v253 = vld [vmem:[#allocation5 + $0x2f8] sm:$0xff]
    %v254 = vld [vmem:[#allocation5 + $0x300] sm:$0xff]
    %v255 = vld [vmem:[#allocation5 + $0x308] sm:$0xff]
    %v256 = vld [vmem:[#allocation5 + $0x310] sm:$0xff]
    %v257 = vld [vmem:[#allocation5 + $0x318] sm:$0xff]
    %v258 = vld [vmem:[#allocation5 + $0x320] sm:$0xff]
    %v259 = vld [vmem:[#allocation5 + $0x328] sm:$0xff]
    %v260 = vld [vmem:[#allocation5 + $0x330] sm:$0xff]
    %v261 = vld [vmem:[#allocation5 + $0x338] sm:$0xff]
    %v262 = vld [vmem:[#allocation5 + $0x340] sm:$0xff]
    %v263 = vld [vmem:[#allocation5 + $0x348] sm:$0xff]
    %v264 = vld [vmem:[#allocation5 + $0x350] sm:$0xff]
    %v265 = vld [vmem:[#allocation5 + $0x358] sm:$0xff]
    %v266 = vld [vmem:[#allocation5 + $0x360] sm:$0xff]
    %v267 = vld [vmem:[#allocation5 + $0x368] sm:$0xff]
    %v268 = vld [vmem:[#allocation5 + $0x370] sm:$0xff]
    %v269 = vld [vmem:[#allocation5 + $0x378] sm:$0xff]
    %v270 = vld [vmem:[#allocation5 + $0x380] sm:$0xff]
    %v271 = vld [vmem:[#allocation5 + $0x388] sm:$0xff]
    %v272 = vld [vmem:[#allocation5 + $0x390] sm:$0xff]
    %v273 = vld [vmem:[#allocation5 + $0x398] sm:$0xff]
    %v274 = vld [vmem:[#allocation5 + $0x3a0] sm:$0xff]
    %v275 = vld [vmem:[#allocation5 + $0x3a8] sm:$0xff]
    %v276 = vld [vmem:[#allocation5 + $0x3b0] sm:$0xff]
    %v277 = vld [vmem:[#allocation5 + $0x3b8] sm:$0xff]
    %v278 = vld [vmem:[#allocation5 + $0x3c0] sm:$0xff]
    %v279 = vld [vmem:[#allocation5 + $0x3c8] sm:$0xff]
    %v280 = vld [vmem:[#allocation5 + $0x3d0] sm:$0xff]
    %v281 = vld [vmem:[#allocation5 + $0x3d8] sm:$0xff]
    %v282 = vld [vmem:[#allocation5 + $0x3e0] sm:$0xff]
    %v283 = vld [vmem:[#allocation5 + $0x3e8] sm:$0xff]
    %v284 = vld [vmem:[#allocation5 + $0x3f0] sm:$0xff]
    %v285 = vld [vmem:[#allocation5 + $0x3f8] sm:$0xff]
    %v286 = vld [vmem:[#allocation5 + $0x400] sm:$0xff]
    %v287 = vld [vmem:[#allocation5 + $0x408] sm:$0xff]
    %v288 = vld [vmem:[#allocation5 + $0x410] sm:$0xff]
    %v289 = vld [vmem:[#allocation5 + $0x418] sm:$0xff]
    %v290 = vld [vmem:[#allocation5 + $0x420] sm:$0xff]
    %v291 = vld [vmem:[#allocation5 + $0x428] sm:$0xff]
    %v292 = vld [vmem:[#allocation5 + $0x430] sm:$0xff]
    %v293 = vld [vmem:[#allocation5 + $0x438] sm:$0xff]
    %v294 = vld [vmem:[#allocation5 + $0x440] sm:$0xff]
    %v295 = vld [vmem:[#allocation5 + $0x448] sm:$0xff]
    %v296 = vld [vmem:[#allocation5 + $0x450] sm:$0xff]
    %v297 = vld [vmem:[#allocation5 + $0x458] sm:$0xff]
    %v298 = vld [vmem:[#allocation5 + $0x460] sm:$0xff]
    %v299 = vld [vmem:[#allocation5 + $0x468] sm:$0xff]
    %v300 = vld [vmem:[#allocation5 + $0x470] sm:$0xff]
    %v301 = vld [vmem:[#allocation5 + $0x478] sm:$0xff]
    %v302 = vld [vmem:[#allocation5 + $0x480] sm:$0xff]
    %v303 = vld [vmem:[#allocation5 + $0x488] sm:$0xff]
    %v304 = vld [vmem:[#allocation5 + $0x490] sm:$0xff]
    %v305 = vld [vmem:[#allocation5 + $0x498] sm:$0xff]
    %v306 = vld [vmem:[#allocation5 + $0x4a0] sm:$0xff]
    %v307 = vld [vmem:[#allocation5 + $0x4a8] sm:$0xff]
    %v308 = vld [vmem:[#allocation5 + $0x4b0] sm:$0xff]
    %v309 = vld [vmem:[#allocation5 + $0x4b8] sm:$0xff]
    %v310 = vld [vmem:[#allocation5 + $0x4c0] sm:$0xff]
    %v311 = vld [vmem:[#allocation5 + $0x4c8] sm:$0xff]
    %v312 = vld [vmem:[#allocation5 + $0x4d0] sm:$0xff]
    %v313 = vld [vmem:[#allocation5 + $0x4d8] sm:$0xff]
    %v314 = vld [vmem:[#allocation5 + $0x4e0] sm:$0xff]
    %v315 = vld [vmem:[#allocation5 + $0x4e8] sm:$0xff]
    %v316 = vld [vmem:[#allocation5 + $0x4f0] sm:$0xff]
    %v317 = vld [vmem:[#allocation5 + $0x4f8] sm:$0xff]
    %v318 = vld [vmem:[#allocation5 + $0x500] sm:$0xff]
    %v319 = vld [vmem:[#allocation5 + $0x508] sm:$0xff]
    %v320 = vld [vmem:[#allocation5 + $0x510] sm:$0xff]
    %v321 = vld [vmem:[#allocation5 + $0x518] sm:$0xff]
    %v322 = vld [vmem:[#allocation5 + $0x520] sm:$0xff]
    %v323 = vld [vmem:[#allocation5 + $0x528] sm:$0xff]
    %v324 = vld [vmem:[#allocation5 + $0x530] sm:$0xff]
    %v325 = vld [vmem:[#allocation5 + $0x538] sm:$0xff]
    %v326 = vld [vmem:[#allocation5 + $0x540] sm:$0xff]
    %v327 = vld [vmem:[#allocation5 + $0x548] sm:$0xff]
    %v328 = vld [vmem:[#allocation5 + $0x550] sm:$0xff]
    %v329 = vld [vmem:[#allocation5 + $0x558] sm:$0xff]
    %v330 = vld [vmem:[#allocation5 + $0x560] sm:$0xff]
    %v331 = vld [vmem:[#allocation5 + $0x568] sm:$0xff]
    %v332 = vld [vmem:[#allocation5 + $0x570] sm:$0xff]
    %v333 = vld [vmem:[#allocation5 + $0x578] sm:$0xff]
    %v334 = vld [vmem:[#allocation5 + $0x580] sm:$0xff]
    %v335 = vld [vmem:[#allocation5 + $0x588] sm:$0xff]
    %v336 = vld [vmem:[#allocation5 + $0x590] sm:$0xff]
    %v337 = vld [vmem:[#allocation5 + $0x598] sm:$0xff]
    %v338 = vld [vmem:[#allocation5 + $0x5a0] sm:$0xff]
    %v339 = vld [vmem:[#allocation5 + $0x5a8] sm:$0xff]
    %v340 = vld [vmem:[#allocation5 + $0x5b0] sm:$0xff]
    %v341 = vld [vmem:[#allocation5 + $0x5b8] sm:$0xff]
    %v342 = vld [vmem:[#allocation5 + $0x5c0] sm:$0xff]
    %v343 = vld [vmem:[#allocation5 + $0x5c8] sm:$0xff]
    %v344 = vld [vmem:[#allocation5 + $0x5d0] sm:$0xff]
    %v345 = vld [vmem:[#allocation5 + $0x5d8] sm:$0xff]
    %v346 = vld [vmem:[#allocation5 + $0x5e0] sm:$0xff]
    %v347 = vld [vmem:[#allocation5 + $0x5e8] sm:$0xff]
    %v348 = vld [vmem:[#allocation5 + $0x5f0] sm:$0xff]
    %v349 = vld [vmem:[#allocation5 + $0x5f8] sm:$0xff]
    %v350 = vld [vmem:[#allocation5 + $0x600] sm:$0xff]
    %v351 = vld [vmem:[#allocation5 + $0x608] sm:$0xff]
    %v352 = vld [vmem:[#allocation5 + $0x610] sm:$0xff]
    %v353 = vld [vmem:[#allocation5 + $0x618] sm:$0xff]
    %v354 = vld [vmem:[#allocation5 + $0x620] sm:$0xff]
    %v355 = vld [vmem:[#allocation5 + $0x628] sm:$0xff]
    %v356 = vld [vmem:[#allocation5 + $0x630] sm:$0xff]
    %v357 = vld [vmem:[#allocation5 + $0x638] sm:$0xff]
    %v358 = vld [vmem:[#allocation5 + $0x640] sm:$0xff]
    %v359 = vld [vmem:[#allocation5 + $0x648] sm:$0xff]
    %v360 = vld [vmem:[#allocation5 + $0x650] sm:$0xff]
    %v361 = vld [vmem:[#allocation5 + $0x658] sm:$0xff]
    %v362 = vld [vmem:[#allocation5 + $0x660] sm:$0xff]
    %v363 = vld [vmem:[#allocation5 + $0x668] sm:$0xff]
    %v364 = vld [vmem:[#allocation5 + $0x670] sm:$0xff]
    %v365 = vld [vmem:[#allocation5 + $0x678] sm:$0xff]
    %v366 = vld [vmem:[#allocation5 + $0x680] sm:$0xff]
    %v367 = vld [vmem:[#allocation5 + $0x688] sm:$0xff]
    %v368 = vld [vmem:[#allocation5 + $0x690] sm:$0xff]
    %v369 = vld [vmem:[#allocation5 + $0x698] sm:$0xff]
    %v370 = vld [vmem:[#allocation5 + $0x6a0] sm:$0xff]
    %v371 = vld [vmem:[#allocation5 + $0x6a8] sm:$0xff]
    %v372 = vld [vmem:[#allocation5 + $0x6b0] sm:$0xff]
    %v373 = vld [vmem:[#allocation5 + $0x6b8] sm:$0xff]
    %v374 = vld [vmem:[#allocation5 + $0x6c0] sm:$0xff]
    %v375 = vld [vmem:[#allocation5 + $0x6c8] sm:$0xff]
    %v376 = vld [vmem:[#allocation5 + $0x6d0] sm:$0xff]
    %v377 = vld [vmem:[#allocation5 + $0x6d8] sm:$0xff]
    %v378 = vld [vmem:[#allocation5 + $0x6e0] sm:$0xff]
    %v379 = vld [vmem:[#allocation5 + $0x6e8] sm:$0xff]
    %v380 = vld [vmem:[#allocation5 + $0x6f0] sm:$0xff]
    %v381 = vld [vmem:[#allocation5 + $0x6f8] sm:$0xff]
    %v382 = vld [vmem:[#allocation7] sm:$0xf]
    %v384 = vperm.slane %v382, 0
    %v385 = vperm.slane %v382, 1
    %v386 = vperm.slane %v382, 2
    %v387 = vperm.slane %v382, 3
    %v400 = vunpack.c.l.b16 %v150
    %v401 = vunpack.c.h.b16 %v150
    %v402 = vunpack.c.l.b16 %v151
    %v403 = vunpack.c.h.b16 %v151
    %v404 = vunpack.c.l.b16 %v152
    %v405 = vunpack.c.h.b16 %v152
    %v406 = vunpack.c.l.b16 %v153
    %v407 = vunpack.c.l.b16 %v154
    %v408 = vunpack.c.h.b16 %v154
    %v409 = vunpack.c.l.b16 %v155
    %v410 = vunpack.c.h.b16 %v155
    %v411 = vunpack.c.l.b16 %v156
    %v412 = vunpack.c.h.b16 %v156
    %v413 = vunpack.c.l.b16 %v157
    %v414 = vpack.c.b16 %v407, %v400
    %v415 = vpack.c.b16 %v408, %v401
    %v416 = vpack.c.b16 %v409, %v402
    %v417 = vpack.c.b16 %v410, %v403
    %v418 = vpack.c.b16 %v411, %v404
    %v419 = vpack.c.b16 %v412, %v405
    %v420 = vpack.c.b16 %v413, %v406
    %v652 = vunpack.c.l.b16 %v158
    %v653 = vunpack.c.h.b16 %v158
    %v654 = vunpack.c.l.b16 %v159
    %v655 = vunpack.c.h.b16 %v159
    %v656 = vunpack.c.l.b16 %v160
    %v657 = vunpack.c.h.b16 %v160
    %v658 = vunpack.c.l.b16 %v161
    %v659 = vunpack.c.h.b16 %v161
    %v660 = vunpack.c.l.b16 %v162
    %v661 = vunpack.c.h.b16 %v162
    %v662 = vunpack.c.l.b16 %v163
    %v663 = vunpack.c.h.b16 %v163
    %v664 = vunpack.c.l.b16 %v164
    %v665 = vunpack.c.h.b16 %v164
    %v666 = vunpack.c.l.b16 %v165
    %v667 = vunpack.c.h.b16 %v165
    %v668 = vunpack.c.l.b16 %v166
    %v669 = vunpack.c.h.b16 %v166
    %v670 = vunpack.c.l.b16 %v167
    %v671 = vunpack.c.h.b16 %v167
    %v672 = vunpack.c.l.b16 %v168
    %v673 = vunpack.c.h.b16 %v168
    %v674 = vunpack.c.l.b16 %v169
    %v675 = vunpack.c.h.b16 %v169
    %v676 = vunpack.c.l.b16 %v170
    %v677 = vunpack.c.h.b16 %v170
    %v678 = vunpack.c.l.b16 %v171
    %v679 = vunpack.c.h.b16 %v171
    %v680 = vunpack.c.l.b16 %v172
    %v681 = vunpack.c.h.b16 %v172
    %v682 = vunpack.c.l.b16 %v173
    %v683 = vunpack.c.h.b16 %v173
    %v684 = vunpack.c.l.b16 %v174
    %v685 = vunpack.c.h.b16 %v174
    %v686 = vunpack.c.l.b16 %v175
    %v687 = vunpack.c.h.b16 %v175
    %v688 = vunpack.c.l.b16 %v176
    %v689 = vunpack.c.h.b16 %v176
    %v690 = vunpack.c.l.b16 %v177
    %v691 = vunpack.c.h.b16 %v177
    %v692 = vunpack.c.l.b16 %v178
    %v693 = vunpack.c.h.b16 %v178
    %v694 = vunpack.c.l.b16 %v179
    %v695 = vunpack.c.h.b16 %v179
    %v696 = vunpack.c.l.b16 %v180
    %v697 = vunpack.c.h.b16 %v180
    %v698 = vunpack.c.l.b16 %v181
    %v699 = vunpack.c.h.b16 %v181
    %v700 = vunpack.c.l.b16 %v182
    %v701 = vunpack.c.h.b16 %v182
    %v702 = vunpack.c.l.b16 %v183
    %v703 = vunpack.c.h.b16 %v183
    %v704 = vunpack.c.l.b16 %v184
    %v705 = vunpack.c.h.b16 %v184
    %v706 = vunpack.c.l.b16 %v185
    %v707 = vunpack.c.h.b16 %v185
    %v708 = vunpack.c.l.b16 %v186
    %v709 = vunpack.c.h.b16 %v186
    %v710 = vunpack.c.l.b16 %v187
    %v711 = vunpack.c.h.b16 %v187
    %v712 = vunpack.c.l.b16 %v188
    %v713 = vunpack.c.h.b16 %v188
    %v714 = vunpack.c.l.b16 %v189
    %v715 = vunpack.c.h.b16 %v189
    %v716 = vunpack.c.l.b16 %v190
    %v717 = vunpack.c.h.b16 %v190
    %v718 = vunpack.c.l.b16 %v191
    %v719 = vunpack.c.h.b16 %v191
    %v720 = vunpack.c.l.b16 %v192
    %v721 = vunpack.c.h.b16 %v192
    %v722 = vunpack.c.l.b16 %v193
    %v723 = vunpack.c.h.b16 %v193
    %v724 = vunpack.c.l.b16 %v194
    %v725 = vunpack.c.h.b16 %v194
    %v726 = vunpack.c.l.b16 %v195
    %v727 = vunpack.c.h.b16 %v195
    %v728 = vunpack.c.l.b16 %v196
    %v729 = vunpack.c.h.b16 %v196
    %v730 = vunpack.c.l.b16 %v197
    %v731 = vunpack.c.h.b16 %v197
    %v732 = vunpack.c.l.b16 %v198
    %v733 = vunpack.c.h.b16 %v198
    %v734 = vunpack.c.l.b16 %v199
    %v735 = vunpack.c.h.b16 %v199
    %v736 = vunpack.c.l.b16 %v200
    %v737 = vunpack.c.h.b16 %v200
    %v738 = vunpack.c.l.b16 %v201
    %v739 = vunpack.c.h.b16 %v201
    %v740 = vunpack.c.l.b16 %v202
    %v741 = vunpack.c.h.b16 %v202
    %v742 = vunpack.c.l.b16 %v203
    %v743 = vunpack.c.h.b16 %v203
    %v744 = vunpack.c.l.b16 %v204
    %v745 = vunpack.c.h.b16 %v204
    %v746 = vunpack.c.l.b16 %v205
    %v747 = vunpack.c.h.b16 %v205
    %v748 = vunpack.c.l.b16 %v206
    %v749 = vunpack.c.h.b16 %v206
    %v750 = vunpack.c.l.b16 %v207
    %v751 = vunpack.c.h.b16 %v207
    %v752 = vunpack.c.l.b16 %v208
    %v753 = vunpack.c.h.b16 %v208
    %v754 = vunpack.c.l.b16 %v209
    %v755 = vunpack.c.h.b16 %v209
    %v756 = vunpack.c.l.b16 %v210
    %v757 = vunpack.c.h.b16 %v210
    %v758 = vunpack.c.l.b16 %v211
    %v759 = vunpack.c.h.b16 %v211
    %v760 = vunpack.c.l.b16 %v212
    %v761 = vunpack.c.h.b16 %v212
    %v762 = vunpack.c.l.b16 %v213
    %v763 = vunpack.c.h.b16 %v213
    %v764 = vunpack.c.l.b16 %v214
    %v765 = vunpack.c.h.b16 %v214
    %v766 = vunpack.c.l.b16 %v215
    %v767 = vunpack.c.h.b16 %v215
    %v768 = vunpack.c.l.b16 %v216
    %v769 = vunpack.c.h.b16 %v216
    %v770 = vunpack.c.l.b16 %v217
    %v771 = vunpack.c.h.b16 %v217
    %v772 = vunpack.c.l.b16 %v218
    %v773 = vunpack.c.h.b16 %v218
    %v774 = vunpack.c.l.b16 %v219
    %v775 = vunpack.c.h.b16 %v219
    %v776 = vunpack.c.l.b16 %v220
    %v777 = vunpack.c.h.b16 %v220
    %v778 = vunpack.c.l.b16 %v221
    %v779 = vunpack.c.h.b16 %v221
    %v780 = vunpack.c.l.b16 %v222
    %v781 = vunpack.c.h.b16 %v222
    %v782 = vunpack.c.l.b16 %v223
    %v783 = vunpack.c.h.b16 %v223
    %v784 = vunpack.c.l.b16 %v224
    %v785 = vunpack.c.h.b16 %v224
    %v786 = vunpack.c.l.b16 %v225
    %v787 = vunpack.c.h.b16 %v225
    %v788 = vunpack.c.l.b16 %v226
    %v789 = vunpack.c.h.b16 %v226
    %v790 = vunpack.c.l.b16 %v227
    %v791 = vunpack.c.h.b16 %v227
    %v792 = vunpack.c.l.b16 %v228
    %v793 = vunpack.c.h.b16 %v228
    %v794 = vunpack.c.l.b16 %v229
    %v795 = vunpack.c.h.b16 %v229
    %v796 = vunpack.c.l.b16 %v230
    %v797 = vunpack.c.h.b16 %v230
    %v798 = vunpack.c.l.b16 %v231
    %v799 = vunpack.c.h.b16 %v231
    %v800 = vunpack.c.l.b16 %v232
    %v801 = vunpack.c.h.b16 %v232
    %v802 = vunpack.c.l.b16 %v233
    %v803 = vunpack.c.h.b16 %v233
    %v804 = vunpack.c.l.b16 %v234
    %v805 = vunpack.c.h.b16 %v234
    %v806 = vunpack.c.l.b16 %v235
    %v807 = vunpack.c.h.b16 %v235
    %v808 = vunpack.c.l.b16 %v236
    %v809 = vunpack.c.h.b16 %v236
    %v810 = vunpack.c.l.b16 %v237
    %v811 = vunpack.c.h.b16 %v237
    %v812 = vunpack.c.l.b16 %v238
    %v813 = vunpack.c.h.b16 %v238
    %v814 = vunpack.c.l.b16 %v239
    %v815 = vunpack.c.h.b16 %v239
    %v816 = vunpack.c.l.b16 %v240
    %v817 = vunpack.c.h.b16 %v240
    %v818 = vunpack.c.l.b16 %v241
    %v819 = vunpack.c.h.b16 %v241
    %v820 = vunpack.c.l.b16 %v242
    %v821 = vunpack.c.h.b16 %v242
    %v822 = vunpack.c.l.b16 %v243
    %v823 = vunpack.c.h.b16 %v243
    %v824 = vunpack.c.l.b16 %v244
    %v825 = vunpack.c.h.b16 %v244
    %v826 = vunpack.c.l.b16 %v245
    %v827 = vunpack.c.h.b16 %v245
    %v828 = vunpack.c.l.b16 %v246
    %v829 = vunpack.c.h.b16 %v246
    %v830 = vunpack.c.l.b16 %v247
    %v831 = vunpack.c.h.b16 %v247
    %v832 = vunpack.c.l.b16 %v248
    %v833 = vunpack.c.h.b16 %v248
    %v834 = vunpack.c.l.b16 %v249
    %v835 = vunpack.c.h.b16 %v249
    %v836 = vunpack.c.l.b16 %v250
    %v837 = vunpack.c.h.b16 %v250
    %v838 = vunpack.c.l.b16 %v251
    %v839 = vunpack.c.h.b16 %v251
    %v840 = vunpack.c.l.b16 %v252
    %v841 = vunpack.c.h.b16 %v252
    %v842 = vunpack.c.l.b16 %v253
    %v843 = vunpack.c.h.b16 %v253
    %v844 = vunpack.c.l.b16 %v254
    %v845 = vunpack.c.h.b16 %v254
    %v846 = vunpack.c.l.b16 %v255
    %v847 = vunpack.c.h.b16 %v255
    %v848 = vunpack.c.l.b16 %v256
    %v849 = vunpack.c.h.b16 %v256
    %v850 = vunpack.c.l.b16 %v257
    %v851 = vunpack.c.h.b16 %v257
    %v852 = vunpack.c.l.b16 %v258
    %v853 = vunpack.c.h.b16 %v258
    %v854 = vunpack.c.l.b16 %v259
    %v855 = vunpack.c.h.b16 %v259
    %v856 = vunpack.c.l.b16 %v260
    %v857 = vunpack.c.h.b16 %v260
    %v858 = vunpack.c.l.b16 %v261
    %v859 = vunpack.c.h.b16 %v261
    %v860 = vunpack.c.l.b16 %v262
    %v861 = vunpack.c.h.b16 %v262
    %v862 = vunpack.c.l.b16 %v263
    %v863 = vunpack.c.h.b16 %v263
    %v864 = vunpack.c.l.b16 %v264
    %v865 = vunpack.c.h.b16 %v264
    %v866 = vunpack.c.l.b16 %v265
    %v867 = vunpack.c.h.b16 %v265
    %v868 = vunpack.c.l.b16 %v266
    %v869 = vunpack.c.h.b16 %v266
    %v870 = vunpack.c.l.b16 %v267
    %v871 = vunpack.c.h.b16 %v267
    %v872 = vunpack.c.l.b16 %v268
    %v873 = vunpack.c.h.b16 %v268
    %v874 = vunpack.c.l.b16 %v269
    %v875 = vunpack.c.h.b16 %v269
    %v876 = vunpack.c.l.b16 %v270
    %v877 = vunpack.c.h.b16 %v270
    %v878 = vunpack.c.l.b16 %v271
    %v879 = vunpack.c.h.b16 %v271
    %v880 = vunpack.c.l.b16 %v272
    %v881 = vunpack.c.h.b16 %v272
    %v882 = vunpack.c.l.b16 %v273
    %v883 = vunpack.c.h.b16 %v273
    %v884 = vunpack.c.l.b16 %v274
    %v885 = vunpack.c.h.b16 %v274
    %v886 = vunpack.c.l.b16 %v275
    %v887 = vunpack.c.h.b16 %v275
    %v888 = vunpack.c.l.b16 %v276
    %v889 = vunpack.c.h.b16 %v276
    %v890 = vunpack.c.l.b16 %v277
    %v891 = vunpack.c.h.b16 %v277
    %v892 = vunpack.c.l.b16 %v278
    %v893 = vunpack.c.h.b16 %v278
    %v894 = vunpack.c.l.b16 %v279
    %v895 = vunpack.c.h.b16 %v279
    %v896 = vunpack.c.l.b16 %v280
    %v897 = vunpack.c.h.b16 %v280
    %v898 = vunpack.c.l.b16 %v281
    %v899 = vunpack.c.h.b16 %v281
    %v900 = vunpack.c.l.b16 %v282
    %v901 = vunpack.c.h.b16 %v282
    %v902 = vunpack.c.l.b16 %v283
    %v903 = vunpack.c.h.b16 %v283
    %v904 = vunpack.c.l.b16 %v284
    %v905 = vunpack.c.h.b16 %v284
    %v906 = vunpack.c.l.b16 %v285
    %v907 = vunpack.c.h.b16 %v285
    %v908 = vunpack.c.l.b16 %v286
    %v909 = vunpack.c.h.b16 %v286
    %v910 = vunpack.c.l.b16 %v287
    %v911 = vunpack.c.h.b16 %v287
    %v912 = vunpack.c.l.b16 %v288
    %v913 = vunpack.c.h.b16 %v288
    %v914 = vunpack.c.l.b16 %v289
    %v915 = vunpack.c.h.b16 %v289
    %v916 = vunpack.c.l.b16 %v290
    %v917 = vunpack.c.h.b16 %v290
    %v918 = vunpack.c.l.b16 %v291
    %v919 = vunpack.c.h.b16 %v291
    %v920 = vunpack.c.l.b16 %v292
    %v921 = vunpack.c.h.b16 %v292
    %v922 = vunpack.c.l.b16 %v293
    %v923 = vunpack.c.h.b16 %v293
    %v924 = vunpack.c.l.b16 %v294
    %v925 = vunpack.c.h.b16 %v294
    %v926 = vunpack.c.l.b16 %v295
    %v927 = vunpack.c.h.b16 %v295
    %v928 = vunpack.c.l.b16 %v296
    %v929 = vunpack.c.h.b16 %v296
    %v930 = vunpack.c.l.b16 %v297
    %v931 = vunpack.c.h.b16 %v297
    %v932 = vunpack.c.l.b16 %v298
    %v933 = vunpack.c.h.b16 %v298
    %v934 = vunpack.c.l.b16 %v299
    %v935 = vunpack.c.h.b16 %v299
    %v936 = vunpack.c.l.b16 %v300
    %v937 = vunpack.c.h.b16 %v300
    %v938 = vunpack.c.l.b16 %v301
    %v939 = vunpack.c.h.b16 %v301
    %v940 = vunpack.c.l.b16 %v302
    %v941 = vunpack.c.h.b16 %v302
    %v942 = vunpack.c.l.b16 %v303
    %v943 = vunpack.c.h.b16 %v303
    %v944 = vunpack.c.l.b16 %v304
    %v945 = vunpack.c.h.b16 %v304
    %v946 = vunpack.c.l.b16 %v305
    %v947 = vunpack.c.h.b16 %v305
    %v948 = vunpack.c.l.b16 %v306
    %v949 = vunpack.c.h.b16 %v306
    %v950 = vunpack.c.l.b16 %v307
    %v951 = vunpack.c.h.b16 %v307
    %v952 = vunpack.c.l.b16 %v308
    %v953 = vunpack.c.h.b16 %v308
    %v954 = vunpack.c.l.b16 %v309
    %v955 = vunpack.c.h.b16 %v309
    %v956 = vunpack.c.l.b16 %v310
    %v957 = vunpack.c.h.b16 %v310
    %v958 = vunpack.c.l.b16 %v311
    %v959 = vunpack.c.h.b16 %v311
    %v960 = vunpack.c.l.b16 %v312
    %v961 = vunpack.c.h.b16 %v312
    %v962 = vunpack.c.l.b16 %v313
    %v963 = vunpack.c.h.b16 %v313
    %v964 = vunpack.c.l.b16 %v314
    %v965 = vunpack.c.h.b16 %v314
    %v966 = vunpack.c.l.b16 %v315
    %v967 = vunpack.c.h.b16 %v315
    %v968 = vunpack.c.l.b16 %v316
    %v969 = vunpack.c.h.b16 %v316
    %v970 = vunpack.c.l.b16 %v317
    %v971 = vunpack.c.h.b16 %v317
    %v972 = vunpack.c.l.b16 %v318
    %v973 = vunpack.c.h.b16 %v318
    %v974 = vunpack.c.l.b16 %v319
    %v975 = vunpack.c.h.b16 %v319
    %v976 = vunpack.c.l.b16 %v320
    %v977 = vunpack.c.h.b16 %v320
    %v978 = vunpack.c.l.b16 %v321
    %v979 = vunpack.c.h.b16 %v321
    %v980 = vunpack.c.l.b16 %v322
    %v981 = vunpack.c.h.b16 %v322
    %v982 = vunpack.c.l.b16 %v323
    %v983 = vunpack.c.h.b16 %v323
    %v984 = vunpack.c.l.b16 %v324
    %v985 = vunpack.c.h.b16 %v324
    %v986 = vunpack.c.l.b16 %v325
    %v987 = vunpack.c.h.b16 %v325
    %v988 = vunpack.c.l.b16 %v326
    %v989 = vunpack.c.h.b16 %v326
    %v990 = vunpack.c.l.b16 %v327
    %v991 = vunpack.c.h.b16 %v327
    %v992 = vunpack.c.l.b16 %v328
    %v993 = vunpack.c.h.b16 %v328
    %v994 = vunpack.c.l.b16 %v329
    %v995 = vunpack.c.h.b16 %v329
    %v996 = vunpack.c.l.b16 %v330
    %v997 = vunpack.c.h.b16 %v330
    %v998 = vunpack.c.l.b16 %v331
    %v999 = vunpack.c.h.b16 %v331
    %v1000 = vunpack.c.l.b16 %v332
    %v1001 = vunpack.c.h.b16 %v332
    %v1002 = vunpack.c.l.b16 %v333
    %v1003 = vunpack.c.h.b16 %v333
    %v1004 = vunpack.c.l.b16 %v334
    %v1005 = vunpack.c.h.b16 %v334
    %v1006 = vunpack.c.l.b16 %v335
    %v1007 = vunpack.c.h.b16 %v335
    %v1008 = vunpack.c.l.b16 %v336
    %v1009 = vunpack.c.h.b16 %v336
    %v1010 = vunpack.c.l.b16 %v337
    %v1011 = vunpack.c.h.b16 %v337
    %v1012 = vunpack.c.l.b16 %v338
    %v1013 = vunpack.c.h.b16 %v338
    %v1014 = vunpack.c.l.b16 %v339
    %v1015 = vunpack.c.h.b16 %v339
    %v1016 = vunpack.c.l.b16 %v340
    %v1017 = vunpack.c.h.b16 %v340
    %v1018 = vunpack.c.l.b16 %v341
    %v1019 = vunpack.c.h.b16 %v341
    %v1020 = vunpack.c.l.b16 %v342
    %v1021 = vunpack.c.h.b16 %v342
    %v1022 = vunpack.c.l.b16 %v343
    %v1023 = vunpack.c.h.b16 %v343
    %v1024 = vunpack.c.l.b16 %v344
    %v1025 = vunpack.c.h.b16 %v344
    %v1026 = vunpack.c.l.b16 %v345
    %v1027 = vunpack.c.h.b16 %v345
    %v1028 = vunpack.c.l.b16 %v346
    %v1029 = vunpack.c.h.b16 %v346
    %v1030 = vunpack.c.l.b16 %v347
    %v1031 = vunpack.c.h.b16 %v347
    %v1032 = vunpack.c.l.b16 %v348
    %v1033 = vunpack.c.h.b16 %v348
    %v1034 = vunpack.c.l.b16 %v349
    %v1035 = vunpack.c.h.b16 %v349
    %v1036 = vunpack.c.l.b16 %v350
    %v1037 = vunpack.c.h.b16 %v350
    %v1038 = vunpack.c.l.b16 %v351
    %v1039 = vunpack.c.h.b16 %v351
    %v1040 = vunpack.c.l.b16 %v352
    %v1041 = vunpack.c.h.b16 %v352
    %v1042 = vunpack.c.l.b16 %v353
    %v1043 = vunpack.c.h.b16 %v353
    %v1044 = vunpack.c.l.b16 %v354
    %v1045 = vunpack.c.h.b16 %v354
    %v1046 = vunpack.c.l.b16 %v355
    %v1047 = vunpack.c.h.b16 %v355
    %v1048 = vunpack.c.l.b16 %v356
    %v1049 = vunpack.c.h.b16 %v356
    %v1050 = vunpack.c.l.b16 %v357
    %v1051 = vunpack.c.h.b16 %v357
    %v1052 = vunpack.c.l.b16 %v358
    %v1053 = vunpack.c.h.b16 %v358
    %v1054 = vunpack.c.l.b16 %v359
    %v1055 = vunpack.c.h.b16 %v359
    %v1056 = vunpack.c.l.b16 %v360
    %v1057 = vunpack.c.h.b16 %v360
    %v1058 = vunpack.c.l.b16 %v361
    %v1059 = vunpack.c.h.b16 %v361
    %v1060 = vunpack.c.l.b16 %v362
    %v1061 = vunpack.c.h.b16 %v362
    %v1062 = vunpack.c.l.b16 %v363
    %v1063 = vunpack.c.h.b16 %v363
    %v1064 = vunpack.c.l.b16 %v364
    %v1065 = vunpack.c.h.b16 %v364
    %v1066 = vunpack.c.l.b16 %v365
    %v1067 = vunpack.c.h.b16 %v365
    %v1068 = vunpack.c.l.b16 %v366
    %v1069 = vunpack.c.h.b16 %v366
    %v1070 = vunpack.c.l.b16 %v367
    %v1071 = vunpack.c.h.b16 %v367
    %v1072 = vunpack.c.l.b16 %v368
    %v1073 = vunpack.c.h.b16 %v368
    %v1074 = vunpack.c.l.b16 %v369
    %v1075 = vunpack.c.h.b16 %v369
    %v1076 = vunpack.c.l.b16 %v370
    %v1077 = vunpack.c.h.b16 %v370
    %v1078 = vunpack.c.l.b16 %v371
    %v1079 = vunpack.c.h.b16 %v371
    %v1080 = vunpack.c.l.b16 %v372
    %v1081 = vunpack.c.h.b16 %v372
    %v1082 = vunpack.c.l.b16 %v373
    %v1083 = vunpack.c.h.b16 %v373
    %v1084 = vunpack.c.l.b16 %v374
    %v1085 = vunpack.c.h.b16 %v374
    %v1086 = vunpack.c.l.b16 %v375
    %v1087 = vunpack.c.h.b16 %v375
    %v1088 = vunpack.c.l.b16 %v376
    %v1089 = vunpack.c.h.b16 %v376
    %v1090 = vunpack.c.l.b16 %v377
    %v1091 = vunpack.c.h.b16 %v377
    %v1092 = vunpack.c.l.b16 %v378
    %v1093 = vunpack.c.h.b16 %v378
    %v1094 = vunpack.c.l.b16 %v379
    %v1095 = vunpack.c.h.b16 %v379
    %v1096 = vunpack.c.l.b16 %v380
    %v1097 = vunpack.c.h.b16 %v380
    %v1098 = vunpack.c.l.b16 %v381
    %v1099 = vunpack.c.h.b16 %v381
    %v1100 = vpack.c.b16 %v656, %v652
    %v1101 = vpack.c.b16 %v657, %v653
    %v1102 = vpack.c.b16 %v658, %v654
    %v1103 = vpack.c.b16 %v659, %v655
    %v1104 = vpack.c.b16 %v664, %v660
    %v1105 = vpack.c.b16 %v665, %v661
    %v1106 = vpack.c.b16 %v666, %v662
    %v1107 = vpack.c.b16 %v667, %v663
    %v1108 = vpack.c.b16 %v672, %v668
    %v1109 = vpack.c.b16 %v673, %v669
    %v1110 = vpack.c.b16 %v674, %v670
    %v1111 = vpack.c.b16 %v675, %v671
    %v1112 = vpack.c.b16 %v680, %v676
    %v1113 = vpack.c.b16 %v681, %v677
    %v1114 = vpack.c.b16 %v682, %v678
    %v1115 = vpack.c.b16 %v683, %v679
    %v1116 = vpack.c.b16 %v688, %v684
    %v1117 = vpack.c.b16 %v689, %v685
    %v1118 = vpack.c.b16 %v690, %v686
    %v1119 = vpack.c.b16 %v691, %v687
    %v1120 = vpack.c.b16 %v696, %v692
    %v1121 = vpack.c.b16 %v697, %v693
    %v1122 = vpack.c.b16 %v698, %v694
    %v1123 = vpack.c.b16 %v699, %v695
    %v1124 = vpack.c.b16 %v704, %v700
    %v1125 = vpack.c.b16 %v705, %v701
    %v1126 = vpack.c.b16 %v706, %v702
    %v1127 = vpack.c.b16 %v707, %v703
    %v1128 = vpack.c.b16 %v712, %v708
    %v1129 = vpack.c.b16 %v713, %v709
    %v1130 = vpack.c.b16 %v714, %v710
    %v1131 = vpack.c.b16 %v715, %v711
    %v1132 = vpack.c.b16 %v720, %v716
    %v1133 = vpack.c.b16 %v721, %v717
    %v1134 = vpack.c.b16 %v722, %v718
    %v1135 = vpack.c.b16 %v723, %v719
    %v1136 = vpack.c.b16 %v728, %v724
    %v1137 = vpack.c.b16 %v729, %v725
    %v1138 = vpack.c.b16 %v730, %v726
    %v1139 = vpack.c.b16 %v731, %v727
    %v1140 = vpack.c.b16 %v736, %v732
    %v1141 = vpack.c.b16 %v737, %v733
    %v1142 = vpack.c.b16 %v738, %v734
    %v1143 = vpack.c.b16 %v739, %v735
    %v1144 = vpack.c.b16 %v744, %v740
    %v1145 = vpack.c.b16 %v745, %v741
    %v1146 = vpack.c.b16 %v746, %v742
    %v1147 = vpack.c.b16 %v747, %v743
    %v1148 = vpack.c.b16 %v752, %v748
    %v1149 = vpack.c.b16 %v753, %v749
    %v1150 = vpack.c.b16 %v754, %v750
    %v1151 = vpack.c.b16 %v755, %v751
    %v1152 = vpack.c.b16 %v760, %v756
    %v1153 = vpack.c.b16 %v761, %v757
    %v1154 = vpack.c.b16 %v762, %v758
    %v1155 = vpack.c.b16 %v763, %v759
    %v1156 = vpack.c.b16 %v768, %v764
    %v1157 = vpack.c.b16 %v769, %v765
    %v1158 = vpack.c.b16 %v770, %v766
    %v1159 = vpack.c.b16 %v771, %v767
    %v1160 = vpack.c.b16 %v776, %v772
    %v1161 = vpack.c.b16 %v777, %v773
    %v1162 = vpack.c.b16 %v778, %v774
    %v1163 = vpack.c.b16 %v779, %v775
    %v1164 = vpack.c.b16 %v784, %v780
    %v1165 = vpack.c.b16 %v785, %v781
    %v1166 = vpack.c.b16 %v786, %v782
    %v1167 = vpack.c.b16 %v787, %v783
    %v1168 = vpack.c.b16 %v792, %v788
    %v1169 = vpack.c.b16 %v793, %v789
    %v1170 = vpack.c.b16 %v794, %v790
    %v1171 = vpack.c.b16 %v795, %v791
    %v1172 = vpack.c.b16 %v800, %v796
    %v1173 = vpack.c.b16 %v801, %v797
    %v1174 = vpack.c.b16 %v802, %v798
    %v1175 = vpack.c.b16 %v803, %v799
    %v1176 = vpack.c.b16 %v808, %v804
    %v1177 = vpack.c.b16 %v809, %v805
    %v1178 = vpack.c.b16 %v810, %v806
    %v1179 = vpack.c.b16 %v811, %v807
    %v1180 = vpack.c.b16 %v816, %v812
    %v1181 = vpack.c.b16 %v817, %v813
    %v1182 = vpack.c.b16 %v818, %v814
    %v1183 = vpack.c.b16 %v819, %v815
    %v1184 = vpack.c.b16 %v824, %v820
    %v1185 = vpack.c.b16 %v825, %v821
    %v1186 = vpack.c.b16 %v826, %v822
    %v1187 = vpack.c.b16 %v827, %v823
    %v1188 = vpack.c.b16 %v832, %v828
    %v1189 = vpack.c.b16 %v833, %v829
    %v1190 = vpack.c.b16 %v834, %v830
    %v1191 = vpack.c.b16 %v835, %v831
    %v1192 = vpack.c.b16 %v840, %v836
    %v1193 = vpack.c.b16 %v841, %v837
    %v1194 = vpack.c.b16 %v842, %v838
    %v1195 = vpack.c.b16 %v843, %v839
    %v1196 = vpack.c.b16 %v848, %v844
    %v1197 = vpack.c.b16 %v849, %v845
    %v1198 = vpack.c.b16 %v850, %v846
    %v1199 = vpack.c.b16 %v851, %v847
    %v1200 = vpack.c.b16 %v856, %v852
    %v1201 = vpack.c.b16 %v857, %v853
    %v1202 = vpack.c.b16 %v858, %v854
    %v1203 = vpack.c.b16 %v859, %v855
    %v1204 = vpack.c.b16 %v864, %v860
    %v1205 = vpack.c.b16 %v865, %v861
    %v1206 = vpack.c.b16 %v866, %v862
    %v1207 = vpack.c.b16 %v867, %v863
    %v1208 = vpack.c.b16 %v872, %v868
    %v1209 = vpack.c.b16 %v873, %v869
    %v1210 = vpack.c.b16 %v874, %v870
    %v1211 = vpack.c.b16 %v875, %v871
    %v1212 = vpack.c.b16 %v880, %v876
    %v1213 = vpack.c.b16 %v881, %v877
    %v1214 = vpack.c.b16 %v882, %v878
    %v1215 = vpack.c.b16 %v883, %v879
    %v1216 = vpack.c.b16 %v888, %v884
    %v1217 = vpack.c.b16 %v889, %v885
    %v1218 = vpack.c.b16 %v890, %v886
    %v1219 = vpack.c.b16 %v891, %v887
    %v1220 = vpack.c.b16 %v896, %v892
    %v1221 = vpack.c.b16 %v897, %v893
    %v1222 = vpack.c.b16 %v898, %v894
    %v1223 = vpack.c.b16 %v899, %v895
    %v1224 = vpack.c.b16 %v904, %v900
    %v1225 = vpack.c.b16 %v905, %v901
    %v1226 = vpack.c.b16 %v906, %v902
    %v1227 = vpack.c.b16 %v907, %v903
    %v1228 = vpack.c.b16 %v912, %v908
    %v1229 = vpack.c.b16 %v913, %v909
    %v1230 = vpack.c.b16 %v914, %v910
    %v1231 = vpack.c.b16 %v915, %v911
    %v1232 = vpack.c.b16 %v920, %v916
    %v1233 = vpack.c.b16 %v921, %v917
    %v1234 = vpack.c.b16 %v922, %v918
    %v1235 = vpack.c.b16 %v923, %v919
    %v1236 = vpack.c.b16 %v928, %v924
    %v1237 = vpack.c.b16 %v929, %v925
    %v1238 = vpack.c.b16 %v930, %v926
    %v1239 = vpack.c.b16 %v931, %v927
    %v1240 = vpack.c.b16 %v936, %v932
    %v1241 = vpack.c.b16 %v937, %v933
    %v1242 = vpack.c.b16 %v938, %v934
    %v1243 = vpack.c.b16 %v939, %v935
    %v1244 = vpack.c.b16 %v944, %v940
    %v1245 = vpack.c.b16 %v945, %v941
    %v1246 = vpack.c.b16 %v946, %v942
    %v1247 = vpack.c.b16 %v947, %v943
    %v1248 = vpack.c.b16 %v952, %v948
    %v1249 = vpack.c.b16 %v953, %v949
    %v1250 = vpack.c.b16 %v954, %v950
    %v1251 = vpack.c.b16 %v955, %v951
    %v1252 = vpack.c.b16 %v960, %v956
    %v1253 = vpack.c.b16 %v961, %v957
    %v1254 = vpack.c.b16 %v962, %v958
    %v1255 = vpack.c.b16 %v963, %v959
    %v1256 = vpack.c.b16 %v968, %v964
    %v1257 = vpack.c.b16 %v969, %v965
    %v1258 = vpack.c.b16 %v970, %v966
    %v1259 = vpack.c.b16 %v971, %v967
    %v1260 = vpack.c.b16 %v976, %v972
    %v1261 = vpack.c.b16 %v977, %v973
    %v1262 = vpack.c.b16 %v978, %v974
    %v1263 = vpack.c.b16 %v979, %v975
    %v1264 = vpack.c.b16 %v984, %v980
    %v1265 = vpack.c.b16 %v985, %v981
    %v1266 = vpack.c.b16 %v986, %v982
    %v1267 = vpack.c.b16 %v987, %v983
    %v1268 = vpack.c.b16 %v992, %v988
    %v1269 = vpack.c.b16 %v993, %v989
    %v1270 = vpack.c.b16 %v994, %v990
    %v1271 = vpack.c.b16 %v995, %v991
    %v1272 = vpack.c.b16 %v1000, %v996
    %v1273 = vpack.c.b16 %v1001, %v997
    %v1274 = vpack.c.b16 %v1002, %v998
    %v1275 = vpack.c.b16 %v1003, %v999
    %v1276 = vpack.c.b16 %v1008, %v1004
    %v1277 = vpack.c.b16 %v1009, %v1005
    %v1278 = vpack.c.b16 %v1010, %v1006
    %v1279 = vpack.c.b16 %v1011, %v1007
    %v1280 = vpack.c.b16 %v1016, %v1012
    %v1281 = vpack.c.b16 %v1017, %v1013
    %v1282 = vpack.c.b16 %v1018, %v1014
    %v1283 = vpack.c.b16 %v1019, %v1015
    %v1284 = vpack.c.b16 %v1024, %v1020
    %v1285 = vpack.c.b16 %v1025, %v1021
    %v1286 = vpack.c.b16 %v1026, %v1022
    %v1287 = vpack.c.b16 %v1027, %v1023
    %v1288 = vpack.c.b16 %v1032, %v1028
    %v1289 = vpack.c.b16 %v1033, %v1029
    %v1290 = vpack.c.b16 %v1034, %v1030
    %v1291 = vpack.c.b16 %v1035, %v1031
    %v1292 = vpack.c.b16 %v1040, %v1036
    %v1293 = vpack.c.b16 %v1041, %v1037
    %v1294 = vpack.c.b16 %v1042, %v1038
    %v1295 = vpack.c.b16 %v1043, %v1039
    %v1296 = vpack.c.b16 %v1048, %v1044
    %v1297 = vpack.c.b16 %v1049, %v1045
    %v1298 = vpack.c.b16 %v1050, %v1046
    %v1299 = vpack.c.b16 %v1051, %v1047
    %v1300 = vpack.c.b16 %v1056, %v1052
    %v1301 = vpack.c.b16 %v1057, %v1053
    %v1302 = vpack.c.b16 %v1058, %v1054
    %v1303 = vpack.c.b16 %v1059, %v1055
    %v1304 = vpack.c.b16 %v1064, %v1060
    %v1305 = vpack.c.b16 %v1065, %v1061
    %v1306 = vpack.c.b16 %v1066, %v1062
    %v1307 = vpack.c.b16 %v1067, %v1063
    %v1308 = vpack.c.b16 %v1072, %v1068
    %v1309 = vpack.c.b16 %v1073, %v1069
    %v1310 = vpack.c.b16 %v1074, %v1070
    %v1311 = vpack.c.b16 %v1075, %v1071
    %v1312 = vpack.c.b16 %v1080, %v1076
    %v1313 = vpack.c.b16 %v1081, %v1077
    %v1314 = vpack.c.b16 %v1082, %v1078
    %v1315 = vpack.c.b16 %v1083, %v1079
    %v1316 = vpack.c.b16 %v1088, %v1084
    %v1317 = vpack.c.b16 %v1089, %v1085
    %v1318 = vpack.c.b16 %v1090, %v1086
    %v1319 = vpack.c.b16 %v1091, %v1087
    %v1320 = vpack.c.b16 %v1096, %v1092
    %v1321 = vpack.c.b16 %v1097, %v1093
    %v1322 = vpack.c.b16 %v1098, %v1094
    %v1323 = vpack.c.b16 %v1099, %v1095
    %1548 = vmatpush.bf16.msra.mxu0 %v1128
    %1549 = vmatpush.bf16.msra.mxu0 %v1124
    %1550 = vmatpush.bf16.msra.mxu0 %v1120
    %1551 = vmatpush.bf16.msra.mxu0 %v1116
    %1552 = vmatpush.bf16.msra.mxu0 %v1112
    %1553 = vmatpush.bf16.msra.mxu0 %v1108
    %1554 = vmatpush.bf16.msra.mxu0 %v1104
    %1555 = vmatpush.bf16.msra.mxu0 %v1100
    %1556 = vmatmul.bf16.gmra.mxu0 %v414
    %v1557 = vpop.f32.mrf.mxu0
    %v1558 = vadd.f32 %v384, %v1557
    %v1559 = vpop.f32.mrf.mxu0
    %v1560 = vadd.f32 %v384, %v1559
    %1561 = vdwg.mxu0
    %1562 = vmatpush.bf16.msra.mxu0 %v1160
    %1563 = vmatpush.bf16.msra.mxu0 %v1156
    %1564 = vmatpush.bf16.msra.mxu0 %v1152
    %1565 = vmatpush.bf16.msra.mxu0 %v1148
    %1566 = vmatpush.bf16.msra.mxu0 %v1144
    %1567 = vmatpush.bf16.msra.mxu0 %v1140
    %1568 = vmatpush.bf16.msra.mxu0 %v1136
    %1569 = vmatpush.bf16.msra.mxu0 %v1132
    %1570 = vmatmul.bf16.gmra.mxu0 %v415
    %v1571 = vpop.f32.mrf.mxu0
    %v1572 = vadd.f32 %v1558, %v1571
    %v1573 = vpop.f32.mrf.mxu0
    %v1574 = vadd.f32 %v1560, %v1573
    %1575 = vdwg.mxu0
    %1576 = vmatpush.bf16.msra.mxu0 %v1192
    %1577 = vmatpush.bf16.msra.mxu0 %v1188
    %1578 = vmatpush.bf16.msra.mxu0 %v1184
    %1579 = vmatpush.bf16.msra.mxu0 %v1180
    %1580 = vmatpush.bf16.msra.mxu0 %v1176
    %1581 = vmatpush.bf16.msra.mxu0 %v1172
    %1582 = vmatpush.bf16.msra.mxu0 %v1168
    %1583 = vmatpush.bf16.msra.mxu0 %v1164
    %1584 = vmatmul.bf16.gmra.mxu0 %v416
    %v1585 = vpop.f32.mrf.mxu0
    %v1586 = vadd.f32 %v1572, %v1585
    %v1587 = vpop.f32.mrf.mxu0
    %v1588 = vadd.f32 %v1574, %v1587
    %1589 = vdwg.mxu0
    %1590 = vmatpush.bf16.msra.mxu0 %v1224
    %1591 = vmatpush.bf16.msra.mxu0 %v1220
    %1592 = vmatpush.bf16.msra.mxu0 %v1216
    %1593 = vmatpush.bf16.msra.mxu0 %v1212
    %1594 = vmatpush.bf16.msra.mxu0 %v1208
    %1595 = vmatpush.bf16.msra.mxu0 %v1204
    %1596 = vmatpush.bf16.msra.mxu0 %v1200
    %1597 = vmatpush.bf16.msra.mxu0 %v1196
    %1598 = vmatmul.bf16.gmra.mxu0 %v417
    %v1599 = vpop.f32.mrf.mxu0
    %v1600 = vadd.f32 %v1586, %v1599
    %v1601 = vpop.f32.mrf.mxu0
    %v1602 = vadd.f32 %v1588, %v1601
    %1603 = vdwg.mxu0
    %1604 = vmatpush.bf16.msra.mxu0 %v1256
    %1605 = vmatpush.bf16.msra.mxu0 %v1252
    %1606 = vmatpush.bf16.msra.mxu0 %v1248
    %1607 = vmatpush.bf16.msra.mxu0 %v1244
    %1608 = vmatpush.bf16.msra.mxu0 %v1240
    %1609 = vmatpush.bf16.msra.mxu0 %v1236
    %1610 = vmatpush.bf16.msra.mxu0 %v1232
    %1611 = vmatpush.bf16.msra.mxu0 %v1228
    %1612 = vmatmul.bf16.gmra.mxu0 %v418
    %v1613 = vpop.f32.mrf.mxu0
    %v1614 = vadd.f32 %v1600, %v1613
    %v1615 = vpop.f32.mrf.mxu0
    %v1616 = vadd.f32 %v1602, %v1615
    %1617 = vdwg.mxu0
    %1618 = vmatpush.bf16.msra.mxu0 %v1288
    %1619 = vmatpush.bf16.msra.mxu0 %v1284
    %1620 = vmatpush.bf16.msra.mxu0 %v1280
    %1621 = vmatpush.bf16.msra.mxu0 %v1276
    %1622 = vmatpush.bf16.msra.mxu0 %v1272
    %1623 = vmatpush.bf16.msra.mxu0 %v1268
    %1624 = vmatpush.bf16.msra.mxu0 %v1264
    %1625 = vmatpush.bf16.msra.mxu0 %v1260
    %1626 = vmatmul.bf16.gmra.mxu0 %v419
    %v1627 = vpop.f32.mrf.mxu0
    %v1628 = vadd.f32 %v1614, %v1627
    %v1629 = vpop.f32.mrf.mxu0
    %v1630 = vadd.f32 %v1616, %v1629
    %1631 = vdwg.mxu0
    %1632 = vmatpush.bf16.msra.mxu0 %v1320
    %1633 = vmatpush.bf16.msra.mxu0 %v1316
    %1634 = vmatpush.bf16.msra.mxu0 %v1312
    %1635 = vmatpush.bf16.msra.mxu0 %v1308
    %1636 = vmatpush.bf16.msra.mxu0 %v1304
    %1637 = vmatpush.bf16.msra.mxu0 %v1300
    %1638 = vmatpush.bf16.msra.mxu0 %v1296
    %1639 = vmatpush.bf16.msra.mxu0 %v1292
    %1640 = vmatmul.bf16.gmra.mxu0 %v420
    %v1641 = vpop.f32.mrf.mxu0
    %v1642 = vadd.f32 %v1628, %v1641
    %v1643 = vpop.f32.mrf.mxu0
    %v1644 = vadd.f32 %v1630, %v1643
    %1645 = vdwg.mxu0
    %1646 = vmatpush.bf16.msra.mxu0 %v1129
    %1647 = vmatpush.bf16.msra.mxu0 %v1125
    %1648 = vmatpush.bf16.msra.mxu0 %v1121
    %1649 = vmatpush.bf16.msra.mxu0 %v1117
    %1650 = vmatpush.bf16.msra.mxu0 %v1113
    %1651 = vmatpush.bf16.msra.mxu0 %v1109
    %1652 = vmatpush.bf16.msra.mxu0 %v1105
    %1653 = vmatpush.bf16.msra.mxu0 %v1101
    %1654 = vmatmul.bf16.gmra.mxu0 %v414
    %v1655 = vpop.f32.mrf.mxu0
    %v1656 = vadd.f32 %v385, %v1655
    %v1657 = vpop.f32.mrf.mxu0
    %v1658 = vadd.f32 %v385, %v1657
    %1659 = vdwg.mxu0
    %1660 = vmatpush.bf16.msra.mxu0 %v1161
    %1661 = vmatpush.bf16.msra.mxu0 %v1157
    %1662 = vmatpush.bf16.msra.mxu0 %v1153
    %1663 = vmatpush.bf16.msra.mxu0 %v1149
    %1664 = vmatpush.bf16.msra.mxu0 %v1145
    %1665 = vmatpush.bf16.msra.mxu0 %v1141
    %1666 = vmatpush.bf16.msra.mxu0 %v1137
    %1667 = vmatpush.bf16.msra.mxu0 %v1133
    %1668 = vmatmul.bf16.gmra.mxu0 %v415
    %v1669 = vpop.f32.mrf.mxu0
    %v1670 = vadd.f32 %v1656, %v1669
    %v1671 = vpop.f32.mrf.mxu0
    %v1672 = vadd.f32 %v1658, %v1671
    %1673 = vdwg.mxu0
    %1674 = vmatpush.bf16.msra.mxu0 %v1193
    %1675 = vmatpush.bf16.msra.mxu0 %v1189
    %1676 = vmatpush.bf16.msra.mxu0 %v1185
    %1677 = vmatpush.bf16.msra.mxu0 %v1181
    %1678 = vmatpush.bf16.msra.mxu0 %v1177
    %1679 = vmatpush.bf16.msra.mxu0 %v1173
    %1680 = vmatpush.bf16.msra.mxu0 %v1169
    %1681 = vmatpush.bf16.msra.mxu0 %v1165
    %1682 = vmatmul.bf16.gmra.mxu0 %v416
    %v1683 = vpop.f32.mrf.mxu0
    %v1684 = vadd.f32 %v1670, %v1683
    %v1685 = vpop.f32.mrf.mxu0
    %v1686 = vadd.f32 %v1672, %v1685
    %1687 = vdwg.mxu0
    %1688 = vmatpush.bf16.msra.mxu0 %v1225
    %1689 = vmatpush.bf16.msra.mxu0 %v1221
    %1690 = vmatpush.bf16.msra.mxu0 %v1217
    %1691 = vmatpush.bf16.msra.mxu0 %v1213
    %1692 = vmatpush.bf16.msra.mxu0 %v1209
    %1693 = vmatpush.bf16.msra.mxu0 %v1205
    %1694 = vmatpush.bf16.msra.mxu0 %v1201
    %1695 = vmatpush.bf16.msra.mxu0 %v1197
    %1696 = vmatmul.bf16.gmra.mxu0 %v417
    %v1697 = vpop.f32.mrf.mxu0
    %v1698 = vadd.f32 %v1684, %v1697
    %v1699 = vpop.f32.mrf.mxu0
    %v1700 = vadd.f32 %v1686, %v1699
    %1701 = vdwg.mxu0
    %1702 = vmatpush.bf16.msra.mxu0 %v1257
    %1703 = vmatpush.bf16.msra.mxu0 %v1253
    %1704 = vmatpush.bf16.msra.mxu0 %v1249
    %1705 = vmatpush.bf16.msra.mxu0 %v1245
    %1706 = vmatpush.bf16.msra.mxu0 %v1241
    %1707 = vmatpush.bf16.msra.mxu0 %v1237
    %1708 = vmatpush.bf16.msra.mxu0 %v1233
    %1709 = vmatpush.bf16.msra.mxu0 %v1229
    %1710 = vmatmul.bf16.gmra.mxu0 %v418
    %v1711 = vpop.f32.mrf.mxu0
    %v1712 = vadd.f32 %v1698, %v1711
    %v1713 = vpop.f32.mrf.mxu0
    %v1714 = vadd.f32 %v1700, %v1713
    %1715 = vdwg.mxu0
    %1716 = vmatpush.bf16.msra.mxu0 %v1289
    %1717 = vmatpush.bf16.msra.mxu0 %v1285
    %1718 = vmatpush.bf16.msra.mxu0 %v1281
    %1719 = vmatpush.bf16.msra.mxu0 %v1277
    %1720 = vmatpush.bf16.msra.mxu0 %v1273
    %1721 = vmatpush.bf16.msra.mxu0 %v1269
    %1722 = vmatpush.bf16.msra.mxu0 %v1265
    %1723 = vmatpush.bf16.msra.mxu0 %v1261
    %1724 = vmatmul.bf16.gmra.mxu0 %v419
    %v1725 = vpop.f32.mrf.mxu0
    %v1726 = vadd.f32 %v1712, %v1725
    %v1727 = vpop.f32.mrf.mxu0
    %v1728 = vadd.f32 %v1714, %v1727
    %1729 = vdwg.mxu0
    %1730 = vmatpush.bf16.msra.mxu0 %v1321
    %1731 = vmatpush.bf16.msra.mxu0 %v1317
    %1732 = vmatpush.bf16.msra.mxu0 %v1313
    %1733 = vmatpush.bf16.msra.mxu0 %v1309
    %1734 = vmatpush.bf16.msra.mxu0 %v1305
    %1735 = vmatpush.bf16.msra.mxu0 %v1301
    %1736 = vmatpush.bf16.msra.mxu0 %v1297
    %1737 = vmatpush.bf16.msra.mxu0 %v1293
    %1738 = vmatmul.bf16.gmra.mxu0 %v420
    %v1739 = vpop.f32.mrf.mxu0
    %v1740 = vadd.f32 %v1726, %v1739
    %v1741 = vpop.f32.mrf.mxu0
    %v1742 = vadd.f32 %v1728, %v1741
    %1743 = vdwg.mxu0
    %1744 = vmatpush.bf16.msra.mxu0 %v1130
    %1745 = vmatpush.bf16.msra.mxu0 %v1126
    %1746 = vmatpush.bf16.msra.mxu0 %v1122
    %1747 = vmatpush.bf16.msra.mxu0 %v1118
    %1748 = vmatpush.bf16.msra.mxu0 %v1114
    %1749 = vmatpush.bf16.msra.mxu0 %v1110
    %1750 = vmatpush.bf16.msra.mxu0 %v1106
    %1751 = vmatpush.bf16.msra.mxu0 %v1102
    %1752 = vmatmul.bf16.gmra.mxu0 %v414
    %v1753 = vpop.f32.mrf.mxu0
    %v1754 = vadd.f32 %v386, %v1753
    %v1755 = vpop.f32.mrf.mxu0
    %v1756 = vadd.f32 %v386, %v1755
    %1757 = vdwg.mxu0
    %1758 = vmatpush.bf16.msra.mxu0 %v1162
    %1759 = vmatpush.bf16.msra.mxu0 %v1158
    %1760 = vmatpush.bf16.msra.mxu0 %v1154
    %1761 = vmatpush.bf16.msra.mxu0 %v1150
    %1762 = vmatpush.bf16.msra.mxu0 %v1146
    %1763 = vmatpush.bf16.msra.mxu0 %v1142
    %1764 = vmatpush.bf16.msra.mxu0 %v1138
    %1765 = vmatpush.bf16.msra.mxu0 %v1134
    %1766 = vmatmul.bf16.gmra.mxu0 %v415
    %v1767 = vpop.f32.mrf.mxu0
    %v1768 = vadd.f32 %v1754, %v1767
    %v1769 = vpop.f32.mrf.mxu0
    %v1770 = vadd.f32 %v1756, %v1769
    %1771 = vdwg.mxu0
    %1772 = vmatpush.bf16.msra.mxu0 %v1194
    %1773 = vmatpush.bf16.msra.mxu0 %v1190
    %1774 = vmatpush.bf16.msra.mxu0 %v1186
    %1775 = vmatpush.bf16.msra.mxu0 %v1182
    %1776 = vmatpush.bf16.msra.mxu0 %v1178
    %1777 = vmatpush.bf16.msra.mxu0 %v1174
    %1778 = vmatpush.bf16.msra.mxu0 %v1170
    %1779 = vmatpush.bf16.msra.mxu0 %v1166
    %1780 = vmatmul.bf16.gmra.mxu0 %v416
    %v1781 = vpop.f32.mrf.mxu0
    %v1782 = vadd.f32 %v1768, %v1781
    %v1783 = vpop.f32.mrf.mxu0
    %v1784 = vadd.f32 %v1770, %v1783
    %1785 = vdwg.mxu0
    %1786 = vmatpush.bf16.msra.mxu0 %v1226
    %1787 = vmatpush.bf16.msra.mxu0 %v1222
    %1788 = vmatpush.bf16.msra.mxu0 %v1218
    %1789 = vmatpush.bf16.msra.mxu0 %v1214
    %1790 = vmatpush.bf16.msra.mxu0 %v1210
    %1791 = vmatpush.bf16.msra.mxu0 %v1206
    %1792 = vmatpush.bf16.msra.mxu0 %v1202
    %1793 = vmatpush.bf16.msra.mxu0 %v1198
    %1794 = vmatmul.bf16.gmra.mxu0 %v417
    %v1795 = vpop.f32.mrf.mxu0
    %v1796 = vadd.f32 %v1782, %v1795
    %v1797 = vpop.f32.mrf.mxu0
    %v1798 = vadd.f32 %v1784, %v1797
    %1799 = vdwg.mxu0
    %1800 = vmatpush.bf16.msra.mxu0 %v1258
    %1801 = vmatpush.bf16.msra.mxu0 %v1254
    %1802 = vmatpush.bf16.msra.mxu0 %v1250
    %1803 = vmatpush.bf16.msra.mxu0 %v1246
    %1804 = vmatpush.bf16.msra.mxu0 %v1242
    %1805 = vmatpush.bf16.msra.mxu0 %v1238
    %1806 = vmatpush.bf16.msra.mxu0 %v1234
    %1807 = vmatpush.bf16.msra.mxu0 %v1230
    %1808 = vmatmul.bf16.gmra.mxu0 %v418
    %v1809 = vpop.f32.mrf.mxu0
    %v1810 = vadd.f32 %v1796, %v1809
    %v1811 = vpop.f32.mrf.mxu0
    %v1812 = vadd.f32 %v1798, %v1811
    %1813 = vdwg.mxu0
    %1814 = vmatpush.bf16.msra.mxu0 %v1290
    %1815 = vmatpush.bf16.msra.mxu0 %v1286
    %1816 = vmatpush.bf16.msra.mxu0 %v1282
    %1817 = vmatpush.bf16.msra.mxu0 %v1278
    %1818 = vmatpush.bf16.msra.mxu0 %v1274
    %1819 = vmatpush.bf16.msra.mxu0 %v1270
    %1820 = vmatpush.bf16.msra.mxu0 %v1266
    %1821 = vmatpush.bf16.msra.mxu0 %v1262
    %1822 = vmatmul.bf16.gmra.mxu0 %v419
    %v1823 = vpop.f32.mrf.mxu0
    %v1824 = vadd.f32 %v1810, %v1823
    %v1825 = vpop.f32.mrf.mxu0
    %v1826 = vadd.f32 %v1812, %v1825
    %1827 = vdwg.mxu0
    %1828 = vmatpush.bf16.msra.mxu0 %v1322
    %1829 = vmatpush.bf16.msra.mxu0 %v1318
    %1830 = vmatpush.bf16.msra.mxu0 %v1314
    %1831 = vmatpush.bf16.msra.mxu0 %v1310
    %1832 = vmatpush.bf16.msra.mxu0 %v1306
    %1833 = vmatpush.bf16.msra.mxu0 %v1302
    %1834 = vmatpush.bf16.msra.mxu0 %v1298
    %1835 = vmatpush.bf16.msra.mxu0 %v1294
    %1836 = vmatmul.bf16.gmra.mxu0 %v420
    %v1837 = vpop.f32.mrf.mxu0
    %v1838 = vadd.f32 %v1824, %v1837
    %v1839 = vpop.f32.mrf.mxu0
    %v1840 = vadd.f32 %v1826, %v1839
    %1841 = vdwg.mxu0
    %1842 = vmatpush.bf16.msra.mxu0 %v1131
    %1843 = vmatpush.bf16.msra.mxu0 %v1127
    %1844 = vmatpush.bf16.msra.mxu0 %v1123
    %1845 = vmatpush.bf16.msra.mxu0 %v1119
    %1846 = vmatpush.bf16.msra.mxu0 %v1115
    %1847 = vmatpush.bf16.msra.mxu0 %v1111
    %1848 = vmatpush.bf16.msra.mxu0 %v1107
    %1849 = vmatpush.bf16.msra.mxu0 %v1103
    %1850 = vmatmul.bf16.gmra.mxu0 %v414
    %v1851 = vpop.f32.mrf.mxu0
    %v1852 = vadd.f32 %v387, %v1851
    %v1853 = vpop.f32.mrf.mxu0
    %v1854 = vadd.f32 %v387, %v1853
    %1855 = vdwg.mxu0
    %1856 = vmatpush.bf16.msra.mxu0 %v1163
    %1857 = vmatpush.bf16.msra.mxu0 %v1159
    %1858 = vmatpush.bf16.msra.mxu0 %v1155
    %1859 = vmatpush.bf16.msra.mxu0 %v1151
    %1860 = vmatpush.bf16.msra.mxu0 %v1147
    %1861 = vmatpush.bf16.msra.mxu0 %v1143
    %1862 = vmatpush.bf16.msra.mxu0 %v1139
    %1863 = vmatpush.bf16.msra.mxu0 %v1135
    %1864 = vmatmul.bf16.gmra.mxu0 %v415
    %v1865 = vpop.f32.mrf.mxu0
    %v1866 = vadd.f32 %v1852, %v1865
    %v1867 = vpop.f32.mrf.mxu0
    %v1868 = vadd.f32 %v1854, %v1867
    %1869 = vdwg.mxu0
    %1870 = vmatpush.bf16.msra.mxu0 %v1195
    %1871 = vmatpush.bf16.msra.mxu0 %v1191
    %1872 = vmatpush.bf16.msra.mxu0 %v1187
    %1873 = vmatpush.bf16.msra.mxu0 %v1183
    %1874 = vmatpush.bf16.msra.mxu0 %v1179
    %1875 = vmatpush.bf16.msra.mxu0 %v1175
    %1876 = vmatpush.bf16.msra.mxu0 %v1171
    %1877 = vmatpush.bf16.msra.mxu0 %v1167
    %1878 = vmatmul.bf16.gmra.mxu0 %v416
    %v1879 = vpop.f32.mrf.mxu0
    %v1880 = vadd.f32 %v1866, %v1879
    %v1881 = vpop.f32.mrf.mxu0
    %v1882 = vadd.f32 %v1868, %v1881
    %1883 = vdwg.mxu0
    %1884 = vmatpush.bf16.msra.mxu0 %v1227
    %1885 = vmatpush.bf16.msra.mxu0 %v1223
    %1886 = vmatpush.bf16.msra.mxu0 %v1219
    %1887 = vmatpush.bf16.msra.mxu0 %v1215
    %1888 = vmatpush.bf16.msra.mxu0 %v1211
    %1889 = vmatpush.bf16.msra.mxu0 %v1207
    %1890 = vmatpush.bf16.msra.mxu0 %v1203
    %1891 = vmatpush.bf16.msra.mxu0 %v1199
    %1892 = vmatmul.bf16.gmra.mxu0 %v417
    %v1893 = vpop.f32.mrf.mxu0
    %v1894 = vadd.f32 %v1880, %v1893
    %v1895 = vpop.f32.mrf.mxu0
    %v1896 = vadd.f32 %v1882, %v1895
    %1897 = vdwg.mxu0
    %1898 = vmatpush.bf16.msra.mxu0 %v1259
    %1899 = vmatpush.bf16.msra.mxu0 %v1255
    %1900 = vmatpush.bf16.msra.mxu0 %v1251
    %1901 = vmatpush.bf16.msra.mxu0 %v1247
    %1902 = vmatpush.bf16.msra.mxu0 %v1243
    %1903 = vmatpush.bf16.msra.mxu0 %v1239
    %1904 = vmatpush.bf16.msra.mxu0 %v1235
    %1905 = vmatpush.bf16.msra.mxu0 %v1231
    %1906 = vmatmul.bf16.gmra.mxu0 %v418
    %v1907 = vpop.f32.mrf.mxu0
    %v1908 = vadd.f32 %v1894, %v1907
    %v1909 = vpop.f32.mrf.mxu0
    %v1910 = vadd.f32 %v1896, %v1909
    %1911 = vdwg.mxu0
    %1912 = vmatpush.bf16.msra.mxu0 %v1291
    %1913 = vmatpush.bf16.msra.mxu0 %v1287
    %1914 = vmatpush.bf16.msra.mxu0 %v1283
    %1915 = vmatpush.bf16.msra.mxu0 %v1279
    %1916 = vmatpush.bf16.msra.mxu0 %v1275
    %1917 = vmatpush.bf16.msra.mxu0 %v1271
    %1918 = vmatpush.bf16.msra.mxu0 %v1267
    %1919 = vmatpush.bf16.msra.mxu0 %v1263
    %1920 = vmatmul.bf16.gmra.mxu0 %v419
    %v1921 = vpop.f32.mrf.mxu0
    %v1922 = vadd.f32 %v1908, %v1921
    %v1923 = vpop.f32.mrf.mxu0
    %v1924 = vadd.f32 %v1910, %v1923
    %1925 = vdwg.mxu0
    %1926 = vmatpush.bf16.msra.mxu0 %v1323
    %1927 = vmatpush.bf16.msra.mxu0 %v1319
    %1928 = vmatpush.bf16.msra.mxu0 %v1315
    %1929 = vmatpush.bf16.msra.mxu0 %v1311
    %1930 = vmatpush.bf16.msra.mxu0 %v1307
    %1931 = vmatpush.bf16.msra.mxu0 %v1303
    %1932 = vmatpush.bf16.msra.mxu0 %v1299
    %1933 = vmatpush.bf16.msra.mxu0 %v1295
    %1934 = vmatmul.bf16.gmra.mxu0 %v420
    %v1935 = vpop.f32.mrf.mxu0
    %v1936 = vadd.f32 %v1922, %v1935
    %v1937 = vpop.f32.mrf.mxu0
    %v1938 = vadd.f32 %v1924, %v1937
    %1939 = vdwg.mxu0
    %v1940 = vmax.f32 %v1642, 0.0
    %v1941 = vmax.f32 %v1740, 0.0
    %v1942 = vmax.f32 %v1838, 0.0
    %v1943 = vmax.f32 %v1936, 0.0
    %v1944 = vmax.f32 %v1644, 0.0
    %v1945 = vmax.f32 %v1742, 0.0
    %v1946 = vmax.f32 %v1840, 0.0
    %v1947 = vmax.f32 %v1938, 0.0
    %v1948 = vpack.c.bf16 %v1944, %v1940
    %v1949 = vpack.c.bf16 %v1945, %v1941
    %v1950 = vpack.c.bf16 %v1946, %v1942
    %v1951 = vpack.c.bf16 %v1947, %v1943
    %v1952 = vld [vmem:[#allocation8] sm:$0xff]
    %v1953 = vld [vmem:[#allocation8 + $0x8] sm:$0xff]
    %v1954 = vld [vmem:[#allocation8 + $0x10] sm:$0xff]
    %v1955 = vld [vmem:[#allocation8 + $0x18] sm:$0xff]
    %v1956 = vld [vmem:[#allocation8 + $0x20] sm:$0xff]
    %v1957 = vld [vmem:[#allocation8 + $0x28] sm:$0xff]
    %v1958 = vld [vmem:[#allocation8 + $0x30] sm:$0xff]
    %v1959 = vld [vmem:[#allocation8 + $0x38] sm:$0xff]
    %v1960 = vld [vmem:[#allocation8 + $0x40] sm:$0xff]
    %v1961 = vld [vmem:[#allocation8 + $0x48] sm:$0xff]
    %v1962 = vld [vmem:[#allocation8 + $0x50] sm:$0xff]
    %v1963 = vld [vmem:[#allocation8 + $0x58] sm:$0xff]
    %v1964 = vld [vmem:[#allocation8 + $0x60] sm:$0xff]
    %v1965 = vld [vmem:[#allocation8 + $0x68] sm:$0xff]
    %v1966 = vld [vmem:[#allocation8 + $0x70] sm:$0xff]
    %v1967 = vld [vmem:[#allocation8 + $0x78] sm:$0xff]
    %v1968 = vld [vmem:[#allocation8 + $0x80] sm:$0xff]
    %v1969 = vld [vmem:[#allocation8 + $0x88] sm:$0xff]
    %v1970 = vld [vmem:[#allocation8 + $0x90] sm:$0xff]
    %v1971 = vld [vmem:[#allocation8 + $0x98] sm:$0xff]
    %v1972 = vld [vmem:[#allocation8 + $0xa0] sm:$0xff]
    %v1973 = vld [vmem:[#allocation8 + $0xa8] sm:$0xff]
    %v1974 = vld [vmem:[#allocation8 + $0xb0] sm:$0xff]
    %v1975 = vld [vmem:[#allocation8 + $0xb8] sm:$0xff]
    %v1976 = vld [vmem:[#allocation8 + $0xc0] sm:$0xff]
    %v1977 = vld [vmem:[#allocation8 + $0xc8] sm:$0xff]
    %v1978 = vld [vmem:[#allocation8 + $0xd0] sm:$0xff]
    %v1979 = vld [vmem:[#allocation8 + $0xd8] sm:$0xff]
    %v1980 = vld [vmem:[#allocation8 + $0xe0] sm:$0xff]
    %v1981 = vld [vmem:[#allocation8 + $0xe8] sm:$0xff]
    %v1982 = vld [vmem:[#allocation8 + $0xf0] sm:$0xff]
    %v1983 = vld [vmem:[#allocation8 + $0xf8] sm:$0xff]
    %v1984 = vld [vmem:[#allocation8 + $0x100] sm:$0xff]
    %v1985 = vld [vmem:[#allocation8 + $0x108] sm:$0xff]
    %v1986 = vld [vmem:[#allocation8 + $0x110] sm:$0xff]
    %v1987 = vld [vmem:[#allocation8 + $0x118] sm:$0xff]
    %v1988 = vld [vmem:[#allocation8 + $0x120] sm:$0xff]
    %v1989 = vld [vmem:[#allocation8 + $0x128] sm:$0xff]
    %v1990 = vld [vmem:[#allocation8 + $0x130] sm:$0xff]
    %v1991 = vld [vmem:[#allocation8 + $0x138] sm:$0xff]
    %v1992 = vld [vmem:[#allocation8 + $0x140] sm:$0xff]
    %v1993 = vld [vmem:[#allocation8 + $0x148] sm:$0xff]
    %v1994 = vld [vmem:[#allocation8 + $0x150] sm:$0xff]
    %v1995 = vld [vmem:[#allocation8 + $0x158] sm:$0xff]
    %v1996 = vld [vmem:[#allocation8 + $0x160] sm:$0xff]
    %v1997 = vld [vmem:[#allocation8 + $0x168] sm:$0xff]
    %v1998 = vld [vmem:[#allocation8 + $0x170] sm:$0xff]
    %v1999 = vld [vmem:[#allocation8 + $0x178] sm:$0xff]
    %v2000 = vld [vmem:[#allocation8 + $0x180] sm:$0xff]
    %v2001 = vld [vmem:[#allocation8 + $0x188] sm:$0xff]
    %v2002 = vld [vmem:[#allocation8 + $0x190] sm:$0xff]
    %v2003 = vld [vmem:[#allocation8 + $0x198] sm:$0xff]
    %v2004 = vld [vmem:[#allocation8 + $0x1a0] sm:$0xff]
    %v2005 = vld [vmem:[#allocation8 + $0x1a8] sm:$0xff]
    %v2006 = vld [vmem:[#allocation8 + $0x1b0] sm:$0xff]
    %v2007 = vld [vmem:[#allocation8 + $0x1b8] sm:$0xff]
    %v2008 = vld [vmem:[#allocation8 + $0x1c0] sm:$0xff]
    %v2009 = vld [vmem:[#allocation8 + $0x1c8] sm:$0xff]
    %v2010 = vld [vmem:[#allocation8 + $0x1d0] sm:$0xff]
    %v2011 = vld [vmem:[#allocation8 + $0x1d8] sm:$0xff]
    %v2012 = vld [vmem:[#allocation8 + $0x1e0] sm:$0xff]
    %v2013 = vld [vmem:[#allocation8 + $0x1e8] sm:$0xff]
    %v2014 = vld [vmem:[#allocation8 + $0x1f0] sm:$0xff]
    %v2015 = vld [vmem:[#allocation8 + $0x1f8] sm:$0xff]
    %v2016 = vld [vmem:[#allocation8 + $0x200] sm:$0xff]
    %v2017 = vld [vmem:[#allocation8 + $0x208] sm:$0xff]
    %v2018 = vld [vmem:[#allocation8 + $0x210] sm:$0xff]
    %v2019 = vld [vmem:[#allocation8 + $0x218] sm:$0xff]
    %v2020 = vld [vmem:[#allocation8 + $0x220] sm:$0xff]
    %v2021 = vld [vmem:[#allocation8 + $0x228] sm:$0xff]
    %v2022 = vld [vmem:[#allocation8 + $0x230] sm:$0xff]
    %v2023 = vld [vmem:[#allocation8 + $0x238] sm:$0xff]
    %v2024 = vld [vmem:[#allocation8 + $0x240] sm:$0xff]
    %v2025 = vld [vmem:[#allocation8 + $0x248] sm:$0xff]
    %v2026 = vld [vmem:[#allocation8 + $0x250] sm:$0xff]
    %v2027 = vld [vmem:[#allocation8 + $0x258] sm:$0xff]
    %v2028 = vld [vmem:[#allocation8 + $0x260] sm:$0xff]
    %v2029 = vld [vmem:[#allocation8 + $0x268] sm:$0xff]
    %v2030 = vld [vmem:[#allocation8 + $0x270] sm:$0xff]
    %v2031 = vld [vmem:[#allocation8 + $0x278] sm:$0xff]
    %v2032 = vld [vmem:[#allocation8 + $0x280] sm:$0xff]
    %v2033 = vld [vmem:[#allocation8 + $0x288] sm:$0xff]
    %v2034 = vld [vmem:[#allocation8 + $0x290] sm:$0xff]
    %v2035 = vld [vmem:[#allocation8 + $0x298] sm:$0xff]
    %v2036 = vld [vmem:[#allocation8 + $0x2a0] sm:$0xff]
    %v2037 = vld [vmem:[#allocation8 + $0x2a8] sm:$0xff]
    %v2038 = vld [vmem:[#allocation8 + $0x2b0] sm:$0xff]
    %v2039 = vld [vmem:[#allocation8 + $0x2b8] sm:$0xff]
    %v2040 = vld [vmem:[#allocation8 + $0x2c0] sm:$0xff]
    %v2041 = vld [vmem:[#allocation8 + $0x2c8] sm:$0xff]
    %v2042 = vld [vmem:[#allocation8 + $0x2d0] sm:$0xff]
    %v2043 = vld [vmem:[#allocation8 + $0x2d8] sm:$0xff]
    %v2044 = vld [vmem:[#allocation8 + $0x2e0] sm:$0xff]
    %v2045 = vld [vmem:[#allocation8 + $0x2e8] sm:$0xff]
    %v2046 = vld [vmem:[#allocation8 + $0x2f0] sm:$0xff]
    %v2047 = vld [vmem:[#allocation8 + $0x2f8] sm:$0xff]
    %v2048 = vld [vmem:[#allocation8 + $0x300] sm:$0xff]
    %v2049 = vld [vmem:[#allocation8 + $0x308] sm:$0xff]
    %v2050 = vld [vmem:[#allocation8 + $0x310] sm:$0xff]
    %v2051 = vld [vmem:[#allocation8 + $0x318] sm:$0xff]
    %v2052 = vld [vmem:[#allocation8 + $0x320] sm:$0xff]
    %v2053 = vld [vmem:[#allocation8 + $0x328] sm:$0xff]
    %v2054 = vld [vmem:[#allocation8 + $0x330] sm:$0xff]
    %v2055 = vld [vmem:[#allocation8 + $0x338] sm:$0xff]
    %v2056 = vld [vmem:[#allocation8 + $0x340] sm:$0xff]
    %v2057 = vld [vmem:[#allocation8 + $0x348] sm:$0xff]
    %v2058 = vld [vmem:[#allocation8 + $0x350] sm:$0xff]
    %v2059 = vld [vmem:[#allocation8 + $0x358] sm:$0xff]
    %v2060 = vld [vmem:[#allocation8 + $0x360] sm:$0xff]
    %v2061 = vld [vmem:[#allocation8 + $0x368] sm:$0xff]
    %v2062 = vld [vmem:[#allocation8 + $0x370] sm:$0xff]
    %v2063 = vld [vmem:[#allocation8 + $0x378] sm:$0xff]
    %v2064 = vld [vmem:[#allocation8 + $0x380] sm:$0xff]
    %v2065 = vld [vmem:[#allocation8 + $0x388] sm:$0xff]
    %v2066 = vld [vmem:[#allocation8 + $0x390] sm:$0xff]
    %v2067 = vld [vmem:[#allocation8 + $0x398] sm:$0xff]
    %v2068 = vld [vmem:[#allocation8 + $0x3a0] sm:$0xff]
    %v2069 = vld [vmem:[#allocation8 + $0x3a8] sm:$0xff]
    %v2070 = vld [vmem:[#allocation8 + $0x3b0] sm:$0xff]
    %v2071 = vld [vmem:[#allocation8 + $0x3b8] sm:$0xff]
    %v2072 = vld [vmem:[#allocation8 + $0x3c0] sm:$0xff]
    %v2073 = vld [vmem:[#allocation8 + $0x3c8] sm:$0xff]
    %v2074 = vld [vmem:[#allocation8 + $0x3d0] sm:$0xff]
    %v2075 = vld [vmem:[#allocation8 + $0x3d8] sm:$0xff]
    %v2076 = vld [vmem:[#allocation8 + $0x3e0] sm:$0xff]
    %v2077 = vld [vmem:[#allocation8 + $0x3e8] sm:$0xff]
    %v2078 = vld [vmem:[#allocation8 + $0x3f0] sm:$0xff]
    %v2079 = vld [vmem:[#allocation8 + $0x3f8] sm:$0xff]
    %v2080 = vld [vmem:[#allocation10] sm:$0xf]
    %v2082 = vperm.slane %v2080, 0
    %v2083 = vperm.slane %v2080, 1
    %v2084 = vperm.slane %v2080, 2
    %v2085 = vperm.slane %v2080, 3
    %v2218 = vunpack.c.l.b16 %v1952
    %v2219 = vunpack.c.h.b16 %v1952
    %v2220 = vunpack.c.l.b16 %v1953
    %v2221 = vunpack.c.h.b16 %v1953
    %v2222 = vunpack.c.l.b16 %v1954
    %v2223 = vunpack.c.h.b16 %v1954
    %v2224 = vunpack.c.l.b16 %v1955
    %v2225 = vunpack.c.h.b16 %v1955
    %v2226 = vunpack.c.l.b16 %v1956
    %v2227 = vunpack.c.h.b16 %v1956
    %v2228 = vunpack.c.l.b16 %v1957
    %v2229 = vunpack.c.h.b16 %v1957
    %v2230 = vunpack.c.l.b16 %v1958
    %v2231 = vunpack.c.h.b16 %v1958
    %v2232 = vunpack.c.l.b16 %v1959
    %v2233 = vunpack.c.h.b16 %v1959
    %v2234 = vunpack.c.l.b16 %v1960
    %v2235 = vunpack.c.h.b16 %v1960
    %v2236 = vunpack.c.l.b16 %v1961
    %v2237 = vunpack.c.h.b16 %v1961
    %v2238 = vunpack.c.l.b16 %v1962
    %v2239 = vunpack.c.h.b16 %v1962
    %v2240 = vunpack.c.l.b16 %v1963
    %v2241 = vunpack.c.h.b16 %v1963
    %v2242 = vunpack.c.l.b16 %v1964
    %v2243 = vunpack.c.h.b16 %v1964
    %v2244 = vunpack.c.l.b16 %v1965
    %v2245 = vunpack.c.h.b16 %v1965
    %v2246 = vunpack.c.l.b16 %v1966
    %v2247 = vunpack.c.h.b16 %v1966
    %v2248 = vunpack.c.l.b16 %v1967
    %v2249 = vunpack.c.h.b16 %v1967
    %v2250 = vunpack.c.l.b16 %v1968
    %v2251 = vunpack.c.h.b16 %v1968
    %v2252 = vunpack.c.l.b16 %v1969
    %v2253 = vunpack.c.h.b16 %v1969
    %v2254 = vunpack.c.l.b16 %v1970
    %v2255 = vunpack.c.h.b16 %v1970
    %v2256 = vunpack.c.l.b16 %v1971
    %v2257 = vunpack.c.h.b16 %v1971
    %v2258 = vunpack.c.l.b16 %v1972
    %v2259 = vunpack.c.h.b16 %v1972
    %v2260 = vunpack.c.l.b16 %v1973
    %v2261 = vunpack.c.h.b16 %v1973
    %v2262 = vunpack.c.l.b16 %v1974
    %v2263 = vunpack.c.h.b16 %v1974
    %v2264 = vunpack.c.l.b16 %v1975
    %v2265 = vunpack.c.h.b16 %v1975
    %v2266 = vunpack.c.l.b16 %v1976
    %v2267 = vunpack.c.h.b16 %v1976
    %v2268 = vunpack.c.l.b16 %v1977
    %v2269 = vunpack.c.h.b16 %v1977
    %v2270 = vunpack.c.l.b16 %v1978
    %v2271 = vunpack.c.h.b16 %v1978
    %v2272 = vunpack.c.l.b16 %v1979
    %v2273 = vunpack.c.h.b16 %v1979
    %v2274 = vunpack.c.l.b16 %v1980
    %v2275 = vunpack.c.h.b16 %v1980
    %v2276 = vunpack.c.l.b16 %v1981
    %v2277 = vunpack.c.h.b16 %v1981
    %v2278 = vunpack.c.l.b16 %v1982
    %v2279 = vunpack.c.h.b16 %v1982
    %v2280 = vunpack.c.l.b16 %v1983
    %v2281 = vunpack.c.h.b16 %v1983
    %v2282 = vunpack.c.l.b16 %v1984
    %v2283 = vunpack.c.h.b16 %v1984
    %v2284 = vunpack.c.l.b16 %v1985
    %v2285 = vunpack.c.h.b16 %v1985
    %v2286 = vunpack.c.l.b16 %v1986
    %v2287 = vunpack.c.h.b16 %v1986
    %v2288 = vunpack.c.l.b16 %v1987
    %v2289 = vunpack.c.h.b16 %v1987
    %v2290 = vunpack.c.l.b16 %v1988
    %v2291 = vunpack.c.h.b16 %v1988
    %v2292 = vunpack.c.l.b16 %v1989
    %v2293 = vunpack.c.h.b16 %v1989
    %v2294 = vunpack.c.l.b16 %v1990
    %v2295 = vunpack.c.h.b16 %v1990
    %v2296 = vunpack.c.l.b16 %v1991
    %v2297 = vunpack.c.h.b16 %v1991
    %v2298 = vunpack.c.l.b16 %v1992
    %v2299 = vunpack.c.h.b16 %v1992
    %v2300 = vunpack.c.l.b16 %v1993
    %v2301 = vunpack.c.h.b16 %v1993
    %v2302 = vunpack.c.l.b16 %v1994
    %v2303 = vunpack.c.h.b16 %v1994
    %v2304 = vunpack.c.l.b16 %v1995
    %v2305 = vunpack.c.h.b16 %v1995
    %v2306 = vunpack.c.l.b16 %v1996
    %v2307 = vunpack.c.h.b16 %v1996
    %v2308 = vunpack.c.l.b16 %v1997
    %v2309 = vunpack.c.h.b16 %v1997
    %v2310 = vunpack.c.l.b16 %v1998
    %v2311 = vunpack.c.h.b16 %v1998
    %v2312 = vunpack.c.l.b16 %v1999
    %v2313 = vunpack.c.h.b16 %v1999
    %v2314 = vunpack.c.l.b16 %v2000
    %v2315 = vunpack.c.h.b16 %v2000
    %v2316 = vunpack.c.l.b16 %v2001
    %v2317 = vunpack.c.h.b16 %v2001
    %v2318 = vunpack.c.l.b16 %v2002
    %v2319 = vunpack.c.h.b16 %v2002
    %v2320 = vunpack.c.l.b16 %v2003
    %v2321 = vunpack.c.h.b16 %v2003
    %v2322 = vunpack.c.l.b16 %v2004
    %v2323 = vunpack.c.h.b16 %v2004
    %v2324 = vunpack.c.l.b16 %v2005
    %v2325 = vunpack.c.h.b16 %v2005
    %v2326 = vunpack.c.l.b16 %v2006
    %v2327 = vunpack.c.h.b16 %v2006
    %v2328 = vunpack.c.l.b16 %v2007
    %v2329 = vunpack.c.h.b16 %v2007
    %v2330 = vunpack.c.l.b16 %v2008
    %v2331 = vunpack.c.h.b16 %v2008
    %v2332 = vunpack.c.l.b16 %v2009
    %v2333 = vunpack.c.h.b16 %v2009
    %v2334 = vunpack.c.l.b16 %v2010
    %v2335 = vunpack.c.h.b16 %v2010
    %v2336 = vunpack.c.l.b16 %v2011
    %v2337 = vunpack.c.h.b16 %v2011
    %v2338 = vunpack.c.l.b16 %v2012
    %v2339 = vunpack.c.h.b16 %v2012
    %v2340 = vunpack.c.l.b16 %v2013
    %v2341 = vunpack.c.h.b16 %v2013
    %v2342 = vunpack.c.l.b16 %v2014
    %v2343 = vunpack.c.h.b16 %v2014
    %v2344 = vunpack.c.l.b16 %v2015
    %v2345 = vunpack.c.h.b16 %v2015
    %v2346 = vunpack.c.l.b16 %v2016
    %v2347 = vunpack.c.h.b16 %v2016
    %v2348 = vunpack.c.l.b16 %v2017
    %v2349 = vunpack.c.h.b16 %v2017
    %v2350 = vunpack.c.l.b16 %v2018
    %v2351 = vunpack.c.h.b16 %v2018
    %v2352 = vunpack.c.l.b16 %v2019
    %v2353 = vunpack.c.h.b16 %v2019
    %v2354 = vunpack.c.l.b16 %v2020
    %v2355 = vunpack.c.h.b16 %v2020
    %v2356 = vunpack.c.l.b16 %v2021
    %v2357 = vunpack.c.h.b16 %v2021
    %v2358 = vunpack.c.l.b16 %v2022
    %v2359 = vunpack.c.h.b16 %v2022
    %v2360 = vunpack.c.l.b16 %v2023
    %v2361 = vunpack.c.h.b16 %v2023
    %v2362 = vunpack.c.l.b16 %v2024
    %v2363 = vunpack.c.h.b16 %v2024
    %v2364 = vunpack.c.l.b16 %v2025
    %v2365 = vunpack.c.h.b16 %v2025
    %v2366 = vunpack.c.l.b16 %v2026
    %v2367 = vunpack.c.h.b16 %v2026
    %v2368 = vunpack.c.l.b16 %v2027
    %v2369 = vunpack.c.h.b16 %v2027
    %v2370 = vunpack.c.l.b16 %v2028
    %v2371 = vunpack.c.h.b16 %v2028
    %v2372 = vunpack.c.l.b16 %v2029
    %v2373 = vunpack.c.h.b16 %v2029
    %v2374 = vunpack.c.l.b16 %v2030
    %v2375 = vunpack.c.h.b16 %v2030
    %v2376 = vunpack.c.l.b16 %v2031
    %v2377 = vunpack.c.h.b16 %v2031
    %v2378 = vunpack.c.l.b16 %v2032
    %v2379 = vunpack.c.h.b16 %v2032
    %v2380 = vunpack.c.l.b16 %v2033
    %v2381 = vunpack.c.h.b16 %v2033
    %v2382 = vunpack.c.l.b16 %v2034
    %v2383 = vunpack.c.h.b16 %v2034
    %v2384 = vunpack.c.l.b16 %v2035
    %v2385 = vunpack.c.h.b16 %v2035
    %v2386 = vunpack.c.l.b16 %v2036
    %v2387 = vunpack.c.h.b16 %v2036
    %v2388 = vunpack.c.l.b16 %v2037
    %v2389 = vunpack.c.h.b16 %v2037
    %v2390 = vunpack.c.l.b16 %v2038
    %v2391 = vunpack.c.h.b16 %v2038
    %v2392 = vunpack.c.l.b16 %v2039
    %v2393 = vunpack.c.h.b16 %v2039
    %v2394 = vunpack.c.l.b16 %v2040
    %v2395 = vunpack.c.h.b16 %v2040
    %v2396 = vunpack.c.l.b16 %v2041
    %v2397 = vunpack.c.h.b16 %v2041
    %v2398 = vunpack.c.l.b16 %v2042
    %v2399 = vunpack.c.h.b16 %v2042
    %v2400 = vunpack.c.l.b16 %v2043
    %v2401 = vunpack.c.h.b16 %v2043
    %v2402 = vunpack.c.l.b16 %v2044
    %v2403 = vunpack.c.h.b16 %v2044
    %v2404 = vunpack.c.l.b16 %v2045
    %v2405 = vunpack.c.h.b16 %v2045
    %v2406 = vunpack.c.l.b16 %v2046
    %v2407 = vunpack.c.h.b16 %v2046
    %v2408 = vunpack.c.l.b16 %v2047
    %v2409 = vunpack.c.h.b16 %v2047
    %v2410 = vunpack.c.l.b16 %v2048
    %v2411 = vunpack.c.h.b16 %v2048
    %v2412 = vunpack.c.l.b16 %v2049
    %v2413 = vunpack.c.h.b16 %v2049
    %v2414 = vunpack.c.l.b16 %v2050
    %v2415 = vunpack.c.h.b16 %v2050
    %v2416 = vunpack.c.l.b16 %v2051
    %v2417 = vunpack.c.h.b16 %v2051
    %v2418 = vunpack.c.l.b16 %v2052
    %v2419 = vunpack.c.h.b16 %v2052
    %v2420 = vunpack.c.l.b16 %v2053
    %v2421 = vunpack.c.h.b16 %v2053
    %v2422 = vunpack.c.l.b16 %v2054
    %v2423 = vunpack.c.h.b16 %v2054
    %v2424 = vunpack.c.l.b16 %v2055
    %v2425 = vunpack.c.h.b16 %v2055
    %v2426 = vunpack.c.l.b16 %v2056
    %v2427 = vunpack.c.h.b16 %v2056
    %v2428 = vunpack.c.l.b16 %v2057
    %v2429 = vunpack.c.h.b16 %v2057
    %v2430 = vunpack.c.l.b16 %v2058
    %v2431 = vunpack.c.h.b16 %v2058
    %v2432 = vunpack.c.l.b16 %v2059
    %v2433 = vunpack.c.h.b16 %v2059
    %v2434 = vunpack.c.l.b16 %v2060
    %v2435 = vunpack.c.h.b16 %v2060
    %v2436 = vunpack.c.l.b16 %v2061
    %v2437 = vunpack.c.h.b16 %v2061
    %v2438 = vunpack.c.l.b16 %v2062
    %v2439 = vunpack.c.h.b16 %v2062
    %v2440 = vunpack.c.l.b16 %v2063
    %v2441 = vunpack.c.h.b16 %v2063
    %v2442 = vunpack.c.l.b16 %v2064
    %v2443 = vunpack.c.h.b16 %v2064
    %v2444 = vunpack.c.l.b16 %v2065
    %v2445 = vunpack.c.h.b16 %v2065
    %v2446 = vunpack.c.l.b16 %v2066
    %v2447 = vunpack.c.h.b16 %v2066
    %v2448 = vunpack.c.l.b16 %v2067
    %v2449 = vunpack.c.h.b16 %v2067
    %v2450 = vunpack.c.l.b16 %v2068
    %v2451 = vunpack.c.h.b16 %v2068
    %v2452 = vunpack.c.l.b16 %v2069
    %v2453 = vunpack.c.h.b16 %v2069
    %v2454 = vunpack.c.l.b16 %v2070
    %v2455 = vunpack.c.h.b16 %v2070
    %v2456 = vunpack.c.l.b16 %v2071
    %v2457 = vunpack.c.h.b16 %v2071
    %v2458 = vunpack.c.l.b16 %v2072
    %v2459 = vunpack.c.h.b16 %v2072
    %v2460 = vunpack.c.l.b16 %v2073
    %v2461 = vunpack.c.h.b16 %v2073
    %v2462 = vunpack.c.l.b16 %v2074
    %v2463 = vunpack.c.h.b16 %v2074
    %v2464 = vunpack.c.l.b16 %v2075
    %v2465 = vunpack.c.h.b16 %v2075
    %v2466 = vunpack.c.l.b16 %v2076
    %v2467 = vunpack.c.h.b16 %v2076
    %v2468 = vunpack.c.l.b16 %v2077
    %v2469 = vunpack.c.h.b16 %v2077
    %v2470 = vunpack.c.l.b16 %v2078
    %v2471 = vunpack.c.h.b16 %v2078
    %v2472 = vunpack.c.l.b16 %v2079
    %v2473 = vunpack.c.h.b16 %v2079
    %v2474 = vpack.c.b16 %v2222, %v2218
    %v2475 = vpack.c.b16 %v2223, %v2219
    %v2476 = vpack.c.b16 %v2224, %v2220
    %v2477 = vpack.c.b16 %v2225, %v2221
    %v2478 = vpack.c.b16 %v2230, %v2226
    %v2479 = vpack.c.b16 %v2231, %v2227
    %v2480 = vpack.c.b16 %v2232, %v2228
    %v2481 = vpack.c.b16 %v2233, %v2229
    %v2482 = vpack.c.b16 %v2238, %v2234
    %v2483 = vpack.c.b16 %v2239, %v2235
    %v2484 = vpack.c.b16 %v2240, %v2236
    %v2485 = vpack.c.b16 %v2241, %v2237
    %v2486 = vpack.c.b16 %v2246, %v2242
    %v2487 = vpack.c.b16 %v2247, %v2243
    %v2488 = vpack.c.b16 %v2248, %v2244
    %v2489 = vpack.c.b16 %v2249, %v2245
    %v2490 = vpack.c.b16 %v2254, %v2250
    %v2491 = vpack.c.b16 %v2255, %v2251
    %v2492 = vpack.c.b16 %v2256, %v2252
    %v2493 = vpack.c.b16 %v2257, %v2253
    %v2494 = vpack.c.b16 %v2262, %v2258
    %v2495 = vpack.c.b16 %v2263, %v2259
    %v2496 = vpack.c.b16 %v2264, %v2260
    %v2497 = vpack.c.b16 %v2265, %v2261
    %v2498 = vpack.c.b16 %v2270, %v2266
    %v2499 = vpack.c.b16 %v2271, %v2267
    %v2500 = vpack.c.b16 %v2272, %v2268
    %v2501 = vpack.c.b16 %v2273, %v2269
    %v2502 = vpack.c.b16 %v2278, %v2274
    %v2503 = vpack.c.b16 %v2279, %v2275
    %v2504 = vpack.c.b16 %v2280, %v2276
    %v2505 = vpack.c.b16 %v2281, %v2277
    %v2506 = vpack.c.b16 %v2286, %v2282
    %v2507 = vpack.c.b16 %v2287, %v2283
    %v2508 = vpack.c.b16 %v2288, %v2284
    %v2509 = vpack.c.b16 %v2289, %v2285
    %v2510 = vpack.c.b16 %v2294, %v2290
    %v2511 = vpack.c.b16 %v2295, %v2291
    %v2512 = vpack.c.b16 %v2296, %v2292
    %v2513 = vpack.c.b16 %v2297, %v2293
    %v2514 = vpack.c.b16 %v2302, %v2298
    %v2515 = vpack.c.b16 %v2303, %v2299
    %v2516 = vpack.c.b16 %v2304, %v2300
    %v2517 = vpack.c.b16 %v2305, %v2301
    %v2518 = vpack.c.b16 %v2310, %v2306
    %v2519 = vpack.c.b16 %v2311, %v2307
    %v2520 = vpack.c.b16 %v2312, %v2308
    %v2521 = vpack.c.b16 %v2313, %v2309
    %v2522 = vpack.c.b16 %v2318, %v2314
    %v2523 = vpack.c.b16 %v2319, %v2315
    %v2524 = vpack.c.b16 %v2320, %v2316
    %v2525 = vpack.c.b16 %v2321, %v2317
    %v2526 = vpack.c.b16 %v2326, %v2322
    %v2527 = vpack.c.b16 %v2327, %v2323
    %v2528 = vpack.c.b16 %v2328, %v2324
    %v2529 = vpack.c.b16 %v2329, %v2325
    %v2530 = vpack.c.b16 %v2334, %v2330
    %v2531 = vpack.c.b16 %v2335, %v2331
    %v2532 = vpack.c.b16 %v2336, %v2332
    %v2533 = vpack.c.b16 %v2337, %v2333
    %v2534 = vpack.c.b16 %v2342, %v2338
    %v2535 = vpack.c.b16 %v2343, %v2339
    %v2536 = vpack.c.b16 %v2344, %v2340
    %v2537 = vpack.c.b16 %v2345, %v2341
    %v2538 = vpack.c.b16 %v2350, %v2346
    %v2539 = vpack.c.b16 %v2351, %v2347
    %v2540 = vpack.c.b16 %v2352, %v2348
    %v2541 = vpack.c.b16 %v2353, %v2349
    %v2542 = vpack.c.b16 %v2358, %v2354
    %v2543 = vpack.c.b16 %v2359, %v2355
    %v2544 = vpack.c.b16 %v2360, %v2356
    %v2545 = vpack.c.b16 %v2361, %v2357
    %v2546 = vpack.c.b16 %v2366, %v2362
    %v2547 = vpack.c.b16 %v2367, %v2363
    %v2548 = vpack.c.b16 %v2368, %v2364
    %v2549 = vpack.c.b16 %v2369, %v2365
    %v2550 = vpack.c.b16 %v2374, %v2370
    %v2551 = vpack.c.b16 %v2375, %v2371
    %v2552 = vpack.c.b16 %v2376, %v2372
    %v2553 = vpack.c.b16 %v2377, %v2373
    %v2554 = vpack.c.b16 %v2382, %v2378
    %v2555 = vpack.c.b16 %v2383, %v2379
    %v2556 = vpack.c.b16 %v2384, %v2380
    %v2557 = vpack.c.b16 %v2385, %v2381
    %v2558 = vpack.c.b16 %v2390, %v2386
    %v2559 = vpack.c.b16 %v2391, %v2387
    %v2560 = vpack.c.b16 %v2392, %v2388
    %v2561 = vpack.c.b16 %v2393, %v2389
    %v2562 = vpack.c.b16 %v2398, %v2394
    %v2563 = vpack.c.b16 %v2399, %v2395
    %v2564 = vpack.c.b16 %v2400, %v2396
    %v2565 = vpack.c.b16 %v2401, %v2397
    %v2566 = vpack.c.b16 %v2406, %v2402
    %v2567 = vpack.c.b16 %v2407, %v2403
    %v2568 = vpack.c.b16 %v2408, %v2404
    %v2569 = vpack.c.b16 %v2409, %v2405
    %v2570 = vpack.c.b16 %v2414, %v2410
    %v2571 = vpack.c.b16 %v2415, %v2411
    %v2572 = vpack.c.b16 %v2416, %v2412
    %v2573 = vpack.c.b16 %v2417, %v2413
    %v2574 = vpack.c.b16 %v2422, %v2418
    %v2575 = vpack.c.b16 %v2423, %v2419
    %v2576 = vpack.c.b16 %v2424, %v2420
    %v2577 = vpack.c.b16 %v2425, %v2421
    %v2578 = vpack.c.b16 %v2430, %v2426
    %v2579 = vpack.c.b16 %v2431, %v2427
    %v2580 = vpack.c.b16 %v2432, %v2428
    %v2581 = vpack.c.b16 %v2433, %v2429
    %v2582 = vpack.c.b16 %v2438, %v2434
    %v2583 = vpack.c.b16 %v2439, %v2435
    %v2584 = vpack.c.b16 %v2440, %v2436
    %v2585 = vpack.c.b16 %v2441, %v2437
    %v2586 = vpack.c.b16 %v2446, %v2442
    %v2587 = vpack.c.b16 %v2447, %v2443
    %v2588 = vpack.c.b16 %v2448, %v2444
    %v2589 = vpack.c.b16 %v2449, %v2445
    %v2590 = vpack.c.b16 %v2454, %v2450
    %v2591 = vpack.c.b16 %v2455, %v2451
    %v2592 = vpack.c.b16 %v2456, %v2452
    %v2593 = vpack.c.b16 %v2457, %v2453
    %v2594 = vpack.c.b16 %v2462, %v2458
    %v2595 = vpack.c.b16 %v2463, %v2459
    %v2596 = vpack.c.b16 %v2464, %v2460
    %v2597 = vpack.c.b16 %v2465, %v2461
    %v2598 = vpack.c.b16 %v2470, %v2466
    %v2599 = vpack.c.b16 %v2471, %v2467
    %v2600 = vpack.c.b16 %v2472, %v2468
    %v2601 = vpack.c.b16 %v2473, %v2469
    %2730 = vmatpush.bf16.msra.mxu0 %v2502
    %2731 = vmatpush.bf16.msra.mxu0 %v2498
    %2732 = vmatpush.bf16.msra.mxu0 %v2494
    %2733 = vmatpush.bf16.msra.mxu0 %v2490
    %2734 = vmatpush.bf16.msra.mxu0 %v2486
    %2735 = vmatpush.bf16.msra.mxu0 %v2482
    %2736 = vmatpush.bf16.msra.mxu0 %v2478
    %2737 = vmatpush.bf16.msra.mxu0 %v2474
    %2738 = vmatmul.bf16.gmra.mxu0 %v1948
    %v2739 = vpop.f32.mrf.mxu0
    %v2740 = vadd.f32 %v2082, %v2739
    %v2741 = vpop.f32.mrf.mxu0
    %v2742 = vadd.f32 %v2082, %v2741
    %2743 = vdwg.mxu0
    %2744 = vmatpush.bf16.msra.mxu0 %v2534
    %2745 = vmatpush.bf16.msra.mxu0 %v2530
    %2746 = vmatpush.bf16.msra.mxu0 %v2526
    %2747 = vmatpush.bf16.msra.mxu0 %v2522
    %2748 = vmatpush.bf16.msra.mxu0 %v2518
    %2749 = vmatpush.bf16.msra.mxu0 %v2514
    %2750 = vmatpush.bf16.msra.mxu0 %v2510
    %2751 = vmatpush.bf16.msra.mxu0 %v2506
    %2752 = vmatmul.bf16.gmra.mxu0 %v1949
    %v2753 = vpop.f32.mrf.mxu0
    %v2754 = vadd.f32 %v2740, %v2753
    %v2755 = vpop.f32.mrf.mxu0
    %v2756 = vadd.f32 %v2742, %v2755
    %2757 = vdwg.mxu0
    %2758 = vmatpush.bf16.msra.mxu0 %v2566
    %2759 = vmatpush.bf16.msra.mxu0 %v2562
    %2760 = vmatpush.bf16.msra.mxu0 %v2558
    %2761 = vmatpush.bf16.msra.mxu0 %v2554
    %2762 = vmatpush.bf16.msra.mxu0 %v2550
    %2763 = vmatpush.bf16.msra.mxu0 %v2546
    %2764 = vmatpush.bf16.msra.mxu0 %v2542
    %2765 = vmatpush.bf16.msra.mxu0 %v2538
    %2766 = vmatmul.bf16.gmra.mxu0 %v1950
    %v2767 = vpop.f32.mrf.mxu0
    %v2768 = vadd.f32 %v2754, %v2767
    %v2769 = vpop.f32.mrf.mxu0
    %v2770 = vadd.f32 %v2756, %v2769
    %2771 = vdwg.mxu0
    %2772 = vmatpush.bf16.msra.mxu0 %v2598
    %2773 = vmatpush.bf16.msra.mxu0 %v2594
    %2774 = vmatpush.bf16.msra.mxu0 %v2590
    %2775 = vmatpush.bf16.msra.mxu0 %v2586
    %2776 = vmatpush.bf16.msra.mxu0 %v2582
    %2777 = vmatpush.bf16.msra.mxu0 %v2578
    %2778 = vmatpush.bf16.msra.mxu0 %v2574
    %2779 = vmatpush.bf16.msra.mxu0 %v2570
    %2780 = vmatmul.bf16.gmra.mxu0 %v1951
    %v2781 = vpop.f32.mrf.mxu0
    %v2782 = vadd.f32 %v2768, %v2781
    %v2783 = vpop.f32.mrf.mxu0
    %v2784 = vadd.f32 %v2770, %v2783
    %2785 = vdwg.mxu0
    %2786 = vmatpush.bf16.msra.mxu0 %v2503
    %2787 = vmatpush.bf16.msra.mxu0 %v2499
    %2788 = vmatpush.bf16.msra.mxu0 %v2495
    %2789 = vmatpush.bf16.msra.mxu0 %v2491
    %2790 = vmatpush.bf16.msra.mxu0 %v2487
    %2791 = vmatpush.bf16.msra.mxu0 %v2483
    %2792 = vmatpush.bf16.msra.mxu0 %v2479
    %2793 = vmatpush.bf16.msra.mxu0 %v2475
    %2794 = vmatmul.bf16.gmra.mxu0 %v1948
    %v2795 = vpop.f32.mrf.mxu0
    %v2796 = vadd.f32 %v2083, %v2795
    %v2797 = vpop.f32.mrf.mxu0
    %v2798 = vadd.f32 %v2083, %v2797
    %2799 = vdwg.mxu0
    %2800 = vmatpush.bf16.msra.mxu0 %v2535
    %2801 = vmatpush.bf16.msra.mxu0 %v2531
    %2802 = vmatpush.bf16.msra.mxu0 %v2527
    %2803 = vmatpush.bf16.msra.mxu0 %v2523
    %2804 = vmatpush.bf16.msra.mxu0 %v2519
    %2805 = vmatpush.bf16.msra.mxu0 %v2515
    %2806 = vmatpush.bf16.msra.mxu0 %v2511
    %2807 = vmatpush.bf16.msra.mxu0 %v2507
    %2808 = vmatmul.bf16.gmra.mxu0 %v1949
    %v2809 = vpop.f32.mrf.mxu0
    %v2810 = vadd.f32 %v2796, %v2809
    %v2811 = vpop.f32.mrf.mxu0
    %v2812 = vadd.f32 %v2798, %v2811
    %2813 = vdwg.mxu0
    %2814 = vmatpush.bf16.msra.mxu0 %v2567
    %2815 = vmatpush.bf16.msra.mxu0 %v2563
    %2816 = vmatpush.bf16.msra.mxu0 %v2559
    %2817 = vmatpush.bf16.msra.mxu0 %v2555
    %2818 = vmatpush.bf16.msra.mxu0 %v2551
    %2819 = vmatpush.bf16.msra.mxu0 %v2547
    %2820 = vmatpush.bf16.msra.mxu0 %v2543
    %2821 = vmatpush.bf16.msra.mxu0 %v2539
    %2822 = vmatmul.bf16.gmra.mxu0 %v1950
    %v2823 = vpop.f32.mrf.mxu0
    %v2824 = vadd.f32 %v2810, %v2823
    %v2825 = vpop.f32.mrf.mxu0
    %v2826 = vadd.f32 %v2812, %v2825
    %2827 = vdwg.mxu0
    %2828 = vmatpush.bf16.msra.mxu0 %v2599
    %2829 = vmatpush.bf16.msra.mxu0 %v2595
    %2830 = vmatpush.bf16.msra.mxu0 %v2591
    %2831 = vmatpush.bf16.msra.mxu0 %v2587
    %2832 = vmatpush.bf16.msra.mxu0 %v2583
    %2833 = vmatpush.bf16.msra.mxu0 %v2579
    %2834 = vmatpush.bf16.msra.mxu0 %v2575
    %2835 = vmatpush.bf16.msra.mxu0 %v2571
    %2836 = vmatmul.bf16.gmra.mxu0 %v1951
    %v2837 = vpop.f32.mrf.mxu0
    %v2838 = vadd.f32 %v2824, %v2837
    %v2839 = vpop.f32.mrf.mxu0
    %v2840 = vadd.f32 %v2826, %v2839
    %2841 = vdwg.mxu0
    %2842 = vmatpush.bf16.msra.mxu0 %v2504
    %2843 = vmatpush.bf16.msra.mxu0 %v2500
    %2844 = vmatpush.bf16.msra.mxu0 %v2496
    %2845 = vmatpush.bf16.msra.mxu0 %v2492
    %2846 = vmatpush.bf16.msra.mxu0 %v2488
    %2847 = vmatpush.bf16.msra.mxu0 %v2484
    %2848 = vmatpush.bf16.msra.mxu0 %v2480
    %2849 = vmatpush.bf16.msra.mxu0 %v2476
    %2850 = vmatmul.bf16.gmra.mxu0 %v1948
    %v2851 = vpop.f32.mrf.mxu0
    %v2852 = vadd.f32 %v2084, %v2851
    %v2853 = vpop.f32.mrf.mxu0
    %v2854 = vadd.f32 %v2084, %v2853
    %2855 = vdwg.mxu0
    %2856 = vmatpush.bf16.msra.mxu0 %v2536
    %2857 = vmatpush.bf16.msra.mxu0 %v2532
    %2858 = vmatpush.bf16.msra.mxu0 %v2528
    %2859 = vmatpush.bf16.msra.mxu0 %v2524
    %2860 = vmatpush.bf16.msra.mxu0 %v2520
    %2861 = vmatpush.bf16.msra.mxu0 %v2516
    %2862 = vmatpush.bf16.msra.mxu0 %v2512
    %2863 = vmatpush.bf16.msra.mxu0 %v2508
    %2864 = vmatmul.bf16.gmra.mxu0 %v1949
    %v2865 = vpop.f32.mrf.mxu0
    %v2866 = vadd.f32 %v2852, %v2865
    %v2867 = vpop.f32.mrf.mxu0
    %v2868 = vadd.f32 %v2854, %v2867
    %2869 = vdwg.mxu0
    %2870 = vmatpush.bf16.msra.mxu0 %v2568
    %2871 = vmatpush.bf16.msra.mxu0 %v2564
    %2872 = vmatpush.bf16.msra.mxu0 %v2560
    %2873 = vmatpush.bf16.msra.mxu0 %v2556
    %2874 = vmatpush.bf16.msra.mxu0 %v2552
    %2875 = vmatpush.bf16.msra.mxu0 %v2548
    %2876 = vmatpush.bf16.msra.mxu0 %v2544
    %2877 = vmatpush.bf16.msra.mxu0 %v2540
    %2878 = vmatmul.bf16.gmra.mxu0 %v1950
    %v2879 = vpop.f32.mrf.mxu0
    %v2880 = vadd.f32 %v2866, %v2879
    %v2881 = vpop.f32.mrf.mxu0
    %v2882 = vadd.f32 %v2868, %v2881
    %2883 = vdwg.mxu0
    %2884 = vmatpush.bf16.msra.mxu0 %v2600
    %2885 = vmatpush.bf16.msra.mxu0 %v2596
    %2886 = vmatpush.bf16.msra.mxu0 %v2592
    %2887 = vmatpush.bf16.msra.mxu0 %v2588
    %2888 = vmatpush.bf16.msra.mxu0 %v2584
    %2889 = vmatpush.bf16.msra.mxu0 %v2580
    %2890 = vmatpush.bf16.msra.mxu0 %v2576
    %2891 = vmatpush.bf16.msra.mxu0 %v2572
    %2892 = vmatmul.bf16.gmra.mxu0 %v1951
    %v2893 = vpop.f32.mrf.mxu0
    %v2894 = vadd.f32 %v2880, %v2893
    %v2895 = vpop.f32.mrf.mxu0
    %v2896 = vadd.f32 %v2882, %v2895
    %2897 = vdwg.mxu0
    %2898 = vmatpush.bf16.msra.mxu0 %v2505
    %2899 = vmatpush.bf16.msra.mxu0 %v2501
    %2900 = vmatpush.bf16.msra.mxu0 %v2497
    %2901 = vmatpush.bf16.msra.mxu0 %v2493
    %2902 = vmatpush.bf16.msra.mxu0 %v2489
    %2903 = vmatpush.bf16.msra.mxu0 %v2485
    %2904 = vmatpush.bf16.msra.mxu0 %v2481
    %2905 = vmatpush.bf16.msra.mxu0 %v2477
    %2906 = vmatmul.bf16.gmra.mxu0 %v1948
    %v2907 = vpop.f32.mrf.mxu0
    %v2908 = vadd.f32 %v2085, %v2907
    %v2909 = vpop.f32.mrf.mxu0
    %v2910 = vadd.f32 %v2085, %v2909
    %2911 = vdwg.mxu0
    %2912 = vmatpush.bf16.msra.mxu0 %v2537
    %2913 = vmatpush.bf16.msra.mxu0 %v2533
    %2914 = vmatpush.bf16.msra.mxu0 %v2529
    %2915 = vmatpush.bf16.msra.mxu0 %v2525
    %2916 = vmatpush.bf16.msra.mxu0 %v2521
    %2917 = vmatpush.bf16.msra.mxu0 %v2517
    %2918 = vmatpush.bf16.msra.mxu0 %v2513
    %2919 = vmatpush.bf16.msra.mxu0 %v2509
    %2920 = vmatmul.bf16.gmra.mxu0 %v1949
    %v2921 = vpop.f32.mrf.mxu0
    %v2922 = vadd.f32 %v2908, %v2921
    %v2923 = vpop.f32.mrf.mxu0
    %v2924 = vadd.f32 %v2910, %v2923
    %2925 = vdwg.mxu0
    %2926 = vmatpush.bf16.msra.mxu0 %v2569
    %2927 = vmatpush.bf16.msra.mxu0 %v2565
    %2928 = vmatpush.bf16.msra.mxu0 %v2561
    %2929 = vmatpush.bf16.msra.mxu0 %v2557
    %2930 = vmatpush.bf16.msra.mxu0 %v2553
    %2931 = vmatpush.bf16.msra.mxu0 %v2549
    %2932 = vmatpush.bf16.msra.mxu0 %v2545
    %2933 = vmatpush.bf16.msra.mxu0 %v2541
    %2934 = vmatmul.bf16.gmra.mxu0 %v1950
    %v2935 = vpop.f32.mrf.mxu0
    %v2936 = vadd.f32 %v2922, %v2935
    %v2937 = vpop.f32.mrf.mxu0
    %v2938 = vadd.f32 %v2924, %v2937
    %2939 = vdwg.mxu0
    %2940 = vmatpush.bf16.msra.mxu0 %v2601
    %2941 = vmatpush.bf16.msra.mxu0 %v2597
    %2942 = vmatpush.bf16.msra.mxu0 %v2593
    %2943 = vmatpush.bf16.msra.mxu0 %v2589
    %2944 = vmatpush.bf16.msra.mxu0 %v2585
    %2945 = vmatpush.bf16.msra.mxu0 %v2581
    %2946 = vmatpush.bf16.msra.mxu0 %v2577
    %2947 = vmatpush.bf16.msra.mxu0 %v2573
    %2948 = vmatmul.bf16.gmra.mxu0 %v1951
    %v2949 = vpop.f32.mrf.mxu0
    %v2950 = vadd.f32 %v2936, %v2949
    %v2951 = vpop.f32.mrf.mxu0
    %v2952 = vadd.f32 %v2938, %v2951
    %2953 = vdwg.mxu0
    %v2954 = vmax.f32 %v2782, 0.0
    %v2955 = vmax.f32 %v2838, 0.0
    %v2956 = vmax.f32 %v2894, 0.0
    %v2957 = vmax.f32 %v2950, 0.0
    %v2958 = vmax.f32 %v2784, 0.0
    %v2959 = vmax.f32 %v2840, 0.0
    %v2960 = vmax.f32 %v2896, 0.0
    %v2961 = vmax.f32 %v2952, 0.0
    %v2962 = vpack.c.bf16 %v2958, %v2954
    %v2963 = vpack.c.bf16 %v2959, %v2955
    %v2964 = vpack.c.bf16 %v2960, %v2956
    %v2965 = vpack.c.bf16 %v2961, %v2957
    %v2966 = vld [vmem:[#allocation11] sm:$0xff]
    %v2967 = vld [vmem:[#allocation11 + $0x8] sm:$0xff]
    %v2968 = vld [vmem:[#allocation11 + $0x10] sm:$0xff]
    %v2969 = vld [vmem:[#allocation11 + $0x18] sm:$0xff]
    %v2970 = vld [vmem:[#allocation11 + $0x20] sm:$0xff]
    %v2971 = vld [vmem:[#allocation11 + $0x28] sm:$0xff]
    %v2972 = vld [vmem:[#allocation11 + $0x30] sm:$0xff]
    %v2973 = vld [vmem:[#allocation11 + $0x38] sm:$0xff]
    %v2974 = vld [vmem:[#allocation11 + $0x40] sm:$0xff]
    %v2975 = vld [vmem:[#allocation11 + $0x48] sm:$0xff]
    %v2976 = vld [vmem:[#allocation11 + $0x50] sm:$0xff]
    %v2977 = vld [vmem:[#allocation11 + $0x58] sm:$0xff]
    %v2978 = vld [vmem:[#allocation11 + $0x60] sm:$0xff]
    %v2979 = vld [vmem:[#allocation11 + $0x68] sm:$0xff]
    %v2980 = vld [vmem:[#allocation11 + $0x70] sm:$0xff]
    %v2981 = vld [vmem:[#allocation11 + $0x78] sm:$0xff]
    %v2982 = vld [vmem:[#allocation11 + $0x80] sm:$0xff]
    %v2983 = vld [vmem:[#allocation11 + $0x88] sm:$0xff]
    %v2984 = vld [vmem:[#allocation11 + $0x90] sm:$0xff]
    %v2985 = vld [vmem:[#allocation11 + $0x98] sm:$0xff]
    %v2986 = vld [vmem:[#allocation11 + $0xa0] sm:$0xff]
    %v2987 = vld [vmem:[#allocation11 + $0xa8] sm:$0xff]
    %v2988 = vld [vmem:[#allocation11 + $0xb0] sm:$0xff]
    %v2989 = vld [vmem:[#allocation11 + $0xb8] sm:$0xff]
    %v2990 = vld [vmem:[#allocation11 + $0xc0] sm:$0xff]
    %v2991 = vld [vmem:[#allocation11 + $0xc8] sm:$0xff]
    %v2992 = vld [vmem:[#allocation11 + $0xd0] sm:$0xff]
    %v2993 = vld [vmem:[#allocation11 + $0xd8] sm:$0xff]
    %v2994 = vld [vmem:[#allocation11 + $0xe0] sm:$0xff]
    %v2995 = vld [vmem:[#allocation11 + $0xe8] sm:$0xff]
    %v2996 = vld [vmem:[#allocation11 + $0xf0] sm:$0xff]
    %v2997 = vld [vmem:[#allocation11 + $0xf8] sm:$0xff]
    %v2998 = vld [vmem:[#allocation11 + $0x100] sm:$0xff]
    %v2999 = vld [vmem:[#allocation11 + $0x108] sm:$0xff]
    %v3000 = vld [vmem:[#allocation11 + $0x110] sm:$0xff]
    %v3001 = vld [vmem:[#allocation11 + $0x118] sm:$0xff]
    %v3002 = vld [vmem:[#allocation11 + $0x120] sm:$0xff]
    %v3003 = vld [vmem:[#allocation11 + $0x128] sm:$0xff]
    %v3004 = vld [vmem:[#allocation11 + $0x130] sm:$0xff]
    %v3005 = vld [vmem:[#allocation11 + $0x138] sm:$0xff]
    %v3006 = vld [vmem:[#allocation11 + $0x140] sm:$0xff]
    %v3007 = vld [vmem:[#allocation11 + $0x148] sm:$0xff]
    %v3008 = vld [vmem:[#allocation11 + $0x150] sm:$0xff]
    %v3009 = vld [vmem:[#allocation11 + $0x158] sm:$0xff]
    %v3010 = vld [vmem:[#allocation11 + $0x160] sm:$0xff]
    %v3011 = vld [vmem:[#allocation11 + $0x168] sm:$0xff]
    %v3012 = vld [vmem:[#allocation11 + $0x170] sm:$0xff]
    %v3013 = vld [vmem:[#allocation11 + $0x178] sm:$0xff]
    %v3014 = vld [vmem:[#allocation11 + $0x180] sm:$0xff]
    %v3015 = vld [vmem:[#allocation11 + $0x188] sm:$0xff]
    %v3016 = vld [vmem:[#allocation11 + $0x190] sm:$0xff]
    %v3017 = vld [vmem:[#allocation11 + $0x198] sm:$0xff]
    %v3018 = vld [vmem:[#allocation11 + $0x1a0] sm:$0xff]
    %v3019 = vld [vmem:[#allocation11 + $0x1a8] sm:$0xff]
    %v3020 = vld [vmem:[#allocation11 + $0x1b0] sm:$0xff]
    %v3021 = vld [vmem:[#allocation11 + $0x1b8] sm:$0xff]
    %v3022 = vld [vmem:[#allocation11 + $0x1c0] sm:$0xff]
    %v3023 = vld [vmem:[#allocation11 + $0x1c8] sm:$0xff]
    %v3024 = vld [vmem:[#allocation11 + $0x1d0] sm:$0xff]
    %v3025 = vld [vmem:[#allocation11 + $0x1d8] sm:$0xff]
    %v3026 = vld [vmem:[#allocation11 + $0x1e0] sm:$0xff]
    %v3027 = vld [vmem:[#allocation11 + $0x1e8] sm:$0xff]
    %v3028 = vld [vmem:[#allocation11 + $0x1f0] sm:$0xff]
    %v3029 = vld [vmem:[#allocation11 + $0x1f8] sm:$0xff]
    %v3030 = vld [vmem:[#allocation11 + $0x200] sm:$0xff]
    %v3031 = vld [vmem:[#allocation11 + $0x208] sm:$0xff]
    %v3032 = vld [vmem:[#allocation11 + $0x210] sm:$0xff]
    %v3033 = vld [vmem:[#allocation11 + $0x218] sm:$0xff]
    %v3034 = vld [vmem:[#allocation11 + $0x220] sm:$0xff]
    %v3035 = vld [vmem:[#allocation11 + $0x228] sm:$0xff]
    %v3036 = vld [vmem:[#allocation11 + $0x230] sm:$0xff]
    %v3037 = vld [vmem:[#allocation11 + $0x238] sm:$0xff]
    %v3038 = vld [vmem:[#allocation11 + $0x240] sm:$0xff]
    %v3039 = vld [vmem:[#allocation11 + $0x248] sm:$0xff]
    %v3040 = vld [vmem:[#allocation11 + $0x250] sm:$0xff]
    %v3041 = vld [vmem:[#allocation11 + $0x258] sm:$0xff]
    %v3042 = vld [vmem:[#allocation11 + $0x260] sm:$0xff]
    %v3043 = vld [vmem:[#allocation11 + $0x268] sm:$0xff]
    %v3044 = vld [vmem:[#allocation11 + $0x270] sm:$0xff]
    %v3045 = vld [vmem:[#allocation11 + $0x278] sm:$0xff]
    %v3046 = vld [vmem:[#allocation11 + $0x280] sm:$0xff]
    %v3047 = vld [vmem:[#allocation11 + $0x288] sm:$0xff]
    %v3048 = vld [vmem:[#allocation11 + $0x290] sm:$0xff]
    %v3049 = vld [vmem:[#allocation11 + $0x298] sm:$0xff]
    %v3050 = vld [vmem:[#allocation11 + $0x2a0] sm:$0xff]
    %v3051 = vld [vmem:[#allocation11 + $0x2a8] sm:$0xff]
    %v3052 = vld [vmem:[#allocation11 + $0x2b0] sm:$0xff]
    %v3053 = vld [vmem:[#allocation11 + $0x2b8] sm:$0xff]
    %v3054 = vld [vmem:[#allocation11 + $0x2c0] sm:$0xff]
    %v3055 = vld [vmem:[#allocation11 + $0x2c8] sm:$0xff]
    %v3056 = vld [vmem:[#allocation11 + $0x2d0] sm:$0xff]
    %v3057 = vld [vmem:[#allocation11 + $0x2d8] sm:$0xff]
    %v3058 = vld [vmem:[#allocation11 + $0x2e0] sm:$0xff]
    %v3059 = vld [vmem:[#allocation11 + $0x2e8] sm:$0xff]
    %v3060 = vld [vmem:[#allocation11 + $0x2f0] sm:$0xff]
    %v3061 = vld [vmem:[#allocation11 + $0x2f8] sm:$0xff]
    %v3062 = vld [vmem:[#allocation11 + $0x300] sm:$0xff]
    %v3063 = vld [vmem:[#allocation11 + $0x308] sm:$0xff]
    %v3064 = vld [vmem:[#allocation11 + $0x310] sm:$0xff]
    %v3065 = vld [vmem:[#allocation11 + $0x318] sm:$0xff]
    %v3066 = vld [vmem:[#allocation11 + $0x320] sm:$0xff]
    %v3067 = vld [vmem:[#allocation11 + $0x328] sm:$0xff]
    %v3068 = vld [vmem:[#allocation11 + $0x330] sm:$0xff]
    %v3069 = vld [vmem:[#allocation11 + $0x338] sm:$0xff]
    %v3070 = vld [vmem:[#allocation11 + $0x340] sm:$0xff]
    %v3071 = vld [vmem:[#allocation11 + $0x348] sm:$0xff]
    %v3072 = vld [vmem:[#allocation11 + $0x350] sm:$0xff]
    %v3073 = vld [vmem:[#allocation11 + $0x358] sm:$0xff]
    %v3074 = vld [vmem:[#allocation11 + $0x360] sm:$0xff]
    %v3075 = vld [vmem:[#allocation11 + $0x368] sm:$0xff]
    %v3076 = vld [vmem:[#allocation11 + $0x370] sm:$0xff]
    %v3077 = vld [vmem:[#allocation11 + $0x378] sm:$0xff]
    %v3078 = vld [vmem:[#allocation11 + $0x380] sm:$0xff]
    %v3079 = vld [vmem:[#allocation11 + $0x388] sm:$0xff]
    %v3080 = vld [vmem:[#allocation11 + $0x390] sm:$0xff]
    %v3081 = vld [vmem:[#allocation11 + $0x398] sm:$0xff]
    %v3082 = vld [vmem:[#allocation11 + $0x3a0] sm:$0xff]
    %v3083 = vld [vmem:[#allocation11 + $0x3a8] sm:$0xff]
    %v3084 = vld [vmem:[#allocation11 + $0x3b0] sm:$0xff]
    %v3085 = vld [vmem:[#allocation11 + $0x3b8] sm:$0xff]
    %v3086 = vld [vmem:[#allocation11 + $0x3c0] sm:$0xff]
    %v3087 = vld [vmem:[#allocation11 + $0x3c8] sm:$0xff]
    %v3088 = vld [vmem:[#allocation11 + $0x3d0] sm:$0xff]
    %v3089 = vld [vmem:[#allocation11 + $0x3d8] sm:$0xff]
    %v3090 = vld [vmem:[#allocation11 + $0x3e0] sm:$0xff]
    %v3091 = vld [vmem:[#allocation11 + $0x3e8] sm:$0xff]
    %v3092 = vld [vmem:[#allocation11 + $0x3f0] sm:$0xff]
    %v3093 = vld [vmem:[#allocation11 + $0x3f8] sm:$0xff]
    %v3094 = vld [vmem:[#allocation11 + $0x400] sm:$0xff]
    %v3095 = vld [vmem:[#allocation11 + $0x408] sm:$0xff]
    %v3096 = vld [vmem:[#allocation11 + $0x410] sm:$0xff]
    %v3097 = vld [vmem:[#allocation11 + $0x418] sm:$0xff]
    %v3098 = vld [vmem:[#allocation11 + $0x420] sm:$0xff]
    %v3099 = vld [vmem:[#allocation11 + $0x428] sm:$0xff]
    %v3100 = vld [vmem:[#allocation11 + $0x430] sm:$0xff]
    %v3101 = vld [vmem:[#allocation11 + $0x438] sm:$0xff]
    %v3102 = vld [vmem:[#allocation11 + $0x440] sm:$0xff]
    %v3103 = vld [vmem:[#allocation11 + $0x448] sm:$0xff]
    %v3104 = vld [vmem:[#allocation11 + $0x450] sm:$0xff]
    %v3105 = vld [vmem:[#allocation11 + $0x458] sm:$0xff]
    %v3106 = vld [vmem:[#allocation11 + $0x460] sm:$0xff]
    %v3107 = vld [vmem:[#allocation11 + $0x468] sm:$0xff]
    %v3108 = vld [vmem:[#allocation11 + $0x470] sm:$0xff]
    %v3109 = vld [vmem:[#allocation11 + $0x478] sm:$0xff]
    %v3110 = vld [vmem:[#allocation11 + $0x480] sm:$0xff]
    %v3111 = vld [vmem:[#allocation11 + $0x488] sm:$0xff]
    %v3112 = vld [vmem:[#allocation11 + $0x490] sm:$0xff]
    %v3113 = vld [vmem:[#allocation11 + $0x498] sm:$0xff]
    %v3114 = vld [vmem:[#allocation11 + $0x4a0] sm:$0xff]
    %v3115 = vld [vmem:[#allocation11 + $0x4a8] sm:$0xff]
    %v3116 = vld [vmem:[#allocation11 + $0x4b0] sm:$0xff]
    %v3117 = vld [vmem:[#allocation11 + $0x4b8] sm:$0xff]
    %v3118 = vld [vmem:[#allocation11 + $0x4c0] sm:$0xff]
    %v3119 = vld [vmem:[#allocation11 + $0x4c8] sm:$0xff]
    %v3120 = vld [vmem:[#allocation11 + $0x4d0] sm:$0xff]
    %v3121 = vld [vmem:[#allocation11 + $0x4d8] sm:$0xff]
    %v3122 = vld [vmem:[#allocation11 + $0x4e0] sm:$0xff]
    %v3123 = vld [vmem:[#allocation11 + $0x4e8] sm:$0xff]
    %v3124 = vld [vmem:[#allocation11 + $0x4f0] sm:$0xff]
    %v3125 = vld [vmem:[#allocation11 + $0x4f8] sm:$0xff]
    %v3126 = vld [vmem:[#allocation11 + $0x500] sm:$0xff]
    %v3127 = vld [vmem:[#allocation11 + $0x508] sm:$0xff]
    %v3128 = vld [vmem:[#allocation11 + $0x510] sm:$0xff]
    %v3129 = vld [vmem:[#allocation11 + $0x518] sm:$0xff]
    %v3130 = vld [vmem:[#allocation11 + $0x520] sm:$0xff]
    %v3131 = vld [vmem:[#allocation11 + $0x528] sm:$0xff]
    %v3132 = vld [vmem:[#allocation11 + $0x530] sm:$0xff]
    %v3133 = vld [vmem:[#allocation11 + $0x538] sm:$0xff]
    %v3134 = vld [vmem:[#allocation11 + $0x540] sm:$0xff]
    %v3135 = vld [vmem:[#allocation11 + $0x548] sm:$0xff]
    %v3136 = vld [vmem:[#allocation11 + $0x550] sm:$0xff]
    %v3137 = vld [vmem:[#allocation11 + $0x558] sm:$0xff]
    %v3138 = vld [vmem:[#allocation11 + $0x560] sm:$0xff]
    %v3139 = vld [vmem:[#allocation11 + $0x568] sm:$0xff]
    %v3140 = vld [vmem:[#allocation11 + $0x570] sm:$0xff]
    %v3141 = vld [vmem:[#allocation11 + $0x578] sm:$0xff]
    %v3142 = vld [vmem:[#allocation11 + $0x580] sm:$0xff]
    %v3143 = vld [vmem:[#allocation11 + $0x588] sm:$0xff]
    %v3144 = vld [vmem:[#allocation11 + $0x590] sm:$0xff]
    %v3145 = vld [vmem:[#allocation11 + $0x598] sm:$0xff]
    %v3146 = vld [vmem:[#allocation11 + $0x5a0] sm:$0xff]
    %v3147 = vld [vmem:[#allocation11 + $0x5a8] sm:$0xff]
    %v3148 = vld [vmem:[#allocation11 + $0x5b0] sm:$0xff]
    %v3149 = vld [vmem:[#allocation11 + $0x5b8] sm:$0xff]
    %v3150 = vld [vmem:[#allocation11 + $0x5c0] sm:$0xff]
    %v3151 = vld [vmem:[#allocation11 + $0x5c8] sm:$0xff]
    %v3152 = vld [vmem:[#allocation11 + $0x5d0] sm:$0xff]
    %v3153 = vld [vmem:[#allocation11 + $0x5d8] sm:$0xff]
    %v3154 = vld [vmem:[#allocation11 + $0x5e0] sm:$0xff]
    %v3155 = vld [vmem:[#allocation11 + $0x5e8] sm:$0xff]
    %v3156 = vld [vmem:[#allocation11 + $0x5f0] sm:$0xff]
    %v3157 = vld [vmem:[#allocation11 + $0x5f8] sm:$0xff]
    %v3158 = vld [vmem:[#allocation11 + $0x600] sm:$0xff]
    %v3159 = vld [vmem:[#allocation11 + $0x608] sm:$0xff]
    %v3160 = vld [vmem:[#allocation11 + $0x610] sm:$0xff]
    %v3161 = vld [vmem:[#allocation11 + $0x618] sm:$0xff]
    %v3162 = vld [vmem:[#allocation11 + $0x620] sm:$0xff]
    %v3163 = vld [vmem:[#allocation11 + $0x628] sm:$0xff]
    %v3164 = vld [vmem:[#allocation11 + $0x630] sm:$0xff]
    %v3165 = vld [vmem:[#allocation11 + $0x638] sm:$0xff]
    %v3166 = vld [vmem:[#allocation11 + $0x640] sm:$0xff]
    %v3167 = vld [vmem:[#allocation11 + $0x648] sm:$0xff]
    %v3168 = vld [vmem:[#allocation11 + $0x650] sm:$0xff]
    %v3169 = vld [vmem:[#allocation11 + $0x658] sm:$0xff]
    %v3170 = vld [vmem:[#allocation11 + $0x660] sm:$0xff]
    %v3171 = vld [vmem:[#allocation11 + $0x668] sm:$0xff]
    %v3172 = vld [vmem:[#allocation11 + $0x670] sm:$0xff]
    %v3173 = vld [vmem:[#allocation11 + $0x678] sm:$0xff]
    %v3174 = vld [vmem:[#allocation11 + $0x680] sm:$0xff]
    %v3175 = vld [vmem:[#allocation11 + $0x688] sm:$0xff]
    %v3176 = vld [vmem:[#allocation11 + $0x690] sm:$0xff]
    %v3177 = vld [vmem:[#allocation11 + $0x698] sm:$0xff]
    %v3178 = vld [vmem:[#allocation11 + $0x6a0] sm:$0xff]
    %v3179 = vld [vmem:[#allocation11 + $0x6a8] sm:$0xff]
    %v3180 = vld [vmem:[#allocation11 + $0x6b0] sm:$0xff]
    %v3181 = vld [vmem:[#allocation11 + $0x6b8] sm:$0xff]
    %v3182 = vld [vmem:[#allocation11 + $0x6c0] sm:$0xff]
    %v3183 = vld [vmem:[#allocation11 + $0x6c8] sm:$0xff]
    %v3184 = vld [vmem:[#allocation11 + $0x6d0] sm:$0xff]
    %v3185 = vld [vmem:[#allocation11 + $0x6d8] sm:$0xff]
    %v3186 = vld [vmem:[#allocation11 + $0x6e0] sm:$0xff]
    %v3187 = vld [vmem:[#allocation11 + $0x6e8] sm:$0xff]
    %v3188 = vld [vmem:[#allocation11 + $0x6f0] sm:$0xff]
    %v3189 = vld [vmem:[#allocation11 + $0x6f8] sm:$0xff]
    %v3190 = vld [vmem:[#allocation11 + $0x700] sm:$0xff]
    %v3191 = vld [vmem:[#allocation11 + $0x708] sm:$0xff]
    %v3192 = vld [vmem:[#allocation11 + $0x710] sm:$0xff]
    %v3193 = vld [vmem:[#allocation11 + $0x718] sm:$0xff]
    %v3194 = vld [vmem:[#allocation11 + $0x720] sm:$0xff]
    %v3195 = vld [vmem:[#allocation11 + $0x728] sm:$0xff]
    %v3196 = vld [vmem:[#allocation11 + $0x730] sm:$0xff]
    %v3197 = vld [vmem:[#allocation11 + $0x738] sm:$0xff]
    %v3198 = vld [vmem:[#allocation11 + $0x740] sm:$0xff]
    %v3199 = vld [vmem:[#allocation11 + $0x748] sm:$0xff]
    %v3200 = vld [vmem:[#allocation11 + $0x750] sm:$0xff]
    %v3201 = vld [vmem:[#allocation11 + $0x758] sm:$0xff]
    %v3202 = vld [vmem:[#allocation11 + $0x760] sm:$0xff]
    %v3203 = vld [vmem:[#allocation11 + $0x768] sm:$0xff]
    %v3204 = vld [vmem:[#allocation11 + $0x770] sm:$0xff]
    %v3205 = vld [vmem:[#allocation11 + $0x778] sm:$0xff]
    %v3206 = vld [vmem:[#allocation11 + $0x780] sm:$0xff]
    %v3207 = vld [vmem:[#allocation11 + $0x788] sm:$0xff]
    %v3208 = vld [vmem:[#allocation11 + $0x790] sm:$0xff]
    %v3209 = vld [vmem:[#allocation11 + $0x798] sm:$0xff]
    %v3210 = vld [vmem:[#allocation11 + $0x7a0] sm:$0xff]
    %v3211 = vld [vmem:[#allocation11 + $0x7a8] sm:$0xff]
    %v3212 = vld [vmem:[#allocation11 + $0x7b0] sm:$0xff]
    %v3213 = vld [vmem:[#allocation11 + $0x7b8] sm:$0xff]
    %v3214 = vld [vmem:[#allocation11 + $0x7c0] sm:$0xff]
    %v3215 = vld [vmem:[#allocation11 + $0x7c8] sm:$0xff]
    %v3216 = vld [vmem:[#allocation11 + $0x7d0] sm:$0xff]
    %v3217 = vld [vmem:[#allocation11 + $0x7d8] sm:$0xff]
    %v3218 = vld [vmem:[#allocation11 + $0x7e0] sm:$0xff]
    %v3219 = vld [vmem:[#allocation11 + $0x7e8] sm:$0xff]
    %v3220 = vld [vmem:[#allocation11 + $0x7f0] sm:$0xff]
    %v3221 = vld [vmem:[#allocation11 + $0x7f8] sm:$0xff]
    %v3222 = vld [vmem:[#allocation11 + $0x800] sm:$0xff]
    %v3223 = vld [vmem:[#allocation11 + $0x808] sm:$0xff]
    %v3224 = vld [vmem:[#allocation11 + $0x810] sm:$0xff]
    %v3225 = vld [vmem:[#allocation11 + $0x818] sm:$0xff]
    %v3226 = vld [vmem:[#allocation11 + $0x820] sm:$0xff]
    %v3227 = vld [vmem:[#allocation11 + $0x828] sm:$0xff]
    %v3228 = vld [vmem:[#allocation11 + $0x830] sm:$0xff]
    %v3229 = vld [vmem:[#allocation11 + $0x838] sm:$0xff]
    %v3230 = vld [vmem:[#allocation11 + $0x840] sm:$0xff]
    %v3231 = vld [vmem:[#allocation11 + $0x848] sm:$0xff]
    %v3232 = vld [vmem:[#allocation11 + $0x850] sm:$0xff]
    %v3233 = vld [vmem:[#allocation11 + $0x858] sm:$0xff]
    %v3234 = vld [vmem:[#allocation11 + $0x860] sm:$0xff]
    %v3235 = vld [vmem:[#allocation11 + $0x868] sm:$0xff]
    %v3236 = vld [vmem:[#allocation11 + $0x870] sm:$0xff]
    %v3237 = vld [vmem:[#allocation11 + $0x878] sm:$0xff]
    %v3238 = vld [vmem:[#allocation11 + $0x880] sm:$0xff]
    %v3239 = vld [vmem:[#allocation11 + $0x888] sm:$0xff]
    %v3240 = vld [vmem:[#allocation11 + $0x890] sm:$0xff]
    %v3241 = vld [vmem:[#allocation11 + $0x898] sm:$0xff]
    %v3242 = vld [vmem:[#allocation11 + $0x8a0] sm:$0xff]
    %v3243 = vld [vmem:[#allocation11 + $0x8a8] sm:$0xff]
    %v3244 = vld [vmem:[#allocation11 + $0x8b0] sm:$0xff]
    %v3245 = vld [vmem:[#allocation11 + $0x8b8] sm:$0xff]
    %v3246 = vld [vmem:[#allocation11 + $0x8c0] sm:$0xff]
    %v3247 = vld [vmem:[#allocation11 + $0x8c8] sm:$0xff]
    %v3248 = vld [vmem:[#allocation11 + $0x8d0] sm:$0xff]
    %v3249 = vld [vmem:[#allocation11 + $0x8d8] sm:$0xff]
    %v3250 = vld [vmem:[#allocation11 + $0x8e0] sm:$0xff]
    %v3251 = vld [vmem:[#allocation11 + $0x8e8] sm:$0xff]
    %v3252 = vld [vmem:[#allocation11 + $0x8f0] sm:$0xff]
    %v3253 = vld [vmem:[#allocation11 + $0x8f8] sm:$0xff]
    %v3254 = vld [vmem:[#allocation11 + $0x900] sm:$0xff]
    %v3255 = vld [vmem:[#allocation11 + $0x908] sm:$0xff]
    %v3256 = vld [vmem:[#allocation11 + $0x910] sm:$0xff]
    %v3257 = vld [vmem:[#allocation11 + $0x918] sm:$0xff]
    %v3258 = vld [vmem:[#allocation11 + $0x920] sm:$0xff]
    %v3259 = vld [vmem:[#allocation11 + $0x928] sm:$0xff]
    %v3260 = vld [vmem:[#allocation11 + $0x930] sm:$0xff]
    %v3261 = vld [vmem:[#allocation11 + $0x938] sm:$0xff]
    %v3262 = vld [vmem:[#allocation11 + $0x940] sm:$0xff]
    %v3263 = vld [vmem:[#allocation11 + $0x948] sm:$0xff]
    %v3264 = vld [vmem:[#allocation11 + $0x950] sm:$0xff]
    %v3265 = vld [vmem:[#allocation11 + $0x958] sm:$0xff]
    %v3266 = vld [vmem:[#allocation11 + $0x960] sm:$0xff]
    %v3267 = vld [vmem:[#allocation11 + $0x968] sm:$0xff]
    %v3268 = vld [vmem:[#allocation11 + $0x970] sm:$0xff]
    %v3269 = vld [vmem:[#allocation11 + $0x978] sm:$0xff]
    %v3270 = vld [vmem:[#allocation11 + $0x980] sm:$0xff]
    %v3271 = vld [vmem:[#allocation11 + $0x988] sm:$0xff]
    %v3272 = vld [vmem:[#allocation11 + $0x990] sm:$0xff]
    %v3273 = vld [vmem:[#allocation11 + $0x998] sm:$0xff]
    %v3274 = vld [vmem:[#allocation11 + $0x9a0] sm:$0xff]
    %v3275 = vld [vmem:[#allocation11 + $0x9a8] sm:$0xff]
    %v3276 = vld [vmem:[#allocation11 + $0x9b0] sm:$0xff]
    %v3277 = vld [vmem:[#allocation11 + $0x9b8] sm:$0xff]
    %v3278 = vld [vmem:[#allocation11 + $0x9c0] sm:$0xff]
    %v3279 = vld [vmem:[#allocation11 + $0x9c8] sm:$0xff]
    %v3280 = vld [vmem:[#allocation11 + $0x9d0] sm:$0xff]
    %v3281 = vld [vmem:[#allocation11 + $0x9d8] sm:$0xff]
    %v3282 = vld [vmem:[#allocation11 + $0x9e0] sm:$0xff]
    %v3283 = vld [vmem:[#allocation11 + $0x9e8] sm:$0xff]
    %v3284 = vld [vmem:[#allocation11 + $0x9f0] sm:$0xff]
    %v3285 = vld [vmem:[#allocation11 + $0x9f8] sm:$0xff]
    %v3286 = vld [vmem:[#allocation11 + $0xa00] sm:$0xff]
    %v3287 = vld [vmem:[#allocation11 + $0xa08] sm:$0xff]
    %v3288 = vld [vmem:[#allocation11 + $0xa10] sm:$0xff]
    %v3289 = vld [vmem:[#allocation11 + $0xa18] sm:$0xff]
    %v3290 = vld [vmem:[#allocation11 + $0xa20] sm:$0xff]
    %v3291 = vld [vmem:[#allocation11 + $0xa28] sm:$0xff]
    %v3292 = vld [vmem:[#allocation11 + $0xa30] sm:$0xff]
    %v3293 = vld [vmem:[#allocation11 + $0xa38] sm:$0xff]
    %v3294 = vld [vmem:[#allocation11 + $0xa40] sm:$0xff]
    %v3295 = vld [vmem:[#allocation11 + $0xa48] sm:$0xff]
    %v3296 = vld [vmem:[#allocation11 + $0xa50] sm:$0xff]
    %v3297 = vld [vmem:[#allocation11 + $0xa58] sm:$0xff]
    %v3298 = vld [vmem:[#allocation11 + $0xa60] sm:$0xff]
    %v3299 = vld [vmem:[#allocation11 + $0xa68] sm:$0xff]
    %v3300 = vld [vmem:[#allocation11 + $0xa70] sm:$0xff]
    %v3301 = vld [vmem:[#allocation11 + $0xa78] sm:$0xff]
    %v3302 = vld [vmem:[#allocation11 + $0xa80] sm:$0xff]
    %v3303 = vld [vmem:[#allocation11 + $0xa88] sm:$0xff]
    %v3304 = vld [vmem:[#allocation11 + $0xa90] sm:$0xff]
    %v3305 = vld [vmem:[#allocation11 + $0xa98] sm:$0xff]
    %v3306 = vld [vmem:[#allocation11 + $0xaa0] sm:$0xff]
    %v3307 = vld [vmem:[#allocation11 + $0xaa8] sm:$0xff]
    %v3308 = vld [vmem:[#allocation11 + $0xab0] sm:$0xff]
    %v3309 = vld [vmem:[#allocation11 + $0xab8] sm:$0xff]
    %v3310 = vld [vmem:[#allocation11 + $0xac0] sm:$0xff]
    %v3311 = vld [vmem:[#allocation11 + $0xac8] sm:$0xff]
    %v3312 = vld [vmem:[#allocation11 + $0xad0] sm:$0xff]
    %v3313 = vld [vmem:[#allocation11 + $0xad8] sm:$0xff]
    %v3314 = vld [vmem:[#allocation11 + $0xae0] sm:$0xff]
    %v3315 = vld [vmem:[#allocation11 + $0xae8] sm:$0xff]
    %v3316 = vld [vmem:[#allocation11 + $0xaf0] sm:$0xff]
    %v3317 = vld [vmem:[#allocation11 + $0xaf8] sm:$0xff]
    %v3318 = vld [vmem:[#allocation11 + $0xb00] sm:$0xff]
    %v3319 = vld [vmem:[#allocation11 + $0xb08] sm:$0xff]
    %v3320 = vld [vmem:[#allocation11 + $0xb10] sm:$0xff]
    %v3321 = vld [vmem:[#allocation11 + $0xb18] sm:$0xff]
    %v3322 = vld [vmem:[#allocation11 + $0xb20] sm:$0xff]
    %v3323 = vld [vmem:[#allocation11 + $0xb28] sm:$0xff]
    %v3324 = vld [vmem:[#allocation11 + $0xb30] sm:$0xff]
    %v3325 = vld [vmem:[#allocation11 + $0xb38] sm:$0xff]
    %v3326 = vld [vmem:[#allocation11 + $0xb40] sm:$0xff]
    %v3327 = vld [vmem:[#allocation11 + $0xb48] sm:$0xff]
    %v3328 = vld [vmem:[#allocation11 + $0xb50] sm:$0xff]
    %v3329 = vld [vmem:[#allocation11 + $0xb58] sm:$0xff]
    %v3330 = vld [vmem:[#allocation11 + $0xb60] sm:$0xff]
    %v3331 = vld [vmem:[#allocation11 + $0xb68] sm:$0xff]
    %v3332 = vld [vmem:[#allocation11 + $0xb70] sm:$0xff]
    %v3333 = vld [vmem:[#allocation11 + $0xb78] sm:$0xff]
    %v3334 = vld [vmem:[#allocation11 + $0xb80] sm:$0xff]
    %v3335 = vld [vmem:[#allocation11 + $0xb88] sm:$0xff]
    %v3336 = vld [vmem:[#allocation11 + $0xb90] sm:$0xff]
    %v3337 = vld [vmem:[#allocation11 + $0xb98] sm:$0xff]
    %v3338 = vld [vmem:[#allocation11 + $0xba0] sm:$0xff]
    %v3339 = vld [vmem:[#allocation11 + $0xba8] sm:$0xff]
    %v3340 = vld [vmem:[#allocation11 + $0xbb0] sm:$0xff]
    %v3341 = vld [vmem:[#allocation11 + $0xbb8] sm:$0xff]
    %v3342 = vld [vmem:[#allocation11 + $0xbc0] sm:$0xff]
    %v3343 = vld [vmem:[#allocation11 + $0xbc8] sm:$0xff]
    %v3344 = vld [vmem:[#allocation11 + $0xbd0] sm:$0xff]
    %v3345 = vld [vmem:[#allocation11 + $0xbd8] sm:$0xff]
    %v3346 = vld [vmem:[#allocation11 + $0xbe0] sm:$0xff]
    %v3347 = vld [vmem:[#allocation11 + $0xbe8] sm:$0xff]
    %v3348 = vld [vmem:[#allocation11 + $0xbf0] sm:$0xff]
    %v3349 = vld [vmem:[#allocation11 + $0xbf8] sm:$0xff]
    %v3350 = vld [vmem:[#allocation11 + $0xc00] sm:$0xff]
    %v3351 = vld [vmem:[#allocation11 + $0xc08] sm:$0xff]
    %v3352 = vld [vmem:[#allocation11 + $0xc10] sm:$0xff]
    %v3353 = vld [vmem:[#allocation11 + $0xc18] sm:$0xff]
    %v3354 = vld [vmem:[#allocation11 + $0xc20] sm:$0xff]
    %v3355 = vld [vmem:[#allocation11 + $0xc28] sm:$0xff]
    %v3356 = vld [vmem:[#allocation11 + $0xc30] sm:$0xff]
    %v3357 = vld [vmem:[#allocation11 + $0xc38] sm:$0xff]
    %v3358 = vld [vmem:[#allocation11 + $0xc40] sm:$0xff]
    %v3359 = vld [vmem:[#allocation11 + $0xc48] sm:$0xff]
    %v3360 = vld [vmem:[#allocation11 + $0xc50] sm:$0xff]
    %v3361 = vld [vmem:[#allocation11 + $0xc58] sm:$0xff]
    %v3362 = vld [vmem:[#allocation11 + $0xc60] sm:$0xff]
    %v3363 = vld [vmem:[#allocation11 + $0xc68] sm:$0xff]
    %v3364 = vld [vmem:[#allocation11 + $0xc70] sm:$0xff]
    %v3365 = vld [vmem:[#allocation11 + $0xc78] sm:$0xff]
    %v3366 = vld [vmem:[#allocation11 + $0xc80] sm:$0xff]
    %v3367 = vld [vmem:[#allocation11 + $0xc88] sm:$0xff]
    %v3368 = vld [vmem:[#allocation11 + $0xc90] sm:$0xff]
    %v3369 = vld [vmem:[#allocation11 + $0xc98] sm:$0xff]
    %v3370 = vld [vmem:[#allocation11 + $0xca0] sm:$0xff]
    %v3371 = vld [vmem:[#allocation11 + $0xca8] sm:$0xff]
    %v3372 = vld [vmem:[#allocation11 + $0xcb0] sm:$0xff]
    %v3373 = vld [vmem:[#allocation11 + $0xcb8] sm:$0xff]
    %v3374 = vld [vmem:[#allocation11 + $0xcc0] sm:$0xff]
    %v3375 = vld [vmem:[#allocation11 + $0xcc8] sm:$0xff]
    %v3376 = vld [vmem:[#allocation11 + $0xcd0] sm:$0xff]
    %v3377 = vld [vmem:[#allocation11 + $0xcd8] sm:$0xff]
    %v3378 = vld [vmem:[#allocation11 + $0xce0] sm:$0xff]
    %v3379 = vld [vmem:[#allocation11 + $0xce8] sm:$0xff]
    %v3380 = vld [vmem:[#allocation11 + $0xcf0] sm:$0xff]
    %v3381 = vld [vmem:[#allocation11 + $0xcf8] sm:$0xff]
    %v3382 = vld [vmem:[#allocation11 + $0xd00] sm:$0xff]
    %v3383 = vld [vmem:[#allocation11 + $0xd08] sm:$0xff]
    %v3384 = vld [vmem:[#allocation11 + $0xd10] sm:$0xff]
    %v3385 = vld [vmem:[#allocation11 + $0xd18] sm:$0xff]
    %v3386 = vld [vmem:[#allocation11 + $0xd20] sm:$0xff]
    %v3387 = vld [vmem:[#allocation11 + $0xd28] sm:$0xff]
    %v3388 = vld [vmem:[#allocation11 + $0xd30] sm:$0xff]
    %v3389 = vld [vmem:[#allocation11 + $0xd38] sm:$0xff]
    %v3390 = vld [vmem:[#allocation11 + $0xd40] sm:$0xff]
    %v3391 = vld [vmem:[#allocation11 + $0xd48] sm:$0xff]
    %v3392 = vld [vmem:[#allocation11 + $0xd50] sm:$0xff]
    %v3393 = vld [vmem:[#allocation11 + $0xd58] sm:$0xff]
    %v3394 = vld [vmem:[#allocation11 + $0xd60] sm:$0xff]
    %v3395 = vld [vmem:[#allocation11 + $0xd68] sm:$0xff]
    %v3396 = vld [vmem:[#allocation11 + $0xd70] sm:$0xff]
    %v3397 = vld [vmem:[#allocation11 + $0xd78] sm:$0xff]
    %v3398 = vld [vmem:[#allocation11 + $0xd80] sm:$0xff]
    %v3399 = vld [vmem:[#allocation11 + $0xd88] sm:$0xff]
    %v3400 = vld [vmem:[#allocation11 + $0xd90] sm:$0xff]
    %v3401 = vld [vmem:[#allocation11 + $0xd98] sm:$0xff]
    %v3402 = vld [vmem:[#allocation11 + $0xda0] sm:$0xff]
    %v3403 = vld [vmem:[#allocation11 + $0xda8] sm:$0xff]
    %v3404 = vld [vmem:[#allocation11 + $0xdb0] sm:$0xff]
    %v3405 = vld [vmem:[#allocation11 + $0xdb8] sm:$0xff]
    %v3406 = vld [vmem:[#allocation11 + $0xdc0] sm:$0xff]
    %v3407 = vld [vmem:[#allocation11 + $0xdc8] sm:$0xff]
    %v3408 = vld [vmem:[#allocation11 + $0xdd0] sm:$0xff]
    %v3409 = vld [vmem:[#allocation11 + $0xdd8] sm:$0xff]
    %v3410 = vld [vmem:[#allocation11 + $0xde0] sm:$0xff]
    %v3411 = vld [vmem:[#allocation11 + $0xde8] sm:$0xff]
    %v3412 = vld [vmem:[#allocation11 + $0xdf0] sm:$0xff]
    %v3413 = vld [vmem:[#allocation11 + $0xdf8] sm:$0xff]
    %v3414 = vld [vmem:[#allocation11 + $0xe00] sm:$0xff]
    %v3415 = vld [vmem:[#allocation11 + $0xe08] sm:$0xff]
    %v3416 = vld [vmem:[#allocation11 + $0xe10] sm:$0xff]
    %v3417 = vld [vmem:[#allocation11 + $0xe18] sm:$0xff]
    %v3418 = vld [vmem:[#allocation11 + $0xe20] sm:$0xff]
    %v3419 = vld [vmem:[#allocation11 + $0xe28] sm:$0xff]
    %v3420 = vld [vmem:[#allocation11 + $0xe30] sm:$0xff]
    %v3421 = vld [vmem:[#allocation11 + $0xe38] sm:$0xff]
    %v3422 = vld [vmem:[#allocation11 + $0xe40] sm:$0xff]
    %v3423 = vld [vmem:[#allocation11 + $0xe48] sm:$0xff]
    %v3424 = vld [vmem:[#allocation11 + $0xe50] sm:$0xff]
    %v3425 = vld [vmem:[#allocation11 + $0xe58] sm:$0xff]
    %v3426 = vld [vmem:[#allocation11 + $0xe60] sm:$0xff]
    %v3427 = vld [vmem:[#allocation11 + $0xe68] sm:$0xff]
    %v3428 = vld [vmem:[#allocation11 + $0xe70] sm:$0xff]
    %v3429 = vld [vmem:[#allocation11 + $0xe78] sm:$0xff]
    %v3430 = vld [vmem:[#allocation11 + $0xe80] sm:$0xff]
    %v3431 = vld [vmem:[#allocation11 + $0xe88] sm:$0xff]
    %v3432 = vld [vmem:[#allocation11 + $0xe90] sm:$0xff]
    %v3433 = vld [vmem:[#allocation11 + $0xe98] sm:$0xff]
    %v3434 = vld [vmem:[#allocation11 + $0xea0] sm:$0xff]
    %v3435 = vld [vmem:[#allocation11 + $0xea8] sm:$0xff]
    %v3436 = vld [vmem:[#allocation11 + $0xeb0] sm:$0xff]
    %v3437 = vld [vmem:[#allocation11 + $0xeb8] sm:$0xff]
    %v3438 = vld [vmem:[#allocation11 + $0xec0] sm:$0xff]
    %v3439 = vld [vmem:[#allocation11 + $0xec8] sm:$0xff]
    %v3440 = vld [vmem:[#allocation11 + $0xed0] sm:$0xff]
    %v3441 = vld [vmem:[#allocation11 + $0xed8] sm:$0xff]
    %v3442 = vld [vmem:[#allocation11 + $0xee0] sm:$0xff]
    %v3443 = vld [vmem:[#allocation11 + $0xee8] sm:$0xff]
    %v3444 = vld [vmem:[#allocation11 + $0xef0] sm:$0xff]
    %v3445 = vld [vmem:[#allocation11 + $0xef8] sm:$0xff]
    %v3446 = vld [vmem:[#allocation11 + $0xf00] sm:$0xff]
    %v3447 = vld [vmem:[#allocation11 + $0xf08] sm:$0xff]
    %v3448 = vld [vmem:[#allocation11 + $0xf10] sm:$0xff]
    %v3449 = vld [vmem:[#allocation11 + $0xf18] sm:$0xff]
    %v3450 = vld [vmem:[#allocation11 + $0xf20] sm:$0xff]
    %v3451 = vld [vmem:[#allocation11 + $0xf28] sm:$0xff]
    %v3452 = vld [vmem:[#allocation11 + $0xf30] sm:$0xff]
    %v3453 = vld [vmem:[#allocation11 + $0xf38] sm:$0xff]
    %v3454 = vld [vmem:[#allocation11 + $0xf40] sm:$0xff]
    %v3455 = vld [vmem:[#allocation11 + $0xf48] sm:$0xff]
    %v3456 = vld [vmem:[#allocation11 + $0xf50] sm:$0xff]
    %v3457 = vld [vmem:[#allocation11 + $0xf58] sm:$0xff]
    %v3458 = vld [vmem:[#allocation11 + $0xf60] sm:$0xff]
    %v3459 = vld [vmem:[#allocation11 + $0xf68] sm:$0xff]
    %v3460 = vld [vmem:[#allocation11 + $0xf70] sm:$0xff]
    %v3461 = vld [vmem:[#allocation11 + $0xf78] sm:$0xff]
    %v3462 = vld [vmem:[#allocation11 + $0xf80] sm:$0xff]
    %v3463 = vld [vmem:[#allocation11 + $0xf88] sm:$0xff]
    %v3464 = vld [vmem:[#allocation11 + $0xf90] sm:$0xff]
    %v3465 = vld [vmem:[#allocation11 + $0xf98] sm:$0xff]
    %v3466 = vld [vmem:[#allocation11 + $0xfa0] sm:$0xff]
    %v3467 = vld [vmem:[#allocation11 + $0xfa8] sm:$0xff]
    %v3468 = vld [vmem:[#allocation11 + $0xfb0] sm:$0xff]
    %v3469 = vld [vmem:[#allocation11 + $0xfb8] sm:$0xff]
    %v3470 = vld [vmem:[#allocation11 + $0xfc0] sm:$0xff]
    %v3471 = vld [vmem:[#allocation11 + $0xfc8] sm:$0xff]
    %v3472 = vld [vmem:[#allocation11 + $0xfd0] sm:$0xff]
    %v3473 = vld [vmem:[#allocation11 + $0xfd8] sm:$0xff]
    %v3474 = vld [vmem:[#allocation11 + $0xfe0] sm:$0xff]
    %v3475 = vld [vmem:[#allocation11 + $0xfe8] sm:$0xff]
    %v3476 = vld [vmem:[#allocation11 + $0xff0] sm:$0xff]
    %v3477 = vld [vmem:[#allocation11 + $0xff8] sm:$0xff]
    %v3478 = vld [vmem:[#allocation13] sm:$0xff]
    %v3479 = vld [vmem:[#allocation13 + $0x8] sm:$0xff]
    %v3482 = vperm.slane %v3478, 0
    %v3483 = vperm.slane %v3478, 1
    %v3484 = vperm.slane %v3478, 2
    %v3485 = vperm.slane %v3478, 3
    %v3486 = vperm.slane %v3478, 4
    %v3487 = vperm.slane %v3478, 5
    %v3488 = vperm.slane %v3478, 6
    %v3489 = vperm.slane %v3478, 7
    %v3490 = vperm.slane %v3479, 0
    %v3491 = vperm.slane %v3479, 1
    %v3492 = vperm.slane %v3479, 2
    %v3493 = vperm.slane %v3479, 3
    %v3494 = vperm.slane %v3479, 4
    %v3495 = vperm.slane %v3479, 5
    %v3496 = vperm.slane %v3479, 6
    %v3497 = vperm.slane %v3479, 7
    %v4026 = vunpack.c.l.b16 %v2966
    %v4027 = vunpack.c.h.b16 %v2966
    %v4028 = vunpack.c.l.b16 %v2967
    %v4029 = vunpack.c.h.b16 %v2967
    %v4030 = vunpack.c.l.b16 %v2968
    %v4031 = vunpack.c.h.b16 %v2968
    %v4032 = vunpack.c.l.b16 %v2969
    %v4033 = vunpack.c.h.b16 %v2969
    %v4034 = vunpack.c.l.b16 %v2970
    %v4035 = vunpack.c.h.b16 %v2970
    %v4036 = vunpack.c.l.b16 %v2971
    %v4037 = vunpack.c.h.b16 %v2971
    %v4038 = vunpack.c.l.b16 %v2972
    %v4039 = vunpack.c.h.b16 %v2972
    %v4040 = vunpack.c.l.b16 %v2973
    %v4041 = vunpack.c.h.b16 %v2973
    %v4042 = vunpack.c.l.b16 %v2974
    %v4043 = vunpack.c.h.b16 %v2974
    %v4044 = vunpack.c.l.b16 %v2975
    %v4045 = vunpack.c.h.b16 %v2975
    %v4046 = vunpack.c.l.b16 %v2976
    %v4047 = vunpack.c.h.b16 %v2976
    %v4048 = vunpack.c.l.b16 %v2977
    %v4049 = vunpack.c.h.b16 %v2977
    %v4050 = vunpack.c.l.b16 %v2978
    %v4051 = vunpack.c.h.b16 %v2978
    %v4052 = vunpack.c.l.b16 %v2979
    %v4053 = vunpack.c.h.b16 %v2979
    %v4054 = vunpack.c.l.b16 %v2980
    %v4055 = vunpack.c.h.b16 %v2980
    %v4056 = vunpack.c.l.b16 %v2981
    %v4057 = vunpack.c.h.b16 %v2981
    %v4058 = vunpack.c.l.b16 %v2982
    %v4059 = vunpack.c.h.b16 %v2982
    %v4060 = vunpack.c.l.b16 %v2983
    %v4061 = vunpack.c.h.b16 %v2983
    %v4062 = vunpack.c.l.b16 %v2984
    %v4063 = vunpack.c.h.b16 %v2984
    %v4064 = vunpack.c.l.b16 %v2985
    %v4065 = vunpack.c.h.b16 %v2985
    %v4066 = vunpack.c.l.b16 %v2986
    %v4067 = vunpack.c.h.b16 %v2986
    %v4068 = vunpack.c.l.b16 %v2987
    %v4069 = vunpack.c.h.b16 %v2987
    %v4070 = vunpack.c.l.b16 %v2988
    %v4071 = vunpack.c.h.b16 %v2988
    %v4072 = vunpack.c.l.b16 %v2989
    %v4073 = vunpack.c.h.b16 %v2989
    %v4074 = vunpack.c.l.b16 %v2990
    %v4075 = vunpack.c.h.b16 %v2990
    %v4076 = vunpack.c.l.b16 %v2991
    %v4077 = vunpack.c.h.b16 %v2991
    %v4078 = vunpack.c.l.b16 %v2992
    %v4079 = vunpack.c.h.b16 %v2992
    %v4080 = vunpack.c.l.b16 %v2993
    %v4081 = vunpack.c.h.b16 %v2993
    %v4082 = vunpack.c.l.b16 %v2994
    %v4083 = vunpack.c.h.b16 %v2994
    %v4084 = vunpack.c.l.b16 %v2995
    %v4085 = vunpack.c.h.b16 %v2995
    %v4086 = vunpack.c.l.b16 %v2996
    %v4087 = vunpack.c.h.b16 %v2996
    %v4088 = vunpack.c.l.b16 %v2997
    %v4089 = vunpack.c.h.b16 %v2997
    %v4090 = vunpack.c.l.b16 %v2998
    %v4091 = vunpack.c.h.b16 %v2998
    %v4092 = vunpack.c.l.b16 %v2999
    %v4093 = vunpack.c.h.b16 %v2999
    %v4094 = vunpack.c.l.b16 %v3000
    %v4095 = vunpack.c.h.b16 %v3000
    %v4096 = vunpack.c.l.b16 %v3001
    %v4097 = vunpack.c.h.b16 %v3001
    %v4098 = vunpack.c.l.b16 %v3002
    %v4099 = vunpack.c.h.b16 %v3002
    %v4100 = vunpack.c.l.b16 %v3003
    %v4101 = vunpack.c.h.b16 %v3003
    %v4102 = vunpack.c.l.b16 %v3004
    %v4103 = vunpack.c.h.b16 %v3004
    %v4104 = vunpack.c.l.b16 %v3005
    %v4105 = vunpack.c.h.b16 %v3005
    %v4106 = vunpack.c.l.b16 %v3006
    %v4107 = vunpack.c.h.b16 %v3006
    %v4108 = vunpack.c.l.b16 %v3007
    %v4109 = vunpack.c.h.b16 %v3007
    %v4110 = vunpack.c.l.b16 %v3008
    %v4111 = vunpack.c.h.b16 %v3008
    %v4112 = vunpack.c.l.b16 %v3009
    %v4113 = vunpack.c.h.b16 %v3009
    %v4114 = vunpack.c.l.b16 %v3010
    %v4115 = vunpack.c.h.b16 %v3010
    %v4116 = vunpack.c.l.b16 %v3011
    %v4117 = vunpack.c.h.b16 %v3011
    %v4118 = vunpack.c.l.b16 %v3012
    %v4119 = vunpack.c.h.b16 %v3012
    %v4120 = vunpack.c.l.b16 %v3013
    %v4121 = vunpack.c.h.b16 %v3013
    %v4122 = vunpack.c.l.b16 %v3014
    %v4123 = vunpack.c.h.b16 %v3014
    %v4124 = vunpack.c.l.b16 %v3015
    %v4125 = vunpack.c.h.b16 %v3015
    %v4126 = vunpack.c.l.b16 %v3016
    %v4127 = vunpack.c.h.b16 %v3016
    %v4128 = vunpack.c.l.b16 %v3017
    %v4129 = vunpack.c.h.b16 %v3017
    %v4130 = vunpack.c.l.b16 %v3018
    %v4131 = vunpack.c.h.b16 %v3018
    %v4132 = vunpack.c.l.b16 %v3019
    %v4133 = vunpack.c.h.b16 %v3019
    %v4134 = vunpack.c.l.b16 %v3020
    %v4135 = vunpack.c.h.b16 %v3020
    %v4136 = vunpack.c.l.b16 %v3021
    %v4137 = vunpack.c.h.b16 %v3021
    %v4138 = vunpack.c.l.b16 %v3022
    %v4139 = vunpack.c.h.b16 %v3022
    %v4140 = vunpack.c.l.b16 %v3023
    %v4141 = vunpack.c.h.b16 %v3023
    %v4142 = vunpack.c.l.b16 %v3024
    %v4143 = vunpack.c.h.b16 %v3024
    %v4144 = vunpack.c.l.b16 %v3025
    %v4145 = vunpack.c.h.b16 %v3025
    %v4146 = vunpack.c.l.b16 %v3026
    %v4147 = vunpack.c.h.b16 %v3026
    %v4148 = vunpack.c.l.b16 %v3027
    %v4149 = vunpack.c.h.b16 %v3027
    %v4150 = vunpack.c.l.b16 %v3028
    %v4151 = vunpack.c.h.b16 %v3028
    %v4152 = vunpack.c.l.b16 %v3029
    %v4153 = vunpack.c.h.b16 %v3029
    %v4154 = vunpack.c.l.b16 %v3030
    %v4155 = vunpack.c.h.b16 %v3030
    %v4156 = vunpack.c.l.b16 %v3031
    %v4157 = vunpack.c.h.b16 %v3031
    %v4158 = vunpack.c.l.b16 %v3032
    %v4159 = vunpack.c.h.b16 %v3032
    %v4160 = vunpack.c.l.b16 %v3033
    %v4161 = vunpack.c.h.b16 %v3033
    %v4162 = vunpack.c.l.b16 %v3034
    %v4163 = vunpack.c.h.b16 %v3034
    %v4164 = vunpack.c.l.b16 %v3035
    %v4165 = vunpack.c.h.b16 %v3035
    %v4166 = vunpack.c.l.b16 %v3036
    %v4167 = vunpack.c.h.b16 %v3036
    %v4168 = vunpack.c.l.b16 %v3037
    %v4169 = vunpack.c.h.b16 %v3037
    %v4170 = vunpack.c.l.b16 %v3038
    %v4171 = vunpack.c.h.b16 %v3038
    %v4172 = vunpack.c.l.b16 %v3039
    %v4173 = vunpack.c.h.b16 %v3039
    %v4174 = vunpack.c.l.b16 %v3040
    %v4175 = vunpack.c.h.b16 %v3040
    %v4176 = vunpack.c.l.b16 %v3041
    %v4177 = vunpack.c.h.b16 %v3041
    %v4178 = vunpack.c.l.b16 %v3042
    %v4179 = vunpack.c.h.b16 %v3042
    %v4180 = vunpack.c.l.b16 %v3043
    %v4181 = vunpack.c.h.b16 %v3043
    %v4182 = vunpack.c.l.b16 %v3044
    %v4183 = vunpack.c.h.b16 %v3044
    %v4184 = vunpack.c.l.b16 %v3045
    %v4185 = vunpack.c.h.b16 %v3045
    %v4186 = vunpack.c.l.b16 %v3046
    %v4187 = vunpack.c.h.b16 %v3046
    %v4188 = vunpack.c.l.b16 %v3047
    %v4189 = vunpack.c.h.b16 %v3047
    %v4190 = vunpack.c.l.b16 %v3048
    %v4191 = vunpack.c.h.b16 %v3048
    %v4192 = vunpack.c.l.b16 %v3049
    %v4193 = vunpack.c.h.b16 %v3049
    %v4194 = vunpack.c.l.b16 %v3050
    %v4195 = vunpack.c.h.b16 %v3050
    %v4196 = vunpack.c.l.b16 %v3051
    %v4197 = vunpack.c.h.b16 %v3051
    %v4198 = vunpack.c.l.b16 %v3052
    %v4199 = vunpack.c.h.b16 %v3052
    %v4200 = vunpack.c.l.b16 %v3053
    %v4201 = vunpack.c.h.b16 %v3053
    %v4202 = vunpack.c.l.b16 %v3054
    %v4203 = vunpack.c.h.b16 %v3054
    %v4204 = vunpack.c.l.b16 %v3055
    %v4205 = vunpack.c.h.b16 %v3055
    %v4206 = vunpack.c.l.b16 %v3056
    %v4207 = vunpack.c.h.b16 %v3056
    %v4208 = vunpack.c.l.b16 %v3057
    %v4209 = vunpack.c.h.b16 %v3057
    %v4210 = vunpack.c.l.b16 %v3058
    %v4211 = vunpack.c.h.b16 %v3058
    %v4212 = vunpack.c.l.b16 %v3059
    %v4213 = vunpack.c.h.b16 %v3059
    %v4214 = vunpack.c.l.b16 %v3060
    %v4215 = vunpack.c.h.b16 %v3060
    %v4216 = vunpack.c.l.b16 %v3061
    %v4217 = vunpack.c.h.b16 %v3061
    %v4218 = vunpack.c.l.b16 %v3062
    %v4219 = vunpack.c.h.b16 %v3062
    %v4220 = vunpack.c.l.b16 %v3063
    %v4221 = vunpack.c.h.b16 %v3063
    %v4222 = vunpack.c.l.b16 %v3064
    %v4223 = vunpack.c.h.b16 %v3064
    %v4224 = vunpack.c.l.b16 %v3065
    %v4225 = vunpack.c.h.b16 %v3065
    %v4226 = vunpack.c.l.b16 %v3066
    %v4227 = vunpack.c.h.b16 %v3066
    %v4228 = vunpack.c.l.b16 %v3067
    %v4229 = vunpack.c.h.b16 %v3067
    %v4230 = vunpack.c.l.b16 %v3068
    %v4231 = vunpack.c.h.b16 %v3068
    %v4232 = vunpack.c.l.b16 %v3069
    %v4233 = vunpack.c.h.b16 %v3069
    %v4234 = vunpack.c.l.b16 %v3070
    %v4235 = vunpack.c.h.b16 %v3070
    %v4236 = vunpack.c.l.b16 %v3071
    %v4237 = vunpack.c.h.b16 %v3071
    %v4238 = vunpack.c.l.b16 %v3072
    %v4239 = vunpack.c.h.b16 %v3072
    %v4240 = vunpack.c.l.b16 %v3073
    %v4241 = vunpack.c.h.b16 %v3073
    %v4242 = vunpack.c.l.b16 %v3074
    %v4243 = vunpack.c.h.b16 %v3074
    %v4244 = vunpack.c.l.b16 %v3075
    %v4245 = vunpack.c.h.b16 %v3075
    %v4246 = vunpack.c.l.b16 %v3076
    %v4247 = vunpack.c.h.b16 %v3076
    %v4248 = vunpack.c.l.b16 %v3077
    %v4249 = vunpack.c.h.b16 %v3077
    %v4250 = vunpack.c.l.b16 %v3078
    %v4251 = vunpack.c.h.b16 %v3078
    %v4252 = vunpack.c.l.b16 %v3079
    %v4253 = vunpack.c.h.b16 %v3079
    %v4254 = vunpack.c.l.b16 %v3080
    %v4255 = vunpack.c.h.b16 %v3080
    %v4256 = vunpack.c.l.b16 %v3081
    %v4257 = vunpack.c.h.b16 %v3081
    %v4258 = vunpack.c.l.b16 %v3082
    %v4259 = vunpack.c.h.b16 %v3082
    %v4260 = vunpack.c.l.b16 %v3083
    %v4261 = vunpack.c.h.b16 %v3083
    %v4262 = vunpack.c.l.b16 %v3084
    %v4263 = vunpack.c.h.b16 %v3084
    %v4264 = vunpack.c.l.b16 %v3085
    %v4265 = vunpack.c.h.b16 %v3085
    %v4266 = vunpack.c.l.b16 %v3086
    %v4267 = vunpack.c.h.b16 %v3086
    %v4268 = vunpack.c.l.b16 %v3087
    %v4269 = vunpack.c.h.b16 %v3087
    %v4270 = vunpack.c.l.b16 %v3088
    %v4271 = vunpack.c.h.b16 %v3088
    %v4272 = vunpack.c.l.b16 %v3089
    %v4273 = vunpack.c.h.b16 %v3089
    %v4274 = vunpack.c.l.b16 %v3090
    %v4275 = vunpack.c.h.b16 %v3090
    %v4276 = vunpack.c.l.b16 %v3091
    %v4277 = vunpack.c.h.b16 %v3091
    %v4278 = vunpack.c.l.b16 %v3092
    %v4279 = vunpack.c.h.b16 %v3092
    %v4280 = vunpack.c.l.b16 %v3093
    %v4281 = vunpack.c.h.b16 %v3093
    %v4282 = vunpack.c.l.b16 %v3094
    %v4283 = vunpack.c.h.b16 %v3094
    %v4284 = vunpack.c.l.b16 %v3095
    %v4285 = vunpack.c.h.b16 %v3095
    %v4286 = vunpack.c.l.b16 %v3096
    %v4287 = vunpack.c.h.b16 %v3096
    %v4288 = vunpack.c.l.b16 %v3097
    %v4289 = vunpack.c.h.b16 %v3097
    %v4290 = vunpack.c.l.b16 %v3098
    %v4291 = vunpack.c.h.b16 %v3098
    %v4292 = vunpack.c.l.b16 %v3099
    %v4293 = vunpack.c.h.b16 %v3099
    %v4294 = vunpack.c.l.b16 %v3100
    %v4295 = vunpack.c.h.b16 %v3100
    %v4296 = vunpack.c.l.b16 %v3101
    %v4297 = vunpack.c.h.b16 %v3101
    %v4298 = vunpack.c.l.b16 %v3102
    %v4299 = vunpack.c.h.b16 %v3102
    %v4300 = vunpack.c.l.b16 %v3103
    %v4301 = vunpack.c.h.b16 %v3103
    %v4302 = vunpack.c.l.b16 %v3104
    %v4303 = vunpack.c.h.b16 %v3104
    %v4304 = vunpack.c.l.b16 %v3105
    %v4305 = vunpack.c.h.b16 %v3105
    %v4306 = vunpack.c.l.b16 %v3106
    %v4307 = vunpack.c.h.b16 %v3106
    %v4308 = vunpack.c.l.b16 %v3107
    %v4309 = vunpack.c.h.b16 %v3107
    %v4310 = vunpack.c.l.b16 %v3108
    %v4311 = vunpack.c.h.b16 %v3108
    %v4312 = vunpack.c.l.b16 %v3109
    %v4313 = vunpack.c.h.b16 %v3109
    %v4314 = vunpack.c.l.b16 %v3110
    %v4315 = vunpack.c.h.b16 %v3110
    %v4316 = vunpack.c.l.b16 %v3111
    %v4317 = vunpack.c.h.b16 %v3111
    %v4318 = vunpack.c.l.b16 %v3112
    %v4319 = vunpack.c.h.b16 %v3112
    %v4320 = vunpack.c.l.b16 %v3113
    %v4321 = vunpack.c.h.b16 %v3113
    %v4322 = vunpack.c.l.b16 %v3114
    %v4323 = vunpack.c.h.b16 %v3114
    %v4324 = vunpack.c.l.b16 %v3115
    %v4325 = vunpack.c.h.b16 %v3115
    %v4326 = vunpack.c.l.b16 %v3116
    %v4327 = vunpack.c.h.b16 %v3116
    %v4328 = vunpack.c.l.b16 %v3117
    %v4329 = vunpack.c.h.b16 %v3117
    %v4330 = vunpack.c.l.b16 %v3118
    %v4331 = vunpack.c.h.b16 %v3118
    %v4332 = vunpack.c.l.b16 %v3119
    %v4333 = vunpack.c.h.b16 %v3119
    %v4334 = vunpack.c.l.b16 %v3120
    %v4335 = vunpack.c.h.b16 %v3120
    %v4336 = vunpack.c.l.b16 %v3121
    %v4337 = vunpack.c.h.b16 %v3121
    %v4338 = vunpack.c.l.b16 %v3122
    %v4339 = vunpack.c.h.b16 %v3122
    %v4340 = vunpack.c.l.b16 %v3123
    %v4341 = vunpack.c.h.b16 %v3123
    %v4342 = vunpack.c.l.b16 %v3124
    %v4343 = vunpack.c.h.b16 %v3124
    %v4344 = vunpack.c.l.b16 %v3125
    %v4345 = vunpack.c.h.b16 %v3125
    %v4346 = vunpack.c.l.b16 %v3126
    %v4347 = vunpack.c.h.b16 %v3126
    %v4348 = vunpack.c.l.b16 %v3127
    %v4349 = vunpack.c.h.b16 %v3127
    %v4350 = vunpack.c.l.b16 %v3128
    %v4351 = vunpack.c.h.b16 %v3128
    %v4352 = vunpack.c.l.b16 %v3129
    %v4353 = vunpack.c.h.b16 %v3129
    %v4354 = vunpack.c.l.b16 %v3130
    %v4355 = vunpack.c.h.b16 %v3130
    %v4356 = vunpack.c.l.b16 %v3131
    %v4357 = vunpack.c.h.b16 %v3131
    %v4358 = vunpack.c.l.b16 %v3132
    %v4359 = vunpack.c.h.b16 %v3132
    %v4360 = vunpack.c.l.b16 %v3133
    %v4361 = vunpack.c.h.b16 %v3133
    %v4362 = vunpack.c.l.b16 %v3134
    %v4363 = vunpack.c.h.b16 %v3134
    %v4364 = vunpack.c.l.b16 %v3135
    %v4365 = vunpack.c.h.b16 %v3135
    %v4366 = vunpack.c.l.b16 %v3136
    %v4367 = vunpack.c.h.b16 %v3136
    %v4368 = vunpack.c.l.b16 %v3137
    %v4369 = vunpack.c.h.b16 %v3137
    %v4370 = vunpack.c.l.b16 %v3138
    %v4371 = vunpack.c.h.b16 %v3138
    %v4372 = vunpack.c.l.b16 %v3139
    %v4373 = vunpack.c.h.b16 %v3139
    %v4374 = vunpack.c.l.b16 %v3140
    %v4375 = vunpack.c.h.b16 %v3140
    %v4376 = vunpack.c.l.b16 %v3141
    %v4377 = vunpack.c.h.b16 %v3141
    %v4378 = vunpack.c.l.b16 %v3142
    %v4379 = vunpack.c.h.b16 %v3142
    %v4380 = vunpack.c.l.b16 %v3143
    %v4381 = vunpack.c.h.b16 %v3143
    %v4382 = vunpack.c.l.b16 %v3144
    %v4383 = vunpack.c.h.b16 %v3144
    %v4384 = vunpack.c.l.b16 %v3145
    %v4385 = vunpack.c.h.b16 %v3145
    %v4386 = vunpack.c.l.b16 %v3146
    %v4387 = vunpack.c.h.b16 %v3146
    %v4388 = vunpack.c.l.b16 %v3147
    %v4389 = vunpack.c.h.b16 %v3147
    %v4390 = vunpack.c.l.b16 %v3148
    %v4391 = vunpack.c.h.b16 %v3148
    %v4392 = vunpack.c.l.b16 %v3149
    %v4393 = vunpack.c.h.b16 %v3149
    %v4394 = vunpack.c.l.b16 %v3150
    %v4395 = vunpack.c.h.b16 %v3150
    %v4396 = vunpack.c.l.b16 %v3151
    %v4397 = vunpack.c.h.b16 %v3151
    %v4398 = vunpack.c.l.b16 %v3152
    %v4399 = vunpack.c.h.b16 %v3152
    %v4400 = vunpack.c.l.b16 %v3153
    %v4401 = vunpack.c.h.b16 %v3153
    %v4402 = vunpack.c.l.b16 %v3154
    %v4403 = vunpack.c.h.b16 %v3154
    %v4404 = vunpack.c.l.b16 %v3155
    %v4405 = vunpack.c.h.b16 %v3155
    %v4406 = vunpack.c.l.b16 %v3156
    %v4407 = vunpack.c.h.b16 %v3156
    %v4408 = vunpack.c.l.b16 %v3157
    %v4409 = vunpack.c.h.b16 %v3157
    %v4410 = vunpack.c.l.b16 %v3158
    %v4411 = vunpack.c.h.b16 %v3158
    %v4412 = vunpack.c.l.b16 %v3159
    %v4413 = vunpack.c.h.b16 %v3159
    %v4414 = vunpack.c.l.b16 %v3160
    %v4415 = vunpack.c.h.b16 %v3160
    %v4416 = vunpack.c.l.b16 %v3161
    %v4417 = vunpack.c.h.b16 %v3161
    %v4418 = vunpack.c.l.b16 %v3162
    %v4419 = vunpack.c.h.b16 %v3162
    %v4420 = vunpack.c.l.b16 %v3163
    %v4421 = vunpack.c.h.b16 %v3163
    %v4422 = vunpack.c.l.b16 %v3164
    %v4423 = vunpack.c.h.b16 %v3164
    %v4424 = vunpack.c.l.b16 %v3165
    %v4425 = vunpack.c.h.b16 %v3165
    %v4426 = vunpack.c.l.b16 %v3166
    %v4427 = vunpack.c.h.b16 %v3166
    %v4428 = vunpack.c.l.b16 %v3167
    %v4429 = vunpack.c.h.b16 %v3167
    %v4430 = vunpack.c.l.b16 %v3168
    %v4431 = vunpack.c.h.b16 %v3168
    %v4432 = vunpack.c.l.b16 %v3169
    %v4433 = vunpack.c.h.b16 %v3169
    %v4434 = vunpack.c.l.b16 %v3170
    %v4435 = vunpack.c.h.b16 %v3170
    %v4436 = vunpack.c.l.b16 %v3171
    %v4437 = vunpack.c.h.b16 %v3171
    %v4438 = vunpack.c.l.b16 %v3172
    %v4439 = vunpack.c.h.b16 %v3172
    %v4440 = vunpack.c.l.b16 %v3173
    %v4441 = vunpack.c.h.b16 %v3173
    %v4442 = vunpack.c.l.b16 %v3174
    %v4443 = vunpack.c.h.b16 %v3174
    %v4444 = vunpack.c.l.b16 %v3175
    %v4445 = vunpack.c.h.b16 %v3175
    %v4446 = vunpack.c.l.b16 %v3176
    %v4447 = vunpack.c.h.b16 %v3176
    %v4448 = vunpack.c.l.b16 %v3177
    %v4449 = vunpack.c.h.b16 %v3177
    %v4450 = vunpack.c.l.b16 %v3178
    %v4451 = vunpack.c.h.b16 %v3178
    %v4452 = vunpack.c.l.b16 %v3179
    %v4453 = vunpack.c.h.b16 %v3179
    %v4454 = vunpack.c.l.b16 %v3180
    %v4455 = vunpack.c.h.b16 %v3180
    %v4456 = vunpack.c.l.b16 %v3181
    %v4457 = vunpack.c.h.b16 %v3181
    %v4458 = vunpack.c.l.b16 %v3182
    %v4459 = vunpack.c.h.b16 %v3182
    %v4460 = vunpack.c.l.b16 %v3183
    %v4461 = vunpack.c.h.b16 %v3183
    %v4462 = vunpack.c.l.b16 %v3184
    %v4463 = vunpack.c.h.b16 %v3184
    %v4464 = vunpack.c.l.b16 %v3185
    %v4465 = vunpack.c.h.b16 %v3185
    %v4466 = vunpack.c.l.b16 %v3186
    %v4467 = vunpack.c.h.b16 %v3186
    %v4468 = vunpack.c.l.b16 %v3187
    %v4469 = vunpack.c.h.b16 %v3187
    %v4470 = vunpack.c.l.b16 %v3188
    %v4471 = vunpack.c.h.b16 %v3188
    %v4472 = vunpack.c.l.b16 %v3189
    %v4473 = vunpack.c.h.b16 %v3189
    %v4474 = vunpack.c.l.b16 %v3190
    %v4475 = vunpack.c.h.b16 %v3190
    %v4476 = vunpack.c.l.b16 %v3191
    %v4477 = vunpack.c.h.b16 %v3191
    %v4478 = vunpack.c.l.b16 %v3192
    %v4479 = vunpack.c.h.b16 %v3192
    %v4480 = vunpack.c.l.b16 %v3193
    %v4481 = vunpack.c.h.b16 %v3193
    %v4482 = vunpack.c.l.b16 %v3194
    %v4483 = vunpack.c.h.b16 %v3194
    %v4484 = vunpack.c.l.b16 %v3195
    %v4485 = vunpack.c.h.b16 %v3195
    %v4486 = vunpack.c.l.b16 %v3196
    %v4487 = vunpack.c.h.b16 %v3196
    %v4488 = vunpack.c.l.b16 %v3197
    %v4489 = vunpack.c.h.b16 %v3197
    %v4490 = vunpack.c.l.b16 %v3198
    %v4491 = vunpack.c.h.b16 %v3198
    %v4492 = vunpack.c.l.b16 %v3199
    %v4493 = vunpack.c.h.b16 %v3199
    %v4494 = vunpack.c.l.b16 %v3200
    %v4495 = vunpack.c.h.b16 %v3200
    %v4496 = vunpack.c.l.b16 %v3201
    %v4497 = vunpack.c.h.b16 %v3201
    %v4498 = vunpack.c.l.b16 %v3202
    %v4499 = vunpack.c.h.b16 %v3202
    %v4500 = vunpack.c.l.b16 %v3203
    %v4501 = vunpack.c.h.b16 %v3203
    %v4502 = vunpack.c.l.b16 %v3204
    %v4503 = vunpack.c.h.b16 %v3204
    %v4504 = vunpack.c.l.b16 %v3205
    %v4505 = vunpack.c.h.b16 %v3205
    %v4506 = vunpack.c.l.b16 %v3206
    %v4507 = vunpack.c.h.b16 %v3206
    %v4508 = vunpack.c.l.b16 %v3207
    %v4509 = vunpack.c.h.b16 %v3207
    %v4510 = vunpack.c.l.b16 %v3208
    %v4511 = vunpack.c.h.b16 %v3208
    %v4512 = vunpack.c.l.b16 %v3209
    %v4513 = vunpack.c.h.b16 %v3209
    %v4514 = vunpack.c.l.b16 %v3210
    %v4515 = vunpack.c.h.b16 %v3210
    %v4516 = vunpack.c.l.b16 %v3211
    %v4517 = vunpack.c.h.b16 %v3211
    %v4518 = vunpack.c.l.b16 %v3212
    %v4519 = vunpack.c.h.b16 %v3212
    %v4520 = vunpack.c.l.b16 %v3213
    %v4521 = vunpack.c.h.b16 %v3213
    %v4522 = vunpack.c.l.b16 %v3214
    %v4523 = vunpack.c.h.b16 %v3214
    %v4524 = vunpack.c.l.b16 %v3215
    %v4525 = vunpack.c.h.b16 %v3215
    %v4526 = vunpack.c.l.b16 %v3216
    %v4527 = vunpack.c.h.b16 %v3216
    %v4528 = vunpack.c.l.b16 %v3217
    %v4529 = vunpack.c.h.b16 %v3217
    %v4530 = vunpack.c.l.b16 %v3218
    %v4531 = vunpack.c.h.b16 %v3218
    %v4532 = vunpack.c.l.b16 %v3219
    %v4533 = vunpack.c.h.b16 %v3219
    %v4534 = vunpack.c.l.b16 %v3220
    %v4535 = vunpack.c.h.b16 %v3220
    %v4536 = vunpack.c.l.b16 %v3221
    %v4537 = vunpack.c.h.b16 %v3221
    %v4538 = vunpack.c.l.b16 %v3222
    %v4539 = vunpack.c.h.b16 %v3222
    %v4540 = vunpack.c.l.b16 %v3223
    %v4541 = vunpack.c.h.b16 %v3223
    %v4542 = vunpack.c.l.b16 %v3224
    %v4543 = vunpack.c.h.b16 %v3224
    %v4544 = vunpack.c.l.b16 %v3225
    %v4545 = vunpack.c.h.b16 %v3225
    %v4546 = vunpack.c.l.b16 %v3226
    %v4547 = vunpack.c.h.b16 %v3226
    %v4548 = vunpack.c.l.b16 %v3227
    %v4549 = vunpack.c.h.b16 %v3227
    %v4550 = vunpack.c.l.b16 %v3228
    %v4551 = vunpack.c.h.b16 %v3228
    %v4552 = vunpack.c.l.b16 %v3229
    %v4553 = vunpack.c.h.b16 %v3229
    %v4554 = vunpack.c.l.b16 %v3230
    %v4555 = vunpack.c.h.b16 %v3230
    %v4556 = vunpack.c.l.b16 %v3231
    %v4557 = vunpack.c.h.b16 %v3231
    %v4558 = vunpack.c.l.b16 %v3232
    %v4559 = vunpack.c.h.b16 %v3232
    %v4560 = vunpack.c.l.b16 %v3233
    %v4561 = vunpack.c.h.b16 %v3233
    %v4562 = vunpack.c.l.b16 %v3234
    %v4563 = vunpack.c.h.b16 %v3234
    %v4564 = vunpack.c.l.b16 %v3235
    %v4565 = vunpack.c.h.b16 %v3235
    %v4566 = vunpack.c.l.b16 %v3236
    %v4567 = vunpack.c.h.b16 %v3236
    %v4568 = vunpack.c.l.b16 %v3237
    %v4569 = vunpack.c.h.b16 %v3237
    %v4570 = vunpack.c.l.b16 %v3238
    %v4571 = vunpack.c.h.b16 %v3238
    %v4572 = vunpack.c.l.b16 %v3239
    %v4573 = vunpack.c.h.b16 %v3239
    %v4574 = vunpack.c.l.b16 %v3240
    %v4575 = vunpack.c.h.b16 %v3240
    %v4576 = vunpack.c.l.b16 %v3241
    %v4577 = vunpack.c.h.b16 %v3241
    %v4578 = vunpack.c.l.b16 %v3242
    %v4579 = vunpack.c.h.b16 %v3242
    %v4580 = vunpack.c.l.b16 %v3243
    %v4581 = vunpack.c.h.b16 %v3243
    %v4582 = vunpack.c.l.b16 %v3244
    %v4583 = vunpack.c.h.b16 %v3244
    %v4584 = vunpack.c.l.b16 %v3245
    %v4585 = vunpack.c.h.b16 %v3245
    %v4586 = vunpack.c.l.b16 %v3246
    %v4587 = vunpack.c.h.b16 %v3246
    %v4588 = vunpack.c.l.b16 %v3247
    %v4589 = vunpack.c.h.b16 %v3247
    %v4590 = vunpack.c.l.b16 %v3248
    %v4591 = vunpack.c.h.b16 %v3248
    %v4592 = vunpack.c.l.b16 %v3249
    %v4593 = vunpack.c.h.b16 %v3249
    %v4594 = vunpack.c.l.b16 %v3250
    %v4595 = vunpack.c.h.b16 %v3250
    %v4596 = vunpack.c.l.b16 %v3251
    %v4597 = vunpack.c.h.b16 %v3251
    %v4598 = vunpack.c.l.b16 %v3252
    %v4599 = vunpack.c.h.b16 %v3252
    %v4600 = vunpack.c.l.b16 %v3253
    %v4601 = vunpack.c.h.b16 %v3253
    %v4602 = vunpack.c.l.b16 %v3254
    %v4603 = vunpack.c.h.b16 %v3254
    %v4604 = vunpack.c.l.b16 %v3255
    %v4605 = vunpack.c.h.b16 %v3255
    %v4606 = vunpack.c.l.b16 %v3256
    %v4607 = vunpack.c.h.b16 %v3256
    %v4608 = vunpack.c.l.b16 %v3257
    %v4609 = vunpack.c.h.b16 %v3257
    %v4610 = vunpack.c.l.b16 %v3258
    %v4611 = vunpack.c.h.b16 %v3258
    %v4612 = vunpack.c.l.b16 %v3259
    %v4613 = vunpack.c.h.b16 %v3259
    %v4614 = vunpack.c.l.b16 %v3260
    %v4615 = vunpack.c.h.b16 %v3260
    %v4616 = vunpack.c.l.b16 %v3261
    %v4617 = vunpack.c.h.b16 %v3261
    %v4618 = vunpack.c.l.b16 %v3262
    %v4619 = vunpack.c.h.b16 %v3262
    %v4620 = vunpack.c.l.b16 %v3263
    %v4621 = vunpack.c.h.b16 %v3263
    %v4622 = vunpack.c.l.b16 %v3264
    %v4623 = vunpack.c.h.b16 %v3264
    %v4624 = vunpack.c.l.b16 %v3265
    %v4625 = vunpack.c.h.b16 %v3265
    %v4626 = vunpack.c.l.b16 %v3266
    %v4627 = vunpack.c.h.b16 %v3266
    %v4628 = vunpack.c.l.b16 %v3267
    %v4629 = vunpack.c.h.b16 %v3267
    %v4630 = vunpack.c.l.b16 %v3268
    %v4631 = vunpack.c.h.b16 %v3268
    %v4632 = vunpack.c.l.b16 %v3269
    %v4633 = vunpack.c.h.b16 %v3269
    %v4634 = vunpack.c.l.b16 %v3270
    %v4635 = vunpack.c.h.b16 %v3270
    %v4636 = vunpack.c.l.b16 %v3271
    %v4637 = vunpack.c.h.b16 %v3271
    %v4638 = vunpack.c.l.b16 %v3272
    %v4639 = vunpack.c.h.b16 %v3272
    %v4640 = vunpack.c.l.b16 %v3273
    %v4641 = vunpack.c.h.b16 %v3273
    %v4642 = vunpack.c.l.b16 %v3274
    %v4643 = vunpack.c.h.b16 %v3274
    %v4644 = vunpack.c.l.b16 %v3275
    %v4645 = vunpack.c.h.b16 %v3275
    %v4646 = vunpack.c.l.b16 %v3276
    %v4647 = vunpack.c.h.b16 %v3276
    %v4648 = vunpack.c.l.b16 %v3277
    %v4649 = vunpack.c.h.b16 %v3277
    %v4650 = vunpack.c.l.b16 %v3278
    %v4651 = vunpack.c.h.b16 %v3278
    %v4652 = vunpack.c.l.b16 %v3279
    %v4653 = vunpack.c.h.b16 %v3279
    %v4654 = vunpack.c.l.b16 %v3280
    %v4655 = vunpack.c.h.b16 %v3280
    %v4656 = vunpack.c.l.b16 %v3281
    %v4657 = vunpack.c.h.b16 %v3281
    %v4658 = vunpack.c.l.b16 %v3282
    %v4659 = vunpack.c.h.b16 %v3282
    %v4660 = vunpack.c.l.b16 %v3283
    %v4661 = vunpack.c.h.b16 %v3283
    %v4662 = vunpack.c.l.b16 %v3284
    %v4663 = vunpack.c.h.b16 %v3284
    %v4664 = vunpack.c.l.b16 %v3285
    %v4665 = vunpack.c.h.b16 %v3285
    %v4666 = vunpack.c.l.b16 %v3286
    %v4667 = vunpack.c.h.b16 %v3286
    %v4668 = vunpack.c.l.b16 %v3287
    %v4669 = vunpack.c.h.b16 %v3287
    %v4670 = vunpack.c.l.b16 %v3288
    %v4671 = vunpack.c.h.b16 %v3288
    %v4672 = vunpack.c.l.b16 %v3289
    %v4673 = vunpack.c.h.b16 %v3289
    %v4674 = vunpack.c.l.b16 %v3290
    %v4675 = vunpack.c.h.b16 %v3290
    %v4676 = vunpack.c.l.b16 %v3291
    %v4677 = vunpack.c.h.b16 %v3291
    %v4678 = vunpack.c.l.b16 %v3292
    %v4679 = vunpack.c.h.b16 %v3292
    %v4680 = vunpack.c.l.b16 %v3293
    %v4681 = vunpack.c.h.b16 %v3293
    %v4682 = vunpack.c.l.b16 %v3294
    %v4683 = vunpack.c.h.b16 %v3294
    %v4684 = vunpack.c.l.b16 %v3295
    %v4685 = vunpack.c.h.b16 %v3295
    %v4686 = vunpack.c.l.b16 %v3296
    %v4687 = vunpack.c.h.b16 %v3296
    %v4688 = vunpack.c.l.b16 %v3297
    %v4689 = vunpack.c.h.b16 %v3297
    %v4690 = vunpack.c.l.b16 %v3298
    %v4691 = vunpack.c.h.b16 %v3298
    %v4692 = vunpack.c.l.b16 %v3299
    %v4693 = vunpack.c.h.b16 %v3299
    %v4694 = vunpack.c.l.b16 %v3300
    %v4695 = vunpack.c.h.b16 %v3300
    %v4696 = vunpack.c.l.b16 %v3301
    %v4697 = vunpack.c.h.b16 %v3301
    %v4698 = vunpack.c.l.b16 %v3302
    %v4699 = vunpack.c.h.b16 %v3302
    %v4700 = vunpack.c.l.b16 %v3303
    %v4701 = vunpack.c.h.b16 %v3303
    %v4702 = vunpack.c.l.b16 %v3304
    %v4703 = vunpack.c.h.b16 %v3304
    %v4704 = vunpack.c.l.b16 %v3305
    %v4705 = vunpack.c.h.b16 %v3305
    %v4706 = vunpack.c.l.b16 %v3306
    %v4707 = vunpack.c.h.b16 %v3306
    %v4708 = vunpack.c.l.b16 %v3307
    %v4709 = vunpack.c.h.b16 %v3307
    %v4710 = vunpack.c.l.b16 %v3308
    %v4711 = vunpack.c.h.b16 %v3308
    %v4712 = vunpack.c.l.b16 %v3309
    %v4713 = vunpack.c.h.b16 %v3309
    %v4714 = vunpack.c.l.b16 %v3310
    %v4715 = vunpack.c.h.b16 %v3310
    %v4716 = vunpack.c.l.b16 %v3311
    %v4717 = vunpack.c.h.b16 %v3311
    %v4718 = vunpack.c.l.b16 %v3312
    %v4719 = vunpack.c.h.b16 %v3312
    %v4720 = vunpack.c.l.b16 %v3313
    %v4721 = vunpack.c.h.b16 %v3313
    %v4722 = vunpack.c.l.b16 %v3314
    %v4723 = vunpack.c.h.b16 %v3314
    %v4724 = vunpack.c.l.b16 %v3315
    %v4725 = vunpack.c.h.b16 %v3315
    %v4726 = vunpack.c.l.b16 %v3316
    %v4727 = vunpack.c.h.b16 %v3316
    %v4728 = vunpack.c.l.b16 %v3317
    %v4729 = vunpack.c.h.b16 %v3317
    %v4730 = vunpack.c.l.b16 %v3318
    %v4731 = vunpack.c.h.b16 %v3318
    %v4732 = vunpack.c.l.b16 %v3319
    %v4733 = vunpack.c.h.b16 %v3319
    %v4734 = vunpack.c.l.b16 %v3320
    %v4735 = vunpack.c.h.b16 %v3320
    %v4736 = vunpack.c.l.b16 %v3321
    %v4737 = vunpack.c.h.b16 %v3321
    %v4738 = vunpack.c.l.b16 %v3322
    %v4739 = vunpack.c.h.b16 %v3322
    %v4740 = vunpack.c.l.b16 %v3323
    %v4741 = vunpack.c.h.b16 %v3323
    %v4742 = vunpack.c.l.b16 %v3324
    %v4743 = vunpack.c.h.b16 %v3324
    %v4744 = vunpack.c.l.b16 %v3325
    %v4745 = vunpack.c.h.b16 %v3325
    %v4746 = vunpack.c.l.b16 %v3326
    %v4747 = vunpack.c.h.b16 %v3326
    %v4748 = vunpack.c.l.b16 %v3327
    %v4749 = vunpack.c.h.b16 %v3327
    %v4750 = vunpack.c.l.b16 %v3328
    %v4751 = vunpack.c.h.b16 %v3328
    %v4752 = vunpack.c.l.b16 %v3329
    %v4753 = vunpack.c.h.b16 %v3329
    %v4754 = vunpack.c.l.b16 %v3330
    %v4755 = vunpack.c.h.b16 %v3330
    %v4756 = vunpack.c.l.b16 %v3331
    %v4757 = vunpack.c.h.b16 %v3331
    %v4758 = vunpack.c.l.b16 %v3332
    %v4759 = vunpack.c.h.b16 %v3332
    %v4760 = vunpack.c.l.b16 %v3333
    %v4761 = vunpack.c.h.b16 %v3333
    %v4762 = vunpack.c.l.b16 %v3334
    %v4763 = vunpack.c.h.b16 %v3334
    %v4764 = vunpack.c.l.b16 %v3335
    %v4765 = vunpack.c.h.b16 %v3335
    %v4766 = vunpack.c.l.b16 %v3336
    %v4767 = vunpack.c.h.b16 %v3336
    %v4768 = vunpack.c.l.b16 %v3337
    %v4769 = vunpack.c.h.b16 %v3337
    %v4770 = vunpack.c.l.b16 %v3338
    %v4771 = vunpack.c.h.b16 %v3338
    %v4772 = vunpack.c.l.b16 %v3339
    %v4773 = vunpack.c.h.b16 %v3339
    %v4774 = vunpack.c.l.b16 %v3340
    %v4775 = vunpack.c.h.b16 %v3340
    %v4776 = vunpack.c.l.b16 %v3341
    %v4777 = vunpack.c.h.b16 %v3341
    %v4778 = vunpack.c.l.b16 %v3342
    %v4779 = vunpack.c.h.b16 %v3342
    %v4780 = vunpack.c.l.b16 %v3343
    %v4781 = vunpack.c.h.b16 %v3343
    %v4782 = vunpack.c.l.b16 %v3344
    %v4783 = vunpack.c.h.b16 %v3344
    %v4784 = vunpack.c.l.b16 %v3345
    %v4785 = vunpack.c.h.b16 %v3345
    %v4786 = vunpack.c.l.b16 %v3346
    %v4787 = vunpack.c.h.b16 %v3346
    %v4788 = vunpack.c.l.b16 %v3347
    %v4789 = vunpack.c.h.b16 %v3347
    %v4790 = vunpack.c.l.b16 %v3348
    %v4791 = vunpack.c.h.b16 %v3348
    %v4792 = vunpack.c.l.b16 %v3349
    %v4793 = vunpack.c.h.b16 %v3349
    %v4794 = vunpack.c.l.b16 %v3350
    %v4795 = vunpack.c.h.b16 %v3350
    %v4796 = vunpack.c.l.b16 %v3351
    %v4797 = vunpack.c.h.b16 %v3351
    %v4798 = vunpack.c.l.b16 %v3352
    %v4799 = vunpack.c.h.b16 %v3352
    %v4800 = vunpack.c.l.b16 %v3353
    %v4801 = vunpack.c.h.b16 %v3353
    %v4802 = vunpack.c.l.b16 %v3354
    %v4803 = vunpack.c.h.b16 %v3354
    %v4804 = vunpack.c.l.b16 %v3355
    %v4805 = vunpack.c.h.b16 %v3355
    %v4806 = vunpack.c.l.b16 %v3356
    %v4807 = vunpack.c.h.b16 %v3356
    %v4808 = vunpack.c.l.b16 %v3357
    %v4809 = vunpack.c.h.b16 %v3357
    %v4810 = vunpack.c.l.b16 %v3358
    %v4811 = vunpack.c.h.b16 %v3358
    %v4812 = vunpack.c.l.b16 %v3359
    %v4813 = vunpack.c.h.b16 %v3359
    %v4814 = vunpack.c.l.b16 %v3360
    %v4815 = vunpack.c.h.b16 %v3360
    %v4816 = vunpack.c.l.b16 %v3361
    %v4817 = vunpack.c.h.b16 %v3361
    %v4818 = vunpack.c.l.b16 %v3362
    %v4819 = vunpack.c.h.b16 %v3362
    %v4820 = vunpack.c.l.b16 %v3363
    %v4821 = vunpack.c.h.b16 %v3363
    %v4822 = vunpack.c.l.b16 %v3364
    %v4823 = vunpack.c.h.b16 %v3364
    %v4824 = vunpack.c.l.b16 %v3365
    %v4825 = vunpack.c.h.b16 %v3365
    %v4826 = vunpack.c.l.b16 %v3366
    %v4827 = vunpack.c.h.b16 %v3366
    %v4828 = vunpack.c.l.b16 %v3367
    %v4829 = vunpack.c.h.b16 %v3367
    %v4830 = vunpack.c.l.b16 %v3368
    %v4831 = vunpack.c.h.b16 %v3368
    %v4832 = vunpack.c.l.b16 %v3369
    %v4833 = vunpack.c.h.b16 %v3369
    %v4834 = vunpack.c.l.b16 %v3370
    %v4835 = vunpack.c.h.b16 %v3370
    %v4836 = vunpack.c.l.b16 %v3371
    %v4837 = vunpack.c.h.b16 %v3371
    %v4838 = vunpack.c.l.b16 %v3372
    %v4839 = vunpack.c.h.b16 %v3372
    %v4840 = vunpack.c.l.b16 %v3373
    %v4841 = vunpack.c.h.b16 %v3373
    %v4842 = vunpack.c.l.b16 %v3374
    %v4843 = vunpack.c.h.b16 %v3374
    %v4844 = vunpack.c.l.b16 %v3375
    %v4845 = vunpack.c.h.b16 %v3375
    %v4846 = vunpack.c.l.b16 %v3376
    %v4847 = vunpack.c.h.b16 %v3376
    %v4848 = vunpack.c.l.b16 %v3377
    %v4849 = vunpack.c.h.b16 %v3377
    %v4850 = vunpack.c.l.b16 %v3378
    %v4851 = vunpack.c.h.b16 %v3378
    %v4852 = vunpack.c.l.b16 %v3379
    %v4853 = vunpack.c.h.b16 %v3379
    %v4854 = vunpack.c.l.b16 %v3380
    %v4855 = vunpack.c.h.b16 %v3380
    %v4856 = vunpack.c.l.b16 %v3381
    %v4857 = vunpack.c.h.b16 %v3381
    %v4858 = vunpack.c.l.b16 %v3382
    %v4859 = vunpack.c.h.b16 %v3382
    %v4860 = vunpack.c.l.b16 %v3383
    %v4861 = vunpack.c.h.b16 %v3383
    %v4862 = vunpack.c.l.b16 %v3384
    %v4863 = vunpack.c.h.b16 %v3384
    %v4864 = vunpack.c.l.b16 %v3385
    %v4865 = vunpack.c.h.b16 %v3385
    %v4866 = vunpack.c.l.b16 %v3386
    %v4867 = vunpack.c.h.b16 %v3386
    %v4868 = vunpack.c.l.b16 %v3387
    %v4869 = vunpack.c.h.b16 %v3387
    %v4870 = vunpack.c.l.b16 %v3388
    %v4871 = vunpack.c.h.b16 %v3388
    %v4872 = vunpack.c.l.b16 %v3389
    %v4873 = vunpack.c.h.b16 %v3389
    %v4874 = vunpack.c.l.b16 %v3390
    %v4875 = vunpack.c.h.b16 %v3390
    %v4876 = vunpack.c.l.b16 %v3391
    %v4877 = vunpack.c.h.b16 %v3391
    %v4878 = vunpack.c.l.b16 %v3392
    %v4879 = vunpack.c.h.b16 %v3392
    %v4880 = vunpack.c.l.b16 %v3393
    %v4881 = vunpack.c.h.b16 %v3393
    %v4882 = vunpack.c.l.b16 %v3394
    %v4883 = vunpack.c.h.b16 %v3394
    %v4884 = vunpack.c.l.b16 %v3395
    %v4885 = vunpack.c.h.b16 %v3395
    %v4886 = vunpack.c.l.b16 %v3396
    %v4887 = vunpack.c.h.b16 %v3396
    %v4888 = vunpack.c.l.b16 %v3397
    %v4889 = vunpack.c.h.b16 %v3397
    %v4890 = vunpack.c.l.b16 %v3398
    %v4891 = vunpack.c.h.b16 %v3398
    %v4892 = vunpack.c.l.b16 %v3399
    %v4893 = vunpack.c.h.b16 %v3399
    %v4894 = vunpack.c.l.b16 %v3400
    %v4895 = vunpack.c.h.b16 %v3400
    %v4896 = vunpack.c.l.b16 %v3401
    %v4897 = vunpack.c.h.b16 %v3401
    %v4898 = vunpack.c.l.b16 %v3402
    %v4899 = vunpack.c.h.b16 %v3402
    %v4900 = vunpack.c.l.b16 %v3403
    %v4901 = vunpack.c.h.b16 %v3403
    %v4902 = vunpack.c.l.b16 %v3404
    %v4903 = vunpack.c.h.b16 %v3404
    %v4904 = vunpack.c.l.b16 %v3405
    %v4905 = vunpack.c.h.b16 %v3405
    %v4906 = vunpack.c.l.b16 %v3406
    %v4907 = vunpack.c.h.b16 %v3406
    %v4908 = vunpack.c.l.b16 %v3407
    %v4909 = vunpack.c.h.b16 %v3407
    %v4910 = vunpack.c.l.b16 %v3408
    %v4911 = vunpack.c.h.b16 %v3408
    %v4912 = vunpack.c.l.b16 %v3409
    %v4913 = vunpack.c.h.b16 %v3409
    %v4914 = vunpack.c.l.b16 %v3410
    %v4915 = vunpack.c.h.b16 %v3410
    %v4916 = vunpack.c.l.b16 %v3411
    %v4917 = vunpack.c.h.b16 %v3411
    %v4918 = vunpack.c.l.b16 %v3412
    %v4919 = vunpack.c.h.b16 %v3412
    %v4920 = vunpack.c.l.b16 %v3413
    %v4921 = vunpack.c.h.b16 %v3413
    %v4922 = vunpack.c.l.b16 %v3414
    %v4923 = vunpack.c.h.b16 %v3414
    %v4924 = vunpack.c.l.b16 %v3415
    %v4925 = vunpack.c.h.b16 %v3415
    %v4926 = vunpack.c.l.b16 %v3416
    %v4927 = vunpack.c.h.b16 %v3416
    %v4928 = vunpack.c.l.b16 %v3417
    %v4929 = vunpack.c.h.b16 %v3417
    %v4930 = vunpack.c.l.b16 %v3418
    %v4931 = vunpack.c.h.b16 %v3418
    %v4932 = vunpack.c.l.b16 %v3419
    %v4933 = vunpack.c.h.b16 %v3419
    %v4934 = vunpack.c.l.b16 %v3420
    %v4935 = vunpack.c.h.b16 %v3420
    %v4936 = vunpack.c.l.b16 %v3421
    %v4937 = vunpack.c.h.b16 %v3421
    %v4938 = vunpack.c.l.b16 %v3422
    %v4939 = vunpack.c.h.b16 %v3422
    %v4940 = vunpack.c.l.b16 %v3423
    %v4941 = vunpack.c.h.b16 %v3423
    %v4942 = vunpack.c.l.b16 %v3424
    %v4943 = vunpack.c.h.b16 %v3424
    %v4944 = vunpack.c.l.b16 %v3425
    %v4945 = vunpack.c.h.b16 %v3425
    %v4946 = vunpack.c.l.b16 %v3426
    %v4947 = vunpack.c.h.b16 %v3426
    %v4948 = vunpack.c.l.b16 %v3427
    %v4949 = vunpack.c.h.b16 %v3427
    %v4950 = vunpack.c.l.b16 %v3428
    %v4951 = vunpack.c.h.b16 %v3428
    %v4952 = vunpack.c.l.b16 %v3429
    %v4953 = vunpack.c.h.b16 %v3429
    %v4954 = vunpack.c.l.b16 %v3430
    %v4955 = vunpack.c.h.b16 %v3430
    %v4956 = vunpack.c.l.b16 %v3431
    %v4957 = vunpack.c.h.b16 %v3431
    %v4958 = vunpack.c.l.b16 %v3432
    %v4959 = vunpack.c.h.b16 %v3432
    %v4960 = vunpack.c.l.b16 %v3433
    %v4961 = vunpack.c.h.b16 %v3433
    %v4962 = vunpack.c.l.b16 %v3434
    %v4963 = vunpack.c.h.b16 %v3434
    %v4964 = vunpack.c.l.b16 %v3435
    %v4965 = vunpack.c.h.b16 %v3435
    %v4966 = vunpack.c.l.b16 %v3436
    %v4967 = vunpack.c.h.b16 %v3436
    %v4968 = vunpack.c.l.b16 %v3437
    %v4969 = vunpack.c.h.b16 %v3437
    %v4970 = vunpack.c.l.b16 %v3438
    %v4971 = vunpack.c.h.b16 %v3438
    %v4972 = vunpack.c.l.b16 %v3439
    %v4973 = vunpack.c.h.b16 %v3439
    %v4974 = vunpack.c.l.b16 %v3440
    %v4975 = vunpack.c.h.b16 %v3440
    %v4976 = vunpack.c.l.b16 %v3441
    %v4977 = vunpack.c.h.b16 %v3441
    %v4978 = vunpack.c.l.b16 %v3442
    %v4979 = vunpack.c.h.b16 %v3442
    %v4980 = vunpack.c.l.b16 %v3443
    %v4981 = vunpack.c.h.b16 %v3443
    %v4982 = vunpack.c.l.b16 %v3444
    %v4983 = vunpack.c.h.b16 %v3444
    %v4984 = vunpack.c.l.b16 %v3445
    %v4985 = vunpack.c.h.b16 %v3445
    %v4986 = vunpack.c.l.b16 %v3446
    %v4987 = vunpack.c.h.b16 %v3446
    %v4988 = vunpack.c.l.b16 %v3447
    %v4989 = vunpack.c.h.b16 %v3447
    %v4990 = vunpack.c.l.b16 %v3448
    %v4991 = vunpack.c.h.b16 %v3448
    %v4992 = vunpack.c.l.b16 %v3449
    %v4993 = vunpack.c.h.b16 %v3449
    %v4994 = vunpack.c.l.b16 %v3450
    %v4995 = vunpack.c.h.b16 %v3450
    %v4996 = vunpack.c.l.b16 %v3451
    %v4997 = vunpack.c.h.b16 %v3451
    %v4998 = vunpack.c.l.b16 %v3452
    %v4999 = vunpack.c.h.b16 %v3452
    %v5000 = vunpack.c.l.b16 %v3453
    %v5001 = vunpack.c.h.b16 %v3453
    %v5002 = vunpack.c.l.b16 %v3454
    %v5003 = vunpack.c.h.b16 %v3454
    %v5004 = vunpack.c.l.b16 %v3455
    %v5005 = vunpack.c.h.b16 %v3455
    %v5006 = vunpack.c.l.b16 %v3456
    %v5007 = vunpack.c.h.b16 %v3456
    %v5008 = vunpack.c.l.b16 %v3457
    %v5009 = vunpack.c.h.b16 %v3457
    %v5010 = vunpack.c.l.b16 %v3458
    %v5011 = vunpack.c.h.b16 %v3458
    %v5012 = vunpack.c.l.b16 %v3459
    %v5013 = vunpack.c.h.b16 %v3459
    %v5014 = vunpack.c.l.b16 %v3460
    %v5015 = vunpack.c.h.b16 %v3460
    %v5016 = vunpack.c.l.b16 %v3461
    %v5017 = vunpack.c.h.b16 %v3461
    %v5018 = vunpack.c.l.b16 %v3462
    %v5019 = vunpack.c.h.b16 %v3462
    %v5020 = vunpack.c.l.b16 %v3463
    %v5021 = vunpack.c.h.b16 %v3463
    %v5022 = vunpack.c.l.b16 %v3464
    %v5023 = vunpack.c.h.b16 %v3464
    %v5024 = vunpack.c.l.b16 %v3465
    %v5025 = vunpack.c.h.b16 %v3465
    %v5026 = vunpack.c.l.b16 %v3466
    %v5027 = vunpack.c.h.b16 %v3466
    %v5028 = vunpack.c.l.b16 %v3467
    %v5029 = vunpack.c.h.b16 %v3467
    %v5030 = vunpack.c.l.b16 %v3468
    %v5031 = vunpack.c.h.b16 %v3468
    %v5032 = vunpack.c.l.b16 %v3469
    %v5033 = vunpack.c.h.b16 %v3469
    %v5034 = vunpack.c.l.b16 %v3470
    %v5035 = vunpack.c.h.b16 %v3470
    %v5036 = vunpack.c.l.b16 %v3471
    %v5037 = vunpack.c.h.b16 %v3471
    %v5038 = vunpack.c.l.b16 %v3472
    %v5039 = vunpack.c.h.b16 %v3472
    %v5040 = vunpack.c.l.b16 %v3473
    %v5041 = vunpack.c.h.b16 %v3473
    %v5042 = vunpack.c.l.b16 %v3474
    %v5043 = vunpack.c.h.b16 %v3474
    %v5044 = vunpack.c.l.b16 %v3475
    %v5045 = vunpack.c.h.b16 %v3475
    %v5046 = vunpack.c.l.b16 %v3476
    %v5047 = vunpack.c.h.b16 %v3476
    %v5048 = vunpack.c.l.b16 %v3477
    %v5049 = vunpack.c.h.b16 %v3477
    %v5050 = vpack.c.b16 %v4042, %v4026
    %v5051 = vpack.c.b16 %v4043, %v4027
    %v5052 = vpack.c.b16 %v4044, %v4028
    %v5053 = vpack.c.b16 %v4045, %v4029
    %v5054 = vpack.c.b16 %v4046, %v4030
    %v5055 = vpack.c.b16 %v4047, %v4031
    %v5056 = vpack.c.b16 %v4048, %v4032
    %v5057 = vpack.c.b16 %v4049, %v4033
    %v5058 = vpack.c.b16 %v4050, %v4034
    %v5059 = vpack.c.b16 %v4051, %v4035
    %v5060 = vpack.c.b16 %v4052, %v4036
    %v5061 = vpack.c.b16 %v4053, %v4037
    %v5062 = vpack.c.b16 %v4054, %v4038
    %v5063 = vpack.c.b16 %v4055, %v4039
    %v5064 = vpack.c.b16 %v4056, %v4040
    %v5065 = vpack.c.b16 %v4057, %v4041
    %v5066 = vpack.c.b16 %v4074, %v4058
    %v5067 = vpack.c.b16 %v4075, %v4059
    %v5068 = vpack.c.b16 %v4076, %v4060
    %v5069 = vpack.c.b16 %v4077, %v4061
    %v5070 = vpack.c.b16 %v4078, %v4062
    %v5071 = vpack.c.b16 %v4079, %v4063
    %v5072 = vpack.c.b16 %v4080, %v4064
    %v5073 = vpack.c.b16 %v4081, %v4065
    %v5074 = vpack.c.b16 %v4082, %v4066
    %v5075 = vpack.c.b16 %v4083, %v4067
    %v5076 = vpack.c.b16 %v4084, %v4068
    %v5077 = vpack.c.b16 %v4085, %v4069
    %v5078 = vpack.c.b16 %v4086, %v4070
    %v5079 = vpack.c.b16 %v4087, %v4071
    %v5080 = vpack.c.b16 %v4088, %v4072
    %v5081 = vpack.c.b16 %v4089, %v4073
    %v5082 = vpack.c.b16 %v4106, %v4090
    %v5083 = vpack.c.b16 %v4107, %v4091
    %v5084 = vpack.c.b16 %v4108, %v4092
    %v5085 = vpack.c.b16 %v4109, %v4093
    %v5086 = vpack.c.b16 %v4110, %v4094
    %v5087 = vpack.c.b16 %v4111, %v4095
    %v5088 = vpack.c.b16 %v4112, %v4096
    %v5089 = vpack.c.b16 %v4113, %v4097
    %v5090 = vpack.c.b16 %v4114, %v4098
    %v5091 = vpack.c.b16 %v4115, %v4099
    %v5092 = vpack.c.b16 %v4116, %v4100
    %v5093 = vpack.c.b16 %v4117, %v4101
    %v5094 = vpack.c.b16 %v4118, %v4102
    %v5095 = vpack.c.b16 %v4119, %v4103
    %v5096 = vpack.c.b16 %v4120, %v4104
    %v5097 = vpack.c.b16 %v4121, %v4105
    %v5098 = vpack.c.b16 %v4138, %v4122
    %v5099 = vpack.c.b16 %v4139, %v4123
    %v5100 = vpack.c.b16 %v4140, %v4124
    %v5101 = vpack.c.b16 %v4141, %v4125
    %v5102 = vpack.c.b16 %v4142, %v4126
    %v5103 = vpack.c.b16 %v4143, %v4127
    %v5104 = vpack.c.b16 %v4144, %v4128
    %v5105 = vpack.c.b16 %v4145, %v4129
    %v5106 = vpack.c.b16 %v4146, %v4130
    %v5107 = vpack.c.b16 %v4147, %v4131
    %v5108 = vpack.c.b16 %v4148, %v4132
    %v5109 = vpack.c.b16 %v4149, %v4133
    %v5110 = vpack.c.b16 %v4150, %v4134
    %v5111 = vpack.c.b16 %v4151, %v4135
    %v5112 = vpack.c.b16 %v4152, %v4136
    %v5113 = vpack.c.b16 %v4153, %v4137
    %v5114 = vpack.c.b16 %v4170, %v4154
    %v5115 = vpack.c.b16 %v4171, %v4155
    %v5116 = vpack.c.b16 %v4172, %v4156
    %v5117 = vpack.c.b16 %v4173, %v4157
    %v5118 = vpack.c.b16 %v4174, %v4158
    %v5119 = vpack.c.b16 %v4175, %v4159
    %v5120 = vpack.c.b16 %v4176, %v4160
    %v5121 = vpack.c.b16 %v4177, %v4161
    %v5122 = vpack.c.b16 %v4178, %v4162
    %v5123 = vpack.c.b16 %v4179, %v4163
    %v5124 = vpack.c.b16 %v4180, %v4164
    %v5125 = vpack.c.b16 %v4181, %v4165
    %v5126 = vpack.c.b16 %v4182, %v4166
    %v5127 = vpack.c.b16 %v4183, %v4167
    %v5128 = vpack.c.b16 %v4184, %v4168
    %v5129 = vpack.c.b16 %v4185, %v4169
    %v5130 = vpack.c.b16 %v4202, %v4186
    %v5131 = vpack.c.b16 %v4203, %v4187
    %v5132 = vpack.c.b16 %v4204, %v4188
    %v5133 = vpack.c.b16 %v4205, %v4189
    %v5134 = vpack.c.b16 %v4206, %v4190
    %v5135 = vpack.c.b16 %v4207, %v4191
    %v5136 = vpack.c.b16 %v4208, %v4192
    %v5137 = vpack.c.b16 %v4209, %v4193
    %v5138 = vpack.c.b16 %v4210, %v4194
    %v5139 = vpack.c.b16 %v4211, %v4195
    %v5140 = vpack.c.b16 %v4212, %v4196
    %v5141 = vpack.c.b16 %v4213, %v4197
    %v5142 = vpack.c.b16 %v4214, %v4198
    %v5143 = vpack.c.b16 %v4215, %v4199
    %v5144 = vpack.c.b16 %v4216, %v4200
    %v5145 = vpack.c.b16 %v4217, %v4201
    %v5146 = vpack.c.b16 %v4234, %v4218
    %v5147 = vpack.c.b16 %v4235, %v4219
    %v5148 = vpack.c.b16 %v4236, %v4220
    %v5149 = vpack.c.b16 %v4237, %v4221
    %v5150 = vpack.c.b16 %v4238, %v4222
    %v5151 = vpack.c.b16 %v4239, %v4223
    %v5152 = vpack.c.b16 %v4240, %v4224
    %v5153 = vpack.c.b16 %v4241, %v4225
    %v5154 = vpack.c.b16 %v4242, %v4226
    %v5155 = vpack.c.b16 %v4243, %v4227
    %v5156 = vpack.c.b16 %v4244, %v4228
    %v5157 = vpack.c.b16 %v4245, %v4229
    %v5158 = vpack.c.b16 %v4246, %v4230
    %v5159 = vpack.c.b16 %v4247, %v4231
    %v5160 = vpack.c.b16 %v4248, %v4232
    %v5161 = vpack.c.b16 %v4249, %v4233
    %v5162 = vpack.c.b16 %v4266, %v4250
    %v5163 = vpack.c.b16 %v4267, %v4251
    %v5164 = vpack.c.b16 %v4268, %v4252
    %v5165 = vpack.c.b16 %v4269, %v4253
    %v5166 = vpack.c.b16 %v4270, %v4254
    %v5167 = vpack.c.b16 %v4271, %v4255
    %v5168 = vpack.c.b16 %v4272, %v4256
    %v5169 = vpack.c.b16 %v4273, %v4257
    %v5170 = vpack.c.b16 %v4274, %v4258
    %v5171 = vpack.c.b16 %v4275, %v4259
    %v5172 = vpack.c.b16 %v4276, %v4260
    %v5173 = vpack.c.b16 %v4277, %v4261
    %v5174 = vpack.c.b16 %v4278, %v4262
    %v5175 = vpack.c.b16 %v4279, %v4263
    %v5176 = vpack.c.b16 %v4280, %v4264
    %v5177 = vpack.c.b16 %v4281, %v4265
    %v5178 = vpack.c.b16 %v4298, %v4282
    %v5179 = vpack.c.b16 %v4299, %v4283
    %v5180 = vpack.c.b16 %v4300, %v4284
    %v5181 = vpack.c.b16 %v4301, %v4285
    %v5182 = vpack.c.b16 %v4302, %v4286
    %v5183 = vpack.c.b16 %v4303, %v4287
    %v5184 = vpack.c.b16 %v4304, %v4288
    %v5185 = vpack.c.b16 %v4305, %v4289
    %v5186 = vpack.c.b16 %v4306, %v4290
    %v5187 = vpack.c.b16 %v4307, %v4291
    %v5188 = vpack.c.b16 %v4308, %v4292
    %v5189 = vpack.c.b16 %v4309, %v4293
    %v5190 = vpack.c.b16 %v4310, %v4294
    %v5191 = vpack.c.b16 %v4311, %v4295
    %v5192 = vpack.c.b16 %v4312, %v4296
    %v5193 = vpack.c.b16 %v4313, %v4297
    %v5194 = vpack.c.b16 %v4330, %v4314
    %v5195 = vpack.c.b16 %v4331, %v4315
    %v5196 = vpack.c.b16 %v4332, %v4316
    %v5197 = vpack.c.b16 %v4333, %v4317
    %v5198 = vpack.c.b16 %v4334, %v4318
    %v5199 = vpack.c.b16 %v4335, %v4319
    %v5200 = vpack.c.b16 %v4336, %v4320
    %v5201 = vpack.c.b16 %v4337, %v4321
    %v5202 = vpack.c.b16 %v4338, %v4322
    %v5203 = vpack.c.b16 %v4339, %v4323
    %v5204 = vpack.c.b16 %v4340, %v4324
    %v5205 = vpack.c.b16 %v4341, %v4325
    %v5206 = vpack.c.b16 %v4342, %v4326
    %v5207 = vpack.c.b16 %v4343, %v4327
    %v5208 = vpack.c.b16 %v4344, %v4328
    %v5209 = vpack.c.b16 %v4345, %v4329
    %v5210 = vpack.c.b16 %v4362, %v4346
    %v5211 = vpack.c.b16 %v4363, %v4347
    %v5212 = vpack.c.b16 %v4364, %v4348
    %v5213 = vpack.c.b16 %v4365, %v4349
    %v5214 = vpack.c.b16 %v4366, %v4350
    %v5215 = vpack.c.b16 %v4367, %v4351
    %v5216 = vpack.c.b16 %v4368, %v4352
    %v5217 = vpack.c.b16 %v4369, %v4353
    %v5218 = vpack.c.b16 %v4370, %v4354
    %v5219 = vpack.c.b16 %v4371, %v4355
    %v5220 = vpack.c.b16 %v4372, %v4356
    %v5221 = vpack.c.b16 %v4373, %v4357
    %v5222 = vpack.c.b16 %v4374, %v4358
    %v5223 = vpack.c.b16 %v4375, %v4359
    %v5224 = vpack.c.b16 %v4376, %v4360
    %v5225 = vpack.c.b16 %v4377, %v4361
    %v5226 = vpack.c.b16 %v4394, %v4378
    %v5227 = vpack.c.b16 %v4395, %v4379
    %v5228 = vpack.c.b16 %v4396, %v4380
    %v5229 = vpack.c.b16 %v4397, %v4381
    %v5230 = vpack.c.b16 %v4398, %v4382
    %v5231 = vpack.c.b16 %v4399, %v4383
    %v5232 = vpack.c.b16 %v4400, %v4384
    %v5233 = vpack.c.b16 %v4401, %v4385
    %v5234 = vpack.c.b16 %v4402, %v4386
    %v5235 = vpack.c.b16 %v4403, %v4387
    %v5236 = vpack.c.b16 %v4404, %v4388
    %v5237 = vpack.c.b16 %v4405, %v4389
    %v5238 = vpack.c.b16 %v4406, %v4390
    %v5239 = vpack.c.b16 %v4407, %v4391
    %v5240 = vpack.c.b16 %v4408, %v4392
    %v5241 = vpack.c.b16 %v4409, %v4393
    %v5242 = vpack.c.b16 %v4426, %v4410
    %v5243 = vpack.c.b16 %v4427, %v4411
    %v5244 = vpack.c.b16 %v4428, %v4412
    %v5245 = vpack.c.b16 %v4429, %v4413
    %v5246 = vpack.c.b16 %v4430, %v4414
    %v5247 = vpack.c.b16 %v4431, %v4415
    %v5248 = vpack.c.b16 %v4432, %v4416
    %v5249 = vpack.c.b16 %v4433, %v4417
    %v5250 = vpack.c.b16 %v4434, %v4418
    %v5251 = vpack.c.b16 %v4435, %v4419
    %v5252 = vpack.c.b16 %v4436, %v4420
    %v5253 = vpack.c.b16 %v4437, %v4421
    %v5254 = vpack.c.b16 %v4438, %v4422
    %v5255 = vpack.c.b16 %v4439, %v4423
    %v5256 = vpack.c.b16 %v4440, %v4424
    %v5257 = vpack.c.b16 %v4441, %v4425
    %v5258 = vpack.c.b16 %v4458, %v4442
    %v5259 = vpack.c.b16 %v4459, %v4443
    %v5260 = vpack.c.b16 %v4460, %v4444
    %v5261 = vpack.c.b16 %v4461, %v4445
    %v5262 = vpack.c.b16 %v4462, %v4446
    %v5263 = vpack.c.b16 %v4463, %v4447
    %v5264 = vpack.c.b16 %v4464, %v4448
    %v5265 = vpack.c.b16 %v4465, %v4449
    %v5266 = vpack.c.b16 %v4466, %v4450
    %v5267 = vpack.c.b16 %v4467, %v4451
    %v5268 = vpack.c.b16 %v4468, %v4452
    %v5269 = vpack.c.b16 %v4469, %v4453
    %v5270 = vpack.c.b16 %v4470, %v4454
    %v5271 = vpack.c.b16 %v4471, %v4455
    %v5272 = vpack.c.b16 %v4472, %v4456
    %v5273 = vpack.c.b16 %v4473, %v4457
    %v5274 = vpack.c.b16 %v4490, %v4474
    %v5275 = vpack.c.b16 %v4491, %v4475
    %v5276 = vpack.c.b16 %v4492, %v4476
    %v5277 = vpack.c.b16 %v4493, %v4477
    %v5278 = vpack.c.b16 %v4494, %v4478
    %v5279 = vpack.c.b16 %v4495, %v4479
    %v5280 = vpack.c.b16 %v4496, %v4480
    %v5281 = vpack.c.b16 %v4497, %v4481
    %v5282 = vpack.c.b16 %v4498, %v4482
    %v5283 = vpack.c.b16 %v4499, %v4483
    %v5284 = vpack.c.b16 %v4500, %v4484
    %v5285 = vpack.c.b16 %v4501, %v4485
    %v5286 = vpack.c.b16 %v4502, %v4486
    %v5287 = vpack.c.b16 %v4503, %v4487
    %v5288 = vpack.c.b16 %v4504, %v4488
    %v5289 = vpack.c.b16 %v4505, %v4489
    %v5290 = vpack.c.b16 %v4522, %v4506
    %v5291 = vpack.c.b16 %v4523, %v4507
    %v5292 = vpack.c.b16 %v4524, %v4508
    %v5293 = vpack.c.b16 %v4525, %v4509
    %v5294 = vpack.c.b16 %v4526, %v4510
    %v5295 = vpack.c.b16 %v4527, %v4511
    %v5296 = vpack.c.b16 %v4528, %v4512
    %v5297 = vpack.c.b16 %v4529, %v4513
    %v5298 = vpack.c.b16 %v4530, %v4514
    %v5299 = vpack.c.b16 %v4531, %v4515
    %v5300 = vpack.c.b16 %v4532, %v4516
    %v5301 = vpack.c.b16 %v4533, %v4517
    %v5302 = vpack.c.b16 %v4534, %v4518
    %v5303 = vpack.c.b16 %v4535, %v4519
    %v5304 = vpack.c.b16 %v4536, %v4520
    %v5305 = vpack.c.b16 %v4537, %v4521
    %v5306 = vpack.c.b16 %v4554, %v4538
    %v5307 = vpack.c.b16 %v4555, %v4539
    %v5308 = vpack.c.b16 %v4556, %v4540
    %v5309 = vpack.c.b16 %v4557, %v4541
    %v5310 = vpack.c.b16 %v4558, %v4542
    %v5311 = vpack.c.b16 %v4559, %v4543
    %v5312 = vpack.c.b16 %v4560, %v4544
    %v5313 = vpack.c.b16 %v4561, %v4545
    %v5314 = vpack.c.b16 %v4562, %v4546
    %v5315 = vpack.c.b16 %v4563, %v4547
    %v5316 = vpack.c.b16 %v4564, %v4548
    %v5317 = vpack.c.b16 %v4565, %v4549
    %v5318 = vpack.c.b16 %v4566, %v4550
    %v5319 = vpack.c.b16 %v4567, %v4551
    %v5320 = vpack.c.b16 %v4568, %v4552
    %v5321 = vpack.c.b16 %v4569, %v4553
    %v5322 = vpack.c.b16 %v4586, %v4570
    %v5323 = vpack.c.b16 %v4587, %v4571
    %v5324 = vpack.c.b16 %v4588, %v4572
    %v5325 = vpack.c.b16 %v4589, %v4573
    %v5326 = vpack.c.b16 %v4590, %v4574
    %v5327 = vpack.c.b16 %v4591, %v4575
    %v5328 = vpack.c.b16 %v4592, %v4576
    %v5329 = vpack.c.b16 %v4593, %v4577
    %v5330 = vpack.c.b16 %v4594, %v4578
    %v5331 = vpack.c.b16 %v4595, %v4579
    %v5332 = vpack.c.b16 %v4596, %v4580
    %v5333 = vpack.c.b16 %v4597, %v4581
    %v5334 = vpack.c.b16 %v4598, %v4582
    %v5335 = vpack.c.b16 %v4599, %v4583
    %v5336 = vpack.c.b16 %v4600, %v4584
    %v5337 = vpack.c.b16 %v4601, %v4585
    %v5338 = vpack.c.b16 %v4618, %v4602
    %v5339 = vpack.c.b16 %v4619, %v4603
    %v5340 = vpack.c.b16 %v4620, %v4604
    %v5341 = vpack.c.b16 %v4621, %v4605
    %v5342 = vpack.c.b16 %v4622, %v4606
    %v5343 = vpack.c.b16 %v4623, %v4607
    %v5344 = vpack.c.b16 %v4624, %v4608
    %v5345 = vpack.c.b16 %v4625, %v4609
    %v5346 = vpack.c.b16 %v4626, %v4610
    %v5347 = vpack.c.b16 %v4627, %v4611
    %v5348 = vpack.c.b16 %v4628, %v4612
    %v5349 = vpack.c.b16 %v4629, %v4613
    %v5350 = vpack.c.b16 %v4630, %v4614
    %v5351 = vpack.c.b16 %v4631, %v4615
    %v5352 = vpack.c.b16 %v4632, %v4616
    %v5353 = vpack.c.b16 %v4633, %v4617
    %v5354 = vpack.c.b16 %v4650, %v4634
    %v5355 = vpack.c.b16 %v4651, %v4635
    %v5356 = vpack.c.b16 %v4652, %v4636
    %v5357 = vpack.c.b16 %v4653, %v4637
    %v5358 = vpack.c.b16 %v4654, %v4638
    %v5359 = vpack.c.b16 %v4655, %v4639
    %v5360 = vpack.c.b16 %v4656, %v4640
    %v5361 = vpack.c.b16 %v4657, %v4641
    %v5362 = vpack.c.b16 %v4658, %v4642
    %v5363 = vpack.c.b16 %v4659, %v4643
    %v5364 = vpack.c.b16 %v4660, %v4644
    %v5365 = vpack.c.b16 %v4661, %v4645
    %v5366 = vpack.c.b16 %v4662, %v4646
    %v5367 = vpack.c.b16 %v4663, %v4647
    %v5368 = vpack.c.b16 %v4664, %v4648
    %v5369 = vpack.c.b16 %v4665, %v4649
    %v5370 = vpack.c.b16 %v4682, %v4666
    %v5371 = vpack.c.b16 %v4683, %v4667
    %v5372 = vpack.c.b16 %v4684, %v4668
    %v5373 = vpack.c.b16 %v4685, %v4669
    %v5374 = vpack.c.b16 %v4686, %v4670
    %v5375 = vpack.c.b16 %v4687, %v4671
    %v5376 = vpack.c.b16 %v4688, %v4672
    %v5377 = vpack.c.b16 %v4689, %v4673
    %v5378 = vpack.c.b16 %v4690, %v4674
    %v5379 = vpack.c.b16 %v4691, %v4675
    %v5380 = vpack.c.b16 %v4692, %v4676
    %v5381 = vpack.c.b16 %v4693, %v4677
    %v5382 = vpack.c.b16 %v4694, %v4678
    %v5383 = vpack.c.b16 %v4695, %v4679
    %v5384 = vpack.c.b16 %v4696, %v4680
    %v5385 = vpack.c.b16 %v4697, %v4681
    %v5386 = vpack.c.b16 %v4714, %v4698
    %v5387 = vpack.c.b16 %v4715, %v4699
    %v5388 = vpack.c.b16 %v4716, %v4700
    %v5389 = vpack.c.b16 %v4717, %v4701
    %v5390 = vpack.c.b16 %v4718, %v4702
    %v5391 = vpack.c.b16 %v4719, %v4703
    %v5392 = vpack.c.b16 %v4720, %v4704
    %v5393 = vpack.c.b16 %v4721, %v4705
    %v5394 = vpack.c.b16 %v4722, %v4706
    %v5395 = vpack.c.b16 %v4723, %v4707
    %v5396 = vpack.c.b16 %v4724, %v4708
    %v5397 = vpack.c.b16 %v4725, %v4709
    %v5398 = vpack.c.b16 %v4726, %v4710
    %v5399 = vpack.c.b16 %v4727, %v4711
    %v5400 = vpack.c.b16 %v4728, %v4712
    %v5401 = vpack.c.b16 %v4729, %v4713
    %v5402 = vpack.c.b16 %v4746, %v4730
    %v5403 = vpack.c.b16 %v4747, %v4731
    %v5404 = vpack.c.b16 %v4748, %v4732
    %v5405 = vpack.c.b16 %v4749, %v4733
    %v5406 = vpack.c.b16 %v4750, %v4734
    %v5407 = vpack.c.b16 %v4751, %v4735
    %v5408 = vpack.c.b16 %v4752, %v4736
    %v5409 = vpack.c.b16 %v4753, %v4737
    %v5410 = vpack.c.b16 %v4754, %v4738
    %v5411 = vpack.c.b16 %v4755, %v4739
    %v5412 = vpack.c.b16 %v4756, %v4740
    %v5413 = vpack.c.b16 %v4757, %v4741
    %v5414 = vpack.c.b16 %v4758, %v4742
    %v5415 = vpack.c.b16 %v4759, %v4743
    %v5416 = vpack.c.b16 %v4760, %v4744
    %v5417 = vpack.c.b16 %v4761, %v4745
    %v5418 = vpack.c.b16 %v4778, %v4762
    %v5419 = vpack.c.b16 %v4779, %v4763
    %v5420 = vpack.c.b16 %v4780, %v4764
    %v5421 = vpack.c.b16 %v4781, %v4765
    %v5422 = vpack.c.b16 %v4782, %v4766
    %v5423 = vpack.c.b16 %v4783, %v4767
    %v5424 = vpack.c.b16 %v4784, %v4768
    %v5425 = vpack.c.b16 %v4785, %v4769
    %v5426 = vpack.c.b16 %v4786, %v4770
    %v5427 = vpack.c.b16 %v4787, %v4771
    %v5428 = vpack.c.b16 %v4788, %v4772
    %v5429 = vpack.c.b16 %v4789, %v4773
    %v5430 = vpack.c.b16 %v4790, %v4774
    %v5431 = vpack.c.b16 %v4791, %v4775
    %v5432 = vpack.c.b16 %v4792, %v4776
    %v5433 = vpack.c.b16 %v4793, %v4777
    %v5434 = vpack.c.b16 %v4810, %v4794
    %v5435 = vpack.c.b16 %v4811, %v4795
    %v5436 = vpack.c.b16 %v4812, %v4796
    %v5437 = vpack.c.b16 %v4813, %v4797
    %v5438 = vpack.c.b16 %v4814, %v4798
    %v5439 = vpack.c.b16 %v4815, %v4799
    %v5440 = vpack.c.b16 %v4816, %v4800
    %v5441 = vpack.c.b16 %v4817, %v4801
    %v5442 = vpack.c.b16 %v4818, %v4802
    %v5443 = vpack.c.b16 %v4819, %v4803
    %v5444 = vpack.c.b16 %v4820, %v4804
    %v5445 = vpack.c.b16 %v4821, %v4805
    %v5446 = vpack.c.b16 %v4822, %v4806
    %v5447 = vpack.c.b16 %v4823, %v4807
    %v5448 = vpack.c.b16 %v4824, %v4808
    %v5449 = vpack.c.b16 %v4825, %v4809
    %v5450 = vpack.c.b16 %v4842, %v4826
    %v5451 = vpack.c.b16 %v4843, %v4827
    %v5452 = vpack.c.b16 %v4844, %v4828
    %v5453 = vpack.c.b16 %v4845, %v4829
    %v5454 = vpack.c.b16 %v4846, %v4830
    %v5455 = vpack.c.b16 %v4847, %v4831
    %v5456 = vpack.c.b16 %v4848, %v4832
    %v5457 = vpack.c.b16 %v4849, %v4833
    %v5458 = vpack.c.b16 %v4850, %v4834
    %v5459 = vpack.c.b16 %v4851, %v4835
    %v5460 = vpack.c.b16 %v4852, %v4836
    %v5461 = vpack.c.b16 %v4853, %v4837
    %v5462 = vpack.c.b16 %v4854, %v4838
    %v5463 = vpack.c.b16 %v4855, %v4839
    %v5464 = vpack.c.b16 %v4856, %v4840
    %v5465 = vpack.c.b16 %v4857, %v4841
    %v5466 = vpack.c.b16 %v4874, %v4858
    %v5467 = vpack.c.b16 %v4875, %v4859
    %v5468 = vpack.c.b16 %v4876, %v4860
    %v5469 = vpack.c.b16 %v4877, %v4861
    %v5470 = vpack.c.b16 %v4878, %v4862
    %v5471 = vpack.c.b16 %v4879, %v4863
    %v5472 = vpack.c.b16 %v4880, %v4864
    %v5473 = vpack.c.b16 %v4881, %v4865
    %v5474 = vpack.c.b16 %v4882, %v4866
    %v5475 = vpack.c.b16 %v4883, %v4867
    %v5476 = vpack.c.b16 %v4884, %v4868
    %v5477 = vpack.c.b16 %v4885, %v4869
    %v5478 = vpack.c.b16 %v4886, %v4870
    %v5479 = vpack.c.b16 %v4887, %v4871
    %v5480 = vpack.c.b16 %v4888, %v4872
    %v5481 = vpack.c.b16 %v4889, %v4873
    %v5482 = vpack.c.b16 %v4906, %v4890
    %v5483 = vpack.c.b16 %v4907, %v4891
    %v5484 = vpack.c.b16 %v4908, %v4892
    %v5485 = vpack.c.b16 %v4909, %v4893
    %v5486 = vpack.c.b16 %v4910, %v4894
    %v5487 = vpack.c.b16 %v4911, %v4895
    %v5488 = vpack.c.b16 %v4912, %v4896
    %v5489 = vpack.c.b16 %v4913, %v4897
    %v5490 = vpack.c.b16 %v4914, %v4898
    %v5491 = vpack.c.b16 %v4915, %v4899
    %v5492 = vpack.c.b16 %v4916, %v4900
    %v5493 = vpack.c.b16 %v4917, %v4901
    %v5494 = vpack.c.b16 %v4918, %v4902
    %v5495 = vpack.c.b16 %v4919, %v4903
    %v5496 = vpack.c.b16 %v4920, %v4904
    %v5497 = vpack.c.b16 %v4921, %v4905
    %v5498 = vpack.c.b16 %v4938, %v4922
    %v5499 = vpack.c.b16 %v4939, %v4923
    %v5500 = vpack.c.b16 %v4940, %v4924
    %v5501 = vpack.c.b16 %v4941, %v4925
    %v5502 = vpack.c.b16 %v4942, %v4926
    %v5503 = vpack.c.b16 %v4943, %v4927
    %v5504 = vpack.c.b16 %v4944, %v4928
    %v5505 = vpack.c.b16 %v4945, %v4929
    %v5506 = vpack.c.b16 %v4946, %v4930
    %v5507 = vpack.c.b16 %v4947, %v4931
    %v5508 = vpack.c.b16 %v4948, %v4932
    %v5509 = vpack.c.b16 %v4949, %v4933
    %v5510 = vpack.c.b16 %v4950, %v4934
    %v5511 = vpack.c.b16 %v4951, %v4935
    %v5512 = vpack.c.b16 %v4952, %v4936
    %v5513 = vpack.c.b16 %v4953, %v4937
    %v5514 = vpack.c.b16 %v4970, %v4954
    %v5515 = vpack.c.b16 %v4971, %v4955
    %v5516 = vpack.c.b16 %v4972, %v4956
    %v5517 = vpack.c.b16 %v4973, %v4957
    %v5518 = vpack.c.b16 %v4974, %v4958
    %v5519 = vpack.c.b16 %v4975, %v4959
    %v5520 = vpack.c.b16 %v4976, %v4960
    %v5521 = vpack.c.b16 %v4977, %v4961
    %v5522 = vpack.c.b16 %v4978, %v4962
    %v5523 = vpack.c.b16 %v4979, %v4963
    %v5524 = vpack.c.b16 %v4980, %v4964
    %v5525 = vpack.c.b16 %v4981, %v4965
    %v5526 = vpack.c.b16 %v4982, %v4966
    %v5527 = vpack.c.b16 %v4983, %v4967
    %v5528 = vpack.c.b16 %v4984, %v4968
    %v5529 = vpack.c.b16 %v4985, %v4969
    %v5530 = vpack.c.b16 %v5002, %v4986
    %v5531 = vpack.c.b16 %v5003, %v4987
    %v5532 = vpack.c.b16 %v5004, %v4988
    %v5533 = vpack.c.b16 %v5005, %v4989
    %v5534 = vpack.c.b16 %v5006, %v4990
    %v5535 = vpack.c.b16 %v5007, %v4991
    %v5536 = vpack.c.b16 %v5008, %v4992
    %v5537 = vpack.c.b16 %v5009, %v4993
    %v5538 = vpack.c.b16 %v5010, %v4994
    %v5539 = vpack.c.b16 %v5011, %v4995
    %v5540 = vpack.c.b16 %v5012, %v4996
    %v5541 = vpack.c.b16 %v5013, %v4997
    %v5542 = vpack.c.b16 %v5014, %v4998
    %v5543 = vpack.c.b16 %v5015, %v4999
    %v5544 = vpack.c.b16 %v5016, %v5000
    %v5545 = vpack.c.b16 %v5017, %v5001
    %v5546 = vpack.c.b16 %v5034, %v5018
    %v5547 = vpack.c.b16 %v5035, %v5019
    %v5548 = vpack.c.b16 %v5036, %v5020
    %v5549 = vpack.c.b16 %v5037, %v5021
    %v5550 = vpack.c.b16 %v5038, %v5022
    %v5551 = vpack.c.b16 %v5039, %v5023
    %v5552 = vpack.c.b16 %v5040, %v5024
    %v5553 = vpack.c.b16 %v5041, %v5025
    %v5554 = vpack.c.b16 %v5042, %v5026
    %v5555 = vpack.c.b16 %v5043, %v5027
    %v5556 = vpack.c.b16 %v5044, %v5028
    %v5557 = vpack.c.b16 %v5045, %v5029
    %v5558 = vpack.c.b16 %v5046, %v5030
    %v5559 = vpack.c.b16 %v5047, %v5031
    %v5560 = vpack.c.b16 %v5048, %v5032
    %v5561 = vpack.c.b16 %v5049, %v5033
    %6074 = vmatpush.bf16.msra.mxu0 %v5162
    %6075 = vmatpush.bf16.msra.mxu0 %v5146
    %6076 = vmatpush.bf16.msra.mxu0 %v5130
    %6077 = vmatpush.bf16.msra.mxu0 %v5114
    %6078 = vmatpush.bf16.msra.mxu0 %v5098
    %6079 = vmatpush.bf16.msra.mxu0 %v5082
    %6080 = vmatpush.bf16.msra.mxu0 %v5066
    %6081 = vmatpush.bf16.msra.mxu0 %v5050
    %6082 = vmatmul.bf16.gmra.mxu0 %v2962
    %v6083 = vpop.f32.mrf.mxu0
    %v6084 = vadd.f32 %v3482, %v6083
    %v6085 = vpop.f32.mrf.mxu0
    %v6086 = vadd.f32 %v3482, %v6085
    %6087 = vdwg.mxu0
    %6088 = vmatpush.bf16.msra.mxu0 %v5290
    %6089 = vmatpush.bf16.msra.mxu0 %v5274
    %6090 = vmatpush.bf16.msra.mxu0 %v5258
    %6091 = vmatpush.bf16.msra.mxu0 %v5242
    %6092 = vmatpush.bf16.msra.mxu0 %v5226
    %6093 = vmatpush.bf16.msra.mxu0 %v5210
    %6094 = vmatpush.bf16.msra.mxu0 %v5194
    %6095 = vmatpush.bf16.msra.mxu0 %v5178
    %6096 = vmatmul.bf16.gmra.mxu0 %v2963
    %v6097 = vpop.f32.mrf.mxu0
    %v6098 = vadd.f32 %v6084, %v6097
    %v6099 = vpop.f32.mrf.mxu0
    %v6100 = vadd.f32 %v6086, %v6099
    %6101 = vdwg.mxu0
    %6102 = vmatpush.bf16.msra.mxu0 %v5418
    %6103 = vmatpush.bf16.msra.mxu0 %v5402
    %6104 = vmatpush.bf16.msra.mxu0 %v5386
    %6105 = vmatpush.bf16.msra.mxu0 %v5370
    %6106 = vmatpush.bf16.msra.mxu0 %v5354
    %6107 = vmatpush.bf16.msra.mxu0 %v5338
    %6108 = vmatpush.bf16.msra.mxu0 %v5322
    %6109 = vmatpush.bf16.msra.mxu0 %v5306
    %6110 = vmatmul.bf16.gmra.mxu0 %v2964
    %v6111 = vpop.f32.mrf.mxu0
    %v6112 = vadd.f32 %v6098, %v6111
    %v6113 = vpop.f32.mrf.mxu0
    %v6114 = vadd.f32 %v6100, %v6113
    %6115 = vdwg.mxu0
    %6116 = vmatpush.bf16.msra.mxu0 %v5546
    %6117 = vmatpush.bf16.msra.mxu0 %v5530
    %6118 = vmatpush.bf16.msra.mxu0 %v5514
    %6119 = vmatpush.bf16.msra.mxu0 %v5498
    %6120 = vmatpush.bf16.msra.mxu0 %v5482
    %6121 = vmatpush.bf16.msra.mxu0 %v5466
    %6122 = vmatpush.bf16.msra.mxu0 %v5450
    %6123 = vmatpush.bf16.msra.mxu0 %v5434
    %6124 = vmatmul.bf16.gmra.mxu0 %v2965
    %v6125 = vpop.f32.mrf.mxu0
    %v6126 = vadd.f32 %v6112, %v6125
    %v6127 = vpop.f32.mrf.mxu0
    %v6128 = vadd.f32 %v6114, %v6127
    %6129 = vdwg.mxu0
    %6130 = vmatpush.bf16.msra.mxu0 %v5163
    %6131 = vmatpush.bf16.msra.mxu0 %v5147
    %6132 = vmatpush.bf16.msra.mxu0 %v5131
    %6133 = vmatpush.bf16.msra.mxu0 %v5115
    %6134 = vmatpush.bf16.msra.mxu0 %v5099
    %6135 = vmatpush.bf16.msra.mxu0 %v5083
    %6136 = vmatpush.bf16.msra.mxu0 %v5067
    %6137 = vmatpush.bf16.msra.mxu0 %v5051
    %6138 = vmatmul.bf16.gmra.mxu0 %v2962
    %v6139 = vpop.f32.mrf.mxu0
    %v6140 = vadd.f32 %v3483, %v6139
    %v6141 = vpop.f32.mrf.mxu0
    %v6142 = vadd.f32 %v3483, %v6141
    %6143 = vdwg.mxu0
    %6144 = vmatpush.bf16.msra.mxu0 %v5291
    %6145 = vmatpush.bf16.msra.mxu0 %v5275
    %6146 = vmatpush.bf16.msra.mxu0 %v5259
    %6147 = vmatpush.bf16.msra.mxu0 %v5243
    %6148 = vmatpush.bf16.msra.mxu0 %v5227
    %6149 = vmatpush.bf16.msra.mxu0 %v5211
    %6150 = vmatpush.bf16.msra.mxu0 %v5195
    %6151 = vmatpush.bf16.msra.mxu0 %v5179
    %6152 = vmatmul.bf16.gmra.mxu0 %v2963
    %v6153 = vpop.f32.mrf.mxu0
    %v6154 = vadd.f32 %v6140, %v6153
    %v6155 = vpop.f32.mrf.mxu0
    %v6156 = vadd.f32 %v6142, %v6155
    %6157 = vdwg.mxu0
    %6158 = vmatpush.bf16.msra.mxu0 %v5419
    %6159 = vmatpush.bf16.msra.mxu0 %v5403
    %6160 = vmatpush.bf16.msra.mxu0 %v5387
    %6161 = vmatpush.bf16.msra.mxu0 %v5371
    %6162 = vmatpush.bf16.msra.mxu0 %v5355
    %6163 = vmatpush.bf16.msra.mxu0 %v5339
    %6164 = vmatpush.bf16.msra.mxu0 %v5323
    %6165 = vmatpush.bf16.msra.mxu0 %v5307
    %6166 = vmatmul.bf16.gmra.mxu0 %v2964
    %v6167 = vpop.f32.mrf.mxu0
    %v6168 = vadd.f32 %v6154, %v6167
    %v6169 = vpop.f32.mrf.mxu0
    %v6170 = vadd.f32 %v6156, %v6169
    %6171 = vdwg.mxu0
    %6172 = vmatpush.bf16.msra.mxu0 %v5547
    %6173 = vmatpush.bf16.msra.mxu0 %v5531
    %6174 = vmatpush.bf16.msra.mxu0 %v5515
    %6175 = vmatpush.bf16.msra.mxu0 %v5499
    %6176 = vmatpush.bf16.msra.mxu0 %v5483
    %6177 = vmatpush.bf16.msra.mxu0 %v5467
    %6178 = vmatpush.bf16.msra.mxu0 %v5451
    %6179 = vmatpush.bf16.msra.mxu0 %v5435
    %6180 = vmatmul.bf16.gmra.mxu0 %v2965
    %v6181 = vpop.f32.mrf.mxu0
    %v6182 = vadd.f32 %v6168, %v6181
    %v6183 = vpop.f32.mrf.mxu0
    %v6184 = vadd.f32 %v6170, %v6183
    %6185 = vdwg.mxu0
    %6186 = vmatpush.bf16.msra.mxu0 %v5164
    %6187 = vmatpush.bf16.msra.mxu0 %v5148
    %6188 = vmatpush.bf16.msra.mxu0 %v5132
    %6189 = vmatpush.bf16.msra.mxu0 %v5116
    %6190 = vmatpush.bf16.msra.mxu0 %v5100
    %6191 = vmatpush.bf16.msra.mxu0 %v5084
    %6192 = vmatpush.bf16.msra.mxu0 %v5068
    %6193 = vmatpush.bf16.msra.mxu0 %v5052
    %6194 = vmatmul.bf16.gmra.mxu0 %v2962
    %v6195 = vpop.f32.mrf.mxu0
    %v6196 = vadd.f32 %v3484, %v6195
    %v6197 = vpop.f32.mrf.mxu0
    %v6198 = vadd.f32 %v3484, %v6197
    %6199 = vdwg.mxu0
    %6200 = vmatpush.bf16.msra.mxu0 %v5292
    %6201 = vmatpush.bf16.msra.mxu0 %v5276
    %6202 = vmatpush.bf16.msra.mxu0 %v5260
    %6203 = vmatpush.bf16.msra.mxu0 %v5244
    %6204 = vmatpush.bf16.msra.mxu0 %v5228
    %6205 = vmatpush.bf16.msra.mxu0 %v5212
    %6206 = vmatpush.bf16.msra.mxu0 %v5196
    %6207 = vmatpush.bf16.msra.mxu0 %v5180
    %6208 = vmatmul.bf16.gmra.mxu0 %v2963
    %v6209 = vpop.f32.mrf.mxu0
    %v6210 = vadd.f32 %v6196, %v6209
    %v6211 = vpop.f32.mrf.mxu0
    %v6212 = vadd.f32 %v6198, %v6211
    %6213 = vdwg.mxu0
    %6214 = vmatpush.bf16.msra.mxu0 %v5420
    %6215 = vmatpush.bf16.msra.mxu0 %v5404
    %6216 = vmatpush.bf16.msra.mxu0 %v5388
    %6217 = vmatpush.bf16.msra.mxu0 %v5372
    %6218 = vmatpush.bf16.msra.mxu0 %v5356
    %6219 = vmatpush.bf16.msra.mxu0 %v5340
    %6220 = vmatpush.bf16.msra.mxu0 %v5324
    %6221 = vmatpush.bf16.msra.mxu0 %v5308
    %6222 = vmatmul.bf16.gmra.mxu0 %v2964
    %v6223 = vpop.f32.mrf.mxu0
    %v6224 = vadd.f32 %v6210, %v6223
    %v6225 = vpop.f32.mrf.mxu0
    %v6226 = vadd.f32 %v6212, %v6225
    %6227 = vdwg.mxu0
    %6228 = vmatpush.bf16.msra.mxu0 %v5548
    %6229 = vmatpush.bf16.msra.mxu0 %v5532
    %6230 = vmatpush.bf16.msra.mxu0 %v5516
    %6231 = vmatpush.bf16.msra.mxu0 %v5500
    %6232 = vmatpush.bf16.msra.mxu0 %v5484
    %6233 = vmatpush.bf16.msra.mxu0 %v5468
    %6234 = vmatpush.bf16.msra.mxu0 %v5452
    %6235 = vmatpush.bf16.msra.mxu0 %v5436
    %6236 = vmatmul.bf16.gmra.mxu0 %v2965
    %v6237 = vpop.f32.mrf.mxu0
    %v6238 = vadd.f32 %v6224, %v6237
    %v6239 = vpop.f32.mrf.mxu0
    %v6240 = vadd.f32 %v6226, %v6239
    %6241 = vdwg.mxu0
    %6242 = vmatpush.bf16.msra.mxu0 %v5165
    %6243 = vmatpush.bf16.msra.mxu0 %v5149
    %6244 = vmatpush.bf16.msra.mxu0 %v5133
    %6245 = vmatpush.bf16.msra.mxu0 %v5117
    %6246 = vmatpush.bf16.msra.mxu0 %v5101
    %6247 = vmatpush.bf16.msra.mxu0 %v5085
    %6248 = vmatpush.bf16.msra.mxu0 %v5069
    %6249 = vmatpush.bf16.msra.mxu0 %v5053
    %6250 = vmatmul.bf16.gmra.mxu0 %v2962
    %v6251 = vpop.f32.mrf.mxu0
    %v6252 = vadd.f32 %v3485, %v6251
    %v6253 = vpop.f32.mrf.mxu0
    %v6254 = vadd.f32 %v3485, %v6253
    %6255 = vdwg.mxu0
    %6256 = vmatpush.bf16.msra.mxu0 %v5293
    %6257 = vmatpush.bf16.msra.mxu0 %v5277
    %6258 = vmatpush.bf16.msra.mxu0 %v5261
    %6259 = vmatpush.bf16.msra.mxu0 %v5245
    %6260 = vmatpush.bf16.msra.mxu0 %v5229
    %6261 = vmatpush.bf16.msra.mxu0 %v5213
    %6262 = vmatpush.bf16.msra.mxu0 %v5197
    %6263 = vmatpush.bf16.msra.mxu0 %v5181
    %6264 = vmatmul.bf16.gmra.mxu0 %v2963
    %v6265 = vpop.f32.mrf.mxu0
    %v6266 = vadd.f32 %v6252, %v6265
    %v6267 = vpop.f32.mrf.mxu0
    %v6268 = vadd.f32 %v6254, %v6267
    %6269 = vdwg.mxu0
    %6270 = vmatpush.bf16.msra.mxu0 %v5421
    %6271 = vmatpush.bf16.msra.mxu0 %v5405
    %6272 = vmatpush.bf16.msra.mxu0 %v5389
    %6273 = vmatpush.bf16.msra.mxu0 %v5373
    %6274 = vmatpush.bf16.msra.mxu0 %v5357
    %6275 = vmatpush.bf16.msra.mxu0 %v5341
    %6276 = vmatpush.bf16.msra.mxu0 %v5325
    %6277 = vmatpush.bf16.msra.mxu0 %v5309
    %6278 = vmatmul.bf16.gmra.mxu0 %v2964
    %v6279 = vpop.f32.mrf.mxu0
    %v6280 = vadd.f32 %v6266, %v6279
    %v6281 = vpop.f32.mrf.mxu0
    %v6282 = vadd.f32 %v6268, %v6281
    %6283 = vdwg.mxu0
    %6284 = vmatpush.bf16.msra.mxu0 %v5549
    %6285 = vmatpush.bf16.msra.mxu0 %v5533
    %6286 = vmatpush.bf16.msra.mxu0 %v5517
    %6287 = vmatpush.bf16.msra.mxu0 %v5501
    %6288 = vmatpush.bf16.msra.mxu0 %v5485
    %6289 = vmatpush.bf16.msra.mxu0 %v5469
    %6290 = vmatpush.bf16.msra.mxu0 %v5453
    %6291 = vmatpush.bf16.msra.mxu0 %v5437
    %6292 = vmatmul.bf16.gmra.mxu0 %v2965
    %v6293 = vpop.f32.mrf.mxu0
    %v6294 = vadd.f32 %v6280, %v6293
    %v6295 = vpop.f32.mrf.mxu0
    %v6296 = vadd.f32 %v6282, %v6295
    %6297 = vdwg.mxu0
    %6298 = vmatpush.bf16.msra.mxu0 %v5166
    %6299 = vmatpush.bf16.msra.mxu0 %v5150
    %6300 = vmatpush.bf16.msra.mxu0 %v5134
    %6301 = vmatpush.bf16.msra.mxu0 %v5118
    %6302 = vmatpush.bf16.msra.mxu0 %v5102
    %6303 = vmatpush.bf16.msra.mxu0 %v5086
    %6304 = vmatpush.bf16.msra.mxu0 %v5070
    %6305 = vmatpush.bf16.msra.mxu0 %v5054
    %6306 = vmatmul.bf16.gmra.mxu0 %v2962
    %v6307 = vpop.f32.mrf.mxu0
    %v6308 = vadd.f32 %v3486, %v6307
    %v6309 = vpop.f32.mrf.mxu0
    %v6310 = vadd.f32 %v3486, %v6309
    %6311 = vdwg.mxu0
    %6312 = vmatpush.bf16.msra.mxu0 %v5294
    %6313 = vmatpush.bf16.msra.mxu0 %v5278
    %6314 = vmatpush.bf16.msra.mxu0 %v5262
    %6315 = vmatpush.bf16.msra.mxu0 %v5246
    %6316 = vmatpush.bf16.msra.mxu0 %v5230
    %6317 = vmatpush.bf16.msra.mxu0 %v5214
    %6318 = vmatpush.bf16.msra.mxu0 %v5198
    %6319 = vmatpush.bf16.msra.mxu0 %v5182
    %6320 = vmatmul.bf16.gmra.mxu0 %v2963
    %v6321 = vpop.f32.mrf.mxu0
    %v6322 = vadd.f32 %v6308, %v6321
    %v6323 = vpop.f32.mrf.mxu0
    %v6324 = vadd.f32 %v6310, %v6323
    %6325 = vdwg.mxu0
    %6326 = vmatpush.bf16.msra.mxu0 %v5422
    %6327 = vmatpush.bf16.msra.mxu0 %v5406
    %6328 = vmatpush.bf16.msra.mxu0 %v5390
    %6329 = vmatpush.bf16.msra.mxu0 %v5374
    %6330 = vmatpush.bf16.msra.mxu0 %v5358
    %6331 = vmatpush.bf16.msra.mxu0 %v5342
    %6332 = vmatpush.bf16.msra.mxu0 %v5326
    %6333 = vmatpush.bf16.msra.mxu0 %v5310
    %6334 = vmatmul.bf16.gmra.mxu0 %v2964
    %v6335 = vpop.f32.mrf.mxu0
    %v6336 = vadd.f32 %v6322, %v6335
    %v6337 = vpop.f32.mrf.mxu0
    %v6338 = vadd.f32 %v6324, %v6337
    %6339 = vdwg.mxu0
    %6340 = vmatpush.bf16.msra.mxu0 %v5550
    %6341 = vmatpush.bf16.msra.mxu0 %v5534
    %6342 = vmatpush.bf16.msra.mxu0 %v5518
    %6343 = vmatpush.bf16.msra.mxu0 %v5502
    %6344 = vmatpush.bf16.msra.mxu0 %v5486
    %6345 = vmatpush.bf16.msra.mxu0 %v5470
    %6346 = vmatpush.bf16.msra.mxu0 %v5454
    %6347 = vmatpush.bf16.msra.mxu0 %v5438
    %6348 = vmatmul.bf16.gmra.mxu0 %v2965
    %v6349 = vpop.f32.mrf.mxu0
    %v6350 = vadd.f32 %v6336, %v6349
    %v6351 = vpop.f32.mrf.mxu0
    %v6352 = vadd.f32 %v6338, %v6351
    %6353 = vdwg.mxu0
    %6354 = vmatpush.bf16.msra.mxu0 %v5167
    %6355 = vmatpush.bf16.msra.mxu0 %v5151
    %6356 = vmatpush.bf16.msra.mxu0 %v5135
    %6357 = vmatpush.bf16.msra.mxu0 %v5119
    %6358 = vmatpush.bf16.msra.mxu0 %v5103
    %6359 = vmatpush.bf16.msra.mxu0 %v5087
    %6360 = vmatpush.bf16.msra.mxu0 %v5071
    %6361 = vmatpush.bf16.msra.mxu0 %v5055
    %6362 = vmatmul.bf16.gmra.mxu0 %v2962
    %v6363 = vpop.f32.mrf.mxu0
    %v6364 = vadd.f32 %v3487, %v6363
    %v6365 = vpop.f32.mrf.mxu0
    %v6366 = vadd.f32 %v3487, %v6365
    %6367 = vdwg.mxu0
    %6368 = vmatpush.bf16.msra.mxu0 %v5295
    %6369 = vmatpush.bf16.msra.mxu0 %v5279
    %6370 = vmatpush.bf16.msra.mxu0 %v5263
    %6371 = vmatpush.bf16.msra.mxu0 %v5247
    %6372 = vmatpush.bf16.msra.mxu0 %v5231
    %6373 = vmatpush.bf16.msra.mxu0 %v5215
    %6374 = vmatpush.bf16.msra.mxu0 %v5199
    %6375 = vmatpush.bf16.msra.mxu0 %v5183
    %6376 = vmatmul.bf16.gmra.mxu0 %v2963
    %v6377 = vpop.f32.mrf.mxu0
    %v6378 = vadd.f32 %v6364, %v6377
    %v6379 = vpop.f32.mrf.mxu0
    %v6380 = vadd.f32 %v6366, %v6379
    %6381 = vdwg.mxu0
    %6382 = vmatpush.bf16.msra.mxu0 %v5423
    %6383 = vmatpush.bf16.msra.mxu0 %v5407
    %6384 = vmatpush.bf16.msra.mxu0 %v5391
    %6385 = vmatpush.bf16.msra.mxu0 %v5375
    %6386 = vmatpush.bf16.msra.mxu0 %v5359
    %6387 = vmatpush.bf16.msra.mxu0 %v5343
    %6388 = vmatpush.bf16.msra.mxu0 %v5327
    %6389 = vmatpush.bf16.msra.mxu0 %v5311
    %6390 = vmatmul.bf16.gmra.mxu0 %v2964
    %v6391 = vpop.f32.mrf.mxu0
    %v6392 = vadd.f32 %v6378, %v6391
    %v6393 = vpop.f32.mrf.mxu0
    %v6394 = vadd.f32 %v6380, %v6393
    %6395 = vdwg.mxu0
    %6396 = vmatpush.bf16.msra.mxu0 %v5551
    %6397 = vmatpush.bf16.msra.mxu0 %v5535
    %6398 = vmatpush.bf16.msra.mxu0 %v5519
    %6399 = vmatpush.bf16.msra.mxu0 %v5503
    %6400 = vmatpush.bf16.msra.mxu0 %v5487
    %6401 = vmatpush.bf16.msra.mxu0 %v5471
    %6402 = vmatpush.bf16.msra.mxu0 %v5455
    %6403 = vmatpush.bf16.msra.mxu0 %v5439
    %6404 = vmatmul.bf16.gmra.mxu0 %v2965
    %v6405 = vpop.f32.mrf.mxu0
    %v6406 = vadd.f32 %v6392, %v6405
    %v6407 = vpop.f32.mrf.mxu0
    %v6408 = vadd.f32 %v6394, %v6407
    %6409 = vdwg.mxu0
    %6410 = vmatpush.bf16.msra.mxu0 %v5168
    %6411 = vmatpush.bf16.msra.mxu0 %v5152
    %6412 = vmatpush.bf16.msra.mxu0 %v5136
    %6413 = vmatpush.bf16.msra.mxu0 %v5120
    %6414 = vmatpush.bf16.msra.mxu0 %v5104
    %6415 = vmatpush.bf16.msra.mxu0 %v5088
    %6416 = vmatpush.bf16.msra.mxu0 %v5072
    %6417 = vmatpush.bf16.msra.mxu0 %v5056
    %6418 = vmatmul.bf16.gmra.mxu0 %v2962
    %v6419 = vpop.f32.mrf.mxu0
    %v6420 = vadd.f32 %v3488, %v6419
    %v6421 = vpop.f32.mrf.mxu0
    %v6422 = vadd.f32 %v3488, %v6421
    %6423 = vdwg.mxu0
    %6424 = vmatpush.bf16.msra.mxu0 %v5296
    %6425 = vmatpush.bf16.msra.mxu0 %v5280
    %6426 = vmatpush.bf16.msra.mxu0 %v5264
    %6427 = vmatpush.bf16.msra.mxu0 %v5248
    %6428 = vmatpush.bf16.msra.mxu0 %v5232
    %6429 = vmatpush.bf16.msra.mxu0 %v5216
    %6430 = vmatpush.bf16.msra.mxu0 %v5200
    %6431 = vmatpush.bf16.msra.mxu0 %v5184
    %6432 = vmatmul.bf16.gmra.mxu0 %v2963
    %v6433 = vpop.f32.mrf.mxu0
    %v6434 = vadd.f32 %v6420, %v6433
    %v6435 = vpop.f32.mrf.mxu0
    %v6436 = vadd.f32 %v6422, %v6435
    %6437 = vdwg.mxu0
    %6438 = vmatpush.bf16.msra.mxu0 %v5424
    %6439 = vmatpush.bf16.msra.mxu0 %v5408
    %6440 = vmatpush.bf16.msra.mxu0 %v5392
    %6441 = vmatpush.bf16.msra.mxu0 %v5376
    %6442 = vmatpush.bf16.msra.mxu0 %v5360
    %6443 = vmatpush.bf16.msra.mxu0 %v5344
    %6444 = vmatpush.bf16.msra.mxu0 %v5328
    %6445 = vmatpush.bf16.msra.mxu0 %v5312
    %6446 = vmatmul.bf16.gmra.mxu0 %v2964
    %v6447 = vpop.f32.mrf.mxu0
    %v6448 = vadd.f32 %v6434, %v6447
    %v6449 = vpop.f32.mrf.mxu0
    %v6450 = vadd.f32 %v6436, %v6449
    %6451 = vdwg.mxu0
    %6452 = vmatpush.bf16.msra.mxu0 %v5552
    %6453 = vmatpush.bf16.msra.mxu0 %v5536
    %6454 = vmatpush.bf16.msra.mxu0 %v5520
    %6455 = vmatpush.bf16.msra.mxu0 %v5504
    %6456 = vmatpush.bf16.msra.mxu0 %v5488
    %6457 = vmatpush.bf16.msra.mxu0 %v5472
    %6458 = vmatpush.bf16.msra.mxu0 %v5456
    %6459 = vmatpush.bf16.msra.mxu0 %v5440
    %6460 = vmatmul.bf16.gmra.mxu0 %v2965
    %v6461 = vpop.f32.mrf.mxu0
    %v6462 = vadd.f32 %v6448, %v6461
    %v6463 = vpop.f32.mrf.mxu0
    %v6464 = vadd.f32 %v6450, %v6463
    %6465 = vdwg.mxu0
    %6466 = vmatpush.bf16.msra.mxu0 %v5169
    %6467 = vmatpush.bf16.msra.mxu0 %v5153
    %6468 = vmatpush.bf16.msra.mxu0 %v5137
    %6469 = vmatpush.bf16.msra.mxu0 %v5121
    %6470 = vmatpush.bf16.msra.mxu0 %v5105
    %6471 = vmatpush.bf16.msra.mxu0 %v5089
    %6472 = vmatpush.bf16.msra.mxu0 %v5073
    %6473 = vmatpush.bf16.msra.mxu0 %v5057
    %6474 = vmatmul.bf16.gmra.mxu0 %v2962
    %v6475 = vpop.f32.mrf.mxu0
    %v6476 = vadd.f32 %v3489, %v6475
    %v6477 = vpop.f32.mrf.mxu0
    %v6478 = vadd.f32 %v3489, %v6477
    %6479 = vdwg.mxu0
    %6480 = vmatpush.bf16.msra.mxu0 %v5297
    %6481 = vmatpush.bf16.msra.mxu0 %v5281
    %6482 = vmatpush.bf16.msra.mxu0 %v5265
    %6483 = vmatpush.bf16.msra.mxu0 %v5249
    %6484 = vmatpush.bf16.msra.mxu0 %v5233
    %6485 = vmatpush.bf16.msra.mxu0 %v5217
    %6486 = vmatpush.bf16.msra.mxu0 %v5201
    %6487 = vmatpush.bf16.msra.mxu0 %v5185
    %6488 = vmatmul.bf16.gmra.mxu0 %v2963
    %v6489 = vpop.f32.mrf.mxu0
    %v6490 = vadd.f32 %v6476, %v6489
    %v6491 = vpop.f32.mrf.mxu0
    %v6492 = vadd.f32 %v6478, %v6491
    %6493 = vdwg.mxu0
    %6494 = vmatpush.bf16.msra.mxu0 %v5425
    %6495 = vmatpush.bf16.msra.mxu0 %v5409
    %6496 = vmatpush.bf16.msra.mxu0 %v5393
    %6497 = vmatpush.bf16.msra.mxu0 %v5377
    %6498 = vmatpush.bf16.msra.mxu0 %v5361
    %6499 = vmatpush.bf16.msra.mxu0 %v5345
    %6500 = vmatpush.bf16.msra.mxu0 %v5329
    %6501 = vmatpush.bf16.msra.mxu0 %v5313
    %6502 = vmatmul.bf16.gmra.mxu0 %v2964
    %v6503 = vpop.f32.mrf.mxu0
    %v6504 = vadd.f32 %v6490, %v6503
    %v6505 = vpop.f32.mrf.mxu0
    %v6506 = vadd.f32 %v6492, %v6505
    %6507 = vdwg.mxu0
    %6508 = vmatpush.bf16.msra.mxu0 %v5553
    %6509 = vmatpush.bf16.msra.mxu0 %v5537
    %6510 = vmatpush.bf16.msra.mxu0 %v5521
    %6511 = vmatpush.bf16.msra.mxu0 %v5505
    %6512 = vmatpush.bf16.msra.mxu0 %v5489
    %6513 = vmatpush.bf16.msra.mxu0 %v5473
    %6514 = vmatpush.bf16.msra.mxu0 %v5457
    %6515 = vmatpush.bf16.msra.mxu0 %v5441
    %6516 = vmatmul.bf16.gmra.mxu0 %v2965
    %v6517 = vpop.f32.mrf.mxu0
    %v6518 = vadd.f32 %v6504, %v6517
    %v6519 = vpop.f32.mrf.mxu0
    %v6520 = vadd.f32 %v6506, %v6519
    %6521 = vdwg.mxu0
    %6522 = vmatpush.bf16.msra.mxu0 %v5170
    %6523 = vmatpush.bf16.msra.mxu0 %v5154
    %6524 = vmatpush.bf16.msra.mxu0 %v5138
    %6525 = vmatpush.bf16.msra.mxu0 %v5122
    %6526 = vmatpush.bf16.msra.mxu0 %v5106
    %6527 = vmatpush.bf16.msra.mxu0 %v5090
    %6528 = vmatpush.bf16.msra.mxu0 %v5074
    %6529 = vmatpush.bf16.msra.mxu0 %v5058
    %6530 = vmatmul.bf16.gmra.mxu0 %v2962
    %v6531 = vpop.f32.mrf.mxu0
    %v6532 = vadd.f32 %v3490, %v6531
    %v6533 = vpop.f32.mrf.mxu0
    %v6534 = vadd.f32 %v3490, %v6533
    %6535 = vdwg.mxu0
    %6536 = vmatpush.bf16.msra.mxu0 %v5298
    %6537 = vmatpush.bf16.msra.mxu0 %v5282
    %6538 = vmatpush.bf16.msra.mxu0 %v5266
    %6539 = vmatpush.bf16.msra.mxu0 %v5250
    %6540 = vmatpush.bf16.msra.mxu0 %v5234
    %6541 = vmatpush.bf16.msra.mxu0 %v5218
    %6542 = vmatpush.bf16.msra.mxu0 %v5202
    %6543 = vmatpush.bf16.msra.mxu0 %v5186
    %6544 = vmatmul.bf16.gmra.mxu0 %v2963
    %v6545 = vpop.f32.mrf.mxu0
    %v6546 = vadd.f32 %v6532, %v6545
    %v6547 = vpop.f32.mrf.mxu0
    %v6548 = vadd.f32 %v6534, %v6547
    %6549 = vdwg.mxu0
    %6550 = vmatpush.bf16.msra.mxu0 %v5426
    %6551 = vmatpush.bf16.msra.mxu0 %v5410
    %6552 = vmatpush.bf16.msra.mxu0 %v5394
    %6553 = vmatpush.bf16.msra.mxu0 %v5378
    %6554 = vmatpush.bf16.msra.mxu0 %v5362
    %6555 = vmatpush.bf16.msra.mxu0 %v5346
    %6556 = vmatpush.bf16.msra.mxu0 %v5330
    %6557 = vmatpush.bf16.msra.mxu0 %v5314
    %6558 = vmatmul.bf16.gmra.mxu0 %v2964
    %v6559 = vpop.f32.mrf.mxu0
    %v6560 = vadd.f32 %v6546, %v6559
    %v6561 = vpop.f32.mrf.mxu0
    %v6562 = vadd.f32 %v6548, %v6561
    %6563 = vdwg.mxu0
    %6564 = vmatpush.bf16.msra.mxu0 %v5554
    %6565 = vmatpush.bf16.msra.mxu0 %v5538
    %6566 = vmatpush.bf16.msra.mxu0 %v5522
    %6567 = vmatpush.bf16.msra.mxu0 %v5506
    %6568 = vmatpush.bf16.msra.mxu0 %v5490
    %6569 = vmatpush.bf16.msra.mxu0 %v5474
    %6570 = vmatpush.bf16.msra.mxu0 %v5458
    %6571 = vmatpush.bf16.msra.mxu0 %v5442
    %6572 = vmatmul.bf16.gmra.mxu0 %v2965
    %v6573 = vpop.f32.mrf.mxu0
    %v6574 = vadd.f32 %v6560, %v6573
    %v6575 = vpop.f32.mrf.mxu0
    %v6576 = vadd.f32 %v6562, %v6575
    %6577 = vdwg.mxu0
    %6578 = vmatpush.bf16.msra.mxu0 %v5171
    %6579 = vmatpush.bf16.msra.mxu0 %v5155
    %6580 = vmatpush.bf16.msra.mxu0 %v5139
    %6581 = vmatpush.bf16.msra.mxu0 %v5123
    %6582 = vmatpush.bf16.msra.mxu0 %v5107
    %6583 = vmatpush.bf16.msra.mxu0 %v5091
    %6584 = vmatpush.bf16.msra.mxu0 %v5075
    %6585 = vmatpush.bf16.msra.mxu0 %v5059
    %6586 = vmatmul.bf16.gmra.mxu0 %v2962
    %v6587 = vpop.f32.mrf.mxu0
    %v6588 = vadd.f32 %v3491, %v6587
    %v6589 = vpop.f32.mrf.mxu0
    %v6590 = vadd.f32 %v3491, %v6589
    %6591 = vdwg.mxu0
    %6592 = vmatpush.bf16.msra.mxu0 %v5299
    %6593 = vmatpush.bf16.msra.mxu0 %v5283
    %6594 = vmatpush.bf16.msra.mxu0 %v5267
    %6595 = vmatpush.bf16.msra.mxu0 %v5251
    %6596 = vmatpush.bf16.msra.mxu0 %v5235
    %6597 = vmatpush.bf16.msra.mxu0 %v5219
    %6598 = vmatpush.bf16.msra.mxu0 %v5203
    %6599 = vmatpush.bf16.msra.mxu0 %v5187
    %6600 = vmatmul.bf16.gmra.mxu0 %v2963
    %v6601 = vpop.f32.mrf.mxu0
    %v6602 = vadd.f32 %v6588, %v6601
    %v6603 = vpop.f32.mrf.mxu0
    %v6604 = vadd.f32 %v6590, %v6603
    %6605 = vdwg.mxu0
    %6606 = vmatpush.bf16.msra.mxu0 %v5427
    %6607 = vmatpush.bf16.msra.mxu0 %v5411
    %6608 = vmatpush.bf16.msra.mxu0 %v5395
    %6609 = vmatpush.bf16.msra.mxu0 %v5379
    %6610 = vmatpush.bf16.msra.mxu0 %v5363
    %6611 = vmatpush.bf16.msra.mxu0 %v5347
    %6612 = vmatpush.bf16.msra.mxu0 %v5331
    %6613 = vmatpush.bf16.msra.mxu0 %v5315
    %6614 = vmatmul.bf16.gmra.mxu0 %v2964
    %v6615 = vpop.f32.mrf.mxu0
    %v6616 = vadd.f32 %v6602, %v6615
    %v6617 = vpop.f32.mrf.mxu0
    %v6618 = vadd.f32 %v6604, %v6617
    %6619 = vdwg.mxu0
    %6620 = vmatpush.bf16.msra.mxu0 %v5555
    %6621 = vmatpush.bf16.msra.mxu0 %v5539
    %6622 = vmatpush.bf16.msra.mxu0 %v5523
    %6623 = vmatpush.bf16.msra.mxu0 %v5507
    %6624 = vmatpush.bf16.msra.mxu0 %v5491
    %6625 = vmatpush.bf16.msra.mxu0 %v5475
    %6626 = vmatpush.bf16.msra.mxu0 %v5459
    %6627 = vmatpush.bf16.msra.mxu0 %v5443
    %6628 = vmatmul.bf16.gmra.mxu0 %v2965
    %v6629 = vpop.f32.mrf.mxu0
    %v6630 = vadd.f32 %v6616, %v6629
    %v6631 = vpop.f32.mrf.mxu0
    %v6632 = vadd.f32 %v6618, %v6631
    %6633 = vdwg.mxu0
    %6634 = vmatpush.bf16.msra.mxu0 %v5172
    %6635 = vmatpush.bf16.msra.mxu0 %v5156
    %6636 = vmatpush.bf16.msra.mxu0 %v5140
    %6637 = vmatpush.bf16.msra.mxu0 %v5124
    %6638 = vmatpush.bf16.msra.mxu0 %v5108
    %6639 = vmatpush.bf16.msra.mxu0 %v5092
    %6640 = vmatpush.bf16.msra.mxu0 %v5076
    %6641 = vmatpush.bf16.msra.mxu0 %v5060
    %6642 = vmatmul.bf16.gmra.mxu0 %v2962
    %v6643 = vpop.f32.mrf.mxu0
    %v6644 = vadd.f32 %v3492, %v6643
    %v6645 = vpop.f32.mrf.mxu0
    %v6646 = vadd.f32 %v3492, %v6645
    %6647 = vdwg.mxu0
    %6648 = vmatpush.bf16.msra.mxu0 %v5300
    %6649 = vmatpush.bf16.msra.mxu0 %v5284
    %6650 = vmatpush.bf16.msra.mxu0 %v5268
    %6651 = vmatpush.bf16.msra.mxu0 %v5252
    %6652 = vmatpush.bf16.msra.mxu0 %v5236
    %6653 = vmatpush.bf16.msra.mxu0 %v5220
    %6654 = vmatpush.bf16.msra.mxu0 %v5204
    %6655 = vmatpush.bf16.msra.mxu0 %v5188
    %6656 = vmatmul.bf16.gmra.mxu0 %v2963
    %v6657 = vpop.f32.mrf.mxu0
    %v6658 = vadd.f32 %v6644, %v6657
    %v6659 = vpop.f32.mrf.mxu0
    %v6660 = vadd.f32 %v6646, %v6659
    %6661 = vdwg.mxu0
    %6662 = vmatpush.bf16.msra.mxu0 %v5428
    %6663 = vmatpush.bf16.msra.mxu0 %v5412
    %6664 = vmatpush.bf16.msra.mxu0 %v5396
    %6665 = vmatpush.bf16.msra.mxu0 %v5380
    %6666 = vmatpush.bf16.msra.mxu0 %v5364
    %6667 = vmatpush.bf16.msra.mxu0 %v5348
    %6668 = vmatpush.bf16.msra.mxu0 %v5332
    %6669 = vmatpush.bf16.msra.mxu0 %v5316
    %6670 = vmatmul.bf16.gmra.mxu0 %v2964
    %v6671 = vpop.f32.mrf.mxu0
    %v6672 = vadd.f32 %v6658, %v6671
    %v6673 = vpop.f32.mrf.mxu0
    %v6674 = vadd.f32 %v6660, %v6673
    %6675 = vdwg.mxu0
    %6676 = vmatpush.bf16.msra.mxu0 %v5556
    %6677 = vmatpush.bf16.msra.mxu0 %v5540
    %6678 = vmatpush.bf16.msra.mxu0 %v5524
    %6679 = vmatpush.bf16.msra.mxu0 %v5508
    %6680 = vmatpush.bf16.msra.mxu0 %v5492
    %6681 = vmatpush.bf16.msra.mxu0 %v5476
    %6682 = vmatpush.bf16.msra.mxu0 %v5460
    %6683 = vmatpush.bf16.msra.mxu0 %v5444
    %6684 = vmatmul.bf16.gmra.mxu0 %v2965
    %v6685 = vpop.f32.mrf.mxu0
    %v6686 = vadd.f32 %v6672, %v6685
    %v6687 = vpop.f32.mrf.mxu0
    %v6688 = vadd.f32 %v6674, %v6687
    %6689 = vdwg.mxu0
    %6690 = vmatpush.bf16.msra.mxu0 %v5173
    %6691 = vmatpush.bf16.msra.mxu0 %v5157
    %6692 = vmatpush.bf16.msra.mxu0 %v5141
    %6693 = vmatpush.bf16.msra.mxu0 %v5125
    %6694 = vmatpush.bf16.msra.mxu0 %v5109
    %6695 = vmatpush.bf16.msra.mxu0 %v5093
    %6696 = vmatpush.bf16.msra.mxu0 %v5077
    %6697 = vmatpush.bf16.msra.mxu0 %v5061
    %6698 = vmatmul.bf16.gmra.mxu0 %v2962
    %v6699 = vpop.f32.mrf.mxu0
    %v6700 = vadd.f32 %v3493, %v6699
    %v6701 = vpop.f32.mrf.mxu0
    %v6702 = vadd.f32 %v3493, %v6701
    %6703 = vdwg.mxu0
    %6704 = vmatpush.bf16.msra.mxu0 %v5301
    %6705 = vmatpush.bf16.msra.mxu0 %v5285
    %6706 = vmatpush.bf16.msra.mxu0 %v5269
    %6707 = vmatpush.bf16.msra.mxu0 %v5253
    %6708 = vmatpush.bf16.msra.mxu0 %v5237
    %6709 = vmatpush.bf16.msra.mxu0 %v5221
    %6710 = vmatpush.bf16.msra.mxu0 %v5205
    %6711 = vmatpush.bf16.msra.mxu0 %v5189
    %6712 = vmatmul.bf16.gmra.mxu0 %v2963
    %v6713 = vpop.f32.mrf.mxu0
    %v6714 = vadd.f32 %v6700, %v6713
    %v6715 = vpop.f32.mrf.mxu0
    %v6716 = vadd.f32 %v6702, %v6715
    %6717 = vdwg.mxu0
    %6718 = vmatpush.bf16.msra.mxu0 %v5429
    %6719 = vmatpush.bf16.msra.mxu0 %v5413
    %6720 = vmatpush.bf16.msra.mxu0 %v5397
    %6721 = vmatpush.bf16.msra.mxu0 %v5381
    %6722 = vmatpush.bf16.msra.mxu0 %v5365
    %6723 = vmatpush.bf16.msra.mxu0 %v5349
    %6724 = vmatpush.bf16.msra.mxu0 %v5333
    %6725 = vmatpush.bf16.msra.mxu0 %v5317
    %6726 = vmatmul.bf16.gmra.mxu0 %v2964
    %v6727 = vpop.f32.mrf.mxu0
    %v6728 = vadd.f32 %v6714, %v6727
    %v6729 = vpop.f32.mrf.mxu0
    %v6730 = vadd.f32 %v6716, %v6729
    %6731 = vdwg.mxu0
    %6732 = vmatpush.bf16.msra.mxu0 %v5557
    %6733 = vmatpush.bf16.msra.mxu0 %v5541
    %6734 = vmatpush.bf16.msra.mxu0 %v5525
    %6735 = vmatpush.bf16.msra.mxu0 %v5509
    %6736 = vmatpush.bf16.msra.mxu0 %v5493
    %6737 = vmatpush.bf16.msra.mxu0 %v5477
    %6738 = vmatpush.bf16.msra.mxu0 %v5461
    %6739 = vmatpush.bf16.msra.mxu0 %v5445
    %6740 = vmatmul.bf16.gmra.mxu0 %v2965
    %v6741 = vpop.f32.mrf.mxu0
    %v6742 = vadd.f32 %v6728, %v6741
    %v6743 = vpop.f32.mrf.mxu0
    %v6744 = vadd.f32 %v6730, %v6743
    %6745 = vdwg.mxu0
    %6746 = vmatpush.bf16.msra.mxu0 %v5174
    %6747 = vmatpush.bf16.msra.mxu0 %v5158
    %6748 = vmatpush.bf16.msra.mxu0 %v5142
    %6749 = vmatpush.bf16.msra.mxu0 %v5126
    %6750 = vmatpush.bf16.msra.mxu0 %v5110
    %6751 = vmatpush.bf16.msra.mxu0 %v5094
    %6752 = vmatpush.bf16.msra.mxu0 %v5078
    %6753 = vmatpush.bf16.msra.mxu0 %v5062
    %6754 = vmatmul.bf16.gmra.mxu0 %v2962
    %v6755 = vpop.f32.mrf.mxu0
    %v6756 = vadd.f32 %v3494, %v6755
    %v6757 = vpop.f32.mrf.mxu0
    %v6758 = vadd.f32 %v3494, %v6757
    %6759 = vdwg.mxu0
    %6760 = vmatpush.bf16.msra.mxu0 %v5302
    %6761 = vmatpush.bf16.msra.mxu0 %v5286
    %6762 = vmatpush.bf16.msra.mxu0 %v5270
    %6763 = vmatpush.bf16.msra.mxu0 %v5254
    %6764 = vmatpush.bf16.msra.mxu0 %v5238
    %6765 = vmatpush.bf16.msra.mxu0 %v5222
    %6766 = vmatpush.bf16.msra.mxu0 %v5206
    %6767 = vmatpush.bf16.msra.mxu0 %v5190
    %6768 = vmatmul.bf16.gmra.mxu0 %v2963
    %v6769 = vpop.f32.mrf.mxu0
    %v6770 = vadd.f32 %v6756, %v6769
    %v6771 = vpop.f32.mrf.mxu0
    %v6772 = vadd.f32 %v6758, %v6771
    %6773 = vdwg.mxu0
    %6774 = vmatpush.bf16.msra.mxu0 %v5430
    %6775 = vmatpush.bf16.msra.mxu0 %v5414
    %6776 = vmatpush.bf16.msra.mxu0 %v5398
    %6777 = vmatpush.bf16.msra.mxu0 %v5382
    %6778 = vmatpush.bf16.msra.mxu0 %v5366
    %6779 = vmatpush.bf16.msra.mxu0 %v5350
    %6780 = vmatpush.bf16.msra.mxu0 %v5334
    %6781 = vmatpush.bf16.msra.mxu0 %v5318
    %6782 = vmatmul.bf16.gmra.mxu0 %v2964
    %v6783 = vpop.f32.mrf.mxu0
    %v6784 = vadd.f32 %v6770, %v6783
    %v6785 = vpop.f32.mrf.mxu0
    %v6786 = vadd.f32 %v6772, %v6785
    %6787 = vdwg.mxu0
    %6788 = vmatpush.bf16.msra.mxu0 %v5558
    %6789 = vmatpush.bf16.msra.mxu0 %v5542
    %6790 = vmatpush.bf16.msra.mxu0 %v5526
    %6791 = vmatpush.bf16.msra.mxu0 %v5510
    %6792 = vmatpush.bf16.msra.mxu0 %v5494
    %6793 = vmatpush.bf16.msra.mxu0 %v5478
    %6794 = vmatpush.bf16.msra.mxu0 %v5462
    %6795 = vmatpush.bf16.msra.mxu0 %v5446
    %6796 = vmatmul.bf16.gmra.mxu0 %v2965
    %v6797 = vpop.f32.mrf.mxu0
    %v6798 = vadd.f32 %v6784, %v6797
    %v6799 = vpop.f32.mrf.mxu0
    %v6800 = vadd.f32 %v6786, %v6799
    %6801 = vdwg.mxu0
    %6802 = vmatpush.bf16.msra.mxu0 %v5175
    %6803 = vmatpush.bf16.msra.mxu0 %v5159
    %6804 = vmatpush.bf16.msra.mxu0 %v5143
    %6805 = vmatpush.bf16.msra.mxu0 %v5127
    %6806 = vmatpush.bf16.msra.mxu0 %v5111
    %6807 = vmatpush.bf16.msra.mxu0 %v5095
    %6808 = vmatpush.bf16.msra.mxu0 %v5079
    %6809 = vmatpush.bf16.msra.mxu0 %v5063
    %6810 = vmatmul.bf16.gmra.mxu0 %v2962
    %v6811 = vpop.f32.mrf.mxu0
    %v6812 = vadd.f32 %v3495, %v6811
    %v6813 = vpop.f32.mrf.mxu0
    %v6814 = vadd.f32 %v3495, %v6813
    %6815 = vdwg.mxu0
    %6816 = vmatpush.bf16.msra.mxu0 %v5303
    %6817 = vmatpush.bf16.msra.mxu0 %v5287
    %6818 = vmatpush.bf16.msra.mxu0 %v5271
    %6819 = vmatpush.bf16.msra.mxu0 %v5255
    %6820 = vmatpush.bf16.msra.mxu0 %v5239
    %6821 = vmatpush.bf16.msra.mxu0 %v5223
    %6822 = vmatpush.bf16.msra.mxu0 %v5207
    %6823 = vmatpush.bf16.msra.mxu0 %v5191
    %6824 = vmatmul.bf16.gmra.mxu0 %v2963
    %v6825 = vpop.f32.mrf.mxu0
    %v6826 = vadd.f32 %v6812, %v6825
    %v6827 = vpop.f32.mrf.mxu0
    %v6828 = vadd.f32 %v6814, %v6827
    %6829 = vdwg.mxu0
    %6830 = vmatpush.bf16.msra.mxu0 %v5431
    %6831 = vmatpush.bf16.msra.mxu0 %v5415
    %6832 = vmatpush.bf16.msra.mxu0 %v5399
    %6833 = vmatpush.bf16.msra.mxu0 %v5383
    %6834 = vmatpush.bf16.msra.mxu0 %v5367
    %6835 = vmatpush.bf16.msra.mxu0 %v5351
    %6836 = vmatpush.bf16.msra.mxu0 %v5335
    %6837 = vmatpush.bf16.msra.mxu0 %v5319
    %6838 = vmatmul.bf16.gmra.mxu0 %v2964
    %v6839 = vpop.f32.mrf.mxu0
    %v6840 = vadd.f32 %v6826, %v6839
    %v6841 = vpop.f32.mrf.mxu0
    %v6842 = vadd.f32 %v6828, %v6841
    %6843 = vdwg.mxu0
    %6844 = vmatpush.bf16.msra.mxu0 %v5559
    %6845 = vmatpush.bf16.msra.mxu0 %v5543
    %6846 = vmatpush.bf16.msra.mxu0 %v5527
    %6847 = vmatpush.bf16.msra.mxu0 %v5511
    %6848 = vmatpush.bf16.msra.mxu0 %v5495
    %6849 = vmatpush.bf16.msra.mxu0 %v5479
    %6850 = vmatpush.bf16.msra.mxu0 %v5463
    %6851 = vmatpush.bf16.msra.mxu0 %v5447
    %6852 = vmatmul.bf16.gmra.mxu0 %v2965
    %v6853 = vpop.f32.mrf.mxu0
    %v6854 = vadd.f32 %v6840, %v6853
    %v6855 = vpop.f32.mrf.mxu0
    %v6856 = vadd.f32 %v6842, %v6855
    %6857 = vdwg.mxu0
    %6858 = vmatpush.bf16.msra.mxu0 %v5176
    %6859 = vmatpush.bf16.msra.mxu0 %v5160
    %6860 = vmatpush.bf16.msra.mxu0 %v5144
    %6861 = vmatpush.bf16.msra.mxu0 %v5128
    %6862 = vmatpush.bf16.msra.mxu0 %v5112
    %6863 = vmatpush.bf16.msra.mxu0 %v5096
    %6864 = vmatpush.bf16.msra.mxu0 %v5080
    %6865 = vmatpush.bf16.msra.mxu0 %v5064
    %6866 = vmatmul.bf16.gmra.mxu0 %v2962
    %v6867 = vpop.f32.mrf.mxu0
    %v6868 = vadd.f32 %v3496, %v6867
    %v6869 = vpop.f32.mrf.mxu0
    %v6870 = vadd.f32 %v3496, %v6869
    %6871 = vdwg.mxu0
    %6872 = vmatpush.bf16.msra.mxu0 %v5304
    %6873 = vmatpush.bf16.msra.mxu0 %v5288
    %6874 = vmatpush.bf16.msra.mxu0 %v5272
    %6875 = vmatpush.bf16.msra.mxu0 %v5256
    %6876 = vmatpush.bf16.msra.mxu0 %v5240
    %6877 = vmatpush.bf16.msra.mxu0 %v5224
    %6878 = vmatpush.bf16.msra.mxu0 %v5208
    %6879 = vmatpush.bf16.msra.mxu0 %v5192
    %6880 = vmatmul.bf16.gmra.mxu0 %v2963
    %v6881 = vpop.f32.mrf.mxu0
    %v6882 = vadd.f32 %v6868, %v6881
    %v6883 = vpop.f32.mrf.mxu0
    %v6884 = vadd.f32 %v6870, %v6883
    %6885 = vdwg.mxu0
    %6886 = vmatpush.bf16.msra.mxu0 %v5432
    %6887 = vmatpush.bf16.msra.mxu0 %v5416
    %6888 = vmatpush.bf16.msra.mxu0 %v5400
    %6889 = vmatpush.bf16.msra.mxu0 %v5384
    %6890 = vmatpush.bf16.msra.mxu0 %v5368
    %6891 = vmatpush.bf16.msra.mxu0 %v5352
    %6892 = vmatpush.bf16.msra.mxu0 %v5336
    %6893 = vmatpush.bf16.msra.mxu0 %v5320
    %6894 = vmatmul.bf16.gmra.mxu0 %v2964
    %v6895 = vpop.f32.mrf.mxu0
    %v6896 = vadd.f32 %v6882, %v6895
    %v6897 = vpop.f32.mrf.mxu0
    %v6898 = vadd.f32 %v6884, %v6897
    %6899 = vdwg.mxu0
    %6900 = vmatpush.bf16.msra.mxu0 %v5560
    %6901 = vmatpush.bf16.msra.mxu0 %v5544
    %6902 = vmatpush.bf16.msra.mxu0 %v5528
    %6903 = vmatpush.bf16.msra.mxu0 %v5512
    %6904 = vmatpush.bf16.msra.mxu0 %v5496
    %6905 = vmatpush.bf16.msra.mxu0 %v5480
    %6906 = vmatpush.bf16.msra.mxu0 %v5464
    %6907 = vmatpush.bf16.msra.mxu0 %v5448
    %6908 = vmatmul.bf16.gmra.mxu0 %v2965
    %v6909 = vpop.f32.mrf.mxu0
    %v6910 = vadd.f32 %v6896, %v6909
    %v6911 = vpop.f32.mrf.mxu0
    %v6912 = vadd.f32 %v6898, %v6911
    %6913 = vdwg.mxu0
    %6914 = vmatpush.bf16.msra.mxu0 %v5177
    %6915 = vmatpush.bf16.msra.mxu0 %v5161
    %6916 = vmatpush.bf16.msra.mxu0 %v5145
    %6917 = vmatpush.bf16.msra.mxu0 %v5129
    %6918 = vmatpush.bf16.msra.mxu0 %v5113
    %6919 = vmatpush.bf16.msra.mxu0 %v5097
    %6920 = vmatpush.bf16.msra.mxu0 %v5081
    %6921 = vmatpush.bf16.msra.mxu0 %v5065
    %6922 = vmatmul.bf16.gmra.mxu0 %v2962
    %v6923 = vpop.f32.mrf.mxu0
    %v6924 = vadd.f32 %v3497, %v6923
    %v6925 = vpop.f32.mrf.mxu0
    %v6926 = vadd.f32 %v3497, %v6925
    %6927 = vdwg.mxu0
    %6928 = vmatpush.bf16.msra.mxu0 %v5305
    %6929 = vmatpush.bf16.msra.mxu0 %v5289
    %6930 = vmatpush.bf16.msra.mxu0 %v5273
    %6931 = vmatpush.bf16.msra.mxu0 %v5257
    %6932 = vmatpush.bf16.msra.mxu0 %v5241
    %6933 = vmatpush.bf16.msra.mxu0 %v5225
    %6934 = vmatpush.bf16.msra.mxu0 %v5209
    %6935 = vmatpush.bf16.msra.mxu0 %v5193
    %6936 = vmatmul.bf16.gmra.mxu0 %v2963
    %v6937 = vpop.f32.mrf.mxu0
    %v6938 = vadd.f32 %v6924, %v6937
    %v6939 = vpop.f32.mrf.mxu0
    %v6940 = vadd.f32 %v6926, %v6939
    %6941 = vdwg.mxu0
    %6942 = vmatpush.bf16.msra.mxu0 %v5433
    %6943 = vmatpush.bf16.msra.mxu0 %v5417
    %6944 = vmatpush.bf16.msra.mxu0 %v5401
    %6945 = vmatpush.bf16.msra.mxu0 %v5385
    %6946 = vmatpush.bf16.msra.mxu0 %v5369
    %6947 = vmatpush.bf16.msra.mxu0 %v5353
    %6948 = vmatpush.bf16.msra.mxu0 %v5337
    %6949 = vmatpush.bf16.msra.mxu0 %v5321
    %6950 = vmatmul.bf16.gmra.mxu0 %v2964
    %v6951 = vpop.f32.mrf.mxu0
    %v6952 = vadd.f32 %v6938, %v6951
    %v6953 = vpop.f32.mrf.mxu0
    %v6954 = vadd.f32 %v6940, %v6953
    %6955 = vdwg.mxu0
    %6956 = vmatpush.bf16.msra.mxu0 %v5561
    %6957 = vmatpush.bf16.msra.mxu0 %v5545
    %6958 = vmatpush.bf16.msra.mxu0 %v5529
    %6959 = vmatpush.bf16.msra.mxu0 %v5513
    %6960 = vmatpush.bf16.msra.mxu0 %v5497
    %6961 = vmatpush.bf16.msra.mxu0 %v5481
    %6962 = vmatpush.bf16.msra.mxu0 %v5465
    %6963 = vmatpush.bf16.msra.mxu0 %v5449
    %6964 = vmatmul.bf16.gmra.mxu0 %v2965
    %v6965 = vpop.f32.mrf.mxu0
    %v6966 = vadd.f32 %v6952, %v6965
    %v6967 = vpop.f32.mrf.mxu0
    %v6968 = vadd.f32 %v6954, %v6967
    %6969 = vdwg.mxu0
    %v6970 = vmax.f32 %v6126, 0.0
    %v6971 = vmax.f32 %v6182, 0.0
    %v6972 = vmax.f32 %v6238, 0.0
    %v6973 = vmax.f32 %v6294, 0.0
    %v6974 = vmax.f32 %v6350, 0.0
    %v6975 = vmax.f32 %v6406, 0.0
    %v6976 = vmax.f32 %v6462, 0.0
    %v6977 = vmax.f32 %v6518, 0.0
    %v6978 = vmax.f32 %v6574, 0.0
    %v6979 = vmax.f32 %v6630, 0.0
    %v6980 = vmax.f32 %v6686, 0.0
    %v6981 = vmax.f32 %v6742, 0.0
    %v6982 = vmax.f32 %v6798, 0.0
    %v6983 = vmax.f32 %v6854, 0.0
    %v6984 = vmax.f32 %v6910, 0.0
    %v6985 = vmax.f32 %v6966, 0.0
    %v6986 = vmax.f32 %v6128, 0.0
    %v6987 = vmax.f32 %v6184, 0.0
    %v6988 = vmax.f32 %v6240, 0.0
    %v6989 = vmax.f32 %v6296, 0.0
    %v6990 = vmax.f32 %v6352, 0.0
    %v6991 = vmax.f32 %v6408, 0.0
    %v6992 = vmax.f32 %v6464, 0.0
    %v6993 = vmax.f32 %v6520, 0.0
    %v6994 = vmax.f32 %v6576, 0.0
    %v6995 = vmax.f32 %v6632, 0.0
    %v6996 = vmax.f32 %v6688, 0.0
    %v6997 = vmax.f32 %v6744, 0.0
    %v6998 = vmax.f32 %v6800, 0.0
    %v6999 = vmax.f32 %v6856, 0.0
    %v7000 = vmax.f32 %v6912, 0.0
    %v7001 = vmax.f32 %v6968, 0.0
    %v7002 = vpack.c.bf16 %v6986, %v6970
    %v7003 = vpack.c.bf16 %v6987, %v6971
    %v7004 = vpack.c.bf16 %v6988, %v6972
    %v7005 = vpack.c.bf16 %v6989, %v6973
    %v7006 = vpack.c.bf16 %v6990, %v6974
    %v7007 = vpack.c.bf16 %v6991, %v6975
    %v7008 = vpack.c.bf16 %v6992, %v6976
    %v7009 = vpack.c.bf16 %v6993, %v6977
    %v7010 = vpack.c.bf16 %v6994, %v6978
    %v7011 = vpack.c.bf16 %v6995, %v6979
    %v7012 = vpack.c.bf16 %v6996, %v6980
    %v7013 = vpack.c.bf16 %v6997, %v6981
    %v7014 = vpack.c.bf16 %v6998, %v6982
    %v7015 = vpack.c.bf16 %v6999, %v6983
    %v7016 = vpack.c.bf16 %v7000, %v6984
    %v7017 = vpack.c.bf16 %v7001, %v6985
    %v7018 = vld [vmem:[%s7] sm:$0xf]
    %v7019 = vld [vmem:[%s7 + $0x4] sm:$0xf]
    %v7020 = vld [vmem:[%s7 + $0x8] sm:$0xf]
    %v7021 = vld [vmem:[%s7 + $0xc] sm:$0xf]
    %v7022 = vld [vmem:[%s7 + $0x10] sm:$0xf]
    %v7023 = vld [vmem:[%s7 + $0x14] sm:$0xf]
    %v7024 = vld [vmem:[%s7 + $0x18] sm:$0xf]
    %v7025 = vld [vmem:[%s7 + $0x1c] sm:$0xf]
    %v7026 = vld [vmem:[%s7 + $0x20] sm:$0xf]
    %v7027 = vld [vmem:[%s7 + $0x24] sm:$0xf]
    %v7028 = vld [vmem:[%s7 + $0x28] sm:$0xf]
    %v7029 = vld [vmem:[%s7 + $0x2c] sm:$0xf]
    %v7030 = vld [vmem:[%s7 + $0x30] sm:$0xf]
    %v7031 = vld [vmem:[%s7 + $0x34] sm:$0xf]
    %v7032 = vld [vmem:[%s7 + $0x38] sm:$0xf]
    %v7033 = vld [vmem:[%s7 + $0x3c] sm:$0xf]
    %v7034 = vld [vmem:[%s7 + $0x40] sm:$0xf]
    %v7035 = vld [vmem:[%s7 + $0x44] sm:$0xf]
    %v7036 = vld [vmem:[%s7 + $0x48] sm:$0xf]
    %v7037 = vld [vmem:[%s7 + $0x4c] sm:$0xf]
    %v7038 = vld [vmem:[%s7 + $0x50] sm:$0xf]
    %v7039 = vld [vmem:[%s7 + $0x54] sm:$0xf]
    %v7040 = vld [vmem:[%s7 + $0x58] sm:$0xf]
    %v7041 = vld [vmem:[%s7 + $0x5c] sm:$0xf]
    %v7042 = vld [vmem:[%s7 + $0x60] sm:$0xf]
    %v7043 = vld [vmem:[%s7 + $0x64] sm:$0xf]
    %v7044 = vld [vmem:[%s7 + $0x68] sm:$0xf]
    %v7045 = vld [vmem:[%s7 + $0x6c] sm:$0xf]
    %v7046 = vld [vmem:[%s7 + $0x70] sm:$0xf]
    %v7047 = vld [vmem:[%s7 + $0x74] sm:$0xf]
    %v7048 = vld [vmem:[%s7 + $0x78] sm:$0xf]
    %v7049 = vld [vmem:[%s7 + $0x7c] sm:$0xf]
    %v7050 = vld [vmem:[%s7 + $0x80] sm:$0xf]
    %v7051 = vld [vmem:[%s7 + $0x84] sm:$0xf]
    %v7052 = vld [vmem:[%s7 + $0x88] sm:$0xf]
    %v7053 = vld [vmem:[%s7 + $0x8c] sm:$0xf]
    %v7054 = vld [vmem:[%s7 + $0x90] sm:$0xf]
    %v7055 = vld [vmem:[%s7 + $0x94] sm:$0xf]
    %v7056 = vld [vmem:[%s7 + $0x98] sm:$0xf]
    %v7057 = vld [vmem:[%s7 + $0x9c] sm:$0xf]
    %v7058 = vld [vmem:[%s7 + $0xa0] sm:$0xf]
    %v7059 = vld [vmem:[%s7 + $0xa4] sm:$0xf]
    %v7060 = vld [vmem:[%s7 + $0xa8] sm:$0xf]
    %v7061 = vld [vmem:[%s7 + $0xac] sm:$0xf]
    %v7062 = vld [vmem:[%s7 + $0xb0] sm:$0xf]
    %v7063 = vld [vmem:[%s7 + $0xb4] sm:$0xf]
    %v7064 = vld [vmem:[%s7 + $0xb8] sm:$0xf]
    %v7065 = vld [vmem:[%s7 + $0xbc] sm:$0xf]
    %v7066 = vld [vmem:[%s7 + $0xc0] sm:$0xf]
    %v7067 = vld [vmem:[%s7 + $0xc4] sm:$0xf]
    %v7068 = vld [vmem:[%s7 + $0xc8] sm:$0xf]
    %v7069 = vld [vmem:[%s7 + $0xcc] sm:$0xf]
    %v7070 = vld [vmem:[%s7 + $0xd0] sm:$0xf]
    %v7071 = vld [vmem:[%s7 + $0xd4] sm:$0xf]
    %v7072 = vld [vmem:[%s7 + $0xd8] sm:$0xf]
    %v7073 = vld [vmem:[%s7 + $0xdc] sm:$0xf]
    %v7074 = vld [vmem:[%s7 + $0xe0] sm:$0xf]
    %v7075 = vld [vmem:[%s7 + $0xe4] sm:$0xf]
    %v7076 = vld [vmem:[%s7 + $0xe8] sm:$0xf]
    %v7077 = vld [vmem:[%s7 + $0xec] sm:$0xf]
    %v7078 = vld [vmem:[%s7 + $0xf0] sm:$0xf]
    %v7079 = vld [vmem:[%s7 + $0xf4] sm:$0xf]
    %v7080 = vld [vmem:[%s7 + $0xf8] sm:$0xf]
    %v7081 = vld [vmem:[%s7 + $0xfc] sm:$0xf]
    %v7082 = vld [vmem:[%s7 + $0x100] sm:$0xf]
    %v7083 = vld [vmem:[%s7 + $0x104] sm:$0xf]
    %v7084 = vld [vmem:[%s7 + $0x108] sm:$0xf]
    %v7085 = vld [vmem:[%s7 + $0x10c] sm:$0xf]
    %v7086 = vld [vmem:[%s7 + $0x110] sm:$0xf]
    %v7087 = vld [vmem:[%s7 + $0x114] sm:$0xf]
    %v7088 = vld [vmem:[%s7 + $0x118] sm:$0xf]
    %v7089 = vld [vmem:[%s7 + $0x11c] sm:$0xf]
    %v7090 = vld [vmem:[%s7 + $0x120] sm:$0xf]
    %v7091 = vld [vmem:[%s7 + $0x124] sm:$0xf]
    %v7092 = vld [vmem:[%s7 + $0x128] sm:$0xf]
    %v7093 = vld [vmem:[%s7 + $0x12c] sm:$0xf]
    %v7094 = vld [vmem:[%s7 + $0x130] sm:$0xf]
    %v7095 = vld [vmem:[%s7 + $0x134] sm:$0xf]
    %v7096 = vld [vmem:[%s7 + $0x138] sm:$0xf]
    %v7097 = vld [vmem:[%s7 + $0x13c] sm:$0xf]
    %v7098 = vld [vmem:[%s7 + $0x140] sm:$0xf]
    %v7099 = vld [vmem:[%s7 + $0x144] sm:$0xf]
    %v7100 = vld [vmem:[%s7 + $0x148] sm:$0xf]
    %v7101 = vld [vmem:[%s7 + $0x14c] sm:$0xf]
    %v7102 = vld [vmem:[%s7 + $0x150] sm:$0xf]
    %v7103 = vld [vmem:[%s7 + $0x154] sm:$0xf]
    %v7104 = vld [vmem:[%s7 + $0x158] sm:$0xf]
    %v7105 = vld [vmem:[%s7 + $0x15c] sm:$0xf]
    %v7106 = vld [vmem:[%s7 + $0x160] sm:$0xf]
    %v7107 = vld [vmem:[%s7 + $0x164] sm:$0xf]
    %v7108 = vld [vmem:[%s7 + $0x168] sm:$0xf]
    %v7109 = vld [vmem:[%s7 + $0x16c] sm:$0xf]
    %v7110 = vld [vmem:[%s7 + $0x170] sm:$0xf]
    %v7111 = vld [vmem:[%s7 + $0x174] sm:$0xf]
    %v7112 = vld [vmem:[%s7 + $0x178] sm:$0xf]
    %v7113 = vld [vmem:[%s7 + $0x17c] sm:$0xf]
    %v7114 = vld [vmem:[%s7 + $0x180] sm:$0xf]
    %v7115 = vld [vmem:[%s7 + $0x184] sm:$0xf]
    %v7116 = vld [vmem:[%s7 + $0x188] sm:$0xf]
    %v7117 = vld [vmem:[%s7 + $0x18c] sm:$0xf]
    %v7118 = vld [vmem:[%s7 + $0x190] sm:$0xf]
    %v7119 = vld [vmem:[%s7 + $0x194] sm:$0xf]
    %v7120 = vld [vmem:[%s7 + $0x198] sm:$0xf]
    %v7121 = vld [vmem:[%s7 + $0x19c] sm:$0xf]
    %v7122 = vld [vmem:[%s7 + $0x1a0] sm:$0xf]
    %v7123 = vld [vmem:[%s7 + $0x1a4] sm:$0xf]
    %v7124 = vld [vmem:[%s7 + $0x1a8] sm:$0xf]
    %v7125 = vld [vmem:[%s7 + $0x1ac] sm:$0xf]
    %v7126 = vld [vmem:[%s7 + $0x1b0] sm:$0xf]
    %v7127 = vld [vmem:[%s7 + $0x1b4] sm:$0xf]
    %v7128 = vld [vmem:[%s7 + $0x1b8] sm:$0xf]
    %v7129 = vld [vmem:[%s7 + $0x1bc] sm:$0xf]
    %v7130 = vld [vmem:[%s7 + $0x1c0] sm:$0xf]
    %v7131 = vld [vmem:[%s7 + $0x1c4] sm:$0xf]
    %v7132 = vld [vmem:[%s7 + $0x1c8] sm:$0xf]
    %v7133 = vld [vmem:[%s7 + $0x1cc] sm:$0xf]
    %v7134 = vld [vmem:[%s7 + $0x1d0] sm:$0xf]
    %v7135 = vld [vmem:[%s7 + $0x1d4] sm:$0xf]
    %v7136 = vld [vmem:[%s7 + $0x1d8] sm:$0xf]
    %v7137 = vld [vmem:[%s7 + $0x1dc] sm:$0xf]
    %v7138 = vld [vmem:[%s7 + $0x1e0] sm:$0xf]
    %v7139 = vld [vmem:[%s7 + $0x1e4] sm:$0xf]
    %v7140 = vld [vmem:[%s7 + $0x1e8] sm:$0xf]
    %v7141 = vld [vmem:[%s7 + $0x1ec] sm:$0xf]
    %v7142 = vld [vmem:[%s7 + $0x1f0] sm:$0xf]
    %v7143 = vld [vmem:[%s7 + $0x1f4] sm:$0xf]
    %v7144 = vld [vmem:[%s7 + $0x1f8] sm:$0xf]
    %v7145 = vld [vmem:[%s7 + $0x1fc] sm:$0xf]
    %v7146 = vld [vmem:[%s7 + $0x200] sm:$0xf]
    %v7147 = vld [vmem:[%s7 + $0x204] sm:$0xf]
    %v7148 = vld [vmem:[%s7 + $0x208] sm:$0xf]
    %v7149 = vld [vmem:[%s7 + $0x20c] sm:$0xf]
    %v7150 = vld [vmem:[%s7 + $0x210] sm:$0xf]
    %v7151 = vld [vmem:[%s7 + $0x214] sm:$0xf]
    %v7152 = vld [vmem:[%s7 + $0x218] sm:$0xf]
    %v7153 = vld [vmem:[%s7 + $0x21c] sm:$0xf]
    %v7154 = vld [vmem:[%s7 + $0x220] sm:$0xf]
    %v7155 = vld [vmem:[%s7 + $0x224] sm:$0xf]
    %v7156 = vld [vmem:[%s7 + $0x228] sm:$0xf]
    %v7157 = vld [vmem:[%s7 + $0x22c] sm:$0xf]
    %v7158 = vld [vmem:[%s7 + $0x230] sm:$0xf]
    %v7159 = vld [vmem:[%s7 + $0x234] sm:$0xf]
    %v7160 = vld [vmem:[%s7 + $0x238] sm:$0xf]
    %v7161 = vld [vmem:[%s7 + $0x23c] sm:$0xf]
    %v7162 = vld [vmem:[%s7 + $0x240] sm:$0xf]
    %v7163 = vld [vmem:[%s7 + $0x244] sm:$0xf]
    %v7164 = vld [vmem:[%s7 + $0x248] sm:$0xf]
    %v7165 = vld [vmem:[%s7 + $0x24c] sm:$0xf]
    %v7166 = vld [vmem:[%s7 + $0x250] sm:$0xf]
    %v7167 = vld [vmem:[%s7 + $0x254] sm:$0xf]
    %v7168 = vld [vmem:[%s7 + $0x258] sm:$0xf]
    %v7169 = vld [vmem:[%s7 + $0x25c] sm:$0xf]
    %v7170 = vld [vmem:[%s7 + $0x260] sm:$0xf]
    %v7171 = vld [vmem:[%s7 + $0x264] sm:$0xf]
    %v7172 = vld [vmem:[%s7 + $0x268] sm:$0xf]
    %v7173 = vld [vmem:[%s7 + $0x26c] sm:$0xf]
    %v7174 = vld [vmem:[%s7 + $0x270] sm:$0xf]
    %v7175 = vld [vmem:[%s7 + $0x274] sm:$0xf]
    %v7176 = vld [vmem:[%s7 + $0x278] sm:$0xf]
    %v7177 = vld [vmem:[%s7 + $0x27c] sm:$0xf]
    %v7178 = vld [vmem:[%s7 + $0x280] sm:$0xf]
    %v7179 = vld [vmem:[%s7 + $0x284] sm:$0xf]
    %v7180 = vld [vmem:[%s7 + $0x288] sm:$0xf]
    %v7181 = vld [vmem:[%s7 + $0x28c] sm:$0xf]
    %v7182 = vld [vmem:[%s7 + $0x290] sm:$0xf]
    %v7183 = vld [vmem:[%s7 + $0x294] sm:$0xf]
    %v7184 = vld [vmem:[%s7 + $0x298] sm:$0xf]
    %v7185 = vld [vmem:[%s7 + $0x29c] sm:$0xf]
    %v7186 = vld [vmem:[%s7 + $0x2a0] sm:$0xf]
    %v7187 = vld [vmem:[%s7 + $0x2a4] sm:$0xf]
    %v7188 = vld [vmem:[%s7 + $0x2a8] sm:$0xf]
    %v7189 = vld [vmem:[%s7 + $0x2ac] sm:$0xf]
    %v7190 = vld [vmem:[%s7 + $0x2b0] sm:$0xf]
    %v7191 = vld [vmem:[%s7 + $0x2b4] sm:$0xf]
    %v7192 = vld [vmem:[%s7 + $0x2b8] sm:$0xf]
    %v7193 = vld [vmem:[%s7 + $0x2bc] sm:$0xf]
    %v7194 = vld [vmem:[%s7 + $0x2c0] sm:$0xf]
    %v7195 = vld [vmem:[%s7 + $0x2c4] sm:$0xf]
    %v7196 = vld [vmem:[%s7 + $0x2c8] sm:$0xf]
    %v7197 = vld [vmem:[%s7 + $0x2cc] sm:$0xf]
    %v7198 = vld [vmem:[%s7 + $0x2d0] sm:$0xf]
    %v7199 = vld [vmem:[%s7 + $0x2d4] sm:$0xf]
    %v7200 = vld [vmem:[%s7 + $0x2d8] sm:$0xf]
    %v7201 = vld [vmem:[%s7 + $0x2dc] sm:$0xf]
    %v7202 = vld [vmem:[%s7 + $0x2e0] sm:$0xf]
    %v7203 = vld [vmem:[%s7 + $0x2e4] sm:$0xf]
    %v7204 = vld [vmem:[%s7 + $0x2e8] sm:$0xf]
    %v7205 = vld [vmem:[%s7 + $0x2ec] sm:$0xf]
    %v7206 = vld [vmem:[%s7 + $0x2f0] sm:$0xf]
    %v7207 = vld [vmem:[%s7 + $0x2f4] sm:$0xf]
    %v7208 = vld [vmem:[%s7 + $0x2f8] sm:$0xf]
    %v7209 = vld [vmem:[%s7 + $0x2fc] sm:$0xf]
    %v7210 = vld [vmem:[%s7 + $0x300] sm:$0xf]
    %v7211 = vld [vmem:[%s7 + $0x304] sm:$0xf]
    %v7212 = vld [vmem:[%s7 + $0x308] sm:$0xf]
    %v7213 = vld [vmem:[%s7 + $0x30c] sm:$0xf]
    %v7214 = vld [vmem:[%s7 + $0x310] sm:$0xf]
    %v7215 = vld [vmem:[%s7 + $0x314] sm:$0xf]
    %v7216 = vld [vmem:[%s7 + $0x318] sm:$0xf]
    %v7217 = vld [vmem:[%s7 + $0x31c] sm:$0xf]
    %v7218 = vld [vmem:[%s7 + $0x320] sm:$0xf]
    %v7219 = vld [vmem:[%s7 + $0x324] sm:$0xf]
    %v7220 = vld [vmem:[%s7 + $0x328] sm:$0xf]
    %v7221 = vld [vmem:[%s7 + $0x32c] sm:$0xf]
    %v7222 = vld [vmem:[%s7 + $0x330] sm:$0xf]
    %v7223 = vld [vmem:[%s7 + $0x334] sm:$0xf]
    %v7224 = vld [vmem:[%s7 + $0x338] sm:$0xf]
    %v7225 = vld [vmem:[%s7 + $0x33c] sm:$0xf]
    %v7226 = vld [vmem:[%s7 + $0x340] sm:$0xf]
    %v7227 = vld [vmem:[%s7 + $0x344] sm:$0xf]
    %v7228 = vld [vmem:[%s7 + $0x348] sm:$0xf]
    %v7229 = vld [vmem:[%s7 + $0x34c] sm:$0xf]
    %v7230 = vld [vmem:[%s7 + $0x350] sm:$0xf]
    %v7231 = vld [vmem:[%s7 + $0x354] sm:$0xf]
    %v7232 = vld [vmem:[%s7 + $0x358] sm:$0xf]
    %v7233 = vld [vmem:[%s7 + $0x35c] sm:$0xf]
    %v7234 = vld [vmem:[%s7 + $0x360] sm:$0xf]
    %v7235 = vld [vmem:[%s7 + $0x364] sm:$0xf]
    %v7236 = vld [vmem:[%s7 + $0x368] sm:$0xf]
    %v7237 = vld [vmem:[%s7 + $0x36c] sm:$0xf]
    %v7238 = vld [vmem:[%s7 + $0x370] sm:$0xf]
    %v7239 = vld [vmem:[%s7 + $0x374] sm:$0xf]
    %v7240 = vld [vmem:[%s7 + $0x378] sm:$0xf]
    %v7241 = vld [vmem:[%s7 + $0x37c] sm:$0xf]
    %v7242 = vld [vmem:[%s7 + $0x380] sm:$0xf]
    %v7243 = vld [vmem:[%s7 + $0x384] sm:$0xf]
    %v7244 = vld [vmem:[%s7 + $0x388] sm:$0xf]
    %v7245 = vld [vmem:[%s7 + $0x38c] sm:$0xf]
    %v7246 = vld [vmem:[%s7 + $0x390] sm:$0xf]
    %v7247 = vld [vmem:[%s7 + $0x394] sm:$0xf]
    %v7248 = vld [vmem:[%s7 + $0x398] sm:$0xf]
    %v7249 = vld [vmem:[%s7 + $0x39c] sm:$0xf]
    %v7250 = vld [vmem:[%s7 + $0x3a0] sm:$0xf]
    %v7251 = vld [vmem:[%s7 + $0x3a4] sm:$0xf]
    %v7252 = vld [vmem:[%s7 + $0x3a8] sm:$0xf]
    %v7253 = vld [vmem:[%s7 + $0x3ac] sm:$0xf]
    %v7254 = vld [vmem:[%s7 + $0x3b0] sm:$0xf]
    %v7255 = vld [vmem:[%s7 + $0x3b4] sm:$0xf]
    %v7256 = vld [vmem:[%s7 + $0x3b8] sm:$0xf]
    %v7257 = vld [vmem:[%s7 + $0x3bc] sm:$0xf]
    %v7258 = vld [vmem:[%s7 + $0x3c0] sm:$0xf]
    %v7259 = vld [vmem:[%s7 + $0x3c4] sm:$0xf]
    %v7260 = vld [vmem:[%s7 + $0x3c8] sm:$0xf]
    %v7261 = vld [vmem:[%s7 + $0x3cc] sm:$0xf]
    %v7262 = vld [vmem:[%s7 + $0x3d0] sm:$0xf]
    %v7263 = vld [vmem:[%s7 + $0x3d4] sm:$0xf]
    %v7264 = vld [vmem:[%s7 + $0x3d8] sm:$0xf]
    %v7265 = vld [vmem:[%s7 + $0x3dc] sm:$0xf]
    %v7266 = vld [vmem:[%s7 + $0x3e0] sm:$0xf]
    %v7267 = vld [vmem:[%s7 + $0x3e4] sm:$0xf]
    %v7268 = vld [vmem:[%s7 + $0x3e8] sm:$0xf]
    %v7269 = vld [vmem:[%s7 + $0x3ec] sm:$0xf]
    %v7270 = vld [vmem:[%s7 + $0x3f0] sm:$0xf]
    %v7271 = vld [vmem:[%s7 + $0x3f4] sm:$0xf]
    %v7272 = vld [vmem:[%s7 + $0x3f8] sm:$0xf]
    %v7273 = vld [vmem:[%s7 + $0x3fc] sm:$0xf]
    %v7274 = vld [vmem:[#allocation14] sm:$0x1]
    %v7276 = vperm.slane %v7274, 0
    %v7534 = vunpack.c.l.b16 %v7018
    %v7535 = vunpack.c.l.b16 %v7019
    %v7536 = vunpack.c.l.b16 %v7020
    %v7537 = vunpack.c.l.b16 %v7021
    %v7538 = vunpack.c.l.b16 %v7022
    %v7539 = vunpack.c.l.b16 %v7023
    %v7540 = vunpack.c.l.b16 %v7024
    %v7541 = vunpack.c.l.b16 %v7025
    %v7542 = vunpack.c.l.b16 %v7026
    %v7543 = vunpack.c.l.b16 %v7027
    %v7544 = vunpack.c.l.b16 %v7028
    %v7545 = vunpack.c.l.b16 %v7029
    %v7546 = vunpack.c.l.b16 %v7030
    %v7547 = vunpack.c.l.b16 %v7031
    %v7548 = vunpack.c.l.b16 %v7032
    %v7549 = vunpack.c.l.b16 %v7033
    %v7550 = vunpack.c.l.b16 %v7034
    %v7551 = vunpack.c.l.b16 %v7035
    %v7552 = vunpack.c.l.b16 %v7036
    %v7553 = vunpack.c.l.b16 %v7037
    %v7554 = vunpack.c.l.b16 %v7038
    %v7555 = vunpack.c.l.b16 %v7039
    %v7556 = vunpack.c.l.b16 %v7040
    %v7557 = vunpack.c.l.b16 %v7041
    %v7558 = vunpack.c.l.b16 %v7042
    %v7559 = vunpack.c.l.b16 %v7043
    %v7560 = vunpack.c.l.b16 %v7044
    %v7561 = vunpack.c.l.b16 %v7045
    %v7562 = vunpack.c.l.b16 %v7046
    %v7563 = vunpack.c.l.b16 %v7047
    %v7564 = vunpack.c.l.b16 %v7048
    %v7565 = vunpack.c.l.b16 %v7049
    %v7566 = vunpack.c.l.b16 %v7050
    %v7567 = vunpack.c.l.b16 %v7051
    %v7568 = vunpack.c.l.b16 %v7052
    %v7569 = vunpack.c.l.b16 %v7053
    %v7570 = vunpack.c.l.b16 %v7054
    %v7571 = vunpack.c.l.b16 %v7055
    %v7572 = vunpack.c.l.b16 %v7056
    %v7573 = vunpack.c.l.b16 %v7057
    %v7574 = vunpack.c.l.b16 %v7058
    %v7575 = vunpack.c.l.b16 %v7059
    %v7576 = vunpack.c.l.b16 %v7060
    %v7577 = vunpack.c.l.b16 %v7061
    %v7578 = vunpack.c.l.b16 %v7062
    %v7579 = vunpack.c.l.b16 %v7063
    %v7580 = vunpack.c.l.b16 %v7064
    %v7581 = vunpack.c.l.b16 %v7065
    %v7582 = vunpack.c.l.b16 %v7066
    %v7583 = vunpack.c.l.b16 %v7067
    %v7584 = vunpack.c.l.b16 %v7068
    %v7585 = vunpack.c.l.b16 %v7069
    %v7586 = vunpack.c.l.b16 %v7070
    %v7587 = vunpack.c.l.b16 %v7071
    %v7588 = vunpack.c.l.b16 %v7072
    %v7589 = vunpack.c.l.b16 %v7073
    %v7590 = vunpack.c.l.b16 %v7074
    %v7591 = vunpack.c.l.b16 %v7075
    %v7592 = vunpack.c.l.b16 %v7076
    %v7593 = vunpack.c.l.b16 %v7077
    %v7594 = vunpack.c.l.b16 %v7078
    %v7595 = vunpack.c.l.b16 %v7079
    %v7596 = vunpack.c.l.b16 %v7080
    %v7597 = vunpack.c.l.b16 %v7081
    %v7598 = vunpack.c.l.b16 %v7082
    %v7599 = vunpack.c.l.b16 %v7083
    %v7600 = vunpack.c.l.b16 %v7084
    %v7601 = vunpack.c.l.b16 %v7085
    %v7602 = vunpack.c.l.b16 %v7086
    %v7603 = vunpack.c.l.b16 %v7087
    %v7604 = vunpack.c.l.b16 %v7088
    %v7605 = vunpack.c.l.b16 %v7089
    %v7606 = vunpack.c.l.b16 %v7090
    %v7607 = vunpack.c.l.b16 %v7091
    %v7608 = vunpack.c.l.b16 %v7092
    %v7609 = vunpack.c.l.b16 %v7093
    %v7610 = vunpack.c.l.b16 %v7094
    %v7611 = vunpack.c.l.b16 %v7095
    %v7612 = vunpack.c.l.b16 %v7096
    %v7613 = vunpack.c.l.b16 %v7097
    %v7614 = vunpack.c.l.b16 %v7098
    %v7615 = vunpack.c.l.b16 %v7099
    %v7616 = vunpack.c.l.b16 %v7100
    %v7617 = vunpack.c.l.b16 %v7101
    %v7618 = vunpack.c.l.b16 %v7102
    %v7619 = vunpack.c.l.b16 %v7103
    %v7620 = vunpack.c.l.b16 %v7104
    %v7621 = vunpack.c.l.b16 %v7105
    %v7622 = vunpack.c.l.b16 %v7106
    %v7623 = vunpack.c.l.b16 %v7107
    %v7624 = vunpack.c.l.b16 %v7108
    %v7625 = vunpack.c.l.b16 %v7109
    %v7626 = vunpack.c.l.b16 %v7110
    %v7627 = vunpack.c.l.b16 %v7111
    %v7628 = vunpack.c.l.b16 %v7112
    %v7629 = vunpack.c.l.b16 %v7113
    %v7630 = vunpack.c.l.b16 %v7114
    %v7631 = vunpack.c.l.b16 %v7115
    %v7632 = vunpack.c.l.b16 %v7116
    %v7633 = vunpack.c.l.b16 %v7117
    %v7634 = vunpack.c.l.b16 %v7118
    %v7635 = vunpack.c.l.b16 %v7119
    %v7636 = vunpack.c.l.b16 %v7120
    %v7637 = vunpack.c.l.b16 %v7121
    %v7638 = vunpack.c.l.b16 %v7122
    %v7639 = vunpack.c.l.b16 %v7123
    %v7640 = vunpack.c.l.b16 %v7124
    %v7641 = vunpack.c.l.b16 %v7125
    %v7642 = vunpack.c.l.b16 %v7126
    %v7643 = vunpack.c.l.b16 %v7127
    %v7644 = vunpack.c.l.b16 %v7128
    %v7645 = vunpack.c.l.b16 %v7129
    %v7646 = vunpack.c.l.b16 %v7130
    %v7647 = vunpack.c.l.b16 %v7131
    %v7648 = vunpack.c.l.b16 %v7132
    %v7649 = vunpack.c.l.b16 %v7133
    %v7650 = vunpack.c.l.b16 %v7134
    %v7651 = vunpack.c.l.b16 %v7135
    %v7652 = vunpack.c.l.b16 %v7136
    %v7653 = vunpack.c.l.b16 %v7137
    %v7654 = vunpack.c.l.b16 %v7138
    %v7655 = vunpack.c.l.b16 %v7139
    %v7656 = vunpack.c.l.b16 %v7140
    %v7657 = vunpack.c.l.b16 %v7141
    %v7658 = vunpack.c.l.b16 %v7142
    %v7659 = vunpack.c.l.b16 %v7143
    %v7660 = vunpack.c.l.b16 %v7144
    %v7661 = vunpack.c.l.b16 %v7145
    %v7662 = vunpack.c.l.b16 %v7146
    %v7663 = vunpack.c.l.b16 %v7147
    %v7664 = vunpack.c.l.b16 %v7148
    %v7665 = vunpack.c.l.b16 %v7149
    %v7666 = vunpack.c.l.b16 %v7150
    %v7667 = vunpack.c.l.b16 %v7151
    %v7668 = vunpack.c.l.b16 %v7152
    %v7669 = vunpack.c.l.b16 %v7153
    %v7670 = vunpack.c.l.b16 %v7154
    %v7671 = vunpack.c.l.b16 %v7155
    %v7672 = vunpack.c.l.b16 %v7156
    %v7673 = vunpack.c.l.b16 %v7157
    %v7674 = vunpack.c.l.b16 %v7158
    %v7675 = vunpack.c.l.b16 %v7159
    %v7676 = vunpack.c.l.b16 %v7160
    %v7677 = vunpack.c.l.b16 %v7161
    %v7678 = vunpack.c.l.b16 %v7162
    %v7679 = vunpack.c.l.b16 %v7163
    %v7680 = vunpack.c.l.b16 %v7164
    %v7681 = vunpack.c.l.b16 %v7165
    %v7682 = vunpack.c.l.b16 %v7166
    %v7683 = vunpack.c.l.b16 %v7167
    %v7684 = vunpack.c.l.b16 %v7168
    %v7685 = vunpack.c.l.b16 %v7169
    %v7686 = vunpack.c.l.b16 %v7170
    %v7687 = vunpack.c.l.b16 %v7171
    %v7688 = vunpack.c.l.b16 %v7172
    %v7689 = vunpack.c.l.b16 %v7173
    %v7690 = vunpack.c.l.b16 %v7174
    %v7691 = vunpack.c.l.b16 %v7175
    %v7692 = vunpack.c.l.b16 %v7176
    %v7693 = vunpack.c.l.b16 %v7177
    %v7694 = vunpack.c.l.b16 %v7178
    %v7695 = vunpack.c.l.b16 %v7179
    %v7696 = vunpack.c.l.b16 %v7180
    %v7697 = vunpack.c.l.b16 %v7181
    %v7698 = vunpack.c.l.b16 %v7182
    %v7699 = vunpack.c.l.b16 %v7183
    %v7700 = vunpack.c.l.b16 %v7184
    %v7701 = vunpack.c.l.b16 %v7185
    %v7702 = vunpack.c.l.b16 %v7186
    %v7703 = vunpack.c.l.b16 %v7187
    %v7704 = vunpack.c.l.b16 %v7188
    %v7705 = vunpack.c.l.b16 %v7189
    %v7706 = vunpack.c.l.b16 %v7190
    %v7707 = vunpack.c.l.b16 %v7191
    %v7708 = vunpack.c.l.b16 %v7192
    %v7709 = vunpack.c.l.b16 %v7193
    %v7710 = vunpack.c.l.b16 %v7194
    %v7711 = vunpack.c.l.b16 %v7195
    %v7712 = vunpack.c.l.b16 %v7196
    %v7713 = vunpack.c.l.b16 %v7197
    %v7714 = vunpack.c.l.b16 %v7198
    %v7715 = vunpack.c.l.b16 %v7199
    %v7716 = vunpack.c.l.b16 %v7200
    %v7717 = vunpack.c.l.b16 %v7201
    %v7718 = vunpack.c.l.b16 %v7202
    %v7719 = vunpack.c.l.b16 %v7203
    %v7720 = vunpack.c.l.b16 %v7204
    %v7721 = vunpack.c.l.b16 %v7205
    %v7722 = vunpack.c.l.b16 %v7206
    %v7723 = vunpack.c.l.b16 %v7207
    %v7724 = vunpack.c.l.b16 %v7208
    %v7725 = vunpack.c.l.b16 %v7209
    %v7726 = vunpack.c.l.b16 %v7210
    %v7727 = vunpack.c.l.b16 %v7211
    %v7728 = vunpack.c.l.b16 %v7212
    %v7729 = vunpack.c.l.b16 %v7213
    %v7730 = vunpack.c.l.b16 %v7214
    %v7731 = vunpack.c.l.b16 %v7215
    %v7732 = vunpack.c.l.b16 %v7216
    %v7733 = vunpack.c.l.b16 %v7217
    %v7734 = vunpack.c.l.b16 %v7218
    %v7735 = vunpack.c.l.b16 %v7219
    %v7736 = vunpack.c.l.b16 %v7220
    %v7737 = vunpack.c.l.b16 %v7221
    %v7738 = vunpack.c.l.b16 %v7222
    %v7739 = vunpack.c.l.b16 %v7223
    %v7740 = vunpack.c.l.b16 %v7224
    %v7741 = vunpack.c.l.b16 %v7225
    %v7742 = vunpack.c.l.b16 %v7226
    %v7743 = vunpack.c.l.b16 %v7227
    %v7744 = vunpack.c.l.b16 %v7228
    %v7745 = vunpack.c.l.b16 %v7229
    %v7746 = vunpack.c.l.b16 %v7230
    %v7747 = vunpack.c.l.b16 %v7231
    %v7748 = vunpack.c.l.b16 %v7232
    %v7749 = vunpack.c.l.b16 %v7233
    %v7750 = vunpack.c.l.b16 %v7234
    %v7751 = vunpack.c.l.b16 %v7235
    %v7752 = vunpack.c.l.b16 %v7236
    %v7753 = vunpack.c.l.b16 %v7237
    %v7754 = vunpack.c.l.b16 %v7238
    %v7755 = vunpack.c.l.b16 %v7239
    %v7756 = vunpack.c.l.b16 %v7240
    %v7757 = vunpack.c.l.b16 %v7241
    %v7758 = vunpack.c.l.b16 %v7242
    %v7759 = vunpack.c.l.b16 %v7243
    %v7760 = vunpack.c.l.b16 %v7244
    %v7761 = vunpack.c.l.b16 %v7245
    %v7762 = vunpack.c.l.b16 %v7246
    %v7763 = vunpack.c.l.b16 %v7247
    %v7764 = vunpack.c.l.b16 %v7248
    %v7765 = vunpack.c.l.b16 %v7249
    %v7766 = vunpack.c.l.b16 %v7250
    %v7767 = vunpack.c.l.b16 %v7251
    %v7768 = vunpack.c.l.b16 %v7252
    %v7769 = vunpack.c.l.b16 %v7253
    %v7770 = vunpack.c.l.b16 %v7254
    %v7771 = vunpack.c.l.b16 %v7255
    %v7772 = vunpack.c.l.b16 %v7256
    %v7773 = vunpack.c.l.b16 %v7257
    %v7774 = vunpack.c.l.b16 %v7258
    %v7775 = vunpack.c.l.b16 %v7259
    %v7776 = vunpack.c.l.b16 %v7260
    %v7777 = vunpack.c.l.b16 %v7261
    %v7778 = vunpack.c.l.b16 %v7262
    %v7779 = vunpack.c.l.b16 %v7263
    %v7780 = vunpack.c.l.b16 %v7264
    %v7781 = vunpack.c.l.b16 %v7265
    %v7782 = vunpack.c.l.b16 %v7266
    %v7783 = vunpack.c.l.b16 %v7267
    %v7784 = vunpack.c.l.b16 %v7268
    %v7785 = vunpack.c.l.b16 %v7269
    %v7786 = vunpack.c.l.b16 %v7270
    %v7787 = vunpack.c.l.b16 %v7271
    %v7788 = vunpack.c.l.b16 %v7272
    %v7789 = vunpack.c.l.b16 %v7273
    %v7790 = vpack.c.b16 %v7535, %v7534
    %v7791 = vpack.c.b16 %v7537, %v7536
    %v7792 = vpack.c.b16 %v7539, %v7538
    %v7793 = vpack.c.b16 %v7541, %v7540
    %v7794 = vpack.c.b16 %v7543, %v7542
    %v7795 = vpack.c.b16 %v7545, %v7544
    %v7796 = vpack.c.b16 %v7547, %v7546
    %v7797 = vpack.c.b16 %v7549, %v7548
    %v7798 = vpack.c.b16 %v7551, %v7550
    %v7799 = vpack.c.b16 %v7553, %v7552
    %v7800 = vpack.c.b16 %v7555, %v7554
    %v7801 = vpack.c.b16 %v7557, %v7556
    %v7802 = vpack.c.b16 %v7559, %v7558
    %v7803 = vpack.c.b16 %v7561, %v7560
    %v7804 = vpack.c.b16 %v7563, %v7562
    %v7805 = vpack.c.b16 %v7565, %v7564
    %v7806 = vpack.c.b16 %v7567, %v7566
    %v7807 = vpack.c.b16 %v7569, %v7568
    %v7808 = vpack.c.b16 %v7571, %v7570
    %v7809 = vpack.c.b16 %v7573, %v7572
    %v7810 = vpack.c.b16 %v7575, %v7574
    %v7811 = vpack.c.b16 %v7577, %v7576
    %v7812 = vpack.c.b16 %v7579, %v7578
    %v7813 = vpack.c.b16 %v7581, %v7580
    %v7814 = vpack.c.b16 %v7583, %v7582
    %v7815 = vpack.c.b16 %v7585, %v7584
    %v7816 = vpack.c.b16 %v7587, %v7586
    %v7817 = vpack.c.b16 %v7589, %v7588
    %v7818 = vpack.c.b16 %v7591, %v7590
    %v7819 = vpack.c.b16 %v7593, %v7592
    %v7820 = vpack.c.b16 %v7595, %v7594
    %v7821 = vpack.c.b16 %v7597, %v7596
    %v7822 = vpack.c.b16 %v7599, %v7598
    %v7823 = vpack.c.b16 %v7601, %v7600
    %v7824 = vpack.c.b16 %v7603, %v7602
    %v7825 = vpack.c.b16 %v7605, %v7604
    %v7826 = vpack.c.b16 %v7607, %v7606
    %v7827 = vpack.c.b16 %v7609, %v7608
    %v7828 = vpack.c.b16 %v7611, %v7610
    %v7829 = vpack.c.b16 %v7613, %v7612
    %v7830 = vpack.c.b16 %v7615, %v7614
    %v7831 = vpack.c.b16 %v7617, %v7616
    %v7832 = vpack.c.b16 %v7619, %v7618
    %v7833 = vpack.c.b16 %v7621, %v7620
    %v7834 = vpack.c.b16 %v7623, %v7622
    %v7835 = vpack.c.b16 %v7625, %v7624
    %v7836 = vpack.c.b16 %v7627, %v7626
    %v7837 = vpack.c.b16 %v7629, %v7628
    %v7838 = vpack.c.b16 %v7631, %v7630
    %v7839 = vpack.c.b16 %v7633, %v7632
    %v7840 = vpack.c.b16 %v7635, %v7634
    %v7841 = vpack.c.b16 %v7637, %v7636
    %v7842 = vpack.c.b16 %v7639, %v7638
    %v7843 = vpack.c.b16 %v7641, %v7640
    %v7844 = vpack.c.b16 %v7643, %v7642
    %v7845 = vpack.c.b16 %v7645, %v7644
    %v7846 = vpack.c.b16 %v7647, %v7646
    %v7847 = vpack.c.b16 %v7649, %v7648
    %v7848 = vpack.c.b16 %v7651, %v7650
    %v7849 = vpack.c.b16 %v7653, %v7652
    %v7850 = vpack.c.b16 %v7655, %v7654
    %v7851 = vpack.c.b16 %v7657, %v7656
    %v7852 = vpack.c.b16 %v7659, %v7658
    %v7853 = vpack.c.b16 %v7661, %v7660
    %v7854 = vpack.c.b16 %v7663, %v7662
    %v7855 = vpack.c.b16 %v7665, %v7664
    %v7856 = vpack.c.b16 %v7667, %v7666
    %v7857 = vpack.c.b16 %v7669, %v7668
    %v7858 = vpack.c.b16 %v7671, %v7670
    %v7859 = vpack.c.b16 %v7673, %v7672
    %v7860 = vpack.c.b16 %v7675, %v7674
    %v7861 = vpack.c.b16 %v7677, %v7676
    %v7862 = vpack.c.b16 %v7679, %v7678
    %v7863 = vpack.c.b16 %v7681, %v7680
    %v7864 = vpack.c.b16 %v7683, %v7682
    %v7865 = vpack.c.b16 %v7685, %v7684
    %v7866 = vpack.c.b16 %v7687, %v7686
    %v7867 = vpack.c.b16 %v7689, %v7688
    %v7868 = vpack.c.b16 %v7691, %v7690
    %v7869 = vpack.c.b16 %v7693, %v7692
    %v7870 = vpack.c.b16 %v7695, %v7694
    %v7871 = vpack.c.b16 %v7697, %v7696
    %v7872 = vpack.c.b16 %v7699, %v7698
    %v7873 = vpack.c.b16 %v7701, %v7700
    %v7874 = vpack.c.b16 %v7703, %v7702
    %v7875 = vpack.c.b16 %v7705, %v7704
    %v7876 = vpack.c.b16 %v7707, %v7706
    %v7877 = vpack.c.b16 %v7709, %v7708
    %v7878 = vpack.c.b16 %v7711, %v7710
    %v7879 = vpack.c.b16 %v7713, %v7712
    %v7880 = vpack.c.b16 %v7715, %v7714
    %v7881 = vpack.c.b16 %v7717, %v7716
    %v7882 = vpack.c.b16 %v7719, %v7718
    %v7883 = vpack.c.b16 %v7721, %v7720
    %v7884 = vpack.c.b16 %v7723, %v7722
    %v7885 = vpack.c.b16 %v7725, %v7724
    %v7886 = vpack.c.b16 %v7727, %v7726
    %v7887 = vpack.c.b16 %v7729, %v7728
    %v7888 = vpack.c.b16 %v7731, %v7730
    %v7889 = vpack.c.b16 %v7733, %v7732
    %v7890 = vpack.c.b16 %v7735, %v7734
    %v7891 = vpack.c.b16 %v7737, %v7736
    %v7892 = vpack.c.b16 %v7739, %v7738
    %v7893 = vpack.c.b16 %v7741, %v7740
    %v7894 = vpack.c.b16 %v7743, %v7742
    %v7895 = vpack.c.b16 %v7745, %v7744
    %v7896 = vpack.c.b16 %v7747, %v7746
    %v7897 = vpack.c.b16 %v7749, %v7748
    %v7898 = vpack.c.b16 %v7751, %v7750
    %v7899 = vpack.c.b16 %v7753, %v7752
    %v7900 = vpack.c.b16 %v7755, %v7754
    %v7901 = vpack.c.b16 %v7757, %v7756
    %v7902 = vpack.c.b16 %v7759, %v7758
    %v7903 = vpack.c.b16 %v7761, %v7760
    %v7904 = vpack.c.b16 %v7763, %v7762
    %v7905 = vpack.c.b16 %v7765, %v7764
    %v7906 = vpack.c.b16 %v7767, %v7766
    %v7907 = vpack.c.b16 %v7769, %v7768
    %v7908 = vpack.c.b16 %v7771, %v7770
    %v7909 = vpack.c.b16 %v7773, %v7772
    %v7910 = vpack.c.b16 %v7775, %v7774
    %v7911 = vpack.c.b16 %v7777, %v7776
    %v7912 = vpack.c.b16 %v7779, %v7778
    %v7913 = vpack.c.b16 %v7781, %v7780
    %v7914 = vpack.c.b16 %v7783, %v7782
    %v7915 = vpack.c.b16 %v7785, %v7784
    %v7916 = vpack.c.b16 %v7787, %v7786
    %v7917 = vpack.c.b16 %v7789, %v7788
    %8046 = vmatpush.bf16.msra.mxu0 %v7797
    %8047 = vmatpush.bf16.msra.mxu0 %v7796
    %8048 = vmatpush.bf16.msra.mxu0 %v7795
    %8049 = vmatpush.bf16.msra.mxu0 %v7794
    %8050 = vmatpush.bf16.msra.mxu0 %v7793
    %8051 = vmatpush.bf16.msra.mxu0 %v7792
    %8052 = vmatpush.bf16.msra.mxu0 %v7791
    %8053 = vmatpush.bf16.msra.mxu0 %v7790
    %8054 = vmatmul.bf16.gmra.mxu0 %v7002
    %v8055 = vpop.f32.mrf.mxu0
    %v8056 = vadd.f32 %v7276, %v8055
    %v8057 = vpop.f32.mrf.mxu0
    %v8058 = vadd.f32 %v7276, %v8057
    %8059 = vdwg.mxu0
    %8060 = vmatpush.bf16.msra.mxu0 %v7805
    %8061 = vmatpush.bf16.msra.mxu0 %v7804
    %8062 = vmatpush.bf16.msra.mxu0 %v7803
    %8063 = vmatpush.bf16.msra.mxu0 %v7802
    %8064 = vmatpush.bf16.msra.mxu0 %v7801
    %8065 = vmatpush.bf16.msra.mxu0 %v7800
    %8066 = vmatpush.bf16.msra.mxu0 %v7799
    %8067 = vmatpush.bf16.msra.mxu0 %v7798
    %8068 = vmatmul.bf16.gmra.mxu0 %v7003
    %v8069 = vpop.f32.mrf.mxu0
    %v8070 = vadd.f32 %v8056, %v8069
    %v8071 = vpop.f32.mrf.mxu0
    %v8072 = vadd.f32 %v8058, %v8071
    %8073 = vdwg.mxu0
    %8074 = vmatpush.bf16.msra.mxu0 %v7813
    %8075 = vmatpush.bf16.msra.mxu0 %v7812
    %8076 = vmatpush.bf16.msra.mxu0 %v7811
    %8077 = vmatpush.bf16.msra.mxu0 %v7810
    %8078 = vmatpush.bf16.msra.mxu0 %v7809
    %8079 = vmatpush.bf16.msra.mxu0 %v7808
    %8080 = vmatpush.bf16.msra.mxu0 %v7807
    %8081 = vmatpush.bf16.msra.mxu0 %v7806
    %8082 = vmatmul.bf16.gmra.mxu0 %v7004
    %v8083 = vpop.f32.mrf.mxu0
    %v8084 = vadd.f32 %v8070, %v8083
    %v8085 = vpop.f32.mrf.mxu0
    %v8086 = vadd.f32 %v8072, %v8085
    %8087 = vdwg.mxu0
    %8088 = vmatpush.bf16.msra.mxu0 %v7821
    %8089 = vmatpush.bf16.msra.mxu0 %v7820
    %8090 = vmatpush.bf16.msra.mxu0 %v7819
    %8091 = vmatpush.bf16.msra.mxu0 %v7818
    %8092 = vmatpush.bf16.msra.mxu0 %v7817
    %8093 = vmatpush.bf16.msra.mxu0 %v7816
    %8094 = vmatpush.bf16.msra.mxu0 %v7815
    %8095 = vmatpush.bf16.msra.mxu0 %v7814
    %8096 = vmatmul.bf16.gmra.mxu0 %v7005
    %v8097 = vpop.f32.mrf.mxu0
    %v8098 = vadd.f32 %v8084, %v8097
    %v8099 = vpop.f32.mrf.mxu0
    %v8100 = vadd.f32 %v8086, %v8099
    %8101 = vdwg.mxu0
    %8102 = vmatpush.bf16.msra.mxu0 %v7829
    %8103 = vmatpush.bf16.msra.mxu0 %v7828
    %8104 = vmatpush.bf16.msra.mxu0 %v7827
    %8105 = vmatpush.bf16.msra.mxu0 %v7826
    %8106 = vmatpush.bf16.msra.mxu0 %v7825
    %8107 = vmatpush.bf16.msra.mxu0 %v7824
    %8108 = vmatpush.bf16.msra.mxu0 %v7823
    %8109 = vmatpush.bf16.msra.mxu0 %v7822
    %8110 = vmatmul.bf16.gmra.mxu0 %v7006
    %v8111 = vpop.f32.mrf.mxu0
    %v8112 = vadd.f32 %v8098, %v8111
    %v8113 = vpop.f32.mrf.mxu0
    %v8114 = vadd.f32 %v8100, %v8113
    %8115 = vdwg.mxu0
    %8116 = vmatpush.bf16.msra.mxu0 %v7837
    %8117 = vmatpush.bf16.msra.mxu0 %v7836
    %8118 = vmatpush.bf16.msra.mxu0 %v7835
    %8119 = vmatpush.bf16.msra.mxu0 %v7834
    %8120 = vmatpush.bf16.msra.mxu0 %v7833
    %8121 = vmatpush.bf16.msra.mxu0 %v7832
    %8122 = vmatpush.bf16.msra.mxu0 %v7831
    %8123 = vmatpush.bf16.msra.mxu0 %v7830
    %8124 = vmatmul.bf16.gmra.mxu0 %v7007
    %v8125 = vpop.f32.mrf.mxu0
    %v8126 = vadd.f32 %v8112, %v8125
    %v8127 = vpop.f32.mrf.mxu0
    %v8128 = vadd.f32 %v8114, %v8127
    %8129 = vdwg.mxu0
    %8130 = vmatpush.bf16.msra.mxu0 %v7845
    %8131 = vmatpush.bf16.msra.mxu0 %v7844
    %8132 = vmatpush.bf16.msra.mxu0 %v7843
    %8133 = vmatpush.bf16.msra.mxu0 %v7842
    %8134 = vmatpush.bf16.msra.mxu0 %v7841
    %8135 = vmatpush.bf16.msra.mxu0 %v7840
    %8136 = vmatpush.bf16.msra.mxu0 %v7839
    %8137 = vmatpush.bf16.msra.mxu0 %v7838
    %8138 = vmatmul.bf16.gmra.mxu0 %v7008
    %v8139 = vpop.f32.mrf.mxu0
    %v8140 = vadd.f32 %v8126, %v8139
    %v8141 = vpop.f32.mrf.mxu0
    %v8142 = vadd.f32 %v8128, %v8141
    %8143 = vdwg.mxu0
    %8144 = vmatpush.bf16.msra.mxu0 %v7853
    %8145 = vmatpush.bf16.msra.mxu0 %v7852
    %8146 = vmatpush.bf16.msra.mxu0 %v7851
    %8147 = vmatpush.bf16.msra.mxu0 %v7850
    %8148 = vmatpush.bf16.msra.mxu0 %v7849
    %8149 = vmatpush.bf16.msra.mxu0 %v7848
    %8150 = vmatpush.bf16.msra.mxu0 %v7847
    %8151 = vmatpush.bf16.msra.mxu0 %v7846
    %8152 = vmatmul.bf16.gmra.mxu0 %v7009
    %v8153 = vpop.f32.mrf.mxu0
    %v8154 = vadd.f32 %v8140, %v8153
    %v8155 = vpop.f32.mrf.mxu0
    %v8156 = vadd.f32 %v8142, %v8155
    %8157 = vdwg.mxu0
    %8158 = vmatpush.bf16.msra.mxu0 %v7861
    %8159 = vmatpush.bf16.msra.mxu0 %v7860
    %8160 = vmatpush.bf16.msra.mxu0 %v7859
    %8161 = vmatpush.bf16.msra.mxu0 %v7858
    %8162 = vmatpush.bf16.msra.mxu0 %v7857
    %8163 = vmatpush.bf16.msra.mxu0 %v7856
    %8164 = vmatpush.bf16.msra.mxu0 %v7855
    %8165 = vmatpush.bf16.msra.mxu0 %v7854
    %8166 = vmatmul.bf16.gmra.mxu0 %v7010
    %v8167 = vpop.f32.mrf.mxu0
    %v8168 = vadd.f32 %v8154, %v8167
    %v8169 = vpop.f32.mrf.mxu0
    %v8170 = vadd.f32 %v8156, %v8169
    %8171 = vdwg.mxu0
    %8172 = vmatpush.bf16.msra.mxu0 %v7869
    %8173 = vmatpush.bf16.msra.mxu0 %v7868
    %8174 = vmatpush.bf16.msra.mxu0 %v7867
    %8175 = vmatpush.bf16.msra.mxu0 %v7866
    %8176 = vmatpush.bf16.msra.mxu0 %v7865
    %8177 = vmatpush.bf16.msra.mxu0 %v7864
    %8178 = vmatpush.bf16.msra.mxu0 %v7863
    %8179 = vmatpush.bf16.msra.mxu0 %v7862
    %8180 = vmatmul.bf16.gmra.mxu0 %v7011
    %v8181 = vpop.f32.mrf.mxu0
    %v8182 = vadd.f32 %v8168, %v8181
    %v8183 = vpop.f32.mrf.mxu0
    %v8184 = vadd.f32 %v8170, %v8183
    %8185 = vdwg.mxu0
    %8186 = vmatpush.bf16.msra.mxu0 %v7877
    %8187 = vmatpush.bf16.msra.mxu0 %v7876
    %8188 = vmatpush.bf16.msra.mxu0 %v7875
    %8189 = vmatpush.bf16.msra.mxu0 %v7874
    %8190 = vmatpush.bf16.msra.mxu0 %v7873
    %8191 = vmatpush.bf16.msra.mxu0 %v7872
    %8192 = vmatpush.bf16.msra.mxu0 %v7871
    %8193 = vmatpush.bf16.msra.mxu0 %v7870
    %8194 = vmatmul.bf16.gmra.mxu0 %v7012
    %v8195 = vpop.f32.mrf.mxu0
    %v8196 = vadd.f32 %v8182, %v8195
    %v8197 = vpop.f32.mrf.mxu0
    %v8198 = vadd.f32 %v8184, %v8197
    %8199 = vdwg.mxu0
    %8200 = vmatpush.bf16.msra.mxu0 %v7885
    %8201 = vmatpush.bf16.msra.mxu0 %v7884
    %8202 = vmatpush.bf16.msra.mxu0 %v7883
    %8203 = vmatpush.bf16.msra.mxu0 %v7882
    %8204 = vmatpush.bf16.msra.mxu0 %v7881
    %8205 = vmatpush.bf16.msra.mxu0 %v7880
    %8206 = vmatpush.bf16.msra.mxu0 %v7879
    %8207 = vmatpush.bf16.msra.mxu0 %v7878
    %8208 = vmatmul.bf16.gmra.mxu0 %v7013
    %v8209 = vpop.f32.mrf.mxu0
    %v8210 = vadd.f32 %v8196, %v8209
    %v8211 = vpop.f32.mrf.mxu0
    %v8212 = vadd.f32 %v8198, %v8211
    %8213 = vdwg.mxu0
    %8214 = vmatpush.bf16.msra.mxu0 %v7893
    %8215 = vmatpush.bf16.msra.mxu0 %v7892
    %8216 = vmatpush.bf16.msra.mxu0 %v7891
    %8217 = vmatpush.bf16.msra.mxu0 %v7890
    %8218 = vmatpush.bf16.msra.mxu0 %v7889
    %8219 = vmatpush.bf16.msra.mxu0 %v7888
    %8220 = vmatpush.bf16.msra.mxu0 %v7887
    %8221 = vmatpush.bf16.msra.mxu0 %v7886
    %8222 = vmatmul.bf16.gmra.mxu0 %v7014
    %v8223 = vpop.f32.mrf.mxu0
    %v8224 = vadd.f32 %v8210, %v8223
    %v8225 = vpop.f32.mrf.mxu0
    %v8226 = vadd.f32 %v8212, %v8225
    %8227 = vdwg.mxu0
    %8228 = vmatpush.bf16.msra.mxu0 %v7901
    %8229 = vmatpush.bf16.msra.mxu0 %v7900
    %8230 = vmatpush.bf16.msra.mxu0 %v7899
    %8231 = vmatpush.bf16.msra.mxu0 %v7898
    %8232 = vmatpush.bf16.msra.mxu0 %v7897
    %8233 = vmatpush.bf16.msra.mxu0 %v7896
    %8234 = vmatpush.bf16.msra.mxu0 %v7895
    %8235 = vmatpush.bf16.msra.mxu0 %v7894
    %8236 = vmatmul.bf16.gmra.mxu0 %v7015
    %v8237 = vpop.f32.mrf.mxu0
    %v8238 = vadd.f32 %v8224, %v8237
    %v8239 = vpop.f32.mrf.mxu0
    %v8240 = vadd.f32 %v8226, %v8239
    %8241 = vdwg.mxu0
    %8242 = vmatpush.bf16.msra.mxu0 %v7909
    %8243 = vmatpush.bf16.msra.mxu0 %v7908
    %8244 = vmatpush.bf16.msra.mxu0 %v7907
    %8245 = vmatpush.bf16.msra.mxu0 %v7906
    %8246 = vmatpush.bf16.msra.mxu0 %v7905
    %8247 = vmatpush.bf16.msra.mxu0 %v7904
    %8248 = vmatpush.bf16.msra.mxu0 %v7903
    %8249 = vmatpush.bf16.msra.mxu0 %v7902
    %8250 = vmatmul.bf16.gmra.mxu0 %v7016
    %v8251 = vpop.f32.mrf.mxu0
    %v8252 = vadd.f32 %v8238, %v8251
    %v8253 = vpop.f32.mrf.mxu0
    %v8254 = vadd.f32 %v8240, %v8253
    %8255 = vdwg.mxu0
    %8256 = vmatpush.bf16.msra.mxu0 %v7917
    %8257 = vmatpush.bf16.msra.mxu0 %v7916
    %8258 = vmatpush.bf16.msra.mxu0 %v7915
    %8259 = vmatpush.bf16.msra.mxu0 %v7914
    %8260 = vmatpush.bf16.msra.mxu0 %v7913
    %8261 = vmatpush.bf16.msra.mxu0 %v7912
    %8262 = vmatpush.bf16.msra.mxu0 %v7911
    %8263 = vmatpush.bf16.msra.mxu0 %v7910
    %8264 = vmatmul.bf16.gmra.mxu0 %v7017
    %v8265 = vpop.f32.mrf.mxu0
    %v8266 = vadd.f32 %v8252, %v8265
    %v8267 = vpop.f32.mrf.mxu0
    %v8268 = vadd.f32 %v8254, %v8267
    %8269 = vdwg.mxu0
    %vm8270 = vcmask 261120
    %8271 = vst.msk [vmem:[#allocation16] sm:$0xff] %vm8270, %v8266
    %8272 = vst.msk [vmem:[#allocation16 + $0x8] sm:$0xff] %vm8270, %v8268
    // Predicated region
    $region70: #{tpu_custom_call.1} parent=1 // pred_check
      _
    $region71: #{tpu_custom_call.1} parent=1 // pred_check_branch
      %8274 = sbr.rel (0) target = $region73
    $region72: #{tpu_custom_call.1} parent=1 // pred_region
      %8276 = vsyncadd [#allocation4], 0
      %s8277 = sshll.u32 [#allocation16], 4
      %s8278 = int_to_ptr.vmem [resolvable:$true] %s8277
      %s8279 = sshll.u32 %s9, 4
      %s8280 = int_to_ptr.hbm [resolvable:$true] %s8279
      %8285 = dma.vmem_to_hbm [thread:$0]  %s8278, 256, %s8280, [#allocation4], 128, 128, 8
    $region73: #{tpu_custom_call.1} parent=1 // pred_fallthru
      _
    // Predicated region
    $region74: #{tpu_custom_call.1} parent=1 // pred_check
      _
    $region75: #{tpu_custom_call.1} parent=1 // pred_check_branch
      %8287 = sbr.rel (0) target = $region77
    $region76: #{tpu_custom_call.1} parent=1 // pred_region
      %8289 = dma.done [#allocation4], 256
    $region77: #{tpu_custom_call.1} parent=1 // pred_fallthru
      _
    %8290 = vsyncpa [#allocation3], 1
    %8291 = vsyncpa [#allocation6], 1
    %8292 = vsyncpa [#allocation9], 1
    %8293 = vsyncpa [#allocation12], 1
    %8294 = vsyncpa [#allocation15], 1
    %8295 = vsyncpa [#allocation4], 1

</llo_original>
